<compile_context>
chip_gen: v5e
topology: v5e:2x2
jax: 0.10.0
libtpu: 0.0.40
codegen_flags: <defaults>
</compile_context>

<pallas_src>
import math

import numpy as np
import jax
import jax.numpy as jnp
from jax.experimental import pallas as pl
from jax.experimental.pallas import tpu as pltpu

H = W = 16
N_PIX = H * W                      # 256 pixels, row-major (y, x)
EMBED_DIM = 64
NUM_HEADS = 4
HEAD_DIM = EMBED_DIM // NUM_HEADS  # 16
MLP_DIM = 128
DEPTH = 4
NUM_CLASSES = 3
N_TOKENS = (H // 4) * (W // 4)     # 16 tokens, row-major (py, px)
LN_EPS = 1e-5
BN_EPS = 1e-5


# ---------------------------------------------------------------------------
# In-kernel math helpers (traced inside the Pallas kernel).
# ---------------------------------------------------------------------------
def _erf(x):
    # Abramowitz & Stegun 7.1.26 rational approximation (~1.5e-7 abs error).
    # TODO(synk): nn.GELU uses exact erf; this polynomial matches it to f32 eps.
    a1, a2, a3, a4, a5 = (0.254829592, -0.284496736, 1.421413741,
                          -1.453152027, 1.061405429)
    p = 0.3275911
    s = jnp.where(x >= 0.0, 1.0, -1.0)
    ax = jnp.abs(x)
    t = 1.0 / (1.0 + p * ax)
    poly = ((((a5 * t + a4) * t + a3) * t + a2) * t + a1) * t
    return s * (1.0 - poly * jnp.exp(-ax * ax))


def _gelu(x):
    return 0.5 * x * (1.0 + _erf(x * (1.0 / math.sqrt(2.0))))


# ---------------------------------------------------------------------------
# Fused whole-network kernel (one grid step == one batch element).
# ---------------------------------------------------------------------------
def dsvit_kernel(x_ref,
                 conv1_w_ref, conv1_b_ref, conv2_w_ref, conv2_b_ref,
                 sel_ref, patch_w_ref, patch_b_ref,
                 wqkv_ref, bqkv_ref, wo_ref, bo_ref, ln1g_ref, ln1b_ref,
                 wm1_ref, bm1_ref, wm2_ref, bm2_ref, ln2g_ref, ln2b_ref,
                 bln_g_ref, bln_b_ref, bbox_w_ref, bbox_b_ref,
                 cln_g_ref, cln_b_ref, cls_w_ref, cls_b_ref,
                 bbox_ref, cls_ref):
    f32 = jnp.float32

    # ----- per-row x-position masks for the horizontal 3x3 taps -------------
    xpos = jax.lax.broadcasted_iota(jnp.int32, (N_PIX, 1), 0) % W
    mask_l = (xpos >= 1).astype(f32)        # neighbour at x-1 exists
    mask_r = (xpos <= W - 2).astype(f32)    # neighbour at x+1 exists

    def conv3x3_bn_relu(feat, w_ref, b_ref):
        # feat: (256, Cin) flattened row-major 16x16 map -> (256, Cout).
        cin = feat.shape[1]
        zpad = jnp.zeros((W + 1, cin), f32)                       # 17 rows
        fp = jnp.concatenate([zpad, feat, zpad], axis=0)          # (290, Cin)
        cols = []
        for dy in range(3):
            for dx in range(3):
                off = (dy - 1) * W + (dx - 1)
                sh = fp[(W + 1) + off:(W + 1) + off + N_PIX, :]   # shifted map
                if dx == 0:
                    sh = sh * mask_l
                elif dx == 2:
                    sh = sh * mask_r
                cols.append(sh)
        col = jnp.concatenate(cols, axis=1)                       # (256, 9*Cin)
        y = jnp.dot(col, w_ref[...], preferred_element_type=f32) + b_ref[...]
        return jnp.maximum(y, 0.0)

    # ----- PreEncoder (BatchNorm folded into weights; only shift applied) ---
    f1 = conv3x3_bn_relu(x_ref[...], conv1_w_ref, conv1_b_ref)    # (256, 8)
    f2 = conv3x3_bn_relu(f1, conv2_w_ref, conv2_b_ref)            # (256, 16)

    # ----- patch embed: Conv2d(16, 64, k=4, s=4) via selection matmul -------
    # gathered[k*16 + t, c] = f2[pixel of patch t, tap k, channel c]
    gathered = jnp.dot(sel_ref[...], f2, preferred_element_type=f32)  # (256,16)
    tok = jnp.zeros((N_TOKENS, EMBED_DIM), f32)
    for k in range(16):                                           # k = ph*4+pw
        tok = tok + jnp.dot(gathered[k * N_TOKENS:(k + 1) * N_TOKENS, :],
                            patch_w_ref[k * 16:(k + 1) * 16, :],
                            preferred_element_type=f32)
    tok = tok + patch_b_ref[...]                                  # (16, 64)

    def layernorm(v, g, b):
        mu = jnp.mean(v, axis=-1, keepdims=True)
        vc = v - mu
        var = jnp.mean(vc * vc, axis=-1, keepdims=True)
        return vc * jax.lax.rsqrt(var + LN_EPS) * g + b

    def transformer_block(xin, d):
        # fused QKV projection; 1/sqrt(head_dim) already folded into Q weights
        qkv = jnp.dot(xin, wqkv_ref[d], preferred_element_type=f32) + bqkv_ref[d]
        head_outs = []
        for h in range(NUM_HEADS):
            lo = h * HEAD_DIM
            qh = qkv[:, lo:lo + HEAD_DIM]
            kh = qkv[:, EMBED_DIM + lo:EMBED_DIM + lo + HEAD_DIM]
            vh = qkv[:, 2 * EMBED_DIM + lo:2 * EMBED_DIM + lo + HEAD_DIM]
            s = jax.lax.dot_general(qh, kh, (((1,), (1,)), ((), ())),
                                    preferred_element_type=f32)   # (N, N)
            s = s - jnp.max(s, axis=-1, keepdims=True)
            e = jnp.exp(s)
            prob = e * pl.reciprocal(jnp.sum(e, axis=-1, keepdims=True),
                                     approx=True)
            head_outs.append(jnp.dot(prob, vh, preferred_element_type=f32))
        attn = jnp.concatenate(head_outs, axis=1)                 # (N, 64)
        attn = jnp.dot(attn, wo_ref[d], preferred_element_type=f32) + bo_ref[d]
        h1 = layernorm(xin + attn, ln1g_ref[d], ln1b_ref[d])      # norm1
        m = jnp.dot(h1, wm1_ref[d], preferred_element_type=f32) + bm1_ref[d]
        m = _gelu(m)
        m = jnp.dot(m, wm2_ref[d], preferred_element_type=f32) + bm2_ref[d]
        return layernorm(h1 + m, ln2g_ref[d], ln2b_ref[d])        # norm2

    # ----- densely connected transformer blocks -----------------------------
    cur = tok
    prev = []
    for d in range(DEPTH):
        xin = cur
        for feat in prev:
            xin = xin + feat
        cur = transformer_block(xin, d)
        prev.append(cur)

    # ----- token mean-pool + bbox / class heads ------------------------------
    pooled = jnp.sum(cur, axis=0, keepdims=True) * (1.0 / N_TOKENS)  # (1, 64)
    hb = layernorm(pooled, bln_g_ref[...], bln_b_ref[...])
    bbox_ref[...] = (jnp.dot(hb, bbox_w_ref[...], preferred_element_type=f32)
                     + bbox_b_ref[...])
    hc = layernorm(pooled, cln_g_ref[...], cln_b_ref[...])
    cls_ref[...] = (jnp.dot(hc, cls_w_ref[...], preferred_element_type=f32)
                    + cls_b_ref[...])


# ---------------------------------------------------------------------------
# Host-side constants / parameters
# ---------------------------------------------------------------------------
def _patch_selection_matrix():
    # sel[k*16 + t, r] = 1  where r is the flat pixel index of tap k=(ph,pw)
    # inside patch t=(py,px):  r = 64*py + 16*ph + 4*px + pw.
    sel = np.zeros((N_PIX, N_PIX), np.float32)
    for k in range(16):
        ph, pw = divmod(k, 4)
        for t in range(N_TOKENS):
            py, px = divmod(t, 4)
            r = 64 * py + 16 * ph + 4 * px + pw
            sel[k * N_TOKENS + t, r] = 1.0
    return jnp.asarray(sel)


def init_params(key):
    keys = iter(jax.random.split(key, 160))

    def nrm(shape, std=0.05):
        return std * jax.random.normal(next(keys), shape, dtype=jnp.float32)

    p = {}

    # Conv2d(k=3, pad=1) + BatchNorm2d (eval mode) with the BN scale folded
    # directly into the weights.  Weight rows ordered (kh, kw, cin).
    # TODO(synk): porting real checkpoints requires permuting torch weights
    # (cout, cin, kh, kw) -> (kh, kw, cin, cout) before flattening/folding.
    def conv_bn(cin, cout):
        w = nrm((9 * cin, cout))
        b = nrm((cout,))
        gamma = 1.0 + nrm((cout,))
        beta = nrm((cout,))
        mean = nrm((cout,))
        var = 1.0 + 0.1 * jnp.abs(jax.random.normal(next(keys), (cout,),
                                                    dtype=jnp.float32))
        s = gamma / jnp.sqrt(var + BN_EPS)
        return w * s[None, :], ((b - mean) * s + beta)[None, :]

    p["conv1_w"], p["conv1_b"] = conv_bn(1, 8)
    p["conv2_w"], p["conv2_b"] = conv_bn(8, 16)

    # patch_embed: Conv2d(16, 64, kernel_size=4, stride=4); rows (kh, kw, cin).
    p["patch_w"] = nrm((4 * 4 * 16, EMBED_DIM))
    p["patch_b"] = nrm((1, EMBED_DIM))
    p["patch_sel"] = _patch_selection_matrix()

    # Transformer blocks, stacked over depth; attention scaling folded into Q.
    scale = 1.0 / math.sqrt(HEAD_DIM)
    stacks = {k: [] for k in ("wqkv", "bqkv", "wo", "bo", "ln1_g", "ln1_b",
                              "wm1", "bm1", "wm2", "bm2", "ln2_g", "ln2_b")}
    for _ in range(DEPTH):
        wq, wk, wv = (nrm((EMBED_DIM, EMBED_DIM)) for _ in range(3))
        bq, bk, bv = (nrm((1, EMBED_DIM)) for _ in range(3))
        stacks["wqkv"].append(jnp.concatenate([wq * scale, wk, wv], axis=1))
        stacks["bqkv"].append(jnp.concatenate([bq * scale, bk, bv], axis=1))
        stacks["wo"].append(nrm((EMBED_DIM, EMBED_DIM)))
        stacks["bo"].append(nrm((1, EMBED_DIM)))
        stacks["ln1_g"].append(jnp.ones((1, EMBED_DIM), jnp.float32))
        stacks["ln1_b"].append(jnp.zeros((1, EMBED_DIM), jnp.float32))
        stacks["wm1"].append(nrm((EMBED_DIM, MLP_DIM)))
        stacks["bm1"].append(nrm((1, MLP_DIM)))
        stacks["wm2"].append(nrm((MLP_DIM, EMBED_DIM)))
        stacks["bm2"].append(nrm((1, EMBED_DIM)))
        stacks["ln2_g"].append(jnp.ones((1, EMBED_DIM), jnp.float32))
        stacks["ln2_b"].append(jnp.zeros((1, EMBED_DIM), jnp.float32))
    for name, vals in stacks.items():
        p[name] = jnp.stack(vals)          # (DEPTH, ...)

    # Heads.
    p["bbox_ln_g"] = jnp.ones((1, EMBED_DIM), jnp.float32)
    p["bbox_ln_b"] = jnp.zeros((1, EMBED_DIM), jnp.float32)
    p["bbox_w"] = nrm((EMBED_DIM, 4))
    p["bbox_b"] = nrm((1, 4))
    p["cls_ln_g"] = jnp.ones((1, EMBED_DIM), jnp.float32)
    p["cls_ln_b"] = jnp.zeros((1, EMBED_DIM), jnp.float32)
    p["cls_w"] = nrm((EMBED_DIM, NUM_CLASSES))
    p["cls_b"] = nrm((1, NUM_CLASSES))
    return p


# ---------------------------------------------------------------------------
# Full forward pass: one pallas_call gridded over batch.
# ---------------------------------------------------------------------------
@jax.jit
def dsvit_forward(x_nchw, params):
    B, C, Hin, Win = x_nchw.shape
    assert (C, Hin, Win) == (1, H, W)
    # NCHW (C=1) -> flattened row-major pixels (B, 256, 1).
    x = x_nchw.astype(jnp.float32).reshape(B, N_PIX, 1)

    names = ("conv1_w", "conv1_b", "conv2_w", "conv2_b",
             "patch_sel", "patch_w", "patch_b",
             "wqkv", "bqkv", "wo", "bo", "ln1_g", "ln1_b",
             "wm1", "bm1", "wm2", "bm2", "ln2_g", "ln2_b",
             "bbox_ln_g", "bbox_ln_b", "bbox_w", "bbox_b",
             "cls_ln_g", "cls_ln_b", "cls_w", "cls_b")
    weights = [params[n] for n in names]

    in_specs = [pl.BlockSpec((None, N_PIX, 1), lambda b: (b, 0, 0))]
    for wgt in weights:   # whole-array, VMEM-resident across grid steps
        in_specs.append(pl.BlockSpec(wgt.shape, lambda b, _n=wgt.ndim: (0,) * _n))

    bbox, logits = pl.pallas_call(
        dsvit_kernel,
        out_shape=(jax.ShapeDtypeStruct((B, 1, 4), jnp.float32),
                   jax.ShapeDtypeStruct((B, 1, NUM_CLASSES), jnp.float32)),
        grid=(B,),
        in_specs=in_specs,
        out_specs=(pl.BlockSpec((None, 1, 4), lambda b: (b, 0, 0)),
                   pl.BlockSpec((None, 1, NUM_CLASSES), lambda b: (b, 0, 0))),
        compiler_params=pltpu.CompilerParams(
            dimension_semantics=("parallel",)),   # v7x: one batch elem per TC
    )(x, *weights)
    return bbox[:, 0, :], logits[:, 0, :]


if __name__ == "__main__":
    key = jax.random.PRNGKey(0)
    pkey, xkey = jax.random.split(key)
    params = init_params(pkey)
    # Input matches nn.Conv2d(1, 8, ...): NCHW (B=2, C=1, H=16, W=16)
    x = jax.random.normal(xkey, (2, 1, H, W), dtype=jnp.float32)
    bbox, logits = dsvit_forward(x, params)
    jax.block_until_ready((bbox, logits))
    assert bbox.shape == (2, 4) and logits.shape == (2, NUM_CLASSES)
    assert bool(jnp.all(jnp.isfinite(bbox))) and bool(jnp.all(jnp.isfinite(logits)))
    print("KERNEL_OK")
</pallas_src>

<mosaic_0001>
module attributes {stable_mosaic.version = 11 : i64} {
  func.func @dsvit_kernel(%arg0: i32, %arg1: memref<1x256x1xf32, #tpu.memory_space<vmem>>, %arg2: memref<9x8xf32, #tpu.memory_space<vmem>>, %arg3: memref<1x8xf32, #tpu.memory_space<vmem>>, %arg4: memref<72x16xf32, #tpu.memory_space<vmem>>, %arg5: memref<1x16xf32, #tpu.memory_space<vmem>>, %arg6: memref<256x256xf32, #tpu.memory_space<vmem>>, %arg7: memref<256x64xf32, #tpu.memory_space<vmem>>, %arg8: memref<1x64xf32, #tpu.memory_space<vmem>>, %arg9: memref<4x64x192xf32, #tpu.memory_space<vmem>>, %arg10: memref<4x1x192xf32, #tpu.memory_space<vmem>>, %arg11: memref<4x64x64xf32, #tpu.memory_space<vmem>>, %arg12: memref<4x1x64xf32, #tpu.memory_space<vmem>>, %arg13: memref<4x1x64xf32, #tpu.memory_space<vmem>>, %arg14: memref<4x1x64xf32, #tpu.memory_space<vmem>>, %arg15: memref<4x64x128xf32, #tpu.memory_space<vmem>>, %arg16: memref<4x1x128xf32, #tpu.memory_space<vmem>>, %arg17: memref<4x128x64xf32, #tpu.memory_space<vmem>>, %arg18: memref<4x1x64xf32, #tpu.memory_space<vmem>>, %arg19: memref<4x1x64xf32, #tpu.memory_space<vmem>>, %arg20: memref<4x1x64xf32, #tpu.memory_space<vmem>>, %arg21: memref<1x64xf32, #tpu.memory_space<vmem>>, %arg22: memref<1x64xf32, #tpu.memory_space<vmem>>, %arg23: memref<64x4xf32, #tpu.memory_space<vmem>>, %arg24: memref<1x4xf32, #tpu.memory_space<vmem>>, %arg25: memref<1x64xf32, #tpu.memory_space<vmem>>, %arg26: memref<1x64xf32, #tpu.memory_space<vmem>>, %arg27: memref<64x3xf32, #tpu.memory_space<vmem>>, %arg28: memref<1x3xf32, #tpu.memory_space<vmem>>, %arg29: memref<1x1x4xf32, #tpu.memory_space<vmem>>, %arg30: memref<1x1x3xf32, #tpu.memory_space<vmem>>) attributes {dimension_semantics = [#tpu.dimension_semantics<parallel>], iteration_bounds = array<i64: 2>, scalar_prefetch = 0 : i64, scratch_operands = 0 : i64, tpu.core_type = #tpu.core_type<tc>, window_params = [{transform_indices = @transform_0, window_bounds = array<i64: 1, 256, 1>}, {pipeline_mode = #tpu.pipeline_mode<synchronous>, transform_indices = @transform_1, window_bounds = array<i64: 9, 8>}, {pipeline_mode = #tpu.pipeline_mode<synchronous>, transform_indices = @transform_2, window_bounds = array<i64: 1, 8>}, {pipeline_mode = #tpu.pipeline_mode<synchronous>, transform_indices = @transform_3, window_bounds = array<i64: 72, 16>}, {pipeline_mode = #tpu.pipeline_mode<synchronous>, transform_indices = @transform_4, window_bounds = array<i64: 1, 16>}, {pipeline_mode = #tpu.pipeline_mode<synchronous>, transform_indices = @transform_5, window_bounds = array<i64: 256, 256>}, {pipeline_mode = #tpu.pipeline_mode<synchronous>, transform_indices = @transform_6, window_bounds = array<i64: 256, 64>}, {pipeline_mode = #tpu.pipeline_mode<synchronous>, transform_indices = @transform_7, window_bounds = array<i64: 1, 64>}, {pipeline_mode = #tpu.pipeline_mode<synchronous>, transform_indices = @transform_8, window_bounds = array<i64: 4, 64, 192>}, {pipeline_mode = #tpu.pipeline_mode<synchronous>, transform_indices = @transform_9, window_bounds = array<i64: 4, 1, 192>}, {pipeline_mode = #tpu.pipeline_mode<synchronous>, transform_indices = @transform_10, window_bounds = array<i64: 4, 64, 64>}, {pipeline_mode = #tpu.pipeline_mode<synchronous>, transform_indices = @transform_11, window_bounds = array<i64: 4, 1, 64>}, {pipeline_mode = #tpu.pipeline_mode<synchronous>, transform_indices = @transform_12, window_bounds = array<i64: 4, 1, 64>}, {pipeline_mode = #tpu.pipeline_mode<synchronous>, transform_indices = @transform_13, window_bounds = array<i64: 4, 1, 64>}, {pipeline_mode = #tpu.pipeline_mode<synchronous>, transform_indices = @transform_14, window_bounds = array<i64: 4, 64, 128>}, {pipeline_mode = #tpu.pipeline_mode<synchronous>, transform_indices = @transform_15, window_bounds = array<i64: 4, 1, 128>}, {pipeline_mode = #tpu.pipeline_mode<synchronous>, transform_indices = @transform_16, window_bounds = array<i64: 4, 128, 64>}, {pipeline_mode = #tpu.pipeline_mode<synchronous>, transform_indices = @transform_17, window_bounds = array<i64: 4, 1, 64>}, {pipeline_mode = #tpu.pipeline_mode<synchronous>, transform_indices = @transform_18, window_bounds = array<i64: 4, 1, 64>}, {pipeline_mode = #tpu.pipeline_mode<synchronous>, transform_indices = @transform_19, window_bounds = array<i64: 4, 1, 64>}, {pipeline_mode = #tpu.pipeline_mode<synchronous>, transform_indices = @transform_20, window_bounds = array<i64: 1, 64>}, {pipeline_mode = #tpu.pipeline_mode<synchronous>, transform_indices = @transform_21, window_bounds = array<i64: 1, 64>}, {pipeline_mode = #tpu.pipeline_mode<synchronous>, transform_indices = @transform_22, window_bounds = array<i64: 64, 4>}, {pipeline_mode = #tpu.pipeline_mode<synchronous>, transform_indices = @transform_23, window_bounds = array<i64: 1, 4>}, {pipeline_mode = #tpu.pipeline_mode<synchronous>, transform_indices = @transform_24, window_bounds = array<i64: 1, 64>}, {pipeline_mode = #tpu.pipeline_mode<synchronous>, transform_indices = @transform_25, window_bounds = array<i64: 1, 64>}, {pipeline_mode = #tpu.pipeline_mode<synchronous>, transform_indices = @transform_26, window_bounds = array<i64: 64, 3>}, {pipeline_mode = #tpu.pipeline_mode<synchronous>, transform_indices = @transform_27, window_bounds = array<i64: 1, 3>}, {transform_indices = @transform_28, window_bounds = array<i64: 1, 1, 4>}, {transform_indices = @transform_29, window_bounds = array<i64: 1, 1, 3>}]} {
    %0 = tpu.iota {dimensions = array<i32: 0>} : vector<256x1xi32>
    %c16_i32 = arith.constant 16 : i32
    %c0_i32 = arith.constant 0 : i32
    %1 = arith.cmpi eq, %c16_i32, %c0_i32 : i32
    %c1_i32 = arith.constant 1 : i32
    %2 = arith.select %1, %c1_i32, %c16_i32 : i32
    %3 = vector.broadcast %2 : i32 to vector<256x1xi32>
    %4 = arith.remsi %0, %3 : vector<256x1xi32>
    %c0_i32_0 = arith.constant 0 : i32
    %5 = vector.broadcast %c0_i32_0 : i32 to vector<256x1xi32>
    %6 = arith.cmpi ne, %4, %5 : vector<256x1xi32>
    %c0_i32_1 = arith.constant 0 : i32
    %7 = vector.broadcast %c0_i32_1 : i32 to vector<256x1xi32>
    %8 = arith.cmpi slt, %4, %7 : vector<256x1xi32>
    %c0_i32_2 = arith.constant 0 : i32
    %9 = arith.cmpi slt, %2, %c0_i32_2 : i32
    %10 = vector.broadcast %9 : i1 to vector<256x1xi1>
    %11 = vector.broadcast %10 : vector<256x1xi1> to vector<256x1xi1>
    %12 = arith.xori %8, %11 : vector<256x1xi1>
    %13 = arith.andi %12, %6 : vector<256x1xi1>
    %14 = vector.broadcast %2 : i32 to vector<256x1xi32>
    %15 = arith.addi %4, %14 : vector<256x1xi32>
    %16 = arith.select %13, %15, %4 : vector<256x1xi1>, vector<256x1xi32>
    %c1_i32_3 = arith.constant 1 : i32
    %17 = vector.broadcast %c1_i32_3 : i32 to vector<256x1xi32>
    %18 = arith.cmpi sge, %16, %17 : vector<256x1xi32>
    %19 = arith.extui %18 : vector<256x1xi1> to vector<256x1xi32>
    %20 = arith.sitofp %19 : vector<256x1xi32> to vector<256x1xf32>
    %c14_i32 = arith.constant 14 : i32
    %21 = vector.broadcast %c14_i32 : i32 to vector<256x1xi32>
    %22 = arith.cmpi sle, %16, %21 : vector<256x1xi32>
    %23 = arith.extui %22 : vector<256x1xi1> to vector<256x1xi32>
    %24 = arith.sitofp %23 : vector<256x1xi32> to vector<256x1xf32>
    %c0 = arith.constant 0 : index
    %c0_4 = arith.constant 0 : index
    %c0_5 = arith.constant 0 : index
    %25 = vector.load %arg1[%c0, %c0_4, %c0_5] : memref<1x256x1xf32, #tpu.memory_space<vmem>>, vector<1x256x1xf32>
    %26 = vector.shape_cast %25 : vector<1x256x1xf32> to vector<256x1xf32>
    %cst = arith.constant 0.000000e+00 : f32
    %27 = vector.broadcast %cst : f32 to vector<17x1xf32>
    %28 = tpu.concatenate %27, %26, %27 in 0 : vector<17x1xf32>, vector<256x1xf32>, vector<17x1xf32> -> vector<290x1xf32>
    %29 = vector.extract_strided_slice %28 {offsets = [0, 0], sizes = [256, 1], strides = [1, 1]} : vector<290x1xf32> to vector<256x1xf32>
    %30 = arith.mulf %29, %20 : vector<256x1xf32>
    %31 = vector.extract_strided_slice %28 {offsets = [1, 0], sizes = [256, 1], strides = [1, 1]} : vector<290x1xf32> to vector<256x1xf32>
    %32 = vector.extract_strided_slice %28 {offsets = [2, 0], sizes = [256, 1], strides = [1, 1]} : vector<290x1xf32> to vector<256x1xf32>
    %33 = arith.mulf %32, %24 : vector<256x1xf32>
    %34 = vector.extract_strided_slice %28 {offsets = [16, 0], sizes = [256, 1], strides = [1, 1]} : vector<290x1xf32> to vector<256x1xf32>
    %35 = arith.mulf %34, %20 : vector<256x1xf32>
    %36 = vector.extract_strided_slice %28 {offsets = [17, 0], sizes = [256, 1], strides = [1, 1]} : vector<290x1xf32> to vector<256x1xf32>
    %37 = vector.extract_strided_slice %28 {offsets = [18, 0], sizes = [256, 1], strides = [1, 1]} : vector<290x1xf32> to vector<256x1xf32>
    %38 = arith.mulf %37, %24 : vector<256x1xf32>
    %39 = vector.extract_strided_slice %28 {offsets = [32, 0], sizes = [256, 1], strides = [1, 1]} : vector<290x1xf32> to vector<256x1xf32>
    %40 = arith.mulf %39, %20 : vector<256x1xf32>
    %41 = vector.extract_strided_slice %28 {offsets = [33, 0], sizes = [256, 1], strides = [1, 1]} : vector<290x1xf32> to vector<256x1xf32>
    %42 = vector.extract_strided_slice %28 {offsets = [34, 0], sizes = [256, 1], strides = [1, 1]} : vector<290x1xf32> to vector<256x1xf32>
    %43 = arith.mulf %42, %24 : vector<256x1xf32>
    %44 = tpu.concatenate %30, %31, %33, %35, %36, %38, %40, %41, %43 in 1 : vector<256x1xf32>, vector<256x1xf32>, vector<256x1xf32>, vector<256x1xf32>, vector<256x1xf32>, vector<256x1xf32>, vector<256x1xf32>, vector<256x1xf32>, vector<256x1xf32> -> vector<256x9xf32>
    %c0_6 = arith.constant 0 : index
    %c0_7 = arith.constant 0 : index
    %45 = vector.load %arg2[%c0_6, %c0_7] : memref<9x8xf32, #tpu.memory_space<vmem>>, vector<9x8xf32>
    %cst_8 = arith.constant dense<0.000000e+00> : vector<256x8xf32>
    %46 = tpu.matmul %44, %45, %cst_8 {dimension_numbers = #tpu.dot_dimension_numbers<[1], [0], [0], [1], [0, 0, 1, 1], [], []>} : vector<256x9xf32>, vector<9x8xf32>, vector<256x8xf32> -> vector<256x8xf32>
    %c0_9 = arith.constant 0 : index
    %c0_10 = arith.constant 0 : index
    %47 = vector.load %arg3[%c0_9, %c0_10] : memref<1x8xf32, #tpu.memory_space<vmem>>, vector<1x8xf32>
    %48 = vector.broadcast %47 : vector<1x8xf32> to vector<256x8xf32>
    %49 = arith.addf %46, %48 : vector<256x8xf32>
    %cst_11 = arith.constant 0.000000e+00 : f32
    %50 = vector.broadcast %cst_11 : f32 to vector<256x8xf32>
    %51 = arith.maximumf %49, %50 : vector<256x8xf32>
    %cst_12 = arith.constant 0.000000e+00 : f32
    %52 = vector.broadcast %cst_12 : f32 to vector<17x8xf32>
    %53 = tpu.concatenate %52, %51, %52 in 0 : vector<17x8xf32>, vector<256x8xf32>, vector<17x8xf32> -> vector<290x8xf32>
    %54 = vector.extract_strided_slice %53 {offsets = [0, 0], sizes = [256, 8], strides = [1, 1]} : vector<290x8xf32> to vector<256x8xf32>
    %55 = vector.broadcast %20 : vector<256x1xf32> to vector<256x8xf32>
    %56 = arith.mulf %54, %55 : vector<256x8xf32>
    %57 = vector.extract_strided_slice %53 {offsets = [1, 0], sizes = [256, 8], strides = [1, 1]} : vector<290x8xf32> to vector<256x8xf32>
    %58 = vector.extract_strided_slice %53 {offsets = [2, 0], sizes = [256, 8], strides = [1, 1]} : vector<290x8xf32> to vector<256x8xf32>
    %59 = vector.broadcast %24 : vector<256x1xf32> to vector<256x8xf32>
    %60 = arith.mulf %58, %59 : vector<256x8xf32>
    %61 = vector.extract_strided_slice %53 {offsets = [16, 0], sizes = [256, 8], strides = [1, 1]} : vector<290x8xf32> to vector<256x8xf32>
    %62 = vector.broadcast %20 : vector<256x1xf32> to vector<256x8xf32>
    %63 = arith.mulf %61, %62 : vector<256x8xf32>
    %64 = vector.extract_strided_slice %53 {offsets = [17, 0], sizes = [256, 8], strides = [1, 1]} : vector<290x8xf32> to vector<256x8xf32>
    %65 = vector.extract_strided_slice %53 {offsets = [18, 0], sizes = [256, 8], strides = [1, 1]} : vector<290x8xf32> to vector<256x8xf32>
    %66 = vector.broadcast %24 : vector<256x1xf32> to vector<256x8xf32>
    %67 = arith.mulf %65, %66 : vector<256x8xf32>
    %68 = vector.extract_strided_slice %53 {offsets = [32, 0], sizes = [256, 8], strides = [1, 1]} : vector<290x8xf32> to vector<256x8xf32>
    %69 = vector.broadcast %20 : vector<256x1xf32> to vector<256x8xf32>
    %70 = arith.mulf %68, %69 : vector<256x8xf32>
    %71 = vector.extract_strided_slice %53 {offsets = [33, 0], sizes = [256, 8], strides = [1, 1]} : vector<290x8xf32> to vector<256x8xf32>
    %72 = vector.extract_strided_slice %53 {offsets = [34, 0], sizes = [256, 8], strides = [1, 1]} : vector<290x8xf32> to vector<256x8xf32>
    %73 = vector.broadcast %24 : vector<256x1xf32> to vector<256x8xf32>
    %74 = arith.mulf %72, %73 : vector<256x8xf32>
    %75 = tpu.concatenate %56, %57, %60, %63, %64, %67, %70, %71, %74 in 1 : vector<256x8xf32>, vector<256x8xf32>, vector<256x8xf32>, vector<256x8xf32>, vector<256x8xf32>, vector<256x8xf32>, vector<256x8xf32>, vector<256x8xf32>, vector<256x8xf32> -> vector<256x72xf32>
    %c0_13 = arith.constant 0 : index
    %c0_14 = arith.constant 0 : index
    %76 = vector.load %arg4[%c0_13, %c0_14] : memref<72x16xf32, #tpu.memory_space<vmem>>, vector<72x16xf32>
    %cst_15 = arith.constant dense<0.000000e+00> : vector<256x16xf32>
    %77 = tpu.matmul %75, %76, %cst_15 {dimension_numbers = #tpu.dot_dimension_numbers<[1], [0], [0], [1], [0, 0, 1, 1], [], []>} : vector<256x72xf32>, vector<72x16xf32>, vector<256x16xf32> -> vector<256x16xf32>
    %c0_16 = arith.constant 0 : index
    %c0_17 = arith.constant 0 : index
    %78 = vector.load %arg5[%c0_16, %c0_17] : memref<1x16xf32, #tpu.memory_space<vmem>>, vector<1x16xf32>
    %79 = vector.broadcast %78 : vector<1x16xf32> to vector<256x16xf32>
    %80 = arith.addf %77, %79 : vector<256x16xf32>
    %cst_18 = arith.constant 0.000000e+00 : f32
    %81 = vector.broadcast %cst_18 : f32 to vector<256x16xf32>
    %82 = arith.maximumf %80, %81 : vector<256x16xf32>
    %c0_19 = arith.constant 0 : index
    %c0_20 = arith.constant 0 : index
    %83 = vector.load %arg6[%c0_19, %c0_20] : memref<256x256xf32, #tpu.memory_space<vmem>>, vector<256x256xf32>
    %cst_21 = arith.constant dense<0.000000e+00> : vector<256x16xf32>
    %84 = tpu.matmul %83, %82, %cst_21 {dimension_numbers = #tpu.dot_dimension_numbers<[1], [0], [0], [1], [0, 0, 1, 1], [], []>} : vector<256x256xf32>, vector<256x16xf32>, vector<256x16xf32> -> vector<256x16xf32>
    %cst_22 = arith.constant 0.000000e+00 : f32
    %85 = vector.broadcast %cst_22 : f32 to vector<16x64xf32>
    %86 = vector.extract_strided_slice %84 {offsets = [0, 0], sizes = [16, 16], strides = [1, 1]} : vector<256x16xf32> to vector<16x16xf32>
    %c0_23 = arith.constant 0 : index
    %c0_24 = arith.constant 0 : index
    %87 = vector.load %arg7[%c0_23, %c0_24] : memref<256x64xf32, #tpu.memory_space<vmem>>, vector<16x64xf32>
    %cst_25 = arith.constant dense<0.000000e+00> : vector<16x64xf32>
    %88 = tpu.matmul %86, %87, %cst_25 {dimension_numbers = #tpu.dot_dimension_numbers<[1], [0], [0], [1], [0, 0, 1, 1], [], []>} : vector<16x16xf32>, vector<16x64xf32>, vector<16x64xf32> -> vector<16x64xf32>
    %89 = arith.addf %85, %88 : vector<16x64xf32>
    %90 = vector.extract_strided_slice %84 {offsets = [16, 0], sizes = [16, 16], strides = [1, 1]} : vector<256x16xf32> to vector<16x16xf32>
    %c16 = arith.constant 16 : index
    %c0_26 = arith.constant 0 : index
    %91 = vector.load %arg7[%c16, %c0_26] : memref<256x64xf32, #tpu.memory_space<vmem>>, vector<16x64xf32>
    %cst_27 = arith.constant dense<0.000000e+00> : vector<16x64xf32>
    %92 = tpu.matmul %90, %91, %cst_27 {dimension_numbers = #tpu.dot_dimension_numbers<[1], [0], [0], [1], [0, 0, 1, 1], [], []>} : vector<16x16xf32>, vector<16x64xf32>, vector<16x64xf32> -> vector<16x64xf32>
    %93 = arith.addf %89, %92 : vector<16x64xf32>
    %94 = vector.extract_strided_slice %84 {offsets = [32, 0], sizes = [16, 16], strides = [1, 1]} : vector<256x16xf32> to vector<16x16xf32>
    %c32 = arith.constant 32 : index
    %c0_28 = arith.constant 0 : index
    %95 = vector.load %arg7[%c32, %c0_28] : memref<256x64xf32, #tpu.memory_space<vmem>>, vector<16x64xf32>
    %cst_29 = arith.constant dense<0.000000e+00> : vector<16x64xf32>
    %96 = tpu.matmul %94, %95, %cst_29 {dimension_numbers = #tpu.dot_dimension_numbers<[1], [0], [0], [1], [0, 0, 1, 1], [], []>} : vector<16x16xf32>, vector<16x64xf32>, vector<16x64xf32> -> vector<16x64xf32>
    %97 = arith.addf %93, %96 : vector<16x64xf32>
    %98 = vector.extract_strided_slice %84 {offsets = [48, 0], sizes = [16, 16], strides = [1, 1]} : vector<256x16xf32> to vector<16x16xf32>
    %c48 = arith.constant 48 : index
    %c0_30 = arith.constant 0 : index
    %99 = vector.load %arg7[%c48, %c0_30] : memref<256x64xf32, #tpu.memory_space<vmem>>, vector<16x64xf32>
    %cst_31 = arith.constant dense<0.000000e+00> : vector<16x64xf32>
    %100 = tpu.matmul %98, %99, %cst_31 {dimension_numbers = #tpu.dot_dimension_numbers<[1], [0], [0], [1], [0, 0, 1, 1], [], []>} : vector<16x16xf32>, vector<16x64xf32>, vector<16x64xf32> -> vector<16x64xf32>
    %101 = arith.addf %97, %100 : vector<16x64xf32>
    %102 = vector.extract_strided_slice %84 {offsets = [64, 0], sizes = [16, 16], strides = [1, 1]} : vector<256x16xf32> to vector<16x16xf32>
    %c64 = arith.constant 64 : index
    %c0_32 = arith.constant 0 : index
    %103 = vector.load %arg7[%c64, %c0_32] : memref<256x64xf32, #tpu.memory_space<vmem>>, vector<16x64xf32>
    %cst_33 = arith.constant dense<0.000000e+00> : vector<16x64xf32>
    %104 = tpu.matmul %102, %103, %cst_33 {dimension_numbers = #tpu.dot_dimension_numbers<[1], [0], [0], [1], [0, 0, 1, 1], [], []>} : vector<16x16xf32>, vector<16x64xf32>, vector<16x64xf32> -> vector<16x64xf32>
    %105 = arith.addf %101, %104 : vector<16x64xf32>
    %106 = vector.extract_strided_slice %84 {offsets = [80, 0], sizes = [16, 16], strides = [1, 1]} : vector<256x16xf32> to vector<16x16xf32>
    %c80 = arith.constant 80 : index
    %c0_34 = arith.constant 0 : index
    %107 = vector.load %arg7[%c80, %c0_34] : memref<256x64xf32, #tpu.memory_space<vmem>>, vector<16x64xf32>
    %cst_35 = arith.constant dense<0.000000e+00> : vector<16x64xf32>
    %108 = tpu.matmul %106, %107, %cst_35 {dimension_numbers = #tpu.dot_dimension_numbers<[1], [0], [0], [1], [0, 0, 1, 1], [], []>} : vector<16x16xf32>, vector<16x64xf32>, vector<16x64xf32> -> vector<16x64xf32>
    %109 = arith.addf %105, %108 : vector<16x64xf32>
    %110 = vector.extract_strided_slice %84 {offsets = [96, 0], sizes = [16, 16], strides = [1, 1]} : vector<256x16xf32> to vector<16x16xf32>
    %c96 = arith.constant 96 : index
    %c0_36 = arith.constant 0 : index
    %111 = vector.load %arg7[%c96, %c0_36] : memref<256x64xf32, #tpu.memory_space<vmem>>, vector<16x64xf32>
    %cst_37 = arith.constant dense<0.000000e+00> : vector<16x64xf32>
    %112 = tpu.matmul %110, %111, %cst_37 {dimension_numbers = #tpu.dot_dimension_numbers<[1], [0], [0], [1], [0, 0, 1, 1], [], []>} : vector<16x16xf32>, vector<16x64xf32>, vector<16x64xf32> -> vector<16x64xf32>
    %113 = arith.addf %109, %112 : vector<16x64xf32>
    %114 = vector.extract_strided_slice %84 {offsets = [112, 0], sizes = [16, 16], strides = [1, 1]} : vector<256x16xf32> to vector<16x16xf32>
    %c112 = arith.constant 112 : index
    %c0_38 = arith.constant 0 : index
    %115 = vector.load %arg7[%c112, %c0_38] : memref<256x64xf32, #tpu.memory_space<vmem>>, vector<16x64xf32>
    %cst_39 = arith.constant dense<0.000000e+00> : vector<16x64xf32>
    %116 = tpu.matmul %114, %115, %cst_39 {dimension_numbers = #tpu.dot_dimension_numbers<[1], [0], [0], [1], [0, 0, 1, 1], [], []>} : vector<16x16xf32>, vector<16x64xf32>, vector<16x64xf32> -> vector<16x64xf32>
    %117 = arith.addf %113, %116 : vector<16x64xf32>
    %118 = vector.extract_strided_slice %84 {offsets = [128, 0], sizes = [16, 16], strides = [1, 1]} : vector<256x16xf32> to vector<16x16xf32>
    %c128 = arith.constant 128 : index
    %c0_40 = arith.constant 0 : index
    %119 = vector.load %arg7[%c128, %c0_40] : memref<256x64xf32, #tpu.memory_space<vmem>>, vector<16x64xf32>
    %cst_41 = arith.constant dense<0.000000e+00> : vector<16x64xf32>
    %120 = tpu.matmul %118, %119, %cst_41 {dimension_numbers = #tpu.dot_dimension_numbers<[1], [0], [0], [1], [0, 0, 1, 1], [], []>} : vector<16x16xf32>, vector<16x64xf32>, vector<16x64xf32> -> vector<16x64xf32>
    %121 = arith.addf %117, %120 : vector<16x64xf32>
    %122 = vector.extract_strided_slice %84 {offsets = [144, 0], sizes = [16, 16], strides = [1, 1]} : vector<256x16xf32> to vector<16x16xf32>
    %c144 = arith.constant 144 : index
    %c0_42 = arith.constant 0 : index
    %123 = vector.load %arg7[%c144, %c0_42] : memref<256x64xf32, #tpu.memory_space<vmem>>, vector<16x64xf32>
    %cst_43 = arith.constant dense<0.000000e+00> : vector<16x64xf32>
    %124 = tpu.matmul %122, %123, %cst_43 {dimension_numbers = #tpu.dot_dimension_numbers<[1], [0], [0], [1], [0, 0, 1, 1], [], []>} : vector<16x16xf32>, vector<16x64xf32>, vector<16x64xf32> -> vector<16x64xf32>
    %125 = arith.addf %121, %124 : vector<16x64xf32>
    %126 = vector.extract_strided_slice %84 {offsets = [160, 0], sizes = [16, 16], strides = [1, 1]} : vector<256x16xf32> to vector<16x16xf32>
    %c160 = arith.constant 160 : index
    %c0_44 = arith.constant 0 : index
    %127 = vector.load %arg7[%c160, %c0_44] : memref<256x64xf32, #tpu.memory_space<vmem>>, vector<16x64xf32>
    %cst_45 = arith.constant dense<0.000000e+00> : vector<16x64xf32>
    %128 = tpu.matmul %126, %127, %cst_45 {dimension_numbers = #tpu.dot_dimension_numbers<[1], [0], [0], [1], [0, 0, 1, 1], [], []>} : vector<16x16xf32>, vector<16x64xf32>, vector<16x64xf32> -> vector<16x64xf32>
    %129 = arith.addf %125, %128 : vector<16x64xf32>
    %130 = vector.extract_strided_slice %84 {offsets = [176, 0], sizes = [16, 16], strides = [1, 1]} : vector<256x16xf32> to vector<16x16xf32>
    %c176 = arith.constant 176 : index
    %c0_46 = arith.constant 0 : index
    %131 = vector.load %arg7[%c176, %c0_46] : memref<256x64xf32, #tpu.memory_space<vmem>>, vector<16x64xf32>
    %cst_47 = arith.constant dense<0.000000e+00> : vector<16x64xf32>
    %132 = tpu.matmul %130, %131, %cst_47 {dimension_numbers = #tpu.dot_dimension_numbers<[1], [0], [0], [1], [0, 0, 1, 1], [], []>} : vector<16x16xf32>, vector<16x64xf32>, vector<16x64xf32> -> vector<16x64xf32>
    %133 = arith.addf %129, %132 : vector<16x64xf32>
    %134 = vector.extract_strided_slice %84 {offsets = [192, 0], sizes = [16, 16], strides = [1, 1]} : vector<256x16xf32> to vector<16x16xf32>
    %c192 = arith.constant 192 : index
    %c0_48 = arith.constant 0 : index
    %135 = vector.load %arg7[%c192, %c0_48] : memref<256x64xf32, #tpu.memory_space<vmem>>, vector<16x64xf32>
    %cst_49 = arith.constant dense<0.000000e+00> : vector<16x64xf32>
    %136 = tpu.matmul %134, %135, %cst_49 {dimension_numbers = #tpu.dot_dimension_numbers<[1], [0], [0], [1], [0, 0, 1, 1], [], []>} : vector<16x16xf32>, vector<16x64xf32>, vector<16x64xf32> -> vector<16x64xf32>
    %137 = arith.addf %133, %136 : vector<16x64xf32>
    %138 = vector.extract_strided_slice %84 {offsets = [208, 0], sizes = [16, 16], strides = [1, 1]} : vector<256x16xf32> to vector<16x16xf32>
    %c208 = arith.constant 208 : index
    %c0_50 = arith.constant 0 : index
    %139 = vector.load %arg7[%c208, %c0_50] : memref<256x64xf32, #tpu.memory_space<vmem>>, vector<16x64xf32>
    %cst_51 = arith.constant dense<0.000000e+00> : vector<16x64xf32>
    %140 = tpu.matmul %138, %139, %cst_51 {dimension_numbers = #tpu.dot_dimension_numbers<[1], [0], [0], [1], [0, 0, 1, 1], [], []>} : vector<16x16xf32>, vector<16x64xf32>, vector<16x64xf32> -> vector<16x64xf32>
    %141 = arith.addf %137, %140 : vector<16x64xf32>
    %142 = vector.extract_strided_slice %84 {offsets = [224, 0], sizes = [16, 16], strides = [1, 1]} : vector<256x16xf32> to vector<16x16xf32>
    %c224 = arith.constant 224 : index
    %c0_52 = arith.constant 0 : index
    %143 = vector.load %arg7[%c224, %c0_52] : memref<256x64xf32, #tpu.memory_space<vmem>>, vector<16x64xf32>
    %cst_53 = arith.constant dense<0.000000e+00> : vector<16x64xf32>
    %144 = tpu.matmul %142, %143, %cst_53 {dimension_numbers = #tpu.dot_dimension_numbers<[1], [0], [0], [1], [0, 0, 1, 1], [], []>} : vector<16x16xf32>, vector<16x64xf32>, vector<16x64xf32> -> vector<16x64xf32>
    %145 = arith.addf %141, %144 : vector<16x64xf32>
    %146 = vector.extract_strided_slice %84 {offsets = [240, 0], sizes = [16, 16], strides = [1, 1]} : vector<256x16xf32> to vector<16x16xf32>
    %c240 = arith.constant 240 : index
    %c0_54 = arith.constant 0 : index
    %147 = vector.load %arg7[%c240, %c0_54] : memref<256x64xf32, #tpu.memory_space<vmem>>, vector<16x64xf32>
    %cst_55 = arith.constant dense<0.000000e+00> : vector<16x64xf32>
    %148 = tpu.matmul %146, %147, %cst_55 {dimension_numbers = #tpu.dot_dimension_numbers<[1], [0], [0], [1], [0, 0, 1, 1], [], []>} : vector<16x16xf32>, vector<16x64xf32>, vector<16x64xf32> -> vector<16x64xf32>
    %149 = arith.addf %145, %148 : vector<16x64xf32>
    %c0_56 = arith.constant 0 : index
    %c0_57 = arith.constant 0 : index
    %150 = vector.load %arg8[%c0_56, %c0_57] : memref<1x64xf32, #tpu.memory_space<vmem>>, vector<1x64xf32>
    %151 = vector.broadcast %150 : vector<1x64xf32> to vector<16x64xf32>
    %152 = arith.addf %149, %151 : vector<16x64xf32>
    %c0_58 = arith.constant 0 : index
    %c0_59 = arith.constant 0 : index
    %c0_60 = arith.constant 0 : index
    %153 = vector.load %arg9[%c0_58, %c0_59, %c0_60] : memref<4x64x192xf32, #tpu.memory_space<vmem>>, vector<1x64x192xf32>
    %154 = vector.shape_cast %153 : vector<1x64x192xf32> to vector<64x192xf32>
    %cst_61 = arith.constant dense<0.000000e+00> : vector<16x192xf32>
    %155 = tpu.matmul %152, %154, %cst_61 {dimension_numbers = #tpu.dot_dimension_numbers<[1], [0], [0], [1], [0, 0, 1, 1], [], []>} : vector<16x64xf32>, vector<64x192xf32>, vector<16x192xf32> -> vector<16x192xf32>
    %c0_62 = arith.constant 0 : index
    %c0_63 = arith.constant 0 : index
    %c0_64 = arith.constant 0 : index
    %156 = vector.load %arg10[%c0_62, %c0_63, %c0_64] : memref<4x1x192xf32, #tpu.memory_space<vmem>>, vector<1x1x192xf32>
    %157 = vector.shape_cast %156 : vector<1x1x192xf32> to vector<1x192xf32>
    %158 = vector.broadcast %157 : vector<1x192xf32> to vector<16x192xf32>
    %159 = arith.addf %155, %158 : vector<16x192xf32>
    %160 = vector.extract_strided_slice %159 {offsets = [0, 0], sizes = [16, 16], strides = [1, 1]} : vector<16x192xf32> to vector<16x16xf32>
    %161 = vector.extract_strided_slice %159 {offsets = [0, 64], sizes = [16, 16], strides = [1, 1]} : vector<16x192xf32> to vector<16x16xf32>
    %162 = vector.extract_strided_slice %159 {offsets = [0, 128], sizes = [16, 16], strides = [1, 1]} : vector<16x192xf32> to vector<16x16xf32>
    %cst_65 = arith.constant dense<0.000000e+00> : vector<16x16xf32>
    %163 = tpu.matmul %160, %161, %cst_65 {dimension_numbers = #tpu.dot_dimension_numbers<[1], [1], [0], [0], [0, 0, 1, 0], [], []>} : vector<16x16xf32>, vector<16x16xf32>, vector<16x16xf32> -> vector<16x16xf32>
    %cst_66 = arith.constant dense<0xFF800000> : vector<16xf32>
    %164 = vector.multi_reduction <maximumf>, %163, %cst_66 [1] : vector<16x16xf32> to vector<16xf32>
    %165 = vector.shape_cast %164 : vector<16xf32> to vector<16x1xf32>
    %166 = vector.broadcast %165 : vector<16x1xf32> to vector<16x16xf32>
    %167 = arith.subf %163, %166 : vector<16x16xf32>
    %168 = math.exp %167 : vector<16x16xf32>
    %cst_67 = arith.constant dense<0.000000e+00> : vector<16xf32>
    %169 = vector.multi_reduction <add>, %168, %cst_67 [1] : vector<16x16xf32> to vector<16xf32>
    %170 = vector.shape_cast %169 : vector<16xf32> to vector<16x1xf32>
    %171 = tpu.reciprocal %170 {approx = true} : vector<16x1xf32> -> vector<16x1xf32>
    %172 = vector.broadcast %171 : vector<16x1xf32> to vector<16x16xf32>
    %173 = arith.mulf %168, %172 : vector<16x16xf32>
    %cst_68 = arith.constant dense<0.000000e+00> : vector<16x16xf32>
    %174 = tpu.matmul %173, %162, %cst_68 {dimension_numbers = #tpu.dot_dimension_numbers<[1], [0], [0], [1], [0, 0, 1, 1], [], []>} : vector<16x16xf32>, vector<16x16xf32>, vector<16x16xf32> -> vector<16x16xf32>
    %175 = vector.extract_strided_slice %159 {offsets = [0, 16], sizes = [16, 16], strides = [1, 1]} : vector<16x192xf32> to vector<16x16xf32>
    %176 = vector.extract_strided_slice %159 {offsets = [0, 80], sizes = [16, 16], strides = [1, 1]} : vector<16x192xf32> to vector<16x16xf32>
    %177 = vector.extract_strided_slice %159 {offsets = [0, 144], sizes = [16, 16], strides = [1, 1]} : vector<16x192xf32> to vector<16x16xf32>
    %cst_69 = arith.constant dense<0.000000e+00> : vector<16x16xf32>
    %178 = tpu.matmul %175, %176, %cst_69 {dimension_numbers = #tpu.dot_dimension_numbers<[1], [1], [0], [0], [0, 0, 1, 0], [], []>} : vector<16x16xf32>, vector<16x16xf32>, vector<16x16xf32> -> vector<16x16xf32>
    %cst_70 = arith.constant dense<0xFF800000> : vector<16xf32>
    %179 = vector.multi_reduction <maximumf>, %178, %cst_70 [1] : vector<16x16xf32> to vector<16xf32>
    %180 = vector.shape_cast %179 : vector<16xf32> to vector<16x1xf32>
    %181 = vector.broadcast %180 : vector<16x1xf32> to vector<16x16xf32>
    %182 = arith.subf %178, %181 : vector<16x16xf32>
    %183 = math.exp %182 : vector<16x16xf32>
    %cst_71 = arith.constant dense<0.000000e+00> : vector<16xf32>
    %184 = vector.multi_reduction <add>, %183, %cst_71 [1] : vector<16x16xf32> to vector<16xf32>
    %185 = vector.shape_cast %184 : vector<16xf32> to vector<16x1xf32>
    %186 = tpu.reciprocal %185 {approx = true} : vector<16x1xf32> -> vector<16x1xf32>
    %187 = vector.broadcast %186 : vector<16x1xf32> to vector<16x16xf32>
    %188 = arith.mulf %183, %187 : vector<16x16xf32>
    %cst_72 = arith.constant dense<0.000000e+00> : vector<16x16xf32>
    %189 = tpu.matmul %188, %177, %cst_72 {dimension_numbers = #tpu.dot_dimension_numbers<[1], [0], [0], [1], [0, 0, 1, 1], [], []>} : vector<16x16xf32>, vector<16x16xf32>, vector<16x16xf32> -> vector<16x16xf32>
    %190 = vector.extract_strided_slice %159 {offsets = [0, 32], sizes = [16, 16], strides = [1, 1]} : vector<16x192xf32> to vector<16x16xf32>
    %191 = vector.extract_strided_slice %159 {offsets = [0, 96], sizes = [16, 16], strides = [1, 1]} : vector<16x192xf32> to vector<16x16xf32>
    %192 = vector.extract_strided_slice %159 {offsets = [0, 160], sizes = [16, 16], strides = [1, 1]} : vector<16x192xf32> to vector<16x16xf32>
    %cst_73 = arith.constant dense<0.000000e+00> : vector<16x16xf32>
    %193 = tpu.matmul %190, %191, %cst_73 {dimension_numbers = #tpu.dot_dimension_numbers<[1], [1], [0], [0], [0, 0, 1, 0], [], []>} : vector<16x16xf32>, vector<16x16xf32>, vector<16x16xf32> -> vector<16x16xf32>
    %cst_74 = arith.constant dense<0xFF800000> : vector<16xf32>
    %194 = vector.multi_reduction <maximumf>, %193, %cst_74 [1] : vector<16x16xf32> to vector<16xf32>
    %195 = vector.shape_cast %194 : vector<16xf32> to vector<16x1xf32>
    %196 = vector.broadcast %195 : vector<16x1xf32> to vector<16x16xf32>
    %197 = arith.subf %193, %196 : vector<16x16xf32>
    %198 = math.exp %197 : vector<16x16xf32>
    %cst_75 = arith.constant dense<0.000000e+00> : vector<16xf32>
    %199 = vector.multi_reduction <add>, %198, %cst_75 [1] : vector<16x16xf32> to vector<16xf32>
    %200 = vector.shape_cast %199 : vector<16xf32> to vector<16x1xf32>
    %201 = tpu.reciprocal %200 {approx = true} : vector<16x1xf32> -> vector<16x1xf32>
    %202 = vector.broadcast %201 : vector<16x1xf32> to vector<16x16xf32>
    %203 = arith.mulf %198, %202 : vector<16x16xf32>
    %cst_76 = arith.constant dense<0.000000e+00> : vector<16x16xf32>
    %204 = tpu.matmul %203, %192, %cst_76 {dimension_numbers = #tpu.dot_dimension_numbers<[1], [0], [0], [1], [0, 0, 1, 1], [], []>} : vector<16x16xf32>, vector<16x16xf32>, vector<16x16xf32> -> vector<16x16xf32>
    %205 = vector.extract_strided_slice %159 {offsets = [0, 48], sizes = [16, 16], strides = [1, 1]} : vector<16x192xf32> to vector<16x16xf32>
    %206 = vector.extract_strided_slice %159 {offsets = [0, 112], sizes = [16, 16], strides = [1, 1]} : vector<16x192xf32> to vector<16x16xf32>
    %207 = vector.extract_strided_slice %159 {offsets = [0, 176], sizes = [16, 16], strides = [1, 1]} : vector<16x192xf32> to vector<16x16xf32>
    %cst_77 = arith.constant dense<0.000000e+00> : vector<16x16xf32>
    %208 = tpu.matmul %205, %206, %cst_77 {dimension_numbers = #tpu.dot_dimension_numbers<[1], [1], [0], [0], [0, 0, 1, 0], [], []>} : vector<16x16xf32>, vector<16x16xf32>, vector<16x16xf32> -> vector<16x16xf32>
    %cst_78 = arith.constant dense<0xFF800000> : vector<16xf32>
    %209 = vector.multi_reduction <maximumf>, %208, %cst_78 [1] : vector<16x16xf32> to vector<16xf32>
    %210 = vector.shape_cast %209 : vector<16xf32> to vector<16x1xf32>
    %211 = vector.broadcast %210 : vector<16x1xf32> to vector<16x16xf32>
    %212 = arith.subf %208, %211 : vector<16x16xf32>
    %213 = math.exp %212 : vector<16x16xf32>
    %cst_79 = arith.constant dense<0.000000e+00> : vector<16xf32>
    %214 = vector.multi_reduction <add>, %213, %cst_79 [1] : vector<16x16xf32> to vector<16xf32>
    %215 = vector.shape_cast %214 : vector<16xf32> to vector<16x1xf32>
    %216 = tpu.reciprocal %215 {approx = true} : vector<16x1xf32> -> vector<16x1xf32>
    %217 = vector.broadcast %216 : vector<16x1xf32> to vector<16x16xf32>
    %218 = arith.mulf %213, %217 : vector<16x16xf32>
    %cst_80 = arith.constant dense<0.000000e+00> : vector<16x16xf32>
    %219 = tpu.matmul %218, %207, %cst_80 {dimension_numbers = #tpu.dot_dimension_numbers<[1], [0], [0], [1], [0, 0, 1, 1], [], []>} : vector<16x16xf32>, vector<16x16xf32>, vector<16x16xf32> -> vector<16x16xf32>
    %220 = tpu.concatenate %174, %189, %204, %219 in 1 : vector<16x16xf32>, vector<16x16xf32>, vector<16x16xf32>, vector<16x16xf32> -> vector<16x64xf32>
    %c0_81 = arith.constant 0 : index
    %c0_82 = arith.constant 0 : index
    %c0_83 = arith.constant 0 : index
    %221 = vector.load %arg11[%c0_81, %c0_82, %c0_83] : memref<4x64x64xf32, #tpu.memory_space<vmem>>, vector<1x64x64xf32>
    %222 = vector.shape_cast %221 : vector<1x64x64xf32> to vector<64x64xf32>
    %cst_84 = arith.constant dense<0.000000e+00> : vector<16x64xf32>
    %223 = tpu.matmul %220, %222, %cst_84 {dimension_numbers = #tpu.dot_dimension_numbers<[1], [0], [0], [1], [0, 0, 1, 1], [], []>} : vector<16x64xf32>, vector<64x64xf32>, vector<16x64xf32> -> vector<16x64xf32>
    %c0_85 = arith.constant 0 : index
    %c0_86 = arith.constant 0 : index
    %c0_87 = arith.constant 0 : index
    %224 = vector.load %arg12[%c0_85, %c0_86, %c0_87] : memref<4x1x64xf32, #tpu.memory_space<vmem>>, vector<1x1x64xf32>
    %225 = vector.shape_cast %224 : vector<1x1x64xf32> to vector<1x64xf32>
    %226 = vector.broadcast %225 : vector<1x64xf32> to vector<16x64xf32>
    %227 = arith.addf %223, %226 : vector<16x64xf32>
    %228 = arith.addf %152, %227 : vector<16x64xf32>
    %c0_88 = arith.constant 0 : index
    %c0_89 = arith.constant 0 : index
    %c0_90 = arith.constant 0 : index
    %229 = vector.load %arg13[%c0_88, %c0_89, %c0_90] : memref<4x1x64xf32, #tpu.memory_space<vmem>>, vector<1x1x64xf32>
    %230 = vector.shape_cast %229 : vector<1x1x64xf32> to vector<1x64xf32>
    %c0_91 = arith.constant 0 : index
    %c0_92 = arith.constant 0 : index
    %c0_93 = arith.constant 0 : index
    %231 = vector.load %arg14[%c0_91, %c0_92, %c0_93] : memref<4x1x64xf32, #tpu.memory_space<vmem>>, vector<1x1x64xf32>
    %232 = vector.shape_cast %231 : vector<1x1x64xf32> to vector<1x64xf32>
    %cst_94 = arith.constant dense<0.000000e+00> : vector<16xf32>
    %233 = vector.multi_reduction <add>, %228, %cst_94 [1] : vector<16x64xf32> to vector<16xf32>
    %234 = vector.shape_cast %233 : vector<16xf32> to vector<16x1xf32>
    %cst_95 = arith.constant 6.400000e+01 : f32
    %235 = vector.broadcast %cst_95 : f32 to vector<16x1xf32>
    %236 = arith.divf %234, %235 : vector<16x1xf32>
    %237 = vector.broadcast %236 : vector<16x1xf32> to vector<16x64xf32>
    %238 = arith.subf %228, %237 : vector<16x64xf32>
    %239 = arith.mulf %238, %238 : vector<16x64xf32>
    %cst_96 = arith.constant dense<0.000000e+00> : vector<16xf32>
    %240 = vector.multi_reduction <add>, %239, %cst_96 [1] : vector<16x64xf32> to vector<16xf32>
    %241 = vector.shape_cast %240 : vector<16xf32> to vector<16x1xf32>
    %cst_97 = arith.constant 6.400000e+01 : f32
    %242 = vector.broadcast %cst_97 : f32 to vector<16x1xf32>
    %243 = arith.divf %241, %242 : vector<16x1xf32>
    %cst_98 = arith.constant 9.99999974E-6 : f32
    %244 = vector.broadcast %cst_98 : f32 to vector<16x1xf32>
    %245 = arith.addf %243, %244 : vector<16x1xf32>
    %246 = math.rsqrt %245 : vector<16x1xf32>
    %247 = vector.broadcast %246 : vector<16x1xf32> to vector<16x64xf32>
    %248 = arith.mulf %238, %247 : vector<16x64xf32>
    %249 = vector.broadcast %230 : vector<1x64xf32> to vector<16x64xf32>
    %250 = arith.mulf %248, %249 : vector<16x64xf32>
    %251 = vector.broadcast %232 : vector<1x64xf32> to vector<16x64xf32>
    %252 = arith.addf %250, %251 : vector<16x64xf32>
    %c0_99 = arith.constant 0 : index
    %c0_100 = arith.constant 0 : index
    %c0_101 = arith.constant 0 : index
    %253 = vector.load %arg15[%c0_99, %c0_100, %c0_101] : memref<4x64x128xf32, #tpu.memory_space<vmem>>, vector<1x64x128xf32>
    %254 = vector.shape_cast %253 : vector<1x64x128xf32> to vector<64x128xf32>
    %cst_102 = arith.constant dense<0.000000e+00> : vector<16x128xf32>
    %255 = tpu.matmul %252, %254, %cst_102 {dimension_numbers = #tpu.dot_dimension_numbers<[1], [0], [0], [1], [0, 0, 1, 1], [], []>} : vector<16x64xf32>, vector<64x128xf32>, vector<16x128xf32> -> vector<16x128xf32>
    %c0_103 = arith.constant 0 : index
    %c0_104 = arith.constant 0 : index
    %c0_105 = arith.constant 0 : index
    %256 = vector.load %arg16[%c0_103, %c0_104, %c0_105] : memref<4x1x128xf32, #tpu.memory_space<vmem>>, vector<1x1x128xf32>
    %257 = vector.shape_cast %256 : vector<1x1x128xf32> to vector<1x128xf32>
    %258 = vector.broadcast %257 : vector<1x128xf32> to vector<16x128xf32>
    %259 = arith.addf %255, %258 : vector<16x128xf32>
    %cst_106 = arith.constant 5.000000e-01 : f32
    %260 = vector.broadcast %cst_106 : f32 to vector<16x128xf32>
    %261 = arith.mulf %260, %259 : vector<16x128xf32>
    %cst_107 = arith.constant 0.707106769 : f32
    %262 = vector.broadcast %cst_107 : f32 to vector<16x128xf32>
    %263 = arith.mulf %259, %262 : vector<16x128xf32>
    %cst_108 = arith.constant 0.000000e+00 : f32
    %264 = vector.broadcast %cst_108 : f32 to vector<16x128xf32>
    %265 = arith.cmpf oge, %263, %264 : vector<16x128xf32>
    %cst_109 = arith.constant 1.000000e+00 : f32
    %cst_110 = arith.constant -1.000000e+00 : f32
    %266 = vector.broadcast %cst_109 : f32 to vector<16x128xf32>
    %267 = vector.broadcast %cst_110 : f32 to vector<16x128xf32>
    %268 = arith.select %265, %266, %267 : vector<16x128xi1>, vector<16x128xf32>
    %269 = math.absf %263 : vector<16x128xf32>
    %cst_111 = arith.constant 0.327591091 : f32
    %270 = vector.broadcast %cst_111 : f32 to vector<16x128xf32>
    %271 = arith.mulf %270, %269 : vector<16x128xf32>
    %cst_112 = arith.constant 1.000000e+00 : f32
    %272 = vector.broadcast %cst_112 : f32 to vector<16x128xf32>
    %273 = arith.addf %272, %271 : vector<16x128xf32>
    %cst_113 = arith.constant 1.000000e+00 : f32
    %274 = vector.broadcast %cst_113 : f32 to vector<16x128xf32>
    %275 = arith.divf %274, %273 : vector<16x128xf32>
    %cst_114 = arith.constant 1.06140542 : f32
    %276 = vector.broadcast %cst_114 : f32 to vector<16x128xf32>
    %277 = arith.mulf %276, %275 : vector<16x128xf32>
    %cst_115 = arith.constant -1.45315206 : f32
    %278 = vector.broadcast %cst_115 : f32 to vector<16x128xf32>
    %279 = arith.addf %277, %278 : vector<16x128xf32>
    %280 = arith.mulf %279, %275 : vector<16x128xf32>
    %cst_116 = arith.constant 1.42141378 : f32
    %281 = vector.broadcast %cst_116 : f32 to vector<16x128xf32>
    %282 = arith.addf %280, %281 : vector<16x128xf32>
    %283 = arith.mulf %282, %275 : vector<16x128xf32>
    %cst_117 = arith.constant -0.284496725 : f32
    %284 = vector.broadcast %cst_117 : f32 to vector<16x128xf32>
    %285 = arith.addf %283, %284 : vector<16x128xf32>
    %286 = arith.mulf %285, %275 : vector<16x128xf32>
    %cst_118 = arith.constant 0.254829586 : f32
    %287 = vector.broadcast %cst_118 : f32 to vector<16x128xf32>
    %288 = arith.addf %286, %287 : vector<16x128xf32>
    %289 = arith.mulf %288, %275 : vector<16x128xf32>
    %cst_119 = arith.constant 0.000000e+00 : f32
    %290 = vector.broadcast %cst_119 : f32 to vector<16x128xf32>
    %291 = arith.subf %290, %269 : vector<16x128xf32>
    %292 = arith.mulf %291, %269 : vector<16x128xf32>
    %293 = math.exp %292 : vector<16x128xf32>
    %294 = arith.mulf %289, %293 : vector<16x128xf32>
    %cst_120 = arith.constant 1.000000e+00 : f32
    %295 = vector.broadcast %cst_120 : f32 to vector<16x128xf32>
    %296 = arith.subf %295, %294 : vector<16x128xf32>
    %297 = arith.mulf %268, %296 : vector<16x128xf32>
    %cst_121 = arith.constant 1.000000e+00 : f32
    %298 = vector.broadcast %cst_121 : f32 to vector<16x128xf32>
    %299 = arith.addf %298, %297 : vector<16x128xf32>
    %300 = arith.mulf %261, %299 : vector<16x128xf32>
    %c0_122 = arith.constant 0 : index
    %c0_123 = arith.constant 0 : index
    %c0_124 = arith.constant 0 : index
    %301 = vector.load %arg17[%c0_122, %c0_123, %c0_124] : memref<4x128x64xf32, #tpu.memory_space<vmem>>, vector<1x128x64xf32>
    %302 = vector.shape_cast %301 : vector<1x128x64xf32> to vector<128x64xf32>
    %cst_125 = arith.constant dense<0.000000e+00> : vector<16x64xf32>
    %303 = tpu.matmul %300, %302, %cst_125 {dimension_numbers = #tpu.dot_dimension_numbers<[1], [0], [0], [1], [0, 0, 1, 1], [], []>} : vector<16x128xf32>, vector<128x64xf32>, vector<16x64xf32> -> vector<16x64xf32>
    %c0_126 = arith.constant 0 : index
    %c0_127 = arith.constant 0 : index
    %c0_128 = arith.constant 0 : index
    %304 = vector.load %arg18[%c0_126, %c0_127, %c0_128] : memref<4x1x64xf32, #tpu.memory_space<vmem>>, vector<1x1x64xf32>
    %305 = vector.shape_cast %304 : vector<1x1x64xf32> to vector<1x64xf32>
    %306 = vector.broadcast %305 : vector<1x64xf32> to vector<16x64xf32>
    %307 = arith.addf %303, %306 : vector<16x64xf32>
    %308 = arith.addf %252, %307 : vector<16x64xf32>
    %c0_129 = arith.constant 0 : index
    %c0_130 = arith.constant 0 : index
    %c0_131 = arith.constant 0 : index
    %309 = vector.load %arg19[%c0_129, %c0_130, %c0_131] : memref<4x1x64xf32, #tpu.memory_space<vmem>>, vector<1x1x64xf32>
    %310 = vector.shape_cast %309 : vector<1x1x64xf32> to vector<1x64xf32>
    %c0_132 = arith.constant 0 : index
    %c0_133 = arith.constant 0 : index
    %c0_134 = arith.constant 0 : index
    %311 = vector.load %arg20[%c0_132, %c0_133, %c0_134] : memref<4x1x64xf32, #tpu.memory_space<vmem>>, vector<1x1x64xf32>
    %312 = vector.shape_cast %311 : vector<1x1x64xf32> to vector<1x64xf32>
    %cst_135 = arith.constant dense<0.000000e+00> : vector<16xf32>
    %313 = vector.multi_reduction <add>, %308, %cst_135 [1] : vector<16x64xf32> to vector<16xf32>
    %314 = vector.shape_cast %313 : vector<16xf32> to vector<16x1xf32>
    %cst_136 = arith.constant 6.400000e+01 : f32
    %315 = vector.broadcast %cst_136 : f32 to vector<16x1xf32>
    %316 = arith.divf %314, %315 : vector<16x1xf32>
    %317 = vector.broadcast %316 : vector<16x1xf32> to vector<16x64xf32>
    %318 = arith.subf %308, %317 : vector<16x64xf32>
    %319 = arith.mulf %318, %318 : vector<16x64xf32>
    %cst_137 = arith.constant dense<0.000000e+00> : vector<16xf32>
    %320 = vector.multi_reduction <add>, %319, %cst_137 [1] : vector<16x64xf32> to vector<16xf32>
    %321 = vector.shape_cast %320 : vector<16xf32> to vector<16x1xf32>
    %cst_138 = arith.constant 6.400000e+01 : f32
    %322 = vector.broadcast %cst_138 : f32 to vector<16x1xf32>
    %323 = arith.divf %321, %322 : vector<16x1xf32>
    %cst_139 = arith.constant 9.99999974E-6 : f32
    %324 = vector.broadcast %cst_139 : f32 to vector<16x1xf32>
    %325 = arith.addf %323, %324 : vector<16x1xf32>
    %326 = math.rsqrt %325 : vector<16x1xf32>
    %327 = vector.broadcast %326 : vector<16x1xf32> to vector<16x64xf32>
    %328 = arith.mulf %318, %327 : vector<16x64xf32>
    %329 = vector.broadcast %310 : vector<1x64xf32> to vector<16x64xf32>
    %330 = arith.mulf %328, %329 : vector<16x64xf32>
    %331 = vector.broadcast %312 : vector<1x64xf32> to vector<16x64xf32>
    %332 = arith.addf %330, %331 : vector<16x64xf32>
    %333 = arith.addf %332, %332 : vector<16x64xf32>
    %c1 = arith.constant 1 : index
    %c0_140 = arith.constant 0 : index
    %c0_141 = arith.constant 0 : index
    %334 = vector.load %arg9[%c1, %c0_140, %c0_141] : memref<4x64x192xf32, #tpu.memory_space<vmem>>, vector<1x64x192xf32>
    %335 = vector.shape_cast %334 : vector<1x64x192xf32> to vector<64x192xf32>
    %cst_142 = arith.constant dense<0.000000e+00> : vector<16x192xf32>
    %336 = tpu.matmul %333, %335, %cst_142 {dimension_numbers = #tpu.dot_dimension_numbers<[1], [0], [0], [1], [0, 0, 1, 1], [], []>} : vector<16x64xf32>, vector<64x192xf32>, vector<16x192xf32> -> vector<16x192xf32>
    %c1_143 = arith.constant 1 : index
    %c0_144 = arith.constant 0 : index
    %c0_145 = arith.constant 0 : index
    %337 = vector.load %arg10[%c1_143, %c0_144, %c0_145] : memref<4x1x192xf32, #tpu.memory_space<vmem>>, vector<1x1x192xf32>
    %338 = vector.shape_cast %337 : vector<1x1x192xf32> to vector<1x192xf32>
    %339 = vector.broadcast %338 : vector<1x192xf32> to vector<16x192xf32>
    %340 = arith.addf %336, %339 : vector<16x192xf32>
    %341 = vector.extract_strided_slice %340 {offsets = [0, 0], sizes = [16, 16], strides = [1, 1]} : vector<16x192xf32> to vector<16x16xf32>
    %342 = vector.extract_strided_slice %340 {offsets = [0, 64], sizes = [16, 16], strides = [1, 1]} : vector<16x192xf32> to vector<16x16xf32>
    %343 = vector.extract_strided_slice %340 {offsets = [0, 128], sizes = [16, 16], strides = [1, 1]} : vector<16x192xf32> to vector<16x16xf32>
    %cst_146 = arith.constant dense<0.000000e+00> : vector<16x16xf32>
    %344 = tpu.matmul %341, %342, %cst_146 {dimension_numbers = #tpu.dot_dimension_numbers<[1], [1], [0], [0], [0, 0, 1, 0], [], []>} : vector<16x16xf32>, vector<16x16xf32>, vector<16x16xf32> -> vector<16x16xf32>
    %cst_147 = arith.constant dense<0xFF800000> : vector<16xf32>
    %345 = vector.multi_reduction <maximumf>, %344, %cst_147 [1] : vector<16x16xf32> to vector<16xf32>
    %346 = vector.shape_cast %345 : vector<16xf32> to vector<16x1xf32>
    %347 = vector.broadcast %346 : vector<16x1xf32> to vector<16x16xf32>
    %348 = arith.subf %344, %347 : vector<16x16xf32>
    %349 = math.exp %348 : vector<16x16xf32>
    %cst_148 = arith.constant dense<0.000000e+00> : vector<16xf32>
    %350 = vector.multi_reduction <add>, %349, %cst_148 [1] : vector<16x16xf32> to vector<16xf32>
    %351 = vector.shape_cast %350 : vector<16xf32> to vector<16x1xf32>
    %352 = tpu.reciprocal %351 {approx = true} : vector<16x1xf32> -> vector<16x1xf32>
    %353 = vector.broadcast %352 : vector<16x1xf32> to vector<16x16xf32>
    %354 = arith.mulf %349, %353 : vector<16x16xf32>
    %cst_149 = arith.constant dense<0.000000e+00> : vector<16x16xf32>
    %355 = tpu.matmul %354, %343, %cst_149 {dimension_numbers = #tpu.dot_dimension_numbers<[1], [0], [0], [1], [0, 0, 1, 1], [], []>} : vector<16x16xf32>, vector<16x16xf32>, vector<16x16xf32> -> vector<16x16xf32>
    %356 = vector.extract_strided_slice %340 {offsets = [0, 16], sizes = [16, 16], strides = [1, 1]} : vector<16x192xf32> to vector<16x16xf32>
    %357 = vector.extract_strided_slice %340 {offsets = [0, 80], sizes = [16, 16], strides = [1, 1]} : vector<16x192xf32> to vector<16x16xf32>
    %358 = vector.extract_strided_slice %340 {offsets = [0, 144], sizes = [16, 16], strides = [1, 1]} : vector<16x192xf32> to vector<16x16xf32>
    %cst_150 = arith.constant dense<0.000000e+00> : vector<16x16xf32>
    %359 = tpu.matmul %356, %357, %cst_150 {dimension_numbers = #tpu.dot_dimension_numbers<[1], [1], [0], [0], [0, 0, 1, 0], [], []>} : vector<16x16xf32>, vector<16x16xf32>, vector<16x16xf32> -> vector<16x16xf32>
    %cst_151 = arith.constant dense<0xFF800000> : vector<16xf32>
    %360 = vector.multi_reduction <maximumf>, %359, %cst_151 [1] : vector<16x16xf32> to vector<16xf32>
    %361 = vector.shape_cast %360 : vector<16xf32> to vector<16x1xf32>
    %362 = vector.broadcast %361 : vector<16x1xf32> to vector<16x16xf32>
    %363 = arith.subf %359, %362 : vector<16x16xf32>
    %364 = math.exp %363 : vector<16x16xf32>
    %cst_152 = arith.constant dense<0.000000e+00> : vector<16xf32>
    %365 = vector.multi_reduction <add>, %364, %cst_152 [1] : vector<16x16xf32> to vector<16xf32>
    %366 = vector.shape_cast %365 : vector<16xf32> to vector<16x1xf32>
    %367 = tpu.reciprocal %366 {approx = true} : vector<16x1xf32> -> vector<16x1xf32>
    %368 = vector.broadcast %367 : vector<16x1xf32> to vector<16x16xf32>
    %369 = arith.mulf %364, %368 : vector<16x16xf32>
    %cst_153 = arith.constant dense<0.000000e+00> : vector<16x16xf32>
    %370 = tpu.matmul %369, %358, %cst_153 {dimension_numbers = #tpu.dot_dimension_numbers<[1], [0], [0], [1], [0, 0, 1, 1], [], []>} : vector<16x16xf32>, vector<16x16xf32>, vector<16x16xf32> -> vector<16x16xf32>
    %371 = vector.extract_strided_slice %340 {offsets = [0, 32], sizes = [16, 16], strides = [1, 1]} : vector<16x192xf32> to vector<16x16xf32>
    %372 = vector.extract_strided_slice %340 {offsets = [0, 96], sizes = [16, 16], strides = [1, 1]} : vector<16x192xf32> to vector<16x16xf32>
    %373 = vector.extract_strided_slice %340 {offsets = [0, 160], sizes = [16, 16], strides = [1, 1]} : vector<16x192xf32> to vector<16x16xf32>
    %cst_154 = arith.constant dense<0.000000e+00> : vector<16x16xf32>
    %374 = tpu.matmul %371, %372, %cst_154 {dimension_numbers = #tpu.dot_dimension_numbers<[1], [1], [0], [0], [0, 0, 1, 0], [], []>} : vector<16x16xf32>, vector<16x16xf32>, vector<16x16xf32> -> vector<16x16xf32>
    %cst_155 = arith.constant dense<0xFF800000> : vector<16xf32>
    %375 = vector.multi_reduction <maximumf>, %374, %cst_155 [1] : vector<16x16xf32> to vector<16xf32>
    %376 = vector.shape_cast %375 : vector<16xf32> to vector<16x1xf32>
    %377 = vector.broadcast %376 : vector<16x1xf32> to vector<16x16xf32>
    %378 = arith.subf %374, %377 : vector<16x16xf32>
    %379 = math.exp %378 : vector<16x16xf32>
    %cst_156 = arith.constant dense<0.000000e+00> : vector<16xf32>
    %380 = vector.multi_reduction <add>, %379, %cst_156 [1] : vector<16x16xf32> to vector<16xf32>
    %381 = vector.shape_cast %380 : vector<16xf32> to vector<16x1xf32>
    %382 = tpu.reciprocal %381 {approx = true} : vector<16x1xf32> -> vector<16x1xf32>
    %383 = vector.broadcast %382 : vector<16x1xf32> to vector<16x16xf32>
    %384 = arith.mulf %379, %383 : vector<16x16xf32>
    %cst_157 = arith.constant dense<0.000000e+00> : vector<16x16xf32>
    %385 = tpu.matmul %384, %373, %cst_157 {dimension_numbers = #tpu.dot_dimension_numbers<[1], [0], [0], [1], [0, 0, 1, 1], [], []>} : vector<16x16xf32>, vector<16x16xf32>, vector<16x16xf32> -> vector<16x16xf32>
    %386 = vector.extract_strided_slice %340 {offsets = [0, 48], sizes = [16, 16], strides = [1, 1]} : vector<16x192xf32> to vector<16x16xf32>
    %387 = vector.extract_strided_slice %340 {offsets = [0, 112], sizes = [16, 16], strides = [1, 1]} : vector<16x192xf32> to vector<16x16xf32>
    %388 = vector.extract_strided_slice %340 {offsets = [0, 176], sizes = [16, 16], strides = [1, 1]} : vector<16x192xf32> to vector<16x16xf32>
    %cst_158 = arith.constant dense<0.000000e+00> : vector<16x16xf32>
    %389 = tpu.matmul %386, %387, %cst_158 {dimension_numbers = #tpu.dot_dimension_numbers<[1], [1], [0], [0], [0, 0, 1, 0], [], []>} : vector<16x16xf32>, vector<16x16xf32>, vector<16x16xf32> -> vector<16x16xf32>
    %cst_159 = arith.constant dense<0xFF800000> : vector<16xf32>
    %390 = vector.multi_reduction <maximumf>, %389, %cst_159 [1] : vector<16x16xf32> to vector<16xf32>
    %391 = vector.shape_cast %390 : vector<16xf32> to vector<16x1xf32>
    %392 = vector.broadcast %391 : vector<16x1xf32> to vector<16x16xf32>
    %393 = arith.subf %389, %392 : vector<16x16xf32>
    %394 = math.exp %393 : vector<16x16xf32>
    %cst_160 = arith.constant dense<0.000000e+00> : vector<16xf32>
    %395 = vector.multi_reduction <add>, %394, %cst_160 [1] : vector<16x16xf32> to vector<16xf32>
    %396 = vector.shape_cast %395 : vector<16xf32> to vector<16x1xf32>
    %397 = tpu.reciprocal %396 {approx = true} : vector<16x1xf32> -> vector<16x1xf32>
    %398 = vector.broadcast %397 : vector<16x1xf32> to vector<16x16xf32>
    %399 = arith.mulf %394, %398 : vector<16x16xf32>
    %cst_161 = arith.constant dense<0.000000e+00> : vector<16x16xf32>
    %400 = tpu.matmul %399, %388, %cst_161 {dimension_numbers = #tpu.dot_dimension_numbers<[1], [0], [0], [1], [0, 0, 1, 1], [], []>} : vector<16x16xf32>, vector<16x16xf32>, vector<16x16xf32> -> vector<16x16xf32>
    %401 = tpu.concatenate %355, %370, %385, %400 in 1 : vector<16x16xf32>, vector<16x16xf32>, vector<16x16xf32>, vector<16x16xf32> -> vector<16x64xf32>
    %c1_162 = arith.constant 1 : index
    %c0_163 = arith.constant 0 : index
    %c0_164 = arith.constant 0 : index
    %402 = vector.load %arg11[%c1_162, %c0_163, %c0_164] : memref<4x64x64xf32, #tpu.memory_space<vmem>>, vector<1x64x64xf32>
    %403 = vector.shape_cast %402 : vector<1x64x64xf32> to vector<64x64xf32>
    %cst_165 = arith.constant dense<0.000000e+00> : vector<16x64xf32>
    %404 = tpu.matmul %401, %403, %cst_165 {dimension_numbers = #tpu.dot_dimension_numbers<[1], [0], [0], [1], [0, 0, 1, 1], [], []>} : vector<16x64xf32>, vector<64x64xf32>, vector<16x64xf32> -> vector<16x64xf32>
    %c1_166 = arith.constant 1 : index
    %c0_167 = arith.constant 0 : index
    %c0_168 = arith.constant 0 : index
    %405 = vector.load %arg12[%c1_166, %c0_167, %c0_168] : memref<4x1x64xf32, #tpu.memory_space<vmem>>, vector<1x1x64xf32>
    %406 = vector.shape_cast %405 : vector<1x1x64xf32> to vector<1x64xf32>
    %407 = vector.broadcast %406 : vector<1x64xf32> to vector<16x64xf32>
    %408 = arith.addf %404, %407 : vector<16x64xf32>
    %409 = arith.addf %333, %408 : vector<16x64xf32>
    %c1_169 = arith.constant 1 : index
    %c0_170 = arith.constant 0 : index
    %c0_171 = arith.constant 0 : index
    %410 = vector.load %arg13[%c1_169, %c0_170, %c0_171] : memref<4x1x64xf32, #tpu.memory_space<vmem>>, vector<1x1x64xf32>
    %411 = vector.shape_cast %410 : vector<1x1x64xf32> to vector<1x64xf32>
    %c1_172 = arith.constant 1 : index
    %c0_173 = arith.constant 0 : index
    %c0_174 = arith.constant 0 : index
    %412 = vector.load %arg14[%c1_172, %c0_173, %c0_174] : memref<4x1x64xf32, #tpu.memory_space<vmem>>, vector<1x1x64xf32>
    %413 = vector.shape_cast %412 : vector<1x1x64xf32> to vector<1x64xf32>
    %cst_175 = arith.constant dense<0.000000e+00> : vector<16xf32>
    %414 = vector.multi_reduction <add>, %409, %cst_175 [1] : vector<16x64xf32> to vector<16xf32>
    %415 = vector.shape_cast %414 : vector<16xf32> to vector<16x1xf32>
    %cst_176 = arith.constant 6.400000e+01 : f32
    %416 = vector.broadcast %cst_176 : f32 to vector<16x1xf32>
    %417 = arith.divf %415, %416 : vector<16x1xf32>
    %418 = vector.broadcast %417 : vector<16x1xf32> to vector<16x64xf32>
    %419 = arith.subf %409, %418 : vector<16x64xf32>
    %420 = arith.mulf %419, %419 : vector<16x64xf32>
    %cst_177 = arith.constant dense<0.000000e+00> : vector<16xf32>
    %421 = vector.multi_reduction <add>, %420, %cst_177 [1] : vector<16x64xf32> to vector<16xf32>
    %422 = vector.shape_cast %421 : vector<16xf32> to vector<16x1xf32>
    %cst_178 = arith.constant 6.400000e+01 : f32
    %423 = vector.broadcast %cst_178 : f32 to vector<16x1xf32>
    %424 = arith.divf %422, %423 : vector<16x1xf32>
    %cst_179 = arith.constant 9.99999974E-6 : f32
    %425 = vector.broadcast %cst_179 : f32 to vector<16x1xf32>
    %426 = arith.addf %424, %425 : vector<16x1xf32>
    %427 = math.rsqrt %426 : vector<16x1xf32>
    %428 = vector.broadcast %427 : vector<16x1xf32> to vector<16x64xf32>
    %429 = arith.mulf %419, %428 : vector<16x64xf32>
    %430 = vector.broadcast %411 : vector<1x64xf32> to vector<16x64xf32>
    %431 = arith.mulf %429, %430 : vector<16x64xf32>
    %432 = vector.broadcast %413 : vector<1x64xf32> to vector<16x64xf32>
    %433 = arith.addf %431, %432 : vector<16x64xf32>
    %c1_180 = arith.constant 1 : index
    %c0_181 = arith.constant 0 : index
    %c0_182 = arith.constant 0 : index
    %434 = vector.load %arg15[%c1_180, %c0_181, %c0_182] : memref<4x64x128xf32, #tpu.memory_space<vmem>>, vector<1x64x128xf32>
    %435 = vector.shape_cast %434 : vector<1x64x128xf32> to vector<64x128xf32>
    %cst_183 = arith.constant dense<0.000000e+00> : vector<16x128xf32>
    %436 = tpu.matmul %433, %435, %cst_183 {dimension_numbers = #tpu.dot_dimension_numbers<[1], [0], [0], [1], [0, 0, 1, 1], [], []>} : vector<16x64xf32>, vector<64x128xf32>, vector<16x128xf32> -> vector<16x128xf32>
    %c1_184 = arith.constant 1 : index
    %c0_185 = arith.constant 0 : index
    %c0_186 = arith.constant 0 : index
    %437 = vector.load %arg16[%c1_184, %c0_185, %c0_186] : memref<4x1x128xf32, #tpu.memory_space<vmem>>, vector<1x1x128xf32>
    %438 = vector.shape_cast %437 : vector<1x1x128xf32> to vector<1x128xf32>
    %439 = vector.broadcast %438 : vector<1x128xf32> to vector<16x128xf32>
    %440 = arith.addf %436, %439 : vector<16x128xf32>
    %cst_187 = arith.constant 5.000000e-01 : f32
    %441 = vector.broadcast %cst_187 : f32 to vector<16x128xf32>
    %442 = arith.mulf %441, %440 : vector<16x128xf32>
    %cst_188 = arith.constant 0.707106769 : f32
    %443 = vector.broadcast %cst_188 : f32 to vector<16x128xf32>
    %444 = arith.mulf %440, %443 : vector<16x128xf32>
    %cst_189 = arith.constant 0.000000e+00 : f32
    %445 = vector.broadcast %cst_189 : f32 to vector<16x128xf32>
    %446 = arith.cmpf oge, %444, %445 : vector<16x128xf32>
    %cst_190 = arith.constant 1.000000e+00 : f32
    %cst_191 = arith.constant -1.000000e+00 : f32
    %447 = vector.broadcast %cst_190 : f32 to vector<16x128xf32>
    %448 = vector.broadcast %cst_191 : f32 to vector<16x128xf32>
    %449 = arith.select %446, %447, %448 : vector<16x128xi1>, vector<16x128xf32>
    %450 = math.absf %444 : vector<16x128xf32>
    %cst_192 = arith.constant 0.327591091 : f32
    %451 = vector.broadcast %cst_192 : f32 to vector<16x128xf32>
    %452 = arith.mulf %451, %450 : vector<16x128xf32>
    %cst_193 = arith.constant 1.000000e+00 : f32
    %453 = vector.broadcast %cst_193 : f32 to vector<16x128xf32>
    %454 = arith.addf %453, %452 : vector<16x128xf32>
    %cst_194 = arith.constant 1.000000e+00 : f32
    %455 = vector.broadcast %cst_194 : f32 to vector<16x128xf32>
    %456 = arith.divf %455, %454 : vector<16x128xf32>
    %cst_195 = arith.constant 1.06140542 : f32
    %457 = vector.broadcast %cst_195 : f32 to vector<16x128xf32>
    %458 = arith.mulf %457, %456 : vector<16x128xf32>
    %cst_196 = arith.constant -1.45315206 : f32
    %459 = vector.broadcast %cst_196 : f32 to vector<16x128xf32>
    %460 = arith.addf %458, %459 : vector<16x128xf32>
    %461 = arith.mulf %460, %456 : vector<16x128xf32>
    %cst_197 = arith.constant 1.42141378 : f32
    %462 = vector.broadcast %cst_197 : f32 to vector<16x128xf32>
    %463 = arith.addf %461, %462 : vector<16x128xf32>
    %464 = arith.mulf %463, %456 : vector<16x128xf32>
    %cst_198 = arith.constant -0.284496725 : f32
    %465 = vector.broadcast %cst_198 : f32 to vector<16x128xf32>
    %466 = arith.addf %464, %465 : vector<16x128xf32>
    %467 = arith.mulf %466, %456 : vector<16x128xf32>
    %cst_199 = arith.constant 0.254829586 : f32
    %468 = vector.broadcast %cst_199 : f32 to vector<16x128xf32>
    %469 = arith.addf %467, %468 : vector<16x128xf32>
    %470 = arith.mulf %469, %456 : vector<16x128xf32>
    %cst_200 = arith.constant 0.000000e+00 : f32
    %471 = vector.broadcast %cst_200 : f32 to vector<16x128xf32>
    %472 = arith.subf %471, %450 : vector<16x128xf32>
    %473 = arith.mulf %472, %450 : vector<16x128xf32>
    %474 = math.exp %473 : vector<16x128xf32>
    %475 = arith.mulf %470, %474 : vector<16x128xf32>
    %cst_201 = arith.constant 1.000000e+00 : f32
    %476 = vector.broadcast %cst_201 : f32 to vector<16x128xf32>
    %477 = arith.subf %476, %475 : vector<16x128xf32>
    %478 = arith.mulf %449, %477 : vector<16x128xf32>
    %cst_202 = arith.constant 1.000000e+00 : f32
    %479 = vector.broadcast %cst_202 : f32 to vector<16x128xf32>
    %480 = arith.addf %479, %478 : vector<16x128xf32>
    %481 = arith.mulf %442, %480 : vector<16x128xf32>
    %c1_203 = arith.constant 1 : index
    %c0_204 = arith.constant 0 : index
    %c0_205 = arith.constant 0 : index
    %482 = vector.load %arg17[%c1_203, %c0_204, %c0_205] : memref<4x128x64xf32, #tpu.memory_space<vmem>>, vector<1x128x64xf32>
    %483 = vector.shape_cast %482 : vector<1x128x64xf32> to vector<128x64xf32>
    %cst_206 = arith.constant dense<0.000000e+00> : vector<16x64xf32>
    %484 = tpu.matmul %481, %483, %cst_206 {dimension_numbers = #tpu.dot_dimension_numbers<[1], [0], [0], [1], [0, 0, 1, 1], [], []>} : vector<16x128xf32>, vector<128x64xf32>, vector<16x64xf32> -> vector<16x64xf32>
    %c1_207 = arith.constant 1 : index
    %c0_208 = arith.constant 0 : index
    %c0_209 = arith.constant 0 : index
    %485 = vector.load %arg18[%c1_207, %c0_208, %c0_209] : memref<4x1x64xf32, #tpu.memory_space<vmem>>, vector<1x1x64xf32>
    %486 = vector.shape_cast %485 : vector<1x1x64xf32> to vector<1x64xf32>
    %487 = vector.broadcast %486 : vector<1x64xf32> to vector<16x64xf32>
    %488 = arith.addf %484, %487 : vector<16x64xf32>
    %489 = arith.addf %433, %488 : vector<16x64xf32>
    %c1_210 = arith.constant 1 : index
    %c0_211 = arith.constant 0 : index
    %c0_212 = arith.constant 0 : index
    %490 = vector.load %arg19[%c1_210, %c0_211, %c0_212] : memref<4x1x64xf32, #tpu.memory_space<vmem>>, vector<1x1x64xf32>
    %491 = vector.shape_cast %490 : vector<1x1x64xf32> to vector<1x64xf32>
    %c1_213 = arith.constant 1 : index
    %c0_214 = arith.constant 0 : index
    %c0_215 = arith.constant 0 : index
    %492 = vector.load %arg20[%c1_213, %c0_214, %c0_215] : memref<4x1x64xf32, #tpu.memory_space<vmem>>, vector<1x1x64xf32>
    %493 = vector.shape_cast %492 : vector<1x1x64xf32> to vector<1x64xf32>
    %cst_216 = arith.constant dense<0.000000e+00> : vector<16xf32>
    %494 = vector.multi_reduction <add>, %489, %cst_216 [1] : vector<16x64xf32> to vector<16xf32>
    %495 = vector.shape_cast %494 : vector<16xf32> to vector<16x1xf32>
    %cst_217 = arith.constant 6.400000e+01 : f32
    %496 = vector.broadcast %cst_217 : f32 to vector<16x1xf32>
    %497 = arith.divf %495, %496 : vector<16x1xf32>
    %498 = vector.broadcast %497 : vector<16x1xf32> to vector<16x64xf32>
    %499 = arith.subf %489, %498 : vector<16x64xf32>
    %500 = arith.mulf %499, %499 : vector<16x64xf32>
    %cst_218 = arith.constant dense<0.000000e+00> : vector<16xf32>
    %501 = vector.multi_reduction <add>, %500, %cst_218 [1] : vector<16x64xf32> to vector<16xf32>
    %502 = vector.shape_cast %501 : vector<16xf32> to vector<16x1xf32>
    %cst_219 = arith.constant 6.400000e+01 : f32
    %503 = vector.broadcast %cst_219 : f32 to vector<16x1xf32>
    %504 = arith.divf %502, %503 : vector<16x1xf32>
    %cst_220 = arith.constant 9.99999974E-6 : f32
    %505 = vector.broadcast %cst_220 : f32 to vector<16x1xf32>
    %506 = arith.addf %504, %505 : vector<16x1xf32>
    %507 = math.rsqrt %506 : vector<16x1xf32>
    %508 = vector.broadcast %507 : vector<16x1xf32> to vector<16x64xf32>
    %509 = arith.mulf %499, %508 : vector<16x64xf32>
    %510 = vector.broadcast %491 : vector<1x64xf32> to vector<16x64xf32>
    %511 = arith.mulf %509, %510 : vector<16x64xf32>
    %512 = vector.broadcast %493 : vector<1x64xf32> to vector<16x64xf32>
    %513 = arith.addf %511, %512 : vector<16x64xf32>
    %514 = arith.addf %513, %332 : vector<16x64xf32>
    %515 = arith.addf %514, %513 : vector<16x64xf32>
    %c2 = arith.constant 2 : index
    %c0_221 = arith.constant 0 : index
    %c0_222 = arith.constant 0 : index
    %516 = vector.load %arg9[%c2, %c0_221, %c0_222] : memref<4x64x192xf32, #tpu.memory_space<vmem>>, vector<1x64x192xf32>
    %517 = vector.shape_cast %516 : vector<1x64x192xf32> to vector<64x192xf32>
    %cst_223 = arith.constant dense<0.000000e+00> : vector<16x192xf32>
    %518 = tpu.matmul %515, %517, %cst_223 {dimension_numbers = #tpu.dot_dimension_numbers<[1], [0], [0], [1], [0, 0, 1, 1], [], []>} : vector<16x64xf32>, vector<64x192xf32>, vector<16x192xf32> -> vector<16x192xf32>
    %c2_224 = arith.constant 2 : index
    %c0_225 = arith.constant 0 : index
    %c0_226 = arith.constant 0 : index
    %519 = vector.load %arg10[%c2_224, %c0_225, %c0_226] : memref<4x1x192xf32, #tpu.memory_space<vmem>>, vector<1x1x192xf32>
    %520 = vector.shape_cast %519 : vector<1x1x192xf32> to vector<1x192xf32>
    %521 = vector.broadcast %520 : vector<1x192xf32> to vector<16x192xf32>
    %522 = arith.addf %518, %521 : vector<16x192xf32>
    %523 = vector.extract_strided_slice %522 {offsets = [0, 0], sizes = [16, 16], strides = [1, 1]} : vector<16x192xf32> to vector<16x16xf32>
    %524 = vector.extract_strided_slice %522 {offsets = [0, 64], sizes = [16, 16], strides = [1, 1]} : vector<16x192xf32> to vector<16x16xf32>
    %525 = vector.extract_strided_slice %522 {offsets = [0, 128], sizes = [16, 16], strides = [1, 1]} : vector<16x192xf32> to vector<16x16xf32>
    %cst_227 = arith.constant dense<0.000000e+00> : vector<16x16xf32>
    %526 = tpu.matmul %523, %524, %cst_227 {dimension_numbers = #tpu.dot_dimension_numbers<[1], [1], [0], [0], [0, 0, 1, 0], [], []>} : vector<16x16xf32>, vector<16x16xf32>, vector<16x16xf32> -> vector<16x16xf32>
    %cst_228 = arith.constant dense<0xFF800000> : vector<16xf32>
    %527 = vector.multi_reduction <maximumf>, %526, %cst_228 [1] : vector<16x16xf32> to vector<16xf32>
    %528 = vector.shape_cast %527 : vector<16xf32> to vector<16x1xf32>
    %529 = vector.broadcast %528 : vector<16x1xf32> to vector<16x16xf32>
    %530 = arith.subf %526, %529 : vector<16x16xf32>
    %531 = math.exp %530 : vector<16x16xf32>
    %cst_229 = arith.constant dense<0.000000e+00> : vector<16xf32>
    %532 = vector.multi_reduction <add>, %531, %cst_229 [1] : vector<16x16xf32> to vector<16xf32>
    %533 = vector.shape_cast %532 : vector<16xf32> to vector<16x1xf32>
    %534 = tpu.reciprocal %533 {approx = true} : vector<16x1xf32> -> vector<16x1xf32>
    %535 = vector.broadcast %534 : vector<16x1xf32> to vector<16x16xf32>
    %536 = arith.mulf %531, %535 : vector<16x16xf32>
    %cst_230 = arith.constant dense<0.000000e+00> : vector<16x16xf32>
    %537 = tpu.matmul %536, %525, %cst_230 {dimension_numbers = #tpu.dot_dimension_numbers<[1], [0], [0], [1], [0, 0, 1, 1], [], []>} : vector<16x16xf32>, vector<16x16xf32>, vector<16x16xf32> -> vector<16x16xf32>
    %538 = vector.extract_strided_slice %522 {offsets = [0, 16], sizes = [16, 16], strides = [1, 1]} : vector<16x192xf32> to vector<16x16xf32>
    %539 = vector.extract_strided_slice %522 {offsets = [0, 80], sizes = [16, 16], strides = [1, 1]} : vector<16x192xf32> to vector<16x16xf32>
    %540 = vector.extract_strided_slice %522 {offsets = [0, 144], sizes = [16, 16], strides = [1, 1]} : vector<16x192xf32> to vector<16x16xf32>
    %cst_231 = arith.constant dense<0.000000e+00> : vector<16x16xf32>
    %541 = tpu.matmul %538, %539, %cst_231 {dimension_numbers = #tpu.dot_dimension_numbers<[1], [1], [0], [0], [0, 0, 1, 0], [], []>} : vector<16x16xf32>, vector<16x16xf32>, vector<16x16xf32> -> vector<16x16xf32>
    %cst_232 = arith.constant dense<0xFF800000> : vector<16xf32>
    %542 = vector.multi_reduction <maximumf>, %541, %cst_232 [1] : vector<16x16xf32> to vector<16xf32>
    %543 = vector.shape_cast %542 : vector<16xf32> to vector<16x1xf32>
    %544 = vector.broadcast %543 : vector<16x1xf32> to vector<16x16xf32>
    %545 = arith.subf %541, %544 : vector<16x16xf32>
    %546 = math.exp %545 : vector<16x16xf32>
    %cst_233 = arith.constant dense<0.000000e+00> : vector<16xf32>
    %547 = vector.multi_reduction <add>, %546, %cst_233 [1] : vector<16x16xf32> to vector<16xf32>
    %548 = vector.shape_cast %547 : vector<16xf32> to vector<16x1xf32>
    %549 = tpu.reciprocal %548 {approx = true} : vector<16x1xf32> -> vector<16x1xf32>
    %550 = vector.broadcast %549 : vector<16x1xf32> to vector<16x16xf32>
    %551 = arith.mulf %546, %550 : vector<16x16xf32>
    %cst_234 = arith.constant dense<0.000000e+00> : vector<16x16xf32>
    %552 = tpu.matmul %551, %540, %cst_234 {dimension_numbers = #tpu.dot_dimension_numbers<[1], [0], [0], [1], [0, 0, 1, 1], [], []>} : vector<16x16xf32>, vector<16x16xf32>, vector<16x16xf32> -> vector<16x16xf32>
    %553 = vector.extract_strided_slice %522 {offsets = [0, 32], sizes = [16, 16], strides = [1, 1]} : vector<16x192xf32> to vector<16x16xf32>
    %554 = vector.extract_strided_slice %522 {offsets = [0, 96], sizes = [16, 16], strides = [1, 1]} : vector<16x192xf32> to vector<16x16xf32>
    %555 = vector.extract_strided_slice %522 {offsets = [0, 160], sizes = [16, 16], strides = [1, 1]} : vector<16x192xf32> to vector<16x16xf32>
    %cst_235 = arith.constant dense<0.000000e+00> : vector<16x16xf32>
    %556 = tpu.matmul %553, %554, %cst_235 {dimension_numbers = #tpu.dot_dimension_numbers<[1], [1], [0], [0], [0, 0, 1, 0], [], []>} : vector<16x16xf32>, vector<16x16xf32>, vector<16x16xf32> -> vector<16x16xf32>
    %cst_236 = arith.constant dense<0xFF800000> : vector<16xf32>
    %557 = vector.multi_reduction <maximumf>, %556, %cst_236 [1] : vector<16x16xf32> to vector<16xf32>
    %558 = vector.shape_cast %557 : vector<16xf32> to vector<16x1xf32>
    %559 = vector.broadcast %558 : vector<16x1xf32> to vector<16x16xf32>
    %560 = arith.subf %556, %559 : vector<16x16xf32>
    %561 = math.exp %560 : vector<16x16xf32>
    %cst_237 = arith.constant dense<0.000000e+00> : vector<16xf32>
    %562 = vector.multi_reduction <add>, %561, %cst_237 [1] : vector<16x16xf32> to vector<16xf32>
    %563 = vector.shape_cast %562 : vector<16xf32> to vector<16x1xf32>
    %564 = tpu.reciprocal %563 {approx = true} : vector<16x1xf32> -> vector<16x1xf32>
    %565 = vector.broadcast %564 : vector<16x1xf32> to vector<16x16xf32>
    %566 = arith.mulf %561, %565 : vector<16x16xf32>
    %cst_238 = arith.constant dense<0.000000e+00> : vector<16x16xf32>
    %567 = tpu.matmul %566, %555, %cst_238 {dimension_numbers = #tpu.dot_dimension_numbers<[1], [0], [0], [1], [0, 0, 1, 1], [], []>} : vector<16x16xf32>, vector<16x16xf32>, vector<16x16xf32> -> vector<16x16xf32>
    %568 = vector.extract_strided_slice %522 {offsets = [0, 48], sizes = [16, 16], strides = [1, 1]} : vector<16x192xf32> to vector<16x16xf32>
    %569 = vector.extract_strided_slice %522 {offsets = [0, 112], sizes = [16, 16], strides = [1, 1]} : vector<16x192xf32> to vector<16x16xf32>
    %570 = vector.extract_strided_slice %522 {offsets = [0, 176], sizes = [16, 16], strides = [1, 1]} : vector<16x192xf32> to vector<16x16xf32>
    %cst_239 = arith.constant dense<0.000000e+00> : vector<16x16xf32>
    %571 = tpu.matmul %568, %569, %cst_239 {dimension_numbers = #tpu.dot_dimension_numbers<[1], [1], [0], [0], [0, 0, 1, 0], [], []>} : vector<16x16xf32>, vector<16x16xf32>, vector<16x16xf32> -> vector<16x16xf32>
    %cst_240 = arith.constant dense<0xFF800000> : vector<16xf32>
    %572 = vector.multi_reduction <maximumf>, %571, %cst_240 [1] : vector<16x16xf32> to vector<16xf32>
    %573 = vector.shape_cast %572 : vector<16xf32> to vector<16x1xf32>
    %574 = vector.broadcast %573 : vector<16x1xf32> to vector<16x16xf32>
    %575 = arith.subf %571, %574 : vector<16x16xf32>
    %576 = math.exp %575 : vector<16x16xf32>
    %cst_241 = arith.constant dense<0.000000e+00> : vector<16xf32>
    %577 = vector.multi_reduction <add>, %576, %cst_241 [1] : vector<16x16xf32> to vector<16xf32>
    %578 = vector.shape_cast %577 : vector<16xf32> to vector<16x1xf32>
    %579 = tpu.reciprocal %578 {approx = true} : vector<16x1xf32> -> vector<16x1xf32>
    %580 = vector.broadcast %579 : vector<16x1xf32> to vector<16x16xf32>
    %581 = arith.mulf %576, %580 : vector<16x16xf32>
    %cst_242 = arith.constant dense<0.000000e+00> : vector<16x16xf32>
    %582 = tpu.matmul %581, %570, %cst_242 {dimension_numbers = #tpu.dot_dimension_numbers<[1], [0], [0], [1], [0, 0, 1, 1], [], []>} : vector<16x16xf32>, vector<16x16xf32>, vector<16x16xf32> -> vector<16x16xf32>
    %583 = tpu.concatenate %537, %552, %567, %582 in 1 : vector<16x16xf32>, vector<16x16xf32>, vector<16x16xf32>, vector<16x16xf32> -> vector<16x64xf32>
    %c2_243 = arith.constant 2 : index
    %c0_244 = arith.constant 0 : index
    %c0_245 = arith.constant 0 : index
    %584 = vector.load %arg11[%c2_243, %c0_244, %c0_245] : memref<4x64x64xf32, #tpu.memory_space<vmem>>, vector<1x64x64xf32>
    %585 = vector.shape_cast %584 : vector<1x64x64xf32> to vector<64x64xf32>
    %cst_246 = arith.constant dense<0.000000e+00> : vector<16x64xf32>
    %586 = tpu.matmul %583, %585, %cst_246 {dimension_numbers = #tpu.dot_dimension_numbers<[1], [0], [0], [1], [0, 0, 1, 1], [], []>} : vector<16x64xf32>, vector<64x64xf32>, vector<16x64xf32> -> vector<16x64xf32>
    %c2_247 = arith.constant 2 : index
    %c0_248 = arith.constant 0 : index
    %c0_249 = arith.constant 0 : index
    %587 = vector.load %arg12[%c2_247, %c0_248, %c0_249] : memref<4x1x64xf32, #tpu.memory_space<vmem>>, vector<1x1x64xf32>
    %588 = vector.shape_cast %587 : vector<1x1x64xf32> to vector<1x64xf32>
    %589 = vector.broadcast %588 : vector<1x64xf32> to vector<16x64xf32>
    %590 = arith.addf %586, %589 : vector<16x64xf32>
    %591 = arith.addf %515, %590 : vector<16x64xf32>
    %c2_250 = arith.constant 2 : index
    %c0_251 = arith.constant 0 : index
    %c0_252 = arith.constant 0 : index
    %592 = vector.load %arg13[%c2_250, %c0_251, %c0_252] : memref<4x1x64xf32, #tpu.memory_space<vmem>>, vector<1x1x64xf32>
    %593 = vector.shape_cast %592 : vector<1x1x64xf32> to vector<1x64xf32>
    %c2_253 = arith.constant 2 : index
    %c0_254 = arith.constant 0 : index
    %c0_255 = arith.constant 0 : index
    %594 = vector.load %arg14[%c2_253, %c0_254, %c0_255] : memref<4x1x64xf32, #tpu.memory_space<vmem>>, vector<1x1x64xf32>
    %595 = vector.shape_cast %594 : vector<1x1x64xf32> to vector<1x64xf32>
    %cst_256 = arith.constant dense<0.000000e+00> : vector<16xf32>
    %596 = vector.multi_reduction <add>, %591, %cst_256 [1] : vector<16x64xf32> to vector<16xf32>
    %597 = vector.shape_cast %596 : vector<16xf32> to vector<16x1xf32>
    %cst_257 = arith.constant 6.400000e+01 : f32
    %598 = vector.broadcast %cst_257 : f32 to vector<16x1xf32>
    %599 = arith.divf %597, %598 : vector<16x1xf32>
    %600 = vector.broadcast %599 : vector<16x1xf32> to vector<16x64xf32>
    %601 = arith.subf %591, %600 : vector<16x64xf32>
    %602 = arith.mulf %601, %601 : vector<16x64xf32>
    %cst_258 = arith.constant dense<0.000000e+00> : vector<16xf32>
    %603 = vector.multi_reduction <add>, %602, %cst_258 [1] : vector<16x64xf32> to vector<16xf32>
    %604 = vector.shape_cast %603 : vector<16xf32> to vector<16x1xf32>
    %cst_259 = arith.constant 6.400000e+01 : f32
    %605 = vector.broadcast %cst_259 : f32 to vector<16x1xf32>
    %606 = arith.divf %604, %605 : vector<16x1xf32>
    %cst_260 = arith.constant 9.99999974E-6 : f32
    %607 = vector.broadcast %cst_260 : f32 to vector<16x1xf32>
    %608 = arith.addf %606, %607 : vector<16x1xf32>
    %609 = math.rsqrt %608 : vector<16x1xf32>
    %610 = vector.broadcast %609 : vector<16x1xf32> to vector<16x64xf32>
    %611 = arith.mulf %601, %610 : vector<16x64xf32>
    %612 = vector.broadcast %593 : vector<1x64xf32> to vector<16x64xf32>
    %613 = arith.mulf %611, %612 : vector<16x64xf32>
    %614 = vector.broadcast %595 : vector<1x64xf32> to vector<16x64xf32>
    %615 = arith.addf %613, %614 : vector<16x64xf32>
    %c2_261 = arith.constant 2 : index
    %c0_262 = arith.constant 0 : index
    %c0_263 = arith.constant 0 : index
    %616 = vector.load %arg15[%c2_261, %c0_262, %c0_263] : memref<4x64x128xf32, #tpu.memory_space<vmem>>, vector<1x64x128xf32>
    %617 = vector.shape_cast %616 : vector<1x64x128xf32> to vector<64x128xf32>
    %cst_264 = arith.constant dense<0.000000e+00> : vector<16x128xf32>
    %618 = tpu.matmul %615, %617, %cst_264 {dimension_numbers = #tpu.dot_dimension_numbers<[1], [0], [0], [1], [0, 0, 1, 1], [], []>} : vector<16x64xf32>, vector<64x128xf32>, vector<16x128xf32> -> vector<16x128xf32>
    %c2_265 = arith.constant 2 : index
    %c0_266 = arith.constant 0 : index
    %c0_267 = arith.constant 0 : index
    %619 = vector.load %arg16[%c2_265, %c0_266, %c0_267] : memref<4x1x128xf32, #tpu.memory_space<vmem>>, vector<1x1x128xf32>
    %620 = vector.shape_cast %619 : vector<1x1x128xf32> to vector<1x128xf32>
    %621 = vector.broadcast %620 : vector<1x128xf32> to vector<16x128xf32>
    %622 = arith.addf %618, %621 : vector<16x128xf32>
    %cst_268 = arith.constant 5.000000e-01 : f32
    %623 = vector.broadcast %cst_268 : f32 to vector<16x128xf32>
    %624 = arith.mulf %623, %622 : vector<16x128xf32>
    %cst_269 = arith.constant 0.707106769 : f32
    %625 = vector.broadcast %cst_269 : f32 to vector<16x128xf32>
    %626 = arith.mulf %622, %625 : vector<16x128xf32>
    %cst_270 = arith.constant 0.000000e+00 : f32
    %627 = vector.broadcast %cst_270 : f32 to vector<16x128xf32>
    %628 = arith.cmpf oge, %626, %627 : vector<16x128xf32>
    %cst_271 = arith.constant 1.000000e+00 : f32
    %cst_272 = arith.constant -1.000000e+00 : f32
    %629 = vector.broadcast %cst_271 : f32 to vector<16x128xf32>
    %630 = vector.broadcast %cst_272 : f32 to vector<16x128xf32>
    %631 = arith.select %628, %629, %630 : vector<16x128xi1>, vector<16x128xf32>
    %632 = math.absf %626 : vector<16x128xf32>
    %cst_273 = arith.constant 0.327591091 : f32
    %633 = vector.broadcast %cst_273 : f32 to vector<16x128xf32>
    %634 = arith.mulf %633, %632 : vector<16x128xf32>
    %cst_274 = arith.constant 1.000000e+00 : f32
    %635 = vector.broadcast %cst_274 : f32 to vector<16x128xf32>
    %636 = arith.addf %635, %634 : vector<16x128xf32>
    %cst_275 = arith.constant 1.000000e+00 : f32
    %637 = vector.broadcast %cst_275 : f32 to vector<16x128xf32>
    %638 = arith.divf %637, %636 : vector<16x128xf32>
    %cst_276 = arith.constant 1.06140542 : f32
    %639 = vector.broadcast %cst_276 : f32 to vector<16x128xf32>
    %640 = arith.mulf %639, %638 : vector<16x128xf32>
    %cst_277 = arith.constant -1.45315206 : f32
    %641 = vector.broadcast %cst_277 : f32 to vector<16x128xf32>
    %642 = arith.addf %640, %641 : vector<16x128xf32>
    %643 = arith.mulf %642, %638 : vector<16x128xf32>
    %cst_278 = arith.constant 1.42141378 : f32
    %644 = vector.broadcast %cst_278 : f32 to vector<16x128xf32>
    %645 = arith.addf %643, %644 : vector<16x128xf32>
    %646 = arith.mulf %645, %638 : vector<16x128xf32>
    %cst_279 = arith.constant -0.284496725 : f32
    %647 = vector.broadcast %cst_279 : f32 to vector<16x128xf32>
    %648 = arith.addf %646, %647 : vector<16x128xf32>
    %649 = arith.mulf %648, %638 : vector<16x128xf32>
    %cst_280 = arith.constant 0.254829586 : f32
    %650 = vector.broadcast %cst_280 : f32 to vector<16x128xf32>
    %651 = arith.addf %649, %650 : vector<16x128xf32>
    %652 = arith.mulf %651, %638 : vector<16x128xf32>
    %cst_281 = arith.constant 0.000000e+00 : f32
    %653 = vector.broadcast %cst_281 : f32 to vector<16x128xf32>
    %654 = arith.subf %653, %632 : vector<16x128xf32>
    %655 = arith.mulf %654, %632 : vector<16x128xf32>
    %656 = math.exp %655 : vector<16x128xf32>
    %657 = arith.mulf %652, %656 : vector<16x128xf32>
    %cst_282 = arith.constant 1.000000e+00 : f32
    %658 = vector.broadcast %cst_282 : f32 to vector<16x128xf32>
    %659 = arith.subf %658, %657 : vector<16x128xf32>
    %660 = arith.mulf %631, %659 : vector<16x128xf32>
    %cst_283 = arith.constant 1.000000e+00 : f32
    %661 = vector.broadcast %cst_283 : f32 to vector<16x128xf32>
    %662 = arith.addf %661, %660 : vector<16x128xf32>
    %663 = arith.mulf %624, %662 : vector<16x128xf32>
    %c2_284 = arith.constant 2 : index
    %c0_285 = arith.constant 0 : index
    %c0_286 = arith.constant 0 : index
    %664 = vector.load %arg17[%c2_284, %c0_285, %c0_286] : memref<4x128x64xf32, #tpu.memory_space<vmem>>, vector<1x128x64xf32>
    %665 = vector.shape_cast %664 : vector<1x128x64xf32> to vector<128x64xf32>
    %cst_287 = arith.constant dense<0.000000e+00> : vector<16x64xf32>
    %666 = tpu.matmul %663, %665, %cst_287 {dimension_numbers = #tpu.dot_dimension_numbers<[1], [0], [0], [1], [0, 0, 1, 1], [], []>} : vector<16x128xf32>, vector<128x64xf32>, vector<16x64xf32> -> vector<16x64xf32>
    %c2_288 = arith.constant 2 : index
    %c0_289 = arith.constant 0 : index
    %c0_290 = arith.constant 0 : index
    %667 = vector.load %arg18[%c2_288, %c0_289, %c0_290] : memref<4x1x64xf32, #tpu.memory_space<vmem>>, vector<1x1x64xf32>
    %668 = vector.shape_cast %667 : vector<1x1x64xf32> to vector<1x64xf32>
    %669 = vector.broadcast %668 : vector<1x64xf32> to vector<16x64xf32>
    %670 = arith.addf %666, %669 : vector<16x64xf32>
    %671 = arith.addf %615, %670 : vector<16x64xf32>
    %c2_291 = arith.constant 2 : index
    %c0_292 = arith.constant 0 : index
    %c0_293 = arith.constant 0 : index
    %672 = vector.load %arg19[%c2_291, %c0_292, %c0_293] : memref<4x1x64xf32, #tpu.memory_space<vmem>>, vector<1x1x64xf32>
    %673 = vector.shape_cast %672 : vector<1x1x64xf32> to vector<1x64xf32>
    %c2_294 = arith.constant 2 : index
    %c0_295 = arith.constant 0 : index
    %c0_296 = arith.constant 0 : index
    %674 = vector.load %arg20[%c2_294, %c0_295, %c0_296] : memref<4x1x64xf32, #tpu.memory_space<vmem>>, vector<1x1x64xf32>
    %675 = vector.shape_cast %674 : vector<1x1x64xf32> to vector<1x64xf32>
    %cst_297 = arith.constant dense<0.000000e+00> : vector<16xf32>
    %676 = vector.multi_reduction <add>, %671, %cst_297 [1] : vector<16x64xf32> to vector<16xf32>
    %677 = vector.shape_cast %676 : vector<16xf32> to vector<16x1xf32>
    %cst_298 = arith.constant 6.400000e+01 : f32
    %678 = vector.broadcast %cst_298 : f32 to vector<16x1xf32>
    %679 = arith.divf %677, %678 : vector<16x1xf32>
    %680 = vector.broadcast %679 : vector<16x1xf32> to vector<16x64xf32>
    %681 = arith.subf %671, %680 : vector<16x64xf32>
    %682 = arith.mulf %681, %681 : vector<16x64xf32>
    %cst_299 = arith.constant dense<0.000000e+00> : vector<16xf32>
    %683 = vector.multi_reduction <add>, %682, %cst_299 [1] : vector<16x64xf32> to vector<16xf32>
    %684 = vector.shape_cast %683 : vector<16xf32> to vector<16x1xf32>
    %cst_300 = arith.constant 6.400000e+01 : f32
    %685 = vector.broadcast %cst_300 : f32 to vector<16x1xf32>
    %686 = arith.divf %684, %685 : vector<16x1xf32>
    %cst_301 = arith.constant 9.99999974E-6 : f32
    %687 = vector.broadcast %cst_301 : f32 to vector<16x1xf32>
    %688 = arith.addf %686, %687 : vector<16x1xf32>
    %689 = math.rsqrt %688 : vector<16x1xf32>
    %690 = vector.broadcast %689 : vector<16x1xf32> to vector<16x64xf32>
    %691 = arith.mulf %681, %690 : vector<16x64xf32>
    %692 = vector.broadcast %673 : vector<1x64xf32> to vector<16x64xf32>
    %693 = arith.mulf %691, %692 : vector<16x64xf32>
    %694 = vector.broadcast %675 : vector<1x64xf32> to vector<16x64xf32>
    %695 = arith.addf %693, %694 : vector<16x64xf32>
    %696 = arith.addf %695, %332 : vector<16x64xf32>
    %697 = arith.addf %696, %513 : vector<16x64xf32>
    %698 = arith.addf %697, %695 : vector<16x64xf32>
    %c3 = arith.constant 3 : index
    %c0_302 = arith.constant 0 : index
    %c0_303 = arith.constant 0 : index
    %699 = vector.load %arg9[%c3, %c0_302, %c0_303] : memref<4x64x192xf32, #tpu.memory_space<vmem>>, vector<1x64x192xf32>
    %700 = vector.shape_cast %699 : vector<1x64x192xf32> to vector<64x192xf32>
    %cst_304 = arith.constant dense<0.000000e+00> : vector<16x192xf32>
    %701 = tpu.matmul %698, %700, %cst_304 {dimension_numbers = #tpu.dot_dimension_numbers<[1], [0], [0], [1], [0, 0, 1, 1], [], []>} : vector<16x64xf32>, vector<64x192xf32>, vector<16x192xf32> -> vector<16x192xf32>
    %c3_305 = arith.constant 3 : index
    %c0_306 = arith.constant 0 : index
    %c0_307 = arith.constant 0 : index
    %702 = vector.load %arg10[%c3_305, %c0_306, %c0_307] : memref<4x1x192xf32, #tpu.memory_space<vmem>>, vector<1x1x192xf32>
    %703 = vector.shape_cast %702 : vector<1x1x192xf32> to vector<1x192xf32>
    %704 = vector.broadcast %703 : vector<1x192xf32> to vector<16x192xf32>
    %705 = arith.addf %701, %704 : vector<16x192xf32>
    %706 = vector.extract_strided_slice %705 {offsets = [0, 0], sizes = [16, 16], strides = [1, 1]} : vector<16x192xf32> to vector<16x16xf32>
    %707 = vector.extract_strided_slice %705 {offsets = [0, 64], sizes = [16, 16], strides = [1, 1]} : vector<16x192xf32> to vector<16x16xf32>
    %708 = vector.extract_strided_slice %705 {offsets = [0, 128], sizes = [16, 16], strides = [1, 1]} : vector<16x192xf32> to vector<16x16xf32>
    %cst_308 = arith.constant dense<0.000000e+00> : vector<16x16xf32>
    %709 = tpu.matmul %706, %707, %cst_308 {dimension_numbers = #tpu.dot_dimension_numbers<[1], [1], [0], [0], [0, 0, 1, 0], [], []>} : vector<16x16xf32>, vector<16x16xf32>, vector<16x16xf32> -> vector<16x16xf32>
    %cst_309 = arith.constant dense<0xFF800000> : vector<16xf32>
    %710 = vector.multi_reduction <maximumf>, %709, %cst_309 [1] : vector<16x16xf32> to vector<16xf32>
    %711 = vector.shape_cast %710 : vector<16xf32> to vector<16x1xf32>
    %712 = vector.broadcast %711 : vector<16x1xf32> to vector<16x16xf32>
    %713 = arith.subf %709, %712 : vector<16x16xf32>
    %714 = math.exp %713 : vector<16x16xf32>
    %cst_310 = arith.constant dense<0.000000e+00> : vector<16xf32>
    %715 = vector.multi_reduction <add>, %714, %cst_310 [1] : vector<16x16xf32> to vector<16xf32>
    %716 = vector.shape_cast %715 : vector<16xf32> to vector<16x1xf32>
    %717 = tpu.reciprocal %716 {approx = true} : vector<16x1xf32> -> vector<16x1xf32>
    %718 = vector.broadcast %717 : vector<16x1xf32> to vector<16x16xf32>
    %719 = arith.mulf %714, %718 : vector<16x16xf32>
    %cst_311 = arith.constant dense<0.000000e+00> : vector<16x16xf32>
    %720 = tpu.matmul %719, %708, %cst_311 {dimension_numbers = #tpu.dot_dimension_numbers<[1], [0], [0], [1], [0, 0, 1, 1], [], []>} : vector<16x16xf32>, vector<16x16xf32>, vector<16x16xf32> -> vector<16x16xf32>
    %721 = vector.extract_strided_slice %705 {offsets = [0, 16], sizes = [16, 16], strides = [1, 1]} : vector<16x192xf32> to vector<16x16xf32>
    %722 = vector.extract_strided_slice %705 {offsets = [0, 80], sizes = [16, 16], strides = [1, 1]} : vector<16x192xf32> to vector<16x16xf32>
    %723 = vector.extract_strided_slice %705 {offsets = [0, 144], sizes = [16, 16], strides = [1, 1]} : vector<16x192xf32> to vector<16x16xf32>
    %cst_312 = arith.constant dense<0.000000e+00> : vector<16x16xf32>
    %724 = tpu.matmul %721, %722, %cst_312 {dimension_numbers = #tpu.dot_dimension_numbers<[1], [1], [0], [0], [0, 0, 1, 0], [], []>} : vector<16x16xf32>, vector<16x16xf32>, vector<16x16xf32> -> vector<16x16xf32>
    %cst_313 = arith.constant dense<0xFF800000> : vector<16xf32>
    %725 = vector.multi_reduction <maximumf>, %724, %cst_313 [1] : vector<16x16xf32> to vector<16xf32>
    %726 = vector.shape_cast %725 : vector<16xf32> to vector<16x1xf32>
    %727 = vector.broadcast %726 : vector<16x1xf32> to vector<16x16xf32>
    %728 = arith.subf %724, %727 : vector<16x16xf32>
    %729 = math.exp %728 : vector<16x16xf32>
    %cst_314 = arith.constant dense<0.000000e+00> : vector<16xf32>
    %730 = vector.multi_reduction <add>, %729, %cst_314 [1] : vector<16x16xf32> to vector<16xf32>
    %731 = vector.shape_cast %730 : vector<16xf32> to vector<16x1xf32>
    %732 = tpu.reciprocal %731 {approx = true} : vector<16x1xf32> -> vector<16x1xf32>
    %733 = vector.broadcast %732 : vector<16x1xf32> to vector<16x16xf32>
    %734 = arith.mulf %729, %733 : vector<16x16xf32>
    %cst_315 = arith.constant dense<0.000000e+00> : vector<16x16xf32>
    %735 = tpu.matmul %734, %723, %cst_315 {dimension_numbers = #tpu.dot_dimension_numbers<[1], [0], [0], [1], [0, 0, 1, 1], [], []>} : vector<16x16xf32>, vector<16x16xf32>, vector<16x16xf32> -> vector<16x16xf32>
    %736 = vector.extract_strided_slice %705 {offsets = [0, 32], sizes = [16, 16], strides = [1, 1]} : vector<16x192xf32> to vector<16x16xf32>
    %737 = vector.extract_strided_slice %705 {offsets = [0, 96], sizes = [16, 16], strides = [1, 1]} : vector<16x192xf32> to vector<16x16xf32>
    %738 = vector.extract_strided_slice %705 {offsets = [0, 160], sizes = [16, 16], strides = [1, 1]} : vector<16x192xf32> to vector<16x16xf32>
    %cst_316 = arith.constant dense<0.000000e+00> : vector<16x16xf32>
    %739 = tpu.matmul %736, %737, %cst_316 {dimension_numbers = #tpu.dot_dimension_numbers<[1], [1], [0], [0], [0, 0, 1, 0], [], []>} : vector<16x16xf32>, vector<16x16xf32>, vector<16x16xf32> -> vector<16x16xf32>
    %cst_317 = arith.constant dense<0xFF800000> : vector<16xf32>
    %740 = vector.multi_reduction <maximumf>, %739, %cst_317 [1] : vector<16x16xf32> to vector<16xf32>
    %741 = vector.shape_cast %740 : vector<16xf32> to vector<16x1xf32>
    %742 = vector.broadcast %741 : vector<16x1xf32> to vector<16x16xf32>
    %743 = arith.subf %739, %742 : vector<16x16xf32>
    %744 = math.exp %743 : vector<16x16xf32>
    %cst_318 = arith.constant dense<0.000000e+00> : vector<16xf32>
    %745 = vector.multi_reduction <add>, %744, %cst_318 [1] : vector<16x16xf32> to vector<16xf32>
    %746 = vector.shape_cast %745 : vector<16xf32> to vector<16x1xf32>
    %747 = tpu.reciprocal %746 {approx = true} : vector<16x1xf32> -> vector<16x1xf32>
    %748 = vector.broadcast %747 : vector<16x1xf32> to vector<16x16xf32>
    %749 = arith.mulf %744, %748 : vector<16x16xf32>
    %cst_319 = arith.constant dense<0.000000e+00> : vector<16x16xf32>
    %750 = tpu.matmul %749, %738, %cst_319 {dimension_numbers = #tpu.dot_dimension_numbers<[1], [0], [0], [1], [0, 0, 1, 1], [], []>} : vector<16x16xf32>, vector<16x16xf32>, vector<16x16xf32> -> vector<16x16xf32>
    %751 = vector.extract_strided_slice %705 {offsets = [0, 48], sizes = [16, 16], strides = [1, 1]} : vector<16x192xf32> to vector<16x16xf32>
    %752 = vector.extract_strided_slice %705 {offsets = [0, 112], sizes = [16, 16], strides = [1, 1]} : vector<16x192xf32> to vector<16x16xf32>
    %753 = vector.extract_strided_slice %705 {offsets = [0, 176], sizes = [16, 16], strides = [1, 1]} : vector<16x192xf32> to vector<16x16xf32>
    %cst_320 = arith.constant dense<0.000000e+00> : vector<16x16xf32>
    %754 = tpu.matmul %751, %752, %cst_320 {dimension_numbers = #tpu.dot_dimension_numbers<[1], [1], [0], [0], [0, 0, 1, 0], [], []>} : vector<16x16xf32>, vector<16x16xf32>, vector<16x16xf32> -> vector<16x16xf32>
    %cst_321 = arith.constant dense<0xFF800000> : vector<16xf32>
    %755 = vector.multi_reduction <maximumf>, %754, %cst_321 [1] : vector<16x16xf32> to vector<16xf32>
    %756 = vector.shape_cast %755 : vector<16xf32> to vector<16x1xf32>
    %757 = vector.broadcast %756 : vector<16x1xf32> to vector<16x16xf32>
    %758 = arith.subf %754, %757 : vector<16x16xf32>
    %759 = math.exp %758 : vector<16x16xf32>
    %cst_322 = arith.constant dense<0.000000e+00> : vector<16xf32>
    %760 = vector.multi_reduction <add>, %759, %cst_322 [1] : vector<16x16xf32> to vector<16xf32>
    %761 = vector.shape_cast %760 : vector<16xf32> to vector<16x1xf32>
    %762 = tpu.reciprocal %761 {approx = true} : vector<16x1xf32> -> vector<16x1xf32>
    %763 = vector.broadcast %762 : vector<16x1xf32> to vector<16x16xf32>
    %764 = arith.mulf %759, %763 : vector<16x16xf32>
    %cst_323 = arith.constant dense<0.000000e+00> : vector<16x16xf32>
    %765 = tpu.matmul %764, %753, %cst_323 {dimension_numbers = #tpu.dot_dimension_numbers<[1], [0], [0], [1], [0, 0, 1, 1], [], []>} : vector<16x16xf32>, vector<16x16xf32>, vector<16x16xf32> -> vector<16x16xf32>
    %766 = tpu.concatenate %720, %735, %750, %765 in 1 : vector<16x16xf32>, vector<16x16xf32>, vector<16x16xf32>, vector<16x16xf32> -> vector<16x64xf32>
    %c3_324 = arith.constant 3 : index
    %c0_325 = arith.constant 0 : index
    %c0_326 = arith.constant 0 : index
    %767 = vector.load %arg11[%c3_324, %c0_325, %c0_326] : memref<4x64x64xf32, #tpu.memory_space<vmem>>, vector<1x64x64xf32>
    %768 = vector.shape_cast %767 : vector<1x64x64xf32> to vector<64x64xf32>
    %cst_327 = arith.constant dense<0.000000e+00> : vector<16x64xf32>
    %769 = tpu.matmul %766, %768, %cst_327 {dimension_numbers = #tpu.dot_dimension_numbers<[1], [0], [0], [1], [0, 0, 1, 1], [], []>} : vector<16x64xf32>, vector<64x64xf32>, vector<16x64xf32> -> vector<16x64xf32>
    %c3_328 = arith.constant 3 : index
    %c0_329 = arith.constant 0 : index
    %c0_330 = arith.constant 0 : index
    %770 = vector.load %arg12[%c3_328, %c0_329, %c0_330] : memref<4x1x64xf32, #tpu.memory_space<vmem>>, vector<1x1x64xf32>
    %771 = vector.shape_cast %770 : vector<1x1x64xf32> to vector<1x64xf32>
    %772 = vector.broadcast %771 : vector<1x64xf32> to vector<16x64xf32>
    %773 = arith.addf %769, %772 : vector<16x64xf32>
    %774 = arith.addf %698, %773 : vector<16x64xf32>
    %c3_331 = arith.constant 3 : index
    %c0_332 = arith.constant 0 : index
    %c0_333 = arith.constant 0 : index
    %775 = vector.load %arg13[%c3_331, %c0_332, %c0_333] : memref<4x1x64xf32, #tpu.memory_space<vmem>>, vector<1x1x64xf32>
    %776 = vector.shape_cast %775 : vector<1x1x64xf32> to vector<1x64xf32>
    %c3_334 = arith.constant 3 : index
    %c0_335 = arith.constant 0 : index
    %c0_336 = arith.constant 0 : index
    %777 = vector.load %arg14[%c3_334, %c0_335, %c0_336] : memref<4x1x64xf32, #tpu.memory_space<vmem>>, vector<1x1x64xf32>
    %778 = vector.shape_cast %777 : vector<1x1x64xf32> to vector<1x64xf32>
    %cst_337 = arith.constant dense<0.000000e+00> : vector<16xf32>
    %779 = vector.multi_reduction <add>, %774, %cst_337 [1] : vector<16x64xf32> to vector<16xf32>
    %780 = vector.shape_cast %779 : vector<16xf32> to vector<16x1xf32>
    %cst_338 = arith.constant 6.400000e+01 : f32
    %781 = vector.broadcast %cst_338 : f32 to vector<16x1xf32>
    %782 = arith.divf %780, %781 : vector<16x1xf32>
    %783 = vector.broadcast %782 : vector<16x1xf32> to vector<16x64xf32>
    %784 = arith.subf %774, %783 : vector<16x64xf32>
    %785 = arith.mulf %784, %784 : vector<16x64xf32>
    %cst_339 = arith.constant dense<0.000000e+00> : vector<16xf32>
    %786 = vector.multi_reduction <add>, %785, %cst_339 [1] : vector<16x64xf32> to vector<16xf32>
    %787 = vector.shape_cast %786 : vector<16xf32> to vector<16x1xf32>
    %cst_340 = arith.constant 6.400000e+01 : f32
    %788 = vector.broadcast %cst_340 : f32 to vector<16x1xf32>
    %789 = arith.divf %787, %788 : vector<16x1xf32>
    %cst_341 = arith.constant 9.99999974E-6 : f32
    %790 = vector.broadcast %cst_341 : f32 to vector<16x1xf32>
    %791 = arith.addf %789, %790 : vector<16x1xf32>
    %792 = math.rsqrt %791 : vector<16x1xf32>
    %793 = vector.broadcast %792 : vector<16x1xf32> to vector<16x64xf32>
    %794 = arith.mulf %784, %793 : vector<16x64xf32>
    %795 = vector.broadcast %776 : vector<1x64xf32> to vector<16x64xf32>
    %796 = arith.mulf %794, %795 : vector<16x64xf32>
    %797 = vector.broadcast %778 : vector<1x64xf32> to vector<16x64xf32>
    %798 = arith.addf %796, %797 : vector<16x64xf32>
    %c3_342 = arith.constant 3 : index
    %c0_343 = arith.constant 0 : index
    %c0_344 = arith.constant 0 : index
    %799 = vector.load %arg15[%c3_342, %c0_343, %c0_344] : memref<4x64x128xf32, #tpu.memory_space<vmem>>, vector<1x64x128xf32>
    %800 = vector.shape_cast %799 : vector<1x64x128xf32> to vector<64x128xf32>
    %cst_345 = arith.constant dense<0.000000e+00> : vector<16x128xf32>
    %801 = tpu.matmul %798, %800, %cst_345 {dimension_numbers = #tpu.dot_dimension_numbers<[1], [0], [0], [1], [0, 0, 1, 1], [], []>} : vector<16x64xf32>, vector<64x128xf32>, vector<16x128xf32> -> vector<16x128xf32>
    %c3_346 = arith.constant 3 : index
    %c0_347 = arith.constant 0 : index
    %c0_348 = arith.constant 0 : index
    %802 = vector.load %arg16[%c3_346, %c0_347, %c0_348] : memref<4x1x128xf32, #tpu.memory_space<vmem>>, vector<1x1x128xf32>
    %803 = vector.shape_cast %802 : vector<1x1x128xf32> to vector<1x128xf32>
    %804 = vector.broadcast %803 : vector<1x128xf32> to vector<16x128xf32>
    %805 = arith.addf %801, %804 : vector<16x128xf32>
    %cst_349 = arith.constant 5.000000e-01 : f32
    %806 = vector.broadcast %cst_349 : f32 to vector<16x128xf32>
    %807 = arith.mulf %806, %805 : vector<16x128xf32>
    %cst_350 = arith.constant 0.707106769 : f32
    %808 = vector.broadcast %cst_350 : f32 to vector<16x128xf32>
    %809 = arith.mulf %805, %808 : vector<16x128xf32>
    %cst_351 = arith.constant 0.000000e+00 : f32
    %810 = vector.broadcast %cst_351 : f32 to vector<16x128xf32>
    %811 = arith.cmpf oge, %809, %810 : vector<16x128xf32>
    %cst_352 = arith.constant 1.000000e+00 : f32
    %cst_353 = arith.constant -1.000000e+00 : f32
    %812 = vector.broadcast %cst_352 : f32 to vector<16x128xf32>
    %813 = vector.broadcast %cst_353 : f32 to vector<16x128xf32>
    %814 = arith.select %811, %812, %813 : vector<16x128xi1>, vector<16x128xf32>
    %815 = math.absf %809 : vector<16x128xf32>
    %cst_354 = arith.constant 0.327591091 : f32
    %816 = vector.broadcast %cst_354 : f32 to vector<16x128xf32>
    %817 = arith.mulf %816, %815 : vector<16x128xf32>
    %cst_355 = arith.constant 1.000000e+00 : f32
    %818 = vector.broadcast %cst_355 : f32 to vector<16x128xf32>
    %819 = arith.addf %818, %817 : vector<16x128xf32>
    %cst_356 = arith.constant 1.000000e+00 : f32
    %820 = vector.broadcast %cst_356 : f32 to vector<16x128xf32>
    %821 = arith.divf %820, %819 : vector<16x128xf32>
    %cst_357 = arith.constant 1.06140542 : f32
    %822 = vector.broadcast %cst_357 : f32 to vector<16x128xf32>
    %823 = arith.mulf %822, %821 : vector<16x128xf32>
    %cst_358 = arith.constant -1.45315206 : f32
    %824 = vector.broadcast %cst_358 : f32 to vector<16x128xf32>
    %825 = arith.addf %823, %824 : vector<16x128xf32>
    %826 = arith.mulf %825, %821 : vector<16x128xf32>
    %cst_359 = arith.constant 1.42141378 : f32
    %827 = vector.broadcast %cst_359 : f32 to vector<16x128xf32>
    %828 = arith.addf %826, %827 : vector<16x128xf32>
    %829 = arith.mulf %828, %821 : vector<16x128xf32>
    %cst_360 = arith.constant -0.284496725 : f32
    %830 = vector.broadcast %cst_360 : f32 to vector<16x128xf32>
    %831 = arith.addf %829, %830 : vector<16x128xf32>
    %832 = arith.mulf %831, %821 : vector<16x128xf32>
    %cst_361 = arith.constant 0.254829586 : f32
    %833 = vector.broadcast %cst_361 : f32 to vector<16x128xf32>
    %834 = arith.addf %832, %833 : vector<16x128xf32>
    %835 = arith.mulf %834, %821 : vector<16x128xf32>
    %cst_362 = arith.constant 0.000000e+00 : f32
    %836 = vector.broadcast %cst_362 : f32 to vector<16x128xf32>
    %837 = arith.subf %836, %815 : vector<16x128xf32>
    %838 = arith.mulf %837, %815 : vector<16x128xf32>
    %839 = math.exp %838 : vector<16x128xf32>
    %840 = arith.mulf %835, %839 : vector<16x128xf32>
    %cst_363 = arith.constant 1.000000e+00 : f32
    %841 = vector.broadcast %cst_363 : f32 to vector<16x128xf32>
    %842 = arith.subf %841, %840 : vector<16x128xf32>
    %843 = arith.mulf %814, %842 : vector<16x128xf32>
    %cst_364 = arith.constant 1.000000e+00 : f32
    %844 = vector.broadcast %cst_364 : f32 to vector<16x128xf32>
    %845 = arith.addf %844, %843 : vector<16x128xf32>
    %846 = arith.mulf %807, %845 : vector<16x128xf32>
    %c3_365 = arith.constant 3 : index
    %c0_366 = arith.constant 0 : index
    %c0_367 = arith.constant 0 : index
    %847 = vector.load %arg17[%c3_365, %c0_366, %c0_367] : memref<4x128x64xf32, #tpu.memory_space<vmem>>, vector<1x128x64xf32>
    %848 = vector.shape_cast %847 : vector<1x128x64xf32> to vector<128x64xf32>
    %cst_368 = arith.constant dense<0.000000e+00> : vector<16x64xf32>
    %849 = tpu.matmul %846, %848, %cst_368 {dimension_numbers = #tpu.dot_dimension_numbers<[1], [0], [0], [1], [0, 0, 1, 1], [], []>} : vector<16x128xf32>, vector<128x64xf32>, vector<16x64xf32> -> vector<16x64xf32>
    %c3_369 = arith.constant 3 : index
    %c0_370 = arith.constant 0 : index
    %c0_371 = arith.constant 0 : index
    %850 = vector.load %arg18[%c3_369, %c0_370, %c0_371] : memref<4x1x64xf32, #tpu.memory_space<vmem>>, vector<1x1x64xf32>
    %851 = vector.shape_cast %850 : vector<1x1x64xf32> to vector<1x64xf32>
    %852 = vector.broadcast %851 : vector<1x64xf32> to vector<16x64xf32>
    %853 = arith.addf %849, %852 : vector<16x64xf32>
    %854 = arith.addf %798, %853 : vector<16x64xf32>
    %c3_372 = arith.constant 3 : index
    %c0_373 = arith.constant 0 : index
    %c0_374 = arith.constant 0 : index
    %855 = vector.load %arg19[%c3_372, %c0_373, %c0_374] : memref<4x1x64xf32, #tpu.memory_space<vmem>>, vector<1x1x64xf32>
    %856 = vector.shape_cast %855 : vector<1x1x64xf32> to vector<1x64xf32>
    %c3_375 = arith.constant 3 : index
    %c0_376 = arith.constant 0 : index
    %c0_377 = arith.constant 0 : index
    %857 = vector.load %arg20[%c3_375, %c0_376, %c0_377] : memref<4x1x64xf32, #tpu.memory_space<vmem>>, vector<1x1x64xf32>
    %858 = vector.shape_cast %857 : vector<1x1x64xf32> to vector<1x64xf32>
    %cst_378 = arith.constant dense<0.000000e+00> : vector<16xf32>
    %859 = vector.multi_reduction <add>, %854, %cst_378 [1] : vector<16x64xf32> to vector<16xf32>
    %860 = vector.shape_cast %859 : vector<16xf32> to vector<16x1xf32>
    %cst_379 = arith.constant 6.400000e+01 : f32
    %861 = vector.broadcast %cst_379 : f32 to vector<16x1xf32>
    %862 = arith.divf %860, %861 : vector<16x1xf32>
    %863 = vector.broadcast %862 : vector<16x1xf32> to vector<16x64xf32>
    %864 = arith.subf %854, %863 : vector<16x64xf32>
    %865 = arith.mulf %864, %864 : vector<16x64xf32>
    %cst_380 = arith.constant dense<0.000000e+00> : vector<16xf32>
    %866 = vector.multi_reduction <add>, %865, %cst_380 [1] : vector<16x64xf32> to vector<16xf32>
    %867 = vector.shape_cast %866 : vector<16xf32> to vector<16x1xf32>
    %cst_381 = arith.constant 6.400000e+01 : f32
    %868 = vector.broadcast %cst_381 : f32 to vector<16x1xf32>
    %869 = arith.divf %867, %868 : vector<16x1xf32>
    %cst_382 = arith.constant 9.99999974E-6 : f32
    %870 = vector.broadcast %cst_382 : f32 to vector<16x1xf32>
    %871 = arith.addf %869, %870 : vector<16x1xf32>
    %872 = math.rsqrt %871 : vector<16x1xf32>
    %873 = vector.broadcast %872 : vector<16x1xf32> to vector<16x64xf32>
    %874 = arith.mulf %864, %873 : vector<16x64xf32>
    %875 = vector.broadcast %856 : vector<1x64xf32> to vector<16x64xf32>
    %876 = arith.mulf %874, %875 : vector<16x64xf32>
    %877 = vector.broadcast %858 : vector<1x64xf32> to vector<16x64xf32>
    %878 = arith.addf %876, %877 : vector<16x64xf32>
    %cst_383 = arith.constant dense<0.000000e+00> : vector<64xf32>
    %879 = vector.multi_reduction <add>, %878, %cst_383 [0] : vector<16x64xf32> to vector<64xf32>
    %880 = vector.shape_cast %879 : vector<64xf32> to vector<1x64xf32>
    %cst_384 = arith.constant 6.250000e-02 : f32
    %881 = vector.broadcast %cst_384 : f32 to vector<1x64xf32>
    %882 = arith.mulf %880, %881 : vector<1x64xf32>
    %c0_385 = arith.constant 0 : index
    %c0_386 = arith.constant 0 : index
    %883 = vector.load %arg21[%c0_385, %c0_386] : memref<1x64xf32, #tpu.memory_space<vmem>>, vector<1x64xf32>
    %c0_387 = arith.constant 0 : index
    %c0_388 = arith.constant 0 : index
    %884 = vector.load %arg22[%c0_387, %c0_388] : memref<1x64xf32, #tpu.memory_space<vmem>>, vector<1x64xf32>
    %cst_389 = arith.constant dense<0.000000e+00> : vector<1xf32>
    %885 = vector.multi_reduction <add>, %882, %cst_389 [1] : vector<1x64xf32> to vector<1xf32>
    %886 = vector.shape_cast %885 : vector<1xf32> to vector<1x1xf32>
    %cst_390 = arith.constant 6.400000e+01 : f32
    %887 = vector.broadcast %cst_390 : f32 to vector<1x1xf32>
    %888 = arith.divf %886, %887 : vector<1x1xf32>
    %889 = vector.broadcast %888 : vector<1x1xf32> to vector<1x64xf32>
    %890 = arith.subf %882, %889 : vector<1x64xf32>
    %891 = arith.mulf %890, %890 : vector<1x64xf32>
    %cst_391 = arith.constant dense<0.000000e+00> : vector<1xf32>
    %892 = vector.multi_reduction <add>, %891, %cst_391 [1] : vector<1x64xf32> to vector<1xf32>
    %893 = vector.shape_cast %892 : vector<1xf32> to vector<1x1xf32>
    %cst_392 = arith.constant 6.400000e+01 : f32
    %894 = vector.broadcast %cst_392 : f32 to vector<1x1xf32>
    %895 = arith.divf %893, %894 : vector<1x1xf32>
    %cst_393 = arith.constant 9.99999974E-6 : f32
    %896 = vector.broadcast %cst_393 : f32 to vector<1x1xf32>
    %897 = arith.addf %895, %896 : vector<1x1xf32>
    %898 = math.rsqrt %897 : vector<1x1xf32>
    %899 = vector.broadcast %898 : vector<1x1xf32> to vector<1x64xf32>
    %900 = arith.mulf %890, %899 : vector<1x64xf32>
    %901 = arith.mulf %900, %883 : vector<1x64xf32>
    %902 = arith.addf %901, %884 : vector<1x64xf32>
    %c0_394 = arith.constant 0 : index
    %c0_395 = arith.constant 0 : index
    %903 = vector.load %arg23[%c0_394, %c0_395] : memref<64x4xf32, #tpu.memory_space<vmem>>, vector<64x4xf32>
    %cst_396 = arith.constant dense<0.000000e+00> : vector<1x4xf32>
    %904 = tpu.matmul %902, %903, %cst_396 {dimension_numbers = #tpu.dot_dimension_numbers<[1], [0], [0], [1], [0, 0, 1, 1], [], []>} : vector<1x64xf32>, vector<64x4xf32>, vector<1x4xf32> -> vector<1x4xf32>
    %c0_397 = arith.constant 0 : index
    %c0_398 = arith.constant 0 : index
    %905 = vector.load %arg24[%c0_397, %c0_398] : memref<1x4xf32, #tpu.memory_space<vmem>>, vector<1x4xf32>
    %906 = arith.addf %904, %905 : vector<1x4xf32>
    %c0_399 = arith.constant 0 : index
    %c0_400 = arith.constant 0 : index
    %c0_401 = arith.constant 0 : index
    %907 = vector.load %arg29[%c0_399, %c0_400, %c0_401] : memref<1x1x4xf32, #tpu.memory_space<vmem>>, vector<1x1x4xf32>
    %908 = vector.shape_cast %907 : vector<1x1x4xf32> to vector<1x4xf32>
    %909 = vector.shape_cast %906 : vector<1x4xf32> to vector<1x1x4xf32>
    tpu.vector_store %arg29[%c0_399, %c0_400, %c0_401], %909 {strides = array<i32>} : memref<1x1x4xf32, #tpu.memory_space<vmem>>, vector<1x1x4xf32>,
    %c0_402 = arith.constant 0 : index
    %c0_403 = arith.constant 0 : index
    %910 = vector.load %arg25[%c0_402, %c0_403] : memref<1x64xf32, #tpu.memory_space<vmem>>, vector<1x64xf32>
    %c0_404 = arith.constant 0 : index
    %c0_405 = arith.constant 0 : index
    %911 = vector.load %arg26[%c0_404, %c0_405] : memref<1x64xf32, #tpu.memory_space<vmem>>, vector<1x64xf32>
    %cst_406 = arith.constant dense<0.000000e+00> : vector<1xf32>
    %912 = vector.multi_reduction <add>, %882, %cst_406 [1] : vector<1x64xf32> to vector<1xf32>
    %913 = vector.shape_cast %912 : vector<1xf32> to vector<1x1xf32>
    %cst_407 = arith.constant 6.400000e+01 : f32
    %914 = vector.broadcast %cst_407 : f32 to vector<1x1xf32>
    %915 = arith.divf %913, %914 : vector<1x1xf32>
    %916 = vector.broadcast %915 : vector<1x1xf32> to vector<1x64xf32>
    %917 = arith.subf %882, %916 : vector<1x64xf32>
    %918 = arith.mulf %917, %917 : vector<1x64xf32>
    %cst_408 = arith.constant dense<0.000000e+00> : vector<1xf32>
    %919 = vector.multi_reduction <add>, %918, %cst_408 [1] : vector<1x64xf32> to vector<1xf32>
    %920 = vector.shape_cast %919 : vector<1xf32> to vector<1x1xf32>
    %cst_409 = arith.constant 6.400000e+01 : f32
    %921 = vector.broadcast %cst_409 : f32 to vector<1x1xf32>
    %922 = arith.divf %920, %921 : vector<1x1xf32>
    %cst_410 = arith.constant 9.99999974E-6 : f32
    %923 = vector.broadcast %cst_410 : f32 to vector<1x1xf32>
    %924 = arith.addf %922, %923 : vector<1x1xf32>
    %925 = math.rsqrt %924 : vector<1x1xf32>
    %926 = vector.broadcast %925 : vector<1x1xf32> to vector<1x64xf32>
    %927 = arith.mulf %917, %926 : vector<1x64xf32>
    %928 = arith.mulf %927, %910 : vector<1x64xf32>
    %929 = arith.addf %928, %911 : vector<1x64xf32>
    %c0_411 = arith.constant 0 : index
    %c0_412 = arith.constant 0 : index
    %930 = vector.load %arg27[%c0_411, %c0_412] : memref<64x3xf32, #tpu.memory_space<vmem>>, vector<64x3xf32>
    %cst_413 = arith.constant dense<0.000000e+00> : vector<1x3xf32>
    %931 = tpu.matmul %929, %930, %cst_413 {dimension_numbers = #tpu.dot_dimension_numbers<[1], [0], [0], [1], [0, 0, 1, 1], [], []>} : vector<1x64xf32>, vector<64x3xf32>, vector<1x3xf32> -> vector<1x3xf32>
    %c0_414 = arith.constant 0 : index
    %c0_415 = arith.constant 0 : index
    %932 = vector.load %arg28[%c0_414, %c0_415] : memref<1x3xf32, #tpu.memory_space<vmem>>, vector<1x3xf32>
    %933 = arith.addf %931, %932 : vector<1x3xf32>
    %c0_416 = arith.constant 0 : index
    %c0_417 = arith.constant 0 : index
    %c0_418 = arith.constant 0 : index
    %934 = vector.load %arg30[%c0_416, %c0_417, %c0_418] : memref<1x1x3xf32, #tpu.memory_space<vmem>>, vector<1x1x3xf32>
    %935 = vector.shape_cast %934 : vector<1x1x3xf32> to vector<1x3xf32>
    %936 = vector.shape_cast %933 : vector<1x3xf32> to vector<1x1x3xf32>
    tpu.vector_store %arg30[%c0_416, %c0_417, %c0_418], %936 {strides = array<i32>} : memref<1x1x3xf32, #tpu.memory_space<vmem>>, vector<1x1x3xf32>,
    return
  }
  func.func @transform_0(%arg0: i32) -> (i32, i32, i32) {
    %c0_i32 = arith.constant 0 : i32
    %c0_i32_0 = arith.constant 0 : i32
    %c0_i32_1 = arith.constant 0 : i32
    return %arg0, %c0_i32, %c0_i32_0 : i32, i32, i32
  }
  func.func @transform_1(%arg0: i32) -> (i32, i32) {
    %c0_i32 = arith.constant 0 : i32
    %c0_i32_0 = arith.constant 0 : i32
    %c0_i32_1 = arith.constant 0 : i32
    return %c0_i32, %c0_i32_0 : i32, i32
  }
  func.func @transform_2(%arg0: i32) -> (i32, i32) {
    %c0_i32 = arith.constant 0 : i32
    %c0_i32_0 = arith.constant 0 : i32
    %c0_i32_1 = arith.constant 0 : i32
    return %c0_i32, %c0_i32_0 : i32, i32
  }
  func.func @transform_3(%arg0: i32) -> (i32, i32) {
    %c0_i32 = arith.constant 0 : i32
    %c0_i32_0 = arith.constant 0 : i32
    %c0_i32_1 = arith.constant 0 : i32
    return %c0_i32, %c0_i32_0 : i32, i32
  }
  func.func @transform_4(%arg0: i32) -> (i32, i32) {
    %c0_i32 = arith.constant 0 : i32
    %c0_i32_0 = arith.constant 0 : i32
    %c0_i32_1 = arith.constant 0 : i32
    return %c0_i32, %c0_i32_0 : i32, i32
  }
  func.func @transform_5(%arg0: i32) -> (i32, i32) {
    %c0_i32 = arith.constant 0 : i32
    %c0_i32_0 = arith.constant 0 : i32
    %c0_i32_1 = arith.constant 0 : i32
    return %c0_i32, %c0_i32_0 : i32, i32
  }
  func.func @transform_6(%arg0: i32) -> (i32, i32) {
    %c0_i32 = arith.constant 0 : i32
    %c0_i32_0 = arith.constant 0 : i32
    %c0_i32_1 = arith.constant 0 : i32
    return %c0_i32, %c0_i32_0 : i32, i32
  }
  func.func @transform_7(%arg0: i32) -> (i32, i32) {
    %c0_i32 = arith.constant 0 : i32
    %c0_i32_0 = arith.constant 0 : i32
    %c0_i32_1 = arith.constant 0 : i32
    return %c0_i32, %c0_i32_0 : i32, i32
  }
  func.func @transform_8(%arg0: i32) -> (i32, i32, i32) {
    %c0_i32 = arith.constant 0 : i32
    %c0_i32_0 = arith.constant 0 : i32
    %c0_i32_1 = arith.constant 0 : i32
    %c0_i32_2 = arith.constant 0 : i32
    return %c0_i32, %c0_i32_0, %c0_i32_1 : i32, i32, i32
  }
  func.func @transform_9(%arg0: i32) -> (i32, i32, i32) {
    %c0_i32 = arith.constant 0 : i32
    %c0_i32_0 = arith.constant 0 : i32
    %c0_i32_1 = arith.constant 0 : i32
    %c0_i32_2 = arith.constant 0 : i32
    return %c0_i32, %c0_i32_0, %c0_i32_1 : i32, i32, i32
  }
  func.func @transform_10(%arg0: i32) -> (i32, i32, i32) {
    %c0_i32 = arith.constant 0 : i32
    %c0_i32_0 = arith.constant 0 : i32
    %c0_i32_1 = arith.constant 0 : i32
    %c0_i32_2 = arith.constant 0 : i32
    return %c0_i32, %c0_i32_0, %c0_i32_1 : i32, i32, i32
  }
  func.func @transform_11(%arg0: i32) -> (i32, i32, i32) {
    %c0_i32 = arith.constant 0 : i32
    %c0_i32_0 = arith.constant 0 : i32
    %c0_i32_1 = arith.constant 0 : i32
    %c0_i32_2 = arith.constant 0 : i32
    return %c0_i32, %c0_i32_0, %c0_i32_1 : i32, i32, i32
  }
  func.func @transform_12(%arg0: i32) -> (i32, i32, i32) {
    %c0_i32 = arith.constant 0 : i32
    %c0_i32_0 = arith.constant 0 : i32
    %c0_i32_1 = arith.constant 0 : i32
    %c0_i32_2 = arith.constant 0 : i32
    return %c0_i32, %c0_i32_0, %c0_i32_1 : i32, i32, i32
  }
  func.func @transform_13(%arg0: i32) -> (i32, i32, i32) {
    %c0_i32 = arith.constant 0 : i32
    %c0_i32_0 = arith.constant 0 : i32
    %c0_i32_1 = arith.constant 0 : i32
    %c0_i32_2 = arith.constant 0 : i32
    return %c0_i32, %c0_i32_0, %c0_i32_1 : i32, i32, i32
  }
  func.func @transform_14(%arg0: i32) -> (i32, i32, i32) {
    %c0_i32 = arith.constant 0 : i32
    %c0_i32_0 = arith.constant 0 : i32
    %c0_i32_1 = arith.constant 0 : i32
    %c0_i32_2 = arith.constant 0 : i32
    return %c0_i32, %c0_i32_0, %c0_i32_1 : i32, i32, i32
  }
  func.func @transform_15(%arg0: i32) -> (i32, i32, i32) {
    %c0_i32 = arith.constant 0 : i32
    %c0_i32_0 = arith.constant 0 : i32
    %c0_i32_1 = arith.constant 0 : i32
    %c0_i32_2 = arith.constant 0 : i32
    return %c0_i32, %c0_i32_0, %c0_i32_1 : i32, i32, i32
  }
  func.func @transform_16(%arg0: i32) -> (i32, i32, i32) {
    %c0_i32 = arith.constant 0 : i32
    %c0_i32_0 = arith.constant 0 : i32
    %c0_i32_1 = arith.constant 0 : i32
    %c0_i32_2 = arith.constant 0 : i32
    return %c0_i32, %c0_i32_0, %c0_i32_1 : i32, i32, i32
  }
  func.func @transform_17(%arg0: i32) -> (i32, i32, i32) {
    %c0_i32 = arith.constant 0 : i32
    %c0_i32_0 = arith.constant 0 : i32
    %c0_i32_1 = arith.constant 0 : i32
    %c0_i32_2 = arith.constant 0 : i32
    return %c0_i32, %c0_i32_0, %c0_i32_1 : i32, i32, i32
  }
  func.func @transform_18(%arg0: i32) -> (i32, i32, i32) {
    %c0_i32 = arith.constant 0 : i32
    %c0_i32_0 = arith.constant 0 : i32
    %c0_i32_1 = arith.constant 0 : i32
    %c0_i32_2 = arith.constant 0 : i32
    return %c0_i32, %c0_i32_0, %c0_i32_1 : i32, i32, i32
  }
  func.func @transform_19(%arg0: i32) -> (i32, i32, i32) {
    %c0_i32 = arith.constant 0 : i32
    %c0_i32_0 = arith.constant 0 : i32
    %c0_i32_1 = arith.constant 0 : i32
    %c0_i32_2 = arith.constant 0 : i32
    return %c0_i32, %c0_i32_0, %c0_i32_1 : i32, i32, i32
  }
  func.func @transform_20(%arg0: i32) -> (i32, i32) {
    %c0_i32 = arith.constant 0 : i32
    %c0_i32_0 = arith.constant 0 : i32
    %c0_i32_1 = arith.constant 0 : i32
    return %c0_i32, %c0_i32_0 : i32, i32
  }
  func.func @transform_21(%arg0: i32) -> (i32, i32) {
    %c0_i32 = arith.constant 0 : i32
    %c0_i32_0 = arith.constant 0 : i32
    %c0_i32_1 = arith.constant 0 : i32
    return %c0_i32, %c0_i32_0 : i32, i32
  }
  func.func @transform_22(%arg0: i32) -> (i32, i32) {
    %c0_i32 = arith.constant 0 : i32
    %c0_i32_0 = arith.constant 0 : i32
    %c0_i32_1 = arith.constant 0 : i32
    return %c0_i32, %c0_i32_0 : i32, i32
  }
  func.func @transform_23(%arg0: i32) -> (i32, i32) {
    %c0_i32 = arith.constant 0 : i32
    %c0_i32_0 = arith.constant 0 : i32
    %c0_i32_1 = arith.constant 0 : i32
    return %c0_i32, %c0_i32_0 : i32, i32
  }
  func.func @transform_24(%arg0: i32) -> (i32, i32) {
    %c0_i32 = arith.constant 0 : i32
    %c0_i32_0 = arith.constant 0 : i32
    %c0_i32_1 = arith.constant 0 : i32
    return %c0_i32, %c0_i32_0 : i32, i32
  }
  func.func @transform_25(%arg0: i32) -> (i32, i32) {
    %c0_i32 = arith.constant 0 : i32
    %c0_i32_0 = arith.constant 0 : i32
    %c0_i32_1 = arith.constant 0 : i32
    return %c0_i32, %c0_i32_0 : i32, i32
  }
  func.func @transform_26(%arg0: i32) -> (i32, i32) {
    %c0_i32 = arith.constant 0 : i32
    %c0_i32_0 = arith.constant 0 : i32
    %c0_i32_1 = arith.constant 0 : i32
    return %c0_i32, %c0_i32_0 : i32, i32
  }
  func.func @transform_27(%arg0: i32) -> (i32, i32) {
    %c0_i32 = arith.constant 0 : i32
    %c0_i32_0 = arith.constant 0 : i32
    %c0_i32_1 = arith.constant 0 : i32
    return %c0_i32, %c0_i32_0 : i32, i32
  }
  func.func @transform_28(%arg0: i32) -> (i32, i32, i32) {
    %c0_i32 = arith.constant 0 : i32
    %c0_i32_0 = arith.constant 0 : i32
    %c0_i32_1 = arith.constant 0 : i32
    return %arg0, %c0_i32, %c0_i32_0 : i32, i32, i32
  }
  func.func @transform_29(%arg0: i32) -> (i32, i32, i32) {
    %c0_i32 = arith.constant 0 : i32
    %c0_i32_0 = arith.constant 0 : i32
    %c0_i32_1 = arith.constant 0 : i32
    return %arg0, %c0_i32, %c0_i32_0 : i32, i32, i32
  }
}

</mosaic_0001>

<llo_original>
// kernel: dsvit_forward.1
$region0: #{dsvit_forward.1}
  #allocation0 [shape = 'u32[]', space=smem, size = 0x4, offset = 0x4, fixed_abs, tag = 'smem constant byte address 0x4 - core index']
  #allocation1 [shape = 'u32[72,128]{1,0:T(1,128)}', space=vmem, size = 0x9000, scoped, tag = 'internal scratch']
  %s0 = inlined_call_operand.smem [shape: u32[30], index: -1, kind: input, shape index: {}]
  %s1 = sld [smem:[%s0]]
  %s2 = scalar_lea.smem %s0, 1
  %s3 = sld [smem:[%s2]]
  %s4 = scalar_lea.smem %s0, 2
  %s5 = sld [smem:[%s4]]
  %s6 = scalar_lea.smem %s0, 3
  %s7 = sld [smem:[%s6]]
  %s8 = scalar_lea.smem %s0, 4
  %s9 = sld [smem:[%s8]]
  %s10 = scalar_lea.smem %s0, 5
  %s11 = sld [smem:[%s10]]
  %s12 = scalar_lea.smem %s0, 6
  %s13 = sld [smem:[%s12]]
  %s14 = scalar_lea.smem %s0, 7
  %s15 = sld [smem:[%s14]]
  %s16 = scalar_lea.smem %s0, 8
  %s17 = sld [smem:[%s16]]
  %s18 = scalar_lea.smem %s0, 9
  %s19 = sld [smem:[%s18]]
  %s20 = scalar_lea.smem %s0, 10
  %s21 = sld [smem:[%s20]]
  %s22 = scalar_lea.smem %s0, 11
  %s23 = sld [smem:[%s22]]
  %s24 = scalar_lea.smem %s0, 12
  %s25 = sld [smem:[%s24]]
  %s26 = scalar_lea.smem %s0, 13
  %s27 = sld [smem:[%s26]]
  %s28 = scalar_lea.smem %s0, 14
  %s29 = sld [smem:[%s28]]
  %s30 = scalar_lea.smem %s0, 15
  %s31 = sld [smem:[%s30]]
  %s32 = scalar_lea.smem %s0, 16
  %s33 = sld [smem:[%s32]]
  %s34 = scalar_lea.smem %s0, 17
  %s35 = sld [smem:[%s34]]
  %s36 = scalar_lea.smem %s0, 18
  %s37 = sld [smem:[%s36]]
  %s38 = scalar_lea.smem %s0, 19
  %s39 = sld [smem:[%s38]]
  %s40 = scalar_lea.smem %s0, 20
  %s41 = sld [smem:[%s40]]
  %s42 = scalar_lea.smem %s0, 21
  %s43 = sld [smem:[%s42]]
  %s44 = scalar_lea.smem %s0, 22
  %s45 = sld [smem:[%s44]]
  %s46 = scalar_lea.smem %s0, 23
  %s47 = sld [smem:[%s46]]
  %s48 = scalar_lea.smem %s0, 24
  %s49 = sld [smem:[%s48]]
  %s50 = scalar_lea.smem %s0, 25
  %s51 = sld [smem:[%s50]]
  %s52 = scalar_lea.smem %s0, 26
  %s53 = sld [smem:[%s52]]
  %s54 = scalar_lea.smem %s0, 27
  %s55 = sld [smem:[%s54]]
  %s56 = scalar_lea.smem %s0, 28
  %s57 = sld [smem:[%s56]]
  %s58 = scalar_lea.smem %s0, 29
  %s59 = sld [smem:[%s58]]
  %60 = xla_tuple %s57, %s59
  %s61 = sld [smem:[#allocation0]]
  $region157: #{dsvit_forward.1} parent=0
    _
  %s63 = ssub.s32 1, %s61
  %s64 = scalar_select 0, %s63, %s61
  $region1: #{dsvit_forward.1} parent=0
    #allocation2 [shape = 'u8[131072]{0}', space=vmem, size = 0x20000, scoped, tag = 'input window, operand 14, single buffered']
    #allocation3 [shape = 's32[2]{0}', space=sflag, size = 0x8, scoped, tag = 'scoped memory for dsvit_forward.1']
    #allocation4 [shape = 's32[2]{0}', space=sflag, size = 0x8, scoped, tag = 'scoped memory for dsvit_forward.1']
    #allocation5 [shape = 'u8[1024]{0}', space=vmem, size = 0x400, scoped, tag = 'output window, operand 0']
    #allocation6 [shape = 'u8[1024]{0}', space=vmem, size = 0x400, scoped, tag = 'output window, operand 1']
    #allocation7 [shape = 's32[2]{0}', space=sflag, size = 0x8, scoped, tag = 'scoped memory for dsvit_forward.1']
    %65 = vsyncpa [#allocation3], 0
    %66 = vsyncpa [#allocation4], 0
    %s67 = scalar_lea.sflag [#allocation4], 1
    %68 = vsyncpa %s67, 0
    %69 = vsyncpa [#allocation7], 0
    %s70 = scalar_lea.sflag [#allocation7], 1
    %71 = vsyncpa %s70, 0
    loop: start=0, step=1, limit=4
    $region2: #{dsvit_forward.1} parent=1 // loop_pre_header
      _
    $region3: #{dsvit_forward.1} parent=1 // loop_header
      %s73 = sphi 0, %s77
      %p74 = scmp.ge.s32.totalorder %s73, 4
      %s83 = sphi 0, %s85
      %s86 = sphi 0, %s83
      %s87 = sphi 0, %s86
      %s103 = sphi 0, %s87
      %s107 = sphi 0, %s107
      %s109 = sphi 0, %s107
      %s110 = sphi 0, %s109
      %s124 = sphi 0, %s110
      %s128 = sphi 0, %s128
      %s130 = sphi 0, %s128
      %s131 = sphi 0, %s130
      %s145 = sphi 0, %s131
      %s149 = sphi 0, %s149
      %s151 = sphi 0, %s149
      %s152 = sphi 0, %s151
      %s166 = sphi 0, %s152
      %s170 = sphi 0, %s170
      %s172 = sphi 0, %s170
      %s173 = sphi 0, %s172
      %s187 = sphi 0, %s173
      %s191 = sphi 0, %s191
      %s193 = sphi 0, %s191
      %s194 = sphi 0, %s193
      %s208 = sphi 0, %s194
      %s212 = sphi 0, %s212
      %s214 = sphi 0, %s212
      %s215 = sphi 0, %s214
      %s229 = sphi 0, %s215
      %s233 = sphi 0, %s233
      %s235 = sphi 0, %s233
      %s236 = sphi 0, %s235
      %s250 = sphi 0, %s236
      %s254 = sphi 0, %s254
      %s256 = sphi 0, %s254
      %s257 = sphi 0, %s256
      %s271 = sphi 0, %s257
      %s275 = sphi 0, %s275
      %s277 = sphi 0, %s275
      %s278 = sphi 0, %s277
      %s292 = sphi 0, %s278
      %s296 = sphi 0, %s296
      %s298 = sphi 0, %s296
      %s299 = sphi 0, %s298
      %s313 = sphi 0, %s299
      %s317 = sphi 0, %s317
      %s319 = sphi 0, %s317
      %s320 = sphi 0, %s319
      %s334 = sphi 0, %s320
      %s338 = sphi 0, %s338
      %s340 = sphi 0, %s338
      %s341 = sphi 0, %s340
      %s355 = sphi 0, %s341
      %s359 = sphi 0, %s359
      %s361 = sphi 0, %s359
      %s362 = sphi 0, %s361
      %s376 = sphi 0, %s362
      %s380 = sphi 0, %s380
      %s382 = sphi 0, %s380
      %s383 = sphi 0, %s382
      %s397 = sphi 0, %s383
      %s401 = sphi 0, %s401
      %s403 = sphi 0, %s401
      %s404 = sphi 0, %s403
      %s418 = sphi 0, %s404
      %s422 = sphi 0, %s422
      %s424 = sphi 0, %s422
      %s425 = sphi 0, %s424
      %s439 = sphi 0, %s425
      %s443 = sphi 0, %s443
      %s445 = sphi 0, %s443
      %s446 = sphi 0, %s445
      %s460 = sphi 0, %s446
      %s464 = sphi 0, %s464
      %s466 = sphi 0, %s464
      %s467 = sphi 0, %s466
      %s481 = sphi 0, %s467
      %s485 = sphi 0, %s485
      %s487 = sphi 0, %s485
      %s488 = sphi 0, %s487
      %s502 = sphi 0, %s488
      %s506 = sphi 0, %s506
      %s508 = sphi 0, %s506
      %s509 = sphi 0, %s508
      %s523 = sphi 0, %s509
      %s527 = sphi 0, %s527
      %s529 = sphi 0, %s527
      %s530 = sphi 0, %s529
      %s544 = sphi 0, %s530
      %s548 = sphi 0, %s548
      %s550 = sphi 0, %s548
      %s551 = sphi 0, %s550
      %s565 = sphi 0, %s551
      %s569 = sphi 0, %s569
      %s571 = sphi 0, %s569
      %s572 = sphi 0, %s571
      %s586 = sphi 0, %s572
      %s590 = sphi 0, %s590
      %s592 = sphi 0, %s590
      %s593 = sphi 0, %s592
      %s607 = sphi 0, %s593
      %s611 = sphi 0, %s611
      %s613 = sphi 0, %s611
      %s614 = sphi 0, %s613
      %s628 = sphi 0, %s614
      %s632 = sphi 0, %s632
      %s634 = sphi 0, %s632
      %s635 = sphi 0, %s634
      %s649 = sphi 0, %s635
      %s653 = sphi 0, %s653
      %s655 = sphi 0, %s653
      %s656 = sphi 0, %s655
      %s670 = sphi 0, %s656
      %s676 = sphi 0, %s678
      %s679 = sphi 0, %s676
      %s680 = sphi 0, %s679
      %s696 = sphi 0, %s680
      %s702 = sphi 0, %s704
      %s705 = sphi 0, %s702
      %s706 = sphi 0, %s705
      %s722 = sphi 0, %s706
    $region4: #{dsvit_forward.1} parent=1 // loop_header_branch
      %76 = sbr.rel (%p74) target = $region8
    $region5: #{dsvit_forward.1} parent=1 // loop_body
      %s78 = ssub.s32 %s73, 1
      %s79 = ssub.s32 %s73, 2
      %s80 = sadd.s32 %s73, 1
      %s81 = ssub.s32 %s73, %s80
      %p82 = scmp.eq.s32.totalorder %s81, 0
      %s84 = sadd.s32 %s83, 1
      %s85 = scalar_select %p82, %s83, %s84
      %p88 = pneg %p82
      %p89 = scmp.eq.s32.totalorder %s73, 1
      %p90 = por %p88, %p89
      %p91 = scmp.ne.s32.totalorder %s83, %s86
      %p92 = scmp.eq.s32.totalorder %s73, 0
      %p93 = por %p91, %p92
      %p94 = scmp.ne.s32.totalorder %s83, %s86
      %p95 = scmp.eq.s32.totalorder %s78, 1
      %p96 = por %p94, %p95
      %p97 = scmp.ne.s32.totalorder %s86, %s87
      %p98 = scmp.eq.s32.totalorder %s78, 0
      %p99 = por %p97, %p98
      %p100 = scmp.ne.s32.totalorder %s86, %s87
      %p101 = scmp.eq.s32.totalorder %s79, 1
      %p102 = por %p100, %p101
      %p104 = scmp.ne.s32.totalorder %s87, %s103
      %p105 = scmp.eq.s32.totalorder %s79, 0
      %p106 = por %p104, %p105
      %s108 = sadd.s32 %s107, 1
      %p111 = scmp.eq.s32.totalorder %s73, 1
      %p112 = scmp.ne.s32.totalorder %s107, %s109
      %p113 = scmp.eq.s32.totalorder %s73, 0
      %p114 = por %p112, %p113
      %p115 = scmp.ne.s32.totalorder %s107, %s109
      %p116 = scmp.eq.s32.totalorder %s78, 1
      %p117 = por %p115, %p116
      %p118 = scmp.ne.s32.totalorder %s109, %s110
      %p119 = scmp.eq.s32.totalorder %s78, 0
      %p120 = por %p118, %p119
      %p121 = scmp.ne.s32.totalorder %s109, %s110
      %p122 = scmp.eq.s32.totalorder %s79, 1
      %p123 = por %p121, %p122
      %p125 = scmp.ne.s32.totalorder %s110, %s124
      %p126 = scmp.eq.s32.totalorder %s79, 0
      %p127 = por %p125, %p126
      %s129 = sadd.s32 %s128, 1
      %p132 = scmp.eq.s32.totalorder %s73, 1
      %p133 = scmp.ne.s32.totalorder %s128, %s130
      %p134 = scmp.eq.s32.totalorder %s73, 0
      %p135 = por %p133, %p134
      %p136 = scmp.ne.s32.totalorder %s128, %s130
      %p137 = scmp.eq.s32.totalorder %s78, 1
      %p138 = por %p136, %p137
      %p139 = scmp.ne.s32.totalorder %s130, %s131
      %p140 = scmp.eq.s32.totalorder %s78, 0
      %p141 = por %p139, %p140
      %p142 = scmp.ne.s32.totalorder %s130, %s131
      %p143 = scmp.eq.s32.totalorder %s79, 1
      %p144 = por %p142, %p143
      %p146 = scmp.ne.s32.totalorder %s131, %s145
      %p147 = scmp.eq.s32.totalorder %s79, 0
      %p148 = por %p146, %p147
      %s150 = sadd.s32 %s149, 1
      %p153 = scmp.eq.s32.totalorder %s73, 1
      %p154 = scmp.ne.s32.totalorder %s149, %s151
      %p155 = scmp.eq.s32.totalorder %s73, 0
      %p156 = por %p154, %p155
      %p157 = scmp.ne.s32.totalorder %s149, %s151
      %p158 = scmp.eq.s32.totalorder %s78, 1
      %p159 = por %p157, %p158
      %p160 = scmp.ne.s32.totalorder %s151, %s152
      %p161 = scmp.eq.s32.totalorder %s78, 0
      %p162 = por %p160, %p161
      %p163 = scmp.ne.s32.totalorder %s151, %s152
      %p164 = scmp.eq.s32.totalorder %s79, 1
      %p165 = por %p163, %p164
      %p167 = scmp.ne.s32.totalorder %s152, %s166
      %p168 = scmp.eq.s32.totalorder %s79, 0
      %p169 = por %p167, %p168
      %s171 = sadd.s32 %s170, 1
      %p174 = scmp.eq.s32.totalorder %s73, 1
      %p175 = scmp.ne.s32.totalorder %s170, %s172
      %p176 = scmp.eq.s32.totalorder %s73, 0
      %p177 = por %p175, %p176
      %p178 = scmp.ne.s32.totalorder %s170, %s172
      %p179 = scmp.eq.s32.totalorder %s78, 1
      %p180 = por %p178, %p179
      %p181 = scmp.ne.s32.totalorder %s172, %s173
      %p182 = scmp.eq.s32.totalorder %s78, 0
      %p183 = por %p181, %p182
      %p184 = scmp.ne.s32.totalorder %s172, %s173
      %p185 = scmp.eq.s32.totalorder %s79, 1
      %p186 = por %p184, %p185
      %p188 = scmp.ne.s32.totalorder %s173, %s187
      %p189 = scmp.eq.s32.totalorder %s79, 0
      %p190 = por %p188, %p189
      %s192 = sadd.s32 %s191, 1
      %p195 = scmp.eq.s32.totalorder %s73, 1
      %p196 = scmp.ne.s32.totalorder %s191, %s193
      %p197 = scmp.eq.s32.totalorder %s73, 0
      %p198 = por %p196, %p197
      %p199 = scmp.ne.s32.totalorder %s191, %s193
      %p200 = scmp.eq.s32.totalorder %s78, 1
      %p201 = por %p199, %p200
      %p202 = scmp.ne.s32.totalorder %s193, %s194
      %p203 = scmp.eq.s32.totalorder %s78, 0
      %p204 = por %p202, %p203
      %p205 = scmp.ne.s32.totalorder %s193, %s194
      %p206 = scmp.eq.s32.totalorder %s79, 1
      %p207 = por %p205, %p206
      %p209 = scmp.ne.s32.totalorder %s194, %s208
      %p210 = scmp.eq.s32.totalorder %s79, 0
      %p211 = por %p209, %p210
      %s213 = sadd.s32 %s212, 1
      %p216 = scmp.eq.s32.totalorder %s73, 1
      %p217 = scmp.ne.s32.totalorder %s212, %s214
      %p218 = scmp.eq.s32.totalorder %s73, 0
      %p219 = por %p217, %p218
      %p220 = scmp.ne.s32.totalorder %s212, %s214
      %p221 = scmp.eq.s32.totalorder %s78, 1
      %p222 = por %p220, %p221
      %p223 = scmp.ne.s32.totalorder %s214, %s215
      %p224 = scmp.eq.s32.totalorder %s78, 0
      %p225 = por %p223, %p224
      %p226 = scmp.ne.s32.totalorder %s214, %s215
      %p227 = scmp.eq.s32.totalorder %s79, 1
      %p228 = por %p226, %p227
      %p230 = scmp.ne.s32.totalorder %s215, %s229
      %p231 = scmp.eq.s32.totalorder %s79, 0
      %p232 = por %p230, %p231
      %s234 = sadd.s32 %s233, 1
      %p237 = scmp.eq.s32.totalorder %s73, 1
      %p238 = scmp.ne.s32.totalorder %s233, %s235
      %p239 = scmp.eq.s32.totalorder %s73, 0
      %p240 = por %p238, %p239
      %p241 = scmp.ne.s32.totalorder %s233, %s235
      %p242 = scmp.eq.s32.totalorder %s78, 1
      %p243 = por %p241, %p242
      %p244 = scmp.ne.s32.totalorder %s235, %s236
      %p245 = scmp.eq.s32.totalorder %s78, 0
      %p246 = por %p244, %p245
      %p247 = scmp.ne.s32.totalorder %s235, %s236
      %p248 = scmp.eq.s32.totalorder %s79, 1
      %p249 = por %p247, %p248
      %p251 = scmp.ne.s32.totalorder %s236, %s250
      %p252 = scmp.eq.s32.totalorder %s79, 0
      %p253 = por %p251, %p252
      %s255 = sadd.s32 %s254, 1
      %p258 = scmp.eq.s32.totalorder %s73, 1
      %p259 = scmp.ne.s32.totalorder %s254, %s256
      %p260 = scmp.eq.s32.totalorder %s73, 0
      %p261 = por %p259, %p260
      %p262 = scmp.ne.s32.totalorder %s254, %s256
      %p263 = scmp.eq.s32.totalorder %s78, 1
      %p264 = por %p262, %p263
      %p265 = scmp.ne.s32.totalorder %s256, %s257
      %p266 = scmp.eq.s32.totalorder %s78, 0
      %p267 = por %p265, %p266
      %p268 = scmp.ne.s32.totalorder %s256, %s257
      %p269 = scmp.eq.s32.totalorder %s79, 1
      %p270 = por %p268, %p269
      %p272 = scmp.ne.s32.totalorder %s257, %s271
      %p273 = scmp.eq.s32.totalorder %s79, 0
      %p274 = por %p272, %p273
      %s276 = sadd.s32 %s275, 1
      %p279 = scmp.eq.s32.totalorder %s73, 1
      %p280 = scmp.ne.s32.totalorder %s275, %s277
      %p281 = scmp.eq.s32.totalorder %s73, 0
      %p282 = por %p280, %p281
      %p283 = scmp.ne.s32.totalorder %s275, %s277
      %p284 = scmp.eq.s32.totalorder %s78, 1
      %p285 = por %p283, %p284
      %p286 = scmp.ne.s32.totalorder %s277, %s278
      %p287 = scmp.eq.s32.totalorder %s78, 0
      %p288 = por %p286, %p287
      %p289 = scmp.ne.s32.totalorder %s277, %s278
      %p290 = scmp.eq.s32.totalorder %s79, 1
      %p291 = por %p289, %p290
      %p293 = scmp.ne.s32.totalorder %s278, %s292
      %p294 = scmp.eq.s32.totalorder %s79, 0
      %p295 = por %p293, %p294
      %s297 = sadd.s32 %s296, 1
      %p300 = scmp.eq.s32.totalorder %s73, 1
      %p301 = scmp.ne.s32.totalorder %s296, %s298
      %p302 = scmp.eq.s32.totalorder %s73, 0
      %p303 = por %p301, %p302
      %p304 = scmp.ne.s32.totalorder %s296, %s298
      %p305 = scmp.eq.s32.totalorder %s78, 1
      %p306 = por %p304, %p305
      %p307 = scmp.ne.s32.totalorder %s298, %s299
      %p308 = scmp.eq.s32.totalorder %s78, 0
      %p309 = por %p307, %p308
      %p310 = scmp.ne.s32.totalorder %s298, %s299
      %p311 = scmp.eq.s32.totalorder %s79, 1
      %p312 = por %p310, %p311
      %p314 = scmp.ne.s32.totalorder %s299, %s313
      %p315 = scmp.eq.s32.totalorder %s79, 0
      %p316 = por %p314, %p315
      %s318 = sadd.s32 %s317, 1
      %p321 = scmp.eq.s32.totalorder %s73, 1
      %p322 = scmp.ne.s32.totalorder %s317, %s319
      %p323 = scmp.eq.s32.totalorder %s73, 0
      %p324 = por %p322, %p323
      %p325 = scmp.ne.s32.totalorder %s317, %s319
      %p326 = scmp.eq.s32.totalorder %s78, 1
      %p327 = por %p325, %p326
      %p328 = scmp.ne.s32.totalorder %s319, %s320
      %p329 = scmp.eq.s32.totalorder %s78, 0
      %p330 = por %p328, %p329
      %p331 = scmp.ne.s32.totalorder %s319, %s320
      %p332 = scmp.eq.s32.totalorder %s79, 1
      %p333 = por %p331, %p332
      %p335 = scmp.ne.s32.totalorder %s320, %s334
      %p336 = scmp.eq.s32.totalorder %s79, 0
      %p337 = por %p335, %p336
      %s339 = sadd.s32 %s338, 1
      %p342 = scmp.eq.s32.totalorder %s73, 1
      %p343 = scmp.ne.s32.totalorder %s338, %s340
      %p344 = scmp.eq.s32.totalorder %s73, 0
      %p345 = por %p343, %p344
      %p346 = scmp.ne.s32.totalorder %s338, %s340
      %p347 = scmp.eq.s32.totalorder %s78, 1
      %p348 = por %p346, %p347
      %p349 = scmp.ne.s32.totalorder %s340, %s341
      %p350 = scmp.eq.s32.totalorder %s78, 0
      %p351 = por %p349, %p350
      %p352 = scmp.ne.s32.totalorder %s340, %s341
      %p353 = scmp.eq.s32.totalorder %s79, 1
      %p354 = por %p352, %p353
      %p356 = scmp.ne.s32.totalorder %s341, %s355
      %p357 = scmp.eq.s32.totalorder %s79, 0
      %p358 = por %p356, %p357
      %s360 = sadd.s32 %s359, 1
      %p363 = scmp.eq.s32.totalorder %s73, 1
      %p364 = scmp.ne.s32.totalorder %s359, %s361
      %p365 = scmp.eq.s32.totalorder %s73, 0
      %p366 = por %p364, %p365
      %p367 = scmp.ne.s32.totalorder %s359, %s361
      %p368 = scmp.eq.s32.totalorder %s78, 1
      %p369 = por %p367, %p368
      %p370 = scmp.ne.s32.totalorder %s361, %s362
      %p371 = scmp.eq.s32.totalorder %s78, 0
      %p372 = por %p370, %p371
      %p373 = scmp.ne.s32.totalorder %s361, %s362
      %p374 = scmp.eq.s32.totalorder %s79, 1
      %p375 = por %p373, %p374
      %p377 = scmp.ne.s32.totalorder %s362, %s376
      %p378 = scmp.eq.s32.totalorder %s79, 0
      %p379 = por %p377, %p378
      %s381 = sadd.s32 %s380, 1
      %p384 = scmp.eq.s32.totalorder %s73, 1
      %p385 = scmp.ne.s32.totalorder %s380, %s382
      %p386 = scmp.eq.s32.totalorder %s73, 0
      %p387 = por %p385, %p386
      %p388 = scmp.ne.s32.totalorder %s380, %s382
      %p389 = scmp.eq.s32.totalorder %s78, 1
      %p390 = por %p388, %p389
      %p391 = scmp.ne.s32.totalorder %s382, %s383
      %p392 = scmp.eq.s32.totalorder %s78, 0
      %p393 = por %p391, %p392
      %p394 = scmp.ne.s32.totalorder %s382, %s383
      %p395 = scmp.eq.s32.totalorder %s79, 1
      %p396 = por %p394, %p395
      %p398 = scmp.ne.s32.totalorder %s383, %s397
      %p399 = scmp.eq.s32.totalorder %s79, 0
      %p400 = por %p398, %p399
      %s402 = sadd.s32 %s401, 1
      %p405 = scmp.eq.s32.totalorder %s73, 1
      %p406 = scmp.ne.s32.totalorder %s401, %s403
      %p407 = scmp.eq.s32.totalorder %s73, 0
      %p408 = por %p406, %p407
      %p409 = scmp.ne.s32.totalorder %s401, %s403
      %p410 = scmp.eq.s32.totalorder %s78, 1
      %p411 = por %p409, %p410
      %p412 = scmp.ne.s32.totalorder %s403, %s404
      %p413 = scmp.eq.s32.totalorder %s78, 0
      %p414 = por %p412, %p413
      %p415 = scmp.ne.s32.totalorder %s403, %s404
      %p416 = scmp.eq.s32.totalorder %s79, 1
      %p417 = por %p415, %p416
      %p419 = scmp.ne.s32.totalorder %s404, %s418
      %p420 = scmp.eq.s32.totalorder %s79, 0
      %p421 = por %p419, %p420
      %s423 = sadd.s32 %s422, 1
      %p426 = scmp.eq.s32.totalorder %s73, 1
      %p427 = scmp.ne.s32.totalorder %s422, %s424
      %p428 = scmp.eq.s32.totalorder %s73, 0
      %p429 = por %p427, %p428
      %p430 = scmp.ne.s32.totalorder %s422, %s424
      %p431 = scmp.eq.s32.totalorder %s78, 1
      %p432 = por %p430, %p431
      %p433 = scmp.ne.s32.totalorder %s424, %s425
      %p434 = scmp.eq.s32.totalorder %s78, 0
      %p435 = por %p433, %p434
      %p436 = scmp.ne.s32.totalorder %s424, %s425
      %p437 = scmp.eq.s32.totalorder %s79, 1
      %p438 = por %p436, %p437
      %p440 = scmp.ne.s32.totalorder %s425, %s439
      %p441 = scmp.eq.s32.totalorder %s79, 0
      %p442 = por %p440, %p441
      %s444 = sadd.s32 %s443, 1
      %p447 = scmp.eq.s32.totalorder %s73, 1
      %p448 = scmp.ne.s32.totalorder %s443, %s445
      %p449 = scmp.eq.s32.totalorder %s73, 0
      %p450 = por %p448, %p449
      %p451 = scmp.ne.s32.totalorder %s443, %s445
      %p452 = scmp.eq.s32.totalorder %s78, 1
      %p453 = por %p451, %p452
      %p454 = scmp.ne.s32.totalorder %s445, %s446
      %p455 = scmp.eq.s32.totalorder %s78, 0
      %p456 = por %p454, %p455
      %p457 = scmp.ne.s32.totalorder %s445, %s446
      %p458 = scmp.eq.s32.totalorder %s79, 1
      %p459 = por %p457, %p458
      %p461 = scmp.ne.s32.totalorder %s446, %s460
      %p462 = scmp.eq.s32.totalorder %s79, 0
      %p463 = por %p461, %p462
      %s465 = sadd.s32 %s464, 1
      %p468 = scmp.eq.s32.totalorder %s73, 1
      %p469 = scmp.ne.s32.totalorder %s464, %s466
      %p470 = scmp.eq.s32.totalorder %s73, 0
      %p471 = por %p469, %p470
      %p472 = scmp.ne.s32.totalorder %s464, %s466
      %p473 = scmp.eq.s32.totalorder %s78, 1
      %p474 = por %p472, %p473
      %p475 = scmp.ne.s32.totalorder %s466, %s467
      %p476 = scmp.eq.s32.totalorder %s78, 0
      %p477 = por %p475, %p476
      %p478 = scmp.ne.s32.totalorder %s466, %s467
      %p479 = scmp.eq.s32.totalorder %s79, 1
      %p480 = por %p478, %p479
      %p482 = scmp.ne.s32.totalorder %s467, %s481
      %p483 = scmp.eq.s32.totalorder %s79, 0
      %p484 = por %p482, %p483
      %s486 = sadd.s32 %s485, 1
      %p489 = scmp.eq.s32.totalorder %s73, 1
      %p490 = scmp.ne.s32.totalorder %s485, %s487
      %p491 = scmp.eq.s32.totalorder %s73, 0
      %p492 = por %p490, %p491
      %p493 = scmp.ne.s32.totalorder %s485, %s487
      %p494 = scmp.eq.s32.totalorder %s78, 1
      %p495 = por %p493, %p494
      %p496 = scmp.ne.s32.totalorder %s487, %s488
      %p497 = scmp.eq.s32.totalorder %s78, 0
      %p498 = por %p496, %p497
      %p499 = scmp.ne.s32.totalorder %s487, %s488
      %p500 = scmp.eq.s32.totalorder %s79, 1
      %p501 = por %p499, %p500
      %p503 = scmp.ne.s32.totalorder %s488, %s502
      %p504 = scmp.eq.s32.totalorder %s79, 0
      %p505 = por %p503, %p504
      %s507 = sadd.s32 %s506, 1
      %p510 = scmp.eq.s32.totalorder %s73, 1
      %p511 = scmp.ne.s32.totalorder %s506, %s508
      %p512 = scmp.eq.s32.totalorder %s73, 0
      %p513 = por %p511, %p512
      %p514 = scmp.ne.s32.totalorder %s506, %s508
      %p515 = scmp.eq.s32.totalorder %s78, 1
      %p516 = por %p514, %p515
      %p517 = scmp.ne.s32.totalorder %s508, %s509
      %p518 = scmp.eq.s32.totalorder %s78, 0
      %p519 = por %p517, %p518
      %p520 = scmp.ne.s32.totalorder %s508, %s509
      %p521 = scmp.eq.s32.totalorder %s79, 1
      %p522 = por %p520, %p521
      %p524 = scmp.ne.s32.totalorder %s509, %s523
      %p525 = scmp.eq.s32.totalorder %s79, 0
      %p526 = por %p524, %p525
      %s528 = sadd.s32 %s527, 1
      %p531 = scmp.eq.s32.totalorder %s73, 1
      %p532 = scmp.ne.s32.totalorder %s527, %s529
      %p533 = scmp.eq.s32.totalorder %s73, 0
      %p534 = por %p532, %p533
      %p535 = scmp.ne.s32.totalorder %s527, %s529
      %p536 = scmp.eq.s32.totalorder %s78, 1
      %p537 = por %p535, %p536
      %p538 = scmp.ne.s32.totalorder %s529, %s530
      %p539 = scmp.eq.s32.totalorder %s78, 0
      %p540 = por %p538, %p539
      %p541 = scmp.ne.s32.totalorder %s529, %s530
      %p542 = scmp.eq.s32.totalorder %s79, 1
      %p543 = por %p541, %p542
      %p545 = scmp.ne.s32.totalorder %s530, %s544
      %p546 = scmp.eq.s32.totalorder %s79, 0
      %p547 = por %p545, %p546
      %s549 = sadd.s32 %s548, 1
      %p552 = scmp.eq.s32.totalorder %s73, 1
      %p553 = scmp.ne.s32.totalorder %s548, %s550
      %p554 = scmp.eq.s32.totalorder %s73, 0
      %p555 = por %p553, %p554
      %p556 = scmp.ne.s32.totalorder %s548, %s550
      %p557 = scmp.eq.s32.totalorder %s78, 1
      %p558 = por %p556, %p557
      %p559 = scmp.ne.s32.totalorder %s550, %s551
      %p560 = scmp.eq.s32.totalorder %s78, 0
      %p561 = por %p559, %p560
      %p562 = scmp.ne.s32.totalorder %s550, %s551
      %p563 = scmp.eq.s32.totalorder %s79, 1
      %p564 = por %p562, %p563
      %p566 = scmp.ne.s32.totalorder %s551, %s565
      %p567 = scmp.eq.s32.totalorder %s79, 0
      %p568 = por %p566, %p567
      %s570 = sadd.s32 %s569, 1
      %p573 = scmp.eq.s32.totalorder %s73, 1
      %p574 = scmp.ne.s32.totalorder %s569, %s571
      %p575 = scmp.eq.s32.totalorder %s73, 0
      %p576 = por %p574, %p575
      %p577 = scmp.ne.s32.totalorder %s569, %s571
      %p578 = scmp.eq.s32.totalorder %s78, 1
      %p579 = por %p577, %p578
      %p580 = scmp.ne.s32.totalorder %s571, %s572
      %p581 = scmp.eq.s32.totalorder %s78, 0
      %p582 = por %p580, %p581
      %p583 = scmp.ne.s32.totalorder %s571, %s572
      %p584 = scmp.eq.s32.totalorder %s79, 1
      %p585 = por %p583, %p584
      %p587 = scmp.ne.s32.totalorder %s572, %s586
      %p588 = scmp.eq.s32.totalorder %s79, 0
      %p589 = por %p587, %p588
      %s591 = sadd.s32 %s590, 1
      %p594 = scmp.eq.s32.totalorder %s73, 1
      %p595 = scmp.ne.s32.totalorder %s590, %s592
      %p596 = scmp.eq.s32.totalorder %s73, 0
      %p597 = por %p595, %p596
      %p598 = scmp.ne.s32.totalorder %s590, %s592
      %p599 = scmp.eq.s32.totalorder %s78, 1
      %p600 = por %p598, %p599
      %p601 = scmp.ne.s32.totalorder %s592, %s593
      %p602 = scmp.eq.s32.totalorder %s78, 0
      %p603 = por %p601, %p602
      %p604 = scmp.ne.s32.totalorder %s592, %s593
      %p605 = scmp.eq.s32.totalorder %s79, 1
      %p606 = por %p604, %p605
      %p608 = scmp.ne.s32.totalorder %s593, %s607
      %p609 = scmp.eq.s32.totalorder %s79, 0
      %p610 = por %p608, %p609
      %s612 = sadd.s32 %s611, 1
      %p615 = scmp.eq.s32.totalorder %s73, 1
      %p616 = scmp.ne.s32.totalorder %s611, %s613
      %p617 = scmp.eq.s32.totalorder %s73, 0
      %p618 = por %p616, %p617
      %p619 = scmp.ne.s32.totalorder %s611, %s613
      %p620 = scmp.eq.s32.totalorder %s78, 1
      %p621 = por %p619, %p620
      %p622 = scmp.ne.s32.totalorder %s613, %s614
      %p623 = scmp.eq.s32.totalorder %s78, 0
      %p624 = por %p622, %p623
      %p625 = scmp.ne.s32.totalorder %s613, %s614
      %p626 = scmp.eq.s32.totalorder %s79, 1
      %p627 = por %p625, %p626
      %p629 = scmp.ne.s32.totalorder %s614, %s628
      %p630 = scmp.eq.s32.totalorder %s79, 0
      %p631 = por %p629, %p630
      %s633 = sadd.s32 %s632, 1
      %p636 = scmp.eq.s32.totalorder %s73, 1
      %p637 = scmp.ne.s32.totalorder %s632, %s634
      %p638 = scmp.eq.s32.totalorder %s73, 0
      %p639 = por %p637, %p638
      %p640 = scmp.ne.s32.totalorder %s632, %s634
      %p641 = scmp.eq.s32.totalorder %s78, 1
      %p642 = por %p640, %p641
      %p643 = scmp.ne.s32.totalorder %s634, %s635
      %p644 = scmp.eq.s32.totalorder %s78, 0
      %p645 = por %p643, %p644
      %p646 = scmp.ne.s32.totalorder %s634, %s635
      %p647 = scmp.eq.s32.totalorder %s79, 1
      %p648 = por %p646, %p647
      %p650 = scmp.ne.s32.totalorder %s635, %s649
      %p651 = scmp.eq.s32.totalorder %s79, 0
      %p652 = por %p650, %p651
      %s654 = sadd.s32 %s653, 1
      %p657 = scmp.eq.s32.totalorder %s73, 1
      %p658 = scmp.ne.s32.totalorder %s653, %s655
      %p659 = scmp.eq.s32.totalorder %s73, 0
      %p660 = por %p658, %p659
      %p661 = scmp.ne.s32.totalorder %s653, %s655
      %p662 = scmp.eq.s32.totalorder %s78, 1
      %p663 = por %p661, %p662
      %p664 = scmp.ne.s32.totalorder %s655, %s656
      %p665 = scmp.eq.s32.totalorder %s78, 0
      %p666 = por %p664, %p665
      %p667 = scmp.ne.s32.totalorder %s655, %s656
      %p668 = scmp.eq.s32.totalorder %s79, 1
      %p669 = por %p667, %p668
      %p671 = scmp.ne.s32.totalorder %s656, %s670
      %p672 = scmp.eq.s32.totalorder %s79, 0
      %p673 = por %p671, %p672
      %s674 = ssub.s32 %s73, %s80
      %p675 = scmp.eq.s32.totalorder %s674, 0
      %s677 = sadd.s32 %s676, 1
      %s678 = scalar_select %p675, %s676, %s677
      %p681 = pneg %p675
      %p682 = scmp.eq.s32.totalorder %s73, 1
      %p683 = por %p681, %p682
      %p684 = scmp.ne.s32.totalorder %s676, %s679
      %p685 = scmp.eq.s32.totalorder %s73, 0
      %p686 = por %p684, %p685
      %p687 = scmp.ne.s32.totalorder %s676, %s679
      %p688 = scmp.eq.s32.totalorder %s78, 1
      %p689 = por %p687, %p688
      %p690 = scmp.ne.s32.totalorder %s679, %s680
      %p691 = scmp.eq.s32.totalorder %s78, 0
      %p692 = por %p690, %p691
      %p693 = scmp.ne.s32.totalorder %s679, %s680
      %p694 = scmp.eq.s32.totalorder %s79, 1
      %p695 = por %p693, %p694
      %p697 = scmp.ne.s32.totalorder %s680, %s696
      %p698 = scmp.eq.s32.totalorder %s79, 0
      %p699 = por %p697, %p698
      %s700 = ssub.s32 %s73, %s80
      %p701 = scmp.eq.s32.totalorder %s700, 0
      %s703 = sadd.s32 %s702, 1
      %s704 = scalar_select %p701, %s702, %s703
      %p707 = pneg %p701
      %p708 = scmp.eq.s32.totalorder %s73, 1
      %p709 = por %p707, %p708
      %p710 = scmp.ne.s32.totalorder %s702, %s705
      %p711 = scmp.eq.s32.totalorder %s73, 0
      %p712 = por %p710, %p711
      %p713 = scmp.ne.s32.totalorder %s702, %s705
      %p714 = scmp.eq.s32.totalorder %s78, 1
      %p715 = por %p713, %p714
      %p716 = scmp.ne.s32.totalorder %s705, %s706
      %p717 = scmp.eq.s32.totalorder %s78, 0
      %p718 = por %p716, %p717
      %p719 = scmp.ne.s32.totalorder %s705, %s706
      %p720 = scmp.eq.s32.totalorder %s79, 1
      %p721 = por %p719, %p720
      %p723 = scmp.ne.s32.totalorder %s706, %s722
      %p724 = scmp.eq.s32.totalorder %s79, 0
      %p725 = por %p723, %p724
      %p726 = scmp.le.s32.totalorder 1, %s73
      %p727 = scmp.lt.s32.totalorder %s73, 3
      %p728 = pnand %p726, %p727
      %p729 = pneg %p728
      // Predicated region
      $region9: #{dsvit_forward.1} parent=5 // pred_check
        _
      $region10: #{dsvit_forward.1} parent=5 // pred_check_branch
        %731 = sbr.rel (%p728) target = $region12
      $region11: #{dsvit_forward.1} parent=5 // pred_region
        %s732 = ssub.s32 %s73, 1
        // Predicated region
        $region13: #{dsvit_forward.1} parent=11 // pred_check
          %p733 = pneg %p120
        $region14: #{dsvit_forward.1} parent=11 // pred_check_branch
          %735 = sbr.rel (%p733) target = $region16
        $region15: #{dsvit_forward.1} parent=11 // pred_region
          _
        $region16: #{dsvit_forward.1} parent=11 // pred_fallthru
          _
        // Predicated region
        $region17: #{dsvit_forward.1} parent=11 // pred_check
          %p736 = pneg %p141
        $region18: #{dsvit_forward.1} parent=11 // pred_check_branch
          %738 = sbr.rel (%p736) target = $region20
        $region19: #{dsvit_forward.1} parent=11 // pred_region
          _
        $region20: #{dsvit_forward.1} parent=11 // pred_fallthru
          _
        // Predicated region
        $region21: #{dsvit_forward.1} parent=11 // pred_check
          %p739 = pneg %p162
        $region22: #{dsvit_forward.1} parent=11 // pred_check_branch
          %741 = sbr.rel (%p739) target = $region24
        $region23: #{dsvit_forward.1} parent=11 // pred_region
          _
        $region24: #{dsvit_forward.1} parent=11 // pred_fallthru
          _
        // Predicated region
        $region25: #{dsvit_forward.1} parent=11 // pred_check
          %p742 = pneg %p183
        $region26: #{dsvit_forward.1} parent=11 // pred_check_branch
          %744 = sbr.rel (%p742) target = $region28
        $region27: #{dsvit_forward.1} parent=11 // pred_region
          _
        $region28: #{dsvit_forward.1} parent=11 // pred_fallthru
          _
        // Predicated region
        $region29: #{dsvit_forward.1} parent=11 // pred_check
          %p745 = pneg %p204
        $region30: #{dsvit_forward.1} parent=11 // pred_check_branch
          %747 = sbr.rel (%p745) target = $region32
        $region31: #{dsvit_forward.1} parent=11 // pred_region
          _
        $region32: #{dsvit_forward.1} parent=11 // pred_fallthru
          _
        // Predicated region
        $region33: #{dsvit_forward.1} parent=11 // pred_check
          %p748 = pneg %p225
        $region34: #{dsvit_forward.1} parent=11 // pred_check_branch
          %750 = sbr.rel (%p748) target = $region36
        $region35: #{dsvit_forward.1} parent=11 // pred_region
          _
        $region36: #{dsvit_forward.1} parent=11 // pred_fallthru
          _
        // Predicated region
        $region37: #{dsvit_forward.1} parent=11 // pred_check
          %p751 = pneg %p246
        $region38: #{dsvit_forward.1} parent=11 // pred_check_branch
          %753 = sbr.rel (%p751) target = $region40
        $region39: #{dsvit_forward.1} parent=11 // pred_region
          _
        $region40: #{dsvit_forward.1} parent=11 // pred_fallthru
          _
        // Predicated region
        $region41: #{dsvit_forward.1} parent=11 // pred_check
          %p754 = pneg %p267
        $region42: #{dsvit_forward.1} parent=11 // pred_check_branch
          %756 = sbr.rel (%p754) target = $region44
        $region43: #{dsvit_forward.1} parent=11 // pred_region
          _
        $region44: #{dsvit_forward.1} parent=11 // pred_fallthru
          _
        // Predicated region
        $region45: #{dsvit_forward.1} parent=11 // pred_check
          %p757 = pneg %p288
        $region46: #{dsvit_forward.1} parent=11 // pred_check_branch
          %759 = sbr.rel (%p757) target = $region48
        $region47: #{dsvit_forward.1} parent=11 // pred_region
          _
        $region48: #{dsvit_forward.1} parent=11 // pred_fallthru
          _
        // Predicated region
        $region49: #{dsvit_forward.1} parent=11 // pred_check
          %p760 = pneg %p309
        $region50: #{dsvit_forward.1} parent=11 // pred_check_branch
          %762 = sbr.rel (%p760) target = $region52
        $region51: #{dsvit_forward.1} parent=11 // pred_region
          _
        $region52: #{dsvit_forward.1} parent=11 // pred_fallthru
          _
        // Predicated region
        $region53: #{dsvit_forward.1} parent=11 // pred_check
          %p763 = pneg %p330
        $region54: #{dsvit_forward.1} parent=11 // pred_check_branch
          %765 = sbr.rel (%p763) target = $region56
        $region55: #{dsvit_forward.1} parent=11 // pred_region
          _
        $region56: #{dsvit_forward.1} parent=11 // pred_fallthru
          _
        // Predicated region
        $region57: #{dsvit_forward.1} parent=11 // pred_check
          %p766 = pneg %p351
        $region58: #{dsvit_forward.1} parent=11 // pred_check_branch
          %768 = sbr.rel (%p766) target = $region60
        $region59: #{dsvit_forward.1} parent=11 // pred_region
          _
        $region60: #{dsvit_forward.1} parent=11 // pred_fallthru
          _
        // Predicated region
        $region61: #{dsvit_forward.1} parent=11 // pred_check
          %p769 = pneg %p372
        $region62: #{dsvit_forward.1} parent=11 // pred_check_branch
          %771 = sbr.rel (%p769) target = $region64
        $region63: #{dsvit_forward.1} parent=11 // pred_region
          _
        $region64: #{dsvit_forward.1} parent=11 // pred_fallthru
          _
        // Predicated region
        $region65: #{dsvit_forward.1} parent=11 // pred_check
          %p772 = pneg %p393
        $region66: #{dsvit_forward.1} parent=11 // pred_check_branch
          %774 = sbr.rel (%p772) target = $region68
        $region67: #{dsvit_forward.1} parent=11 // pred_region
          %776 = vsyncadd [#allocation3], 0
          %s777 = sshll.u32 %s29, 4
          %s778 = int_to_ptr.hbm [resolvable:$true] %s777
          %s779 = sshll.u32 [#allocation2], 4
          %s780 = int_to_ptr.vmem [resolvable:$true] %s779
          %785 = dma.hbm_to_vmem [thread:$0]  %s778, 4096, %s780, [#allocation3], 128, 128, 8
        $region68: #{dsvit_forward.1} parent=11 // pred_fallthru
          _
        // Predicated region
        $region69: #{dsvit_forward.1} parent=11 // pred_check
          %p786 = pneg %p414
        $region70: #{dsvit_forward.1} parent=11 // pred_check_branch
          %788 = sbr.rel (%p786) target = $region72
        $region71: #{dsvit_forward.1} parent=11 // pred_region
          _
        $region72: #{dsvit_forward.1} parent=11 // pred_fallthru
          _
        // Predicated region
        $region73: #{dsvit_forward.1} parent=11 // pred_check
          %p789 = pneg %p435
        $region74: #{dsvit_forward.1} parent=11 // pred_check_branch
          %791 = sbr.rel (%p789) target = $region76
        $region75: #{dsvit_forward.1} parent=11 // pred_region
          _
        $region76: #{dsvit_forward.1} parent=11 // pred_fallthru
          _
        // Predicated region
        $region77: #{dsvit_forward.1} parent=11 // pred_check
          %p792 = pneg %p456
        $region78: #{dsvit_forward.1} parent=11 // pred_check_branch
          %794 = sbr.rel (%p792) target = $region80
        $region79: #{dsvit_forward.1} parent=11 // pred_region
          _
        $region80: #{dsvit_forward.1} parent=11 // pred_fallthru
          _
        // Predicated region
        $region81: #{dsvit_forward.1} parent=11 // pred_check
          %p795 = pneg %p477
        $region82: #{dsvit_forward.1} parent=11 // pred_check_branch
          %797 = sbr.rel (%p795) target = $region84
        $region83: #{dsvit_forward.1} parent=11 // pred_region
          _
        $region84: #{dsvit_forward.1} parent=11 // pred_fallthru
          _
        // Predicated region
        $region85: #{dsvit_forward.1} parent=11 // pred_check
          %p798 = pneg %p498
        $region86: #{dsvit_forward.1} parent=11 // pred_check_branch
          %800 = sbr.rel (%p798) target = $region88
        $region87: #{dsvit_forward.1} parent=11 // pred_region
          _
        $region88: #{dsvit_forward.1} parent=11 // pred_fallthru
          _
        // Predicated region
        $region89: #{dsvit_forward.1} parent=11 // pred_check
          %p801 = pneg %p519
        $region90: #{dsvit_forward.1} parent=11 // pred_check_branch
          %803 = sbr.rel (%p801) target = $region92
        $region91: #{dsvit_forward.1} parent=11 // pred_region
          _
        $region92: #{dsvit_forward.1} parent=11 // pred_fallthru
          _
        // Predicated region
        $region93: #{dsvit_forward.1} parent=11 // pred_check
          %p804 = pneg %p540
        $region94: #{dsvit_forward.1} parent=11 // pred_check_branch
          %806 = sbr.rel (%p804) target = $region96
        $region95: #{dsvit_forward.1} parent=11 // pred_region
          _
        $region96: #{dsvit_forward.1} parent=11 // pred_fallthru
          _
        // Predicated region
        $region97: #{dsvit_forward.1} parent=11 // pred_check
          %p807 = pneg %p561
        $region98: #{dsvit_forward.1} parent=11 // pred_check_branch
          %809 = sbr.rel (%p807) target = $region100
        $region99: #{dsvit_forward.1} parent=11 // pred_region
          _
        $region100: #{dsvit_forward.1} parent=11 // pred_fallthru
          _
        // Predicated region
        $region101: #{dsvit_forward.1} parent=11 // pred_check
          %p810 = pneg %p582
        $region102: #{dsvit_forward.1} parent=11 // pred_check_branch
          %812 = sbr.rel (%p810) target = $region104
        $region103: #{dsvit_forward.1} parent=11 // pred_region
          _
        $region104: #{dsvit_forward.1} parent=11 // pred_fallthru
          _
        // Predicated region
        $region105: #{dsvit_forward.1} parent=11 // pred_check
          %p813 = pneg %p603
        $region106: #{dsvit_forward.1} parent=11 // pred_check_branch
          %815 = sbr.rel (%p813) target = $region108
        $region107: #{dsvit_forward.1} parent=11 // pred_region
          _
        $region108: #{dsvit_forward.1} parent=11 // pred_fallthru
          _
        // Predicated region
        $region109: #{dsvit_forward.1} parent=11 // pred_check
          %p816 = pneg %p624
        $region110: #{dsvit_forward.1} parent=11 // pred_check_branch
          %818 = sbr.rel (%p816) target = $region112
        $region111: #{dsvit_forward.1} parent=11 // pred_region
          _
        $region112: #{dsvit_forward.1} parent=11 // pred_fallthru
          _
        // Predicated region
        $region113: #{dsvit_forward.1} parent=11 // pred_check
          %p819 = pneg %p645
        $region114: #{dsvit_forward.1} parent=11 // pred_check_branch
          %821 = sbr.rel (%p819) target = $region116
        $region115: #{dsvit_forward.1} parent=11 // pred_region
          _
        $region116: #{dsvit_forward.1} parent=11 // pred_fallthru
          _
        // Predicated region
        $region117: #{dsvit_forward.1} parent=11 // pred_check
          %p822 = pneg %p666
        $region118: #{dsvit_forward.1} parent=11 // pred_check_branch
          %824 = sbr.rel (%p822) target = $region120
        $region119: #{dsvit_forward.1} parent=11 // pred_region
          _
        $region120: #{dsvit_forward.1} parent=11 // pred_fallthru
          _
      $region12: #{dsvit_forward.1} parent=5 // pred_fallthru
        _
      %p825 = scmp.lt.s32.totalorder %s73, 2
      // Predicated region
      $region121: #{dsvit_forward.1} parent=5 // pred_check
        %p826 = pneg %p825
      $region122: #{dsvit_forward.1} parent=5 // pred_check_branch
        %828 = sbr.rel (%p826) target = $region124
      $region123: #{dsvit_forward.1} parent=5 // pred_region
        // Predicated region
        $region125: #{dsvit_forward.1} parent=123 // pred_check
          %p829 = pneg %p93
        $region126: #{dsvit_forward.1} parent=123 // pred_check_branch
          %831 = sbr.rel (%p829) target = $region128
        $region127: #{dsvit_forward.1} parent=123 // pred_region
          %p832 = scmp.lt.s32.totalorder %s73, 1
          %s833 = scalar_select %p832, %s73, 1
          %s834 = smul.addr %s833, 32
          %s835 = smul.addr %s834, 8
          %s836 = scalar_lea.vmem %s1, %s835
        $region128: #{dsvit_forward.1} parent=123 // pred_fallthru
          _
      $region124: #{dsvit_forward.1} parent=5 // pred_fallthru
        _
      %p837 = scmp.le.s32.totalorder 1, %s73
      %p838 = scmp.lt.s32.totalorder %s73, 3
      %p839 = pnand %p837, %p838
      %p840 = pneg %p839
      // Predicated region
      $region129: #{dsvit_forward.1} parent=5 // pred_check
        _
      $region130: #{dsvit_forward.1} parent=5 // pred_check_branch
        %842 = sbr.rel (%p839) target = $region132
      $region131: #{dsvit_forward.1} parent=5 // pred_region
        %s843 = ssub.s32 %s73, 1
        // Predicated region
        $region133: #{dsvit_forward.1} parent=131 // pred_check
          %p844 = pneg %p393
        $region134: #{dsvit_forward.1} parent=131 // pred_check_branch
          %846 = sbr.rel (%p844) target = $region136
        $region135: #{dsvit_forward.1} parent=131 // pred_region
          %848 = dma.done [#allocation3], 4096
        $region136: #{dsvit_forward.1} parent=131 // pred_fallthru
          _
        %p849 = scmp.lt.s32.totalorder %s78, 1
        %s850 = scalar_select %p849, %s78, 1
        %s851 = smul.addr %s850, 32
        %s852 = smul.addr %s851, 8
        %s853 = scalar_lea.vmem %s1, %s852
        %p854 = pneg %p99
        %p855 = pneg %p96
        %p856 = pneg %p120
        %p857 = pneg %p117
        %p858 = pneg %p141
        %p859 = pneg %p138
        %p860 = pneg %p162
        %p861 = pneg %p159
        %p862 = pneg %p183
        %p863 = pneg %p180
        %p864 = pneg %p204
        %p865 = pneg %p201
        %p866 = pneg %p225
        %p867 = pneg %p222
        %p868 = pneg %p246
        %p869 = pneg %p243
        %p870 = pneg %p267
        %p871 = pneg %p264
        %p872 = pneg %p288
        %p873 = pneg %p285
        %p874 = pneg %p309
        %p875 = pneg %p306
        %p876 = pneg %p330
        %p877 = pneg %p327
        %p878 = pneg %p351
        %p879 = pneg %p348
        %p880 = pneg %p372
        %p881 = pneg %p369
        %p882 = pneg %p393
        %p883 = pneg %p390
        %p884 = pneg %p414
        %p885 = pneg %p411
        %p886 = pneg %p435
        %p887 = pneg %p432
        %p888 = pneg %p456
        %p889 = pneg %p453
        %p890 = pneg %p477
        %p891 = pneg %p474
        %p892 = pneg %p498
        %p893 = pneg %p495
        %p894 = pneg %p519
        %p895 = pneg %p516
        %p896 = pneg %p540
        %p897 = pneg %p537
        %p898 = pneg %p561
        %p899 = pneg %p558
        %p900 = pneg %p582
        %p901 = pneg %p579
        %p902 = pneg %p603
        %p903 = pneg %p600
        %p904 = pneg %p624
        %p905 = pneg %p621
        %p906 = pneg %p645
        %p907 = pneg %p642
        %p908 = pneg %p666
        %p909 = pneg %p663
        %p910 = pneg %p692
        %p911 = pneg %p689
        %s912 = sand.u32 %s679, 1
        %s913 = scalar_lea.sflag [#allocation4], %s912
        %s914 = sand.u32 %s679, 1
        %s915 = scalar_lea.vmem [#allocation5], %s914
        %p916 = pneg %p718
        %p917 = pneg %p715
        %s918 = sand.u32 %s705, 1
        %s919 = scalar_lea.sflag [#allocation7], %s918
        %s920 = sand.u32 %s705, 1
        %s921 = scalar_lea.vmem [#allocation6], %s920
        %p922 = scmp.lt.s32.totalorder %s78, 1
        %s923 = scalar_select %p922, %s78, 1
        %s924 = smul.addr %s923, 32
        %s925 = smul.addr %s924, 8
        %s926 = scalar_lea.vmem %s1, %s925
        %v927 = vlaneseq
        %v928 = vshrl.u32 %v927, 7
        %v929 = vadd.s32 %v928, 8
        %v930 = vadd.s32 %v928, 16
        %v931 = vadd.s32 %v928, 24
        %v932 = vadd.s32 %v928, 32
        %v933 = vadd.s32 %v928, 40
        %v934 = vadd.s32 %v928, 48
        %v935 = vadd.s32 %v928, 56
        %v936 = vadd.s32 %v928, 64
        %v937 = vadd.s32 %v928, 72
        %v938 = vadd.s32 %v928, 80
        %v939 = vadd.s32 %v928, 88
        %v940 = vadd.s32 %v928, 96
        %v941 = vadd.s32 %v928, 104
        %v942 = vadd.s32 %v928, 112
        %v943 = vadd.s32 %v928, 120
        %v944 = vadd.s32 %v928, 128
        %v945 = vadd.s32 %v928, 136
        %v946 = vadd.s32 %v928, 144
        %v947 = vadd.s32 %v928, 152
        %v948 = vadd.s32 %v928, 160
        %v949 = vadd.s32 %v928, 168
        %v950 = vadd.s32 %v928, 176
        %v951 = vadd.s32 %v928, 184
        %v952 = vadd.s32 %v928, 192
        %v953 = vadd.s32 %v928, 200
        %v954 = vadd.s32 %v928, 208
        %v955 = vadd.s32 %v928, 216
        %v956 = vadd.s32 %v928, 224
        %v957 = vadd.s32 %v928, 232
        %v958 = vadd.s32 %v928, 240
        %v959 = vadd.s32 %v928, 248
        %vm960 = vcmp.lt.s32.totalorder %v928, 0
        %v961 = vsub.s32 0, %v928
        %v962 = vsel %vm960, %v961, %v928
        %v963 = vshrl.u32 %v962, 4
        %v964 = vand.u32 %v962, 15
        %v965 = vsub.s32 0, %v964
        %v966 = vsel %vm960, %v965, %v964
        %vm967 = vcmp.lt.s32.totalorder %v929, 0
        %v968 = vsub.s32 0, %v929
        %v969 = vsel %vm967, %v968, %v929
        %v970 = vshrl.u32 %v969, 4
        %v971 = vand.u32 %v969, 15
        %v972 = vsub.s32 0, %v971
        %v973 = vsel %vm967, %v972, %v971
        %vm974 = vcmp.lt.s32.totalorder %v930, 0
        %v975 = vsub.s32 0, %v930
        %v976 = vsel %vm974, %v975, %v930
        %v977 = vshrl.u32 %v976, 4
        %v978 = vand.u32 %v976, 15
        %v979 = vsub.s32 0, %v978
        %v980 = vsel %vm974, %v979, %v978
        %vm981 = vcmp.lt.s32.totalorder %v931, 0
        %v982 = vsub.s32 0, %v931
        %v983 = vsel %vm981, %v982, %v931
        %v984 = vshrl.u32 %v983, 4
        %v985 = vand.u32 %v983, 15
        %v986 = vsub.s32 0, %v985
        %v987 = vsel %vm981, %v986, %v985
        %vm988 = vcmp.lt.s32.totalorder %v932, 0
        %v989 = vsub.s32 0, %v932
        %v990 = vsel %vm988, %v989, %v932
        %v991 = vshrl.u32 %v990, 4
        %v992 = vand.u32 %v990, 15
        %v993 = vsub.s32 0, %v992
        %v994 = vsel %vm988, %v993, %v992
        %vm995 = vcmp.lt.s32.totalorder %v933, 0
        %v996 = vsub.s32 0, %v933
        %v997 = vsel %vm995, %v996, %v933
        %v998 = vshrl.u32 %v997, 4
        %v999 = vand.u32 %v997, 15
        %v1000 = vsub.s32 0, %v999
        %v1001 = vsel %vm995, %v1000, %v999
        %vm1002 = vcmp.lt.s32.totalorder %v934, 0
        %v1003 = vsub.s32 0, %v934
        %v1004 = vsel %vm1002, %v1003, %v934
        %v1005 = vshrl.u32 %v1004, 4
        %v1006 = vand.u32 %v1004, 15
        %v1007 = vsub.s32 0, %v1006
        %v1008 = vsel %vm1002, %v1007, %v1006
        %vm1009 = vcmp.lt.s32.totalorder %v935, 0
        %v1010 = vsub.s32 0, %v935
        %v1011 = vsel %vm1009, %v1010, %v935
        %v1012 = vshrl.u32 %v1011, 4
        %v1013 = vand.u32 %v1011, 15
        %v1014 = vsub.s32 0, %v1013
        %v1015 = vsel %vm1009, %v1014, %v1013
        %vm1016 = vcmp.lt.s32.totalorder %v936, 0
        %v1017 = vsub.s32 0, %v936
        %v1018 = vsel %vm1016, %v1017, %v936
        %v1019 = vshrl.u32 %v1018, 4
        %v1020 = vand.u32 %v1018, 15
        %v1021 = vsub.s32 0, %v1020
        %v1022 = vsel %vm1016, %v1021, %v1020
        %vm1023 = vcmp.lt.s32.totalorder %v937, 0
        %v1024 = vsub.s32 0, %v937
        %v1025 = vsel %vm1023, %v1024, %v937
        %v1026 = vshrl.u32 %v1025, 4
        %v1027 = vand.u32 %v1025, 15
        %v1028 = vsub.s32 0, %v1027
        %v1029 = vsel %vm1023, %v1028, %v1027
        %vm1030 = vcmp.lt.s32.totalorder %v938, 0
        %v1031 = vsub.s32 0, %v938
        %v1032 = vsel %vm1030, %v1031, %v938
        %v1033 = vshrl.u32 %v1032, 4
        %v1034 = vand.u32 %v1032, 15
        %v1035 = vsub.s32 0, %v1034
        %v1036 = vsel %vm1030, %v1035, %v1034
        %vm1037 = vcmp.lt.s32.totalorder %v939, 0
        %v1038 = vsub.s32 0, %v939
        %v1039 = vsel %vm1037, %v1038, %v939
        %v1040 = vshrl.u32 %v1039, 4
        %v1041 = vand.u32 %v1039, 15
        %v1042 = vsub.s32 0, %v1041
        %v1043 = vsel %vm1037, %v1042, %v1041
        %vm1044 = vcmp.lt.s32.totalorder %v940, 0
        %v1045 = vsub.s32 0, %v940
        %v1046 = vsel %vm1044, %v1045, %v940
        %v1047 = vshrl.u32 %v1046, 4
        %v1048 = vand.u32 %v1046, 15
        %v1049 = vsub.s32 0, %v1048
        %v1050 = vsel %vm1044, %v1049, %v1048
        %vm1051 = vcmp.lt.s32.totalorder %v941, 0
        %v1052 = vsub.s32 0, %v941
        %v1053 = vsel %vm1051, %v1052, %v941
        %v1054 = vshrl.u32 %v1053, 4
        %v1055 = vand.u32 %v1053, 15
        %v1056 = vsub.s32 0, %v1055
        %v1057 = vsel %vm1051, %v1056, %v1055
        %vm1058 = vcmp.lt.s32.totalorder %v942, 0
        %v1059 = vsub.s32 0, %v942
        %v1060 = vsel %vm1058, %v1059, %v942
        %v1061 = vshrl.u32 %v1060, 4
        %v1062 = vand.u32 %v1060, 15
        %v1063 = vsub.s32 0, %v1062
        %v1064 = vsel %vm1058, %v1063, %v1062
        %vm1065 = vcmp.lt.s32.totalorder %v943, 0
        %v1066 = vsub.s32 0, %v943
        %v1067 = vsel %vm1065, %v1066, %v943
        %v1068 = vshrl.u32 %v1067, 4
        %v1069 = vand.u32 %v1067, 15
        %v1070 = vsub.s32 0, %v1069
        %v1071 = vsel %vm1065, %v1070, %v1069
        %vm1072 = vcmp.lt.s32.totalorder %v944, 0
        %v1073 = vsub.s32 0, %v944
        %v1074 = vsel %vm1072, %v1073, %v944
        %v1075 = vshrl.u32 %v1074, 4
        %v1076 = vand.u32 %v1074, 15
        %v1077 = vsub.s32 0, %v1076
        %v1078 = vsel %vm1072, %v1077, %v1076
        %vm1079 = vcmp.lt.s32.totalorder %v945, 0
        %v1080 = vsub.s32 0, %v945
        %v1081 = vsel %vm1079, %v1080, %v945
        %v1082 = vshrl.u32 %v1081, 4
        %v1083 = vand.u32 %v1081, 15
        %v1084 = vsub.s32 0, %v1083
        %v1085 = vsel %vm1079, %v1084, %v1083
        %vm1086 = vcmp.lt.s32.totalorder %v946, 0
        %v1087 = vsub.s32 0, %v946
        %v1088 = vsel %vm1086, %v1087, %v946
        %v1089 = vshrl.u32 %v1088, 4
        %v1090 = vand.u32 %v1088, 15
        %v1091 = vsub.s32 0, %v1090
        %v1092 = vsel %vm1086, %v1091, %v1090
        %vm1093 = vcmp.lt.s32.totalorder %v947, 0
        %v1094 = vsub.s32 0, %v947
        %v1095 = vsel %vm1093, %v1094, %v947
        %v1096 = vshrl.u32 %v1095, 4
        %v1097 = vand.u32 %v1095, 15
        %v1098 = vsub.s32 0, %v1097
        %v1099 = vsel %vm1093, %v1098, %v1097
        %vm1100 = vcmp.lt.s32.totalorder %v948, 0
        %v1101 = vsub.s32 0, %v948
        %v1102 = vsel %vm1100, %v1101, %v948
        %v1103 = vshrl.u32 %v1102, 4
        %v1104 = vand.u32 %v1102, 15
        %v1105 = vsub.s32 0, %v1104
        %v1106 = vsel %vm1100, %v1105, %v1104
        %vm1107 = vcmp.lt.s32.totalorder %v949, 0
        %v1108 = vsub.s32 0, %v949
        %v1109 = vsel %vm1107, %v1108, %v949
        %v1110 = vshrl.u32 %v1109, 4
        %v1111 = vand.u32 %v1109, 15
        %v1112 = vsub.s32 0, %v1111
        %v1113 = vsel %vm1107, %v1112, %v1111
        %vm1114 = vcmp.lt.s32.totalorder %v950, 0
        %v1115 = vsub.s32 0, %v950
        %v1116 = vsel %vm1114, %v1115, %v950
        %v1117 = vshrl.u32 %v1116, 4
        %v1118 = vand.u32 %v1116, 15
        %v1119 = vsub.s32 0, %v1118
        %v1120 = vsel %vm1114, %v1119, %v1118
        %vm1121 = vcmp.lt.s32.totalorder %v951, 0
        %v1122 = vsub.s32 0, %v951
        %v1123 = vsel %vm1121, %v1122, %v951
        %v1124 = vshrl.u32 %v1123, 4
        %v1125 = vand.u32 %v1123, 15
        %v1126 = vsub.s32 0, %v1125
        %v1127 = vsel %vm1121, %v1126, %v1125
        %vm1128 = vcmp.lt.s32.totalorder %v952, 0
        %v1129 = vsub.s32 0, %v952
        %v1130 = vsel %vm1128, %v1129, %v952
        %v1131 = vshrl.u32 %v1130, 4
        %v1132 = vand.u32 %v1130, 15
        %v1133 = vsub.s32 0, %v1132
        %v1134 = vsel %vm1128, %v1133, %v1132
        %vm1135 = vcmp.lt.s32.totalorder %v953, 0
        %v1136 = vsub.s32 0, %v953
        %v1137 = vsel %vm1135, %v1136, %v953
        %v1138 = vshrl.u32 %v1137, 4
        %v1139 = vand.u32 %v1137, 15
        %v1140 = vsub.s32 0, %v1139
        %v1141 = vsel %vm1135, %v1140, %v1139
        %vm1142 = vcmp.lt.s32.totalorder %v954, 0
        %v1143 = vsub.s32 0, %v954
        %v1144 = vsel %vm1142, %v1143, %v954
        %v1145 = vshrl.u32 %v1144, 4
        %v1146 = vand.u32 %v1144, 15
        %v1147 = vsub.s32 0, %v1146
        %v1148 = vsel %vm1142, %v1147, %v1146
        %vm1149 = vcmp.lt.s32.totalorder %v955, 0
        %v1150 = vsub.s32 0, %v955
        %v1151 = vsel %vm1149, %v1150, %v955
        %v1152 = vshrl.u32 %v1151, 4
        %v1153 = vand.u32 %v1151, 15
        %v1154 = vsub.s32 0, %v1153
        %v1155 = vsel %vm1149, %v1154, %v1153
        %vm1156 = vcmp.lt.s32.totalorder %v956, 0
        %v1157 = vsub.s32 0, %v956
        %v1158 = vsel %vm1156, %v1157, %v956
        %v1159 = vshrl.u32 %v1158, 4
        %v1160 = vand.u32 %v1158, 15
        %v1161 = vsub.s32 0, %v1160
        %v1162 = vsel %vm1156, %v1161, %v1160
        %vm1163 = vcmp.lt.s32.totalorder %v957, 0
        %v1164 = vsub.s32 0, %v957
        %v1165 = vsel %vm1163, %v1164, %v957
        %v1166 = vshrl.u32 %v1165, 4
        %v1167 = vand.u32 %v1165, 15
        %v1168 = vsub.s32 0, %v1167
        %v1169 = vsel %vm1163, %v1168, %v1167
        %vm1170 = vcmp.lt.s32.totalorder %v958, 0
        %v1171 = vsub.s32 0, %v958
        %v1172 = vsel %vm1170, %v1171, %v958
        %v1173 = vshrl.u32 %v1172, 4
        %v1174 = vand.u32 %v1172, 15
        %v1175 = vsub.s32 0, %v1174
        %v1176 = vsel %vm1170, %v1175, %v1174
        %vm1177 = vcmp.lt.s32.totalorder %v959, 0
        %v1178 = vsub.s32 0, %v959
        %v1179 = vsel %vm1177, %v1178, %v959
        %v1180 = vshrl.u32 %v1179, 4
        %v1181 = vand.u32 %v1179, 15
        %v1182 = vsub.s32 0, %v1181
        %v1183 = vsel %vm1177, %v1182, %v1181
        %vm1184 = vcmp.ne.s32.totalorder %v966, 0
        %vm1185 = vcmp.ne.s32.totalorder %v973, 0
        %vm1186 = vcmp.ne.s32.totalorder %v980, 0
        %vm1187 = vcmp.ne.s32.totalorder %v987, 0
        %vm1188 = vcmp.ne.s32.totalorder %v994, 0
        %vm1189 = vcmp.ne.s32.totalorder %v1001, 0
        %vm1190 = vcmp.ne.s32.totalorder %v1008, 0
        %vm1191 = vcmp.ne.s32.totalorder %v1015, 0
        %vm1192 = vcmp.ne.s32.totalorder %v1022, 0
        %vm1193 = vcmp.ne.s32.totalorder %v1029, 0
        %vm1194 = vcmp.ne.s32.totalorder %v1036, 0
        %vm1195 = vcmp.ne.s32.totalorder %v1043, 0
        %vm1196 = vcmp.ne.s32.totalorder %v1050, 0
        %vm1197 = vcmp.ne.s32.totalorder %v1057, 0
        %vm1198 = vcmp.ne.s32.totalorder %v1064, 0
        %vm1199 = vcmp.ne.s32.totalorder %v1071, 0
        %vm1200 = vcmp.ne.s32.totalorder %v1078, 0
        %vm1201 = vcmp.ne.s32.totalorder %v1085, 0
        %vm1202 = vcmp.ne.s32.totalorder %v1092, 0
        %vm1203 = vcmp.ne.s32.totalorder %v1099, 0
        %vm1204 = vcmp.ne.s32.totalorder %v1106, 0
        %vm1205 = vcmp.ne.s32.totalorder %v1113, 0
        %vm1206 = vcmp.ne.s32.totalorder %v1120, 0
        %vm1207 = vcmp.ne.s32.totalorder %v1127, 0
        %vm1208 = vcmp.ne.s32.totalorder %v1134, 0
        %vm1209 = vcmp.ne.s32.totalorder %v1141, 0
        %vm1210 = vcmp.ne.s32.totalorder %v1148, 0
        %vm1211 = vcmp.ne.s32.totalorder %v1155, 0
        %vm1212 = vcmp.ne.s32.totalorder %v1162, 0
        %vm1213 = vcmp.ne.s32.totalorder %v1169, 0
        %vm1214 = vcmp.ne.s32.totalorder %v1176, 0
        %vm1215 = vcmp.ne.s32.totalorder %v1183, 0
        %vm1216 = vcmp.lt.s32.totalorder %v966, 0
        %vm1217 = vcmp.lt.s32.totalorder %v973, 0
        %vm1218 = vcmp.lt.s32.totalorder %v980, 0
        %vm1219 = vcmp.lt.s32.totalorder %v987, 0
        %vm1220 = vcmp.lt.s32.totalorder %v994, 0
        %vm1221 = vcmp.lt.s32.totalorder %v1001, 0
        %vm1222 = vcmp.lt.s32.totalorder %v1008, 0
        %vm1223 = vcmp.lt.s32.totalorder %v1015, 0
        %vm1224 = vcmp.lt.s32.totalorder %v1022, 0
        %vm1225 = vcmp.lt.s32.totalorder %v1029, 0
        %vm1226 = vcmp.lt.s32.totalorder %v1036, 0
        %vm1227 = vcmp.lt.s32.totalorder %v1043, 0
        %vm1228 = vcmp.lt.s32.totalorder %v1050, 0
        %vm1229 = vcmp.lt.s32.totalorder %v1057, 0
        %vm1230 = vcmp.lt.s32.totalorder %v1064, 0
        %vm1231 = vcmp.lt.s32.totalorder %v1071, 0
        %vm1232 = vcmp.lt.s32.totalorder %v1078, 0
        %vm1233 = vcmp.lt.s32.totalorder %v1085, 0
        %vm1234 = vcmp.lt.s32.totalorder %v1092, 0
        %vm1235 = vcmp.lt.s32.totalorder %v1099, 0
        %vm1236 = vcmp.lt.s32.totalorder %v1106, 0
        %vm1237 = vcmp.lt.s32.totalorder %v1113, 0
        %vm1238 = vcmp.lt.s32.totalorder %v1120, 0
        %vm1239 = vcmp.lt.s32.totalorder %v1127, 0
        %vm1240 = vcmp.lt.s32.totalorder %v1134, 0
        %vm1241 = vcmp.lt.s32.totalorder %v1141, 0
        %vm1242 = vcmp.lt.s32.totalorder %v1148, 0
        %vm1243 = vcmp.lt.s32.totalorder %v1155, 0
        %vm1244 = vcmp.lt.s32.totalorder %v1162, 0
        %vm1245 = vcmp.lt.s32.totalorder %v1169, 0
        %vm1246 = vcmp.lt.s32.totalorder %v1176, 0
        %vm1247 = vcmp.lt.s32.totalorder %v1183, 0
        %vm1248 = vmand %vm1216, %vm1184
        %vm1249 = vmand %vm1217, %vm1185
        %vm1250 = vmand %vm1218, %vm1186
        %vm1251 = vmand %vm1219, %vm1187
        %vm1252 = vmand %vm1220, %vm1188
        %vm1253 = vmand %vm1221, %vm1189
        %vm1254 = vmand %vm1222, %vm1190
        %vm1255 = vmand %vm1223, %vm1191
        %vm1256 = vmand %vm1224, %vm1192
        %vm1257 = vmand %vm1225, %vm1193
        %vm1258 = vmand %vm1226, %vm1194
        %vm1259 = vmand %vm1227, %vm1195
        %vm1260 = vmand %vm1228, %vm1196
        %vm1261 = vmand %vm1229, %vm1197
        %vm1262 = vmand %vm1230, %vm1198
        %vm1263 = vmand %vm1231, %vm1199
        %vm1264 = vmand %vm1232, %vm1200
        %vm1265 = vmand %vm1233, %vm1201
        %vm1266 = vmand %vm1234, %vm1202
        %vm1267 = vmand %vm1235, %vm1203
        %vm1268 = vmand %vm1236, %vm1204
        %vm1269 = vmand %vm1237, %vm1205
        %vm1270 = vmand %vm1238, %vm1206
        %vm1271 = vmand %vm1239, %vm1207
        %vm1272 = vmand %vm1240, %vm1208
        %vm1273 = vmand %vm1241, %vm1209
        %vm1274 = vmand %vm1242, %vm1210
        %vm1275 = vmand %vm1243, %vm1211
        %vm1276 = vmand %vm1244, %vm1212
        %vm1277 = vmand %vm1245, %vm1213
        %vm1278 = vmand %vm1246, %vm1214
        %vm1279 = vmand %vm1247, %vm1215
        %v1280 = vadd.s32 %v966, 16
        %v1281 = vadd.s32 %v973, 16
        %v1282 = vadd.s32 %v980, 16
        %v1283 = vadd.s32 %v987, 16
        %v1284 = vadd.s32 %v994, 16
        %v1285 = vadd.s32 %v1001, 16
        %v1286 = vadd.s32 %v1008, 16
        %v1287 = vadd.s32 %v1015, 16
        %v1288 = vadd.s32 %v1022, 16
        %v1289 = vadd.s32 %v1029, 16
        %v1290 = vadd.s32 %v1036, 16
        %v1291 = vadd.s32 %v1043, 16
        %v1292 = vadd.s32 %v1050, 16
        %v1293 = vadd.s32 %v1057, 16
        %v1294 = vadd.s32 %v1064, 16
        %v1295 = vadd.s32 %v1071, 16
        %v1296 = vadd.s32 %v1078, 16
        %v1297 = vadd.s32 %v1085, 16
        %v1298 = vadd.s32 %v1092, 16
        %v1299 = vadd.s32 %v1099, 16
        %v1300 = vadd.s32 %v1106, 16
        %v1301 = vadd.s32 %v1113, 16
        %v1302 = vadd.s32 %v1120, 16
        %v1303 = vadd.s32 %v1127, 16
        %v1304 = vadd.s32 %v1134, 16
        %v1305 = vadd.s32 %v1141, 16
        %v1306 = vadd.s32 %v1148, 16
        %v1307 = vadd.s32 %v1155, 16
        %v1308 = vadd.s32 %v1162, 16
        %v1309 = vadd.s32 %v1169, 16
        %v1310 = vadd.s32 %v1176, 16
        %v1311 = vadd.s32 %v1183, 16
        %v1312 = vsel %vm1248, %v1280, %v966
        %v1313 = vsel %vm1249, %v1281, %v973
        %v1314 = vsel %vm1250, %v1282, %v980
        %v1315 = vsel %vm1251, %v1283, %v987
        %v1316 = vsel %vm1252, %v1284, %v994
        %v1317 = vsel %vm1253, %v1285, %v1001
        %v1318 = vsel %vm1254, %v1286, %v1008
        %v1319 = vsel %vm1255, %v1287, %v1015
        %v1320 = vsel %vm1256, %v1288, %v1022
        %v1321 = vsel %vm1257, %v1289, %v1029
        %v1322 = vsel %vm1258, %v1290, %v1036
        %v1323 = vsel %vm1259, %v1291, %v1043
        %v1324 = vsel %vm1260, %v1292, %v1050
        %v1325 = vsel %vm1261, %v1293, %v1057
        %v1326 = vsel %vm1262, %v1294, %v1064
        %v1327 = vsel %vm1263, %v1295, %v1071
        %v1328 = vsel %vm1264, %v1296, %v1078
        %v1329 = vsel %vm1265, %v1297, %v1085
        %v1330 = vsel %vm1266, %v1298, %v1092
        %v1331 = vsel %vm1267, %v1299, %v1099
        %v1332 = vsel %vm1268, %v1300, %v1106
        %v1333 = vsel %vm1269, %v1301, %v1113
        %v1334 = vsel %vm1270, %v1302, %v1120
        %v1335 = vsel %vm1271, %v1303, %v1127
        %v1336 = vsel %vm1272, %v1304, %v1134
        %v1337 = vsel %vm1273, %v1305, %v1141
        %v1338 = vsel %vm1274, %v1306, %v1148
        %v1339 = vsel %vm1275, %v1307, %v1155
        %v1340 = vsel %vm1276, %v1308, %v1162
        %v1341 = vsel %vm1277, %v1309, %v1169
        %v1342 = vsel %vm1278, %v1310, %v1176
        %v1343 = vsel %vm1279, %v1311, %v1183
        %vm1344 = vcmp.ge.s32.totalorder %v1312, 1
        %vm1345 = vcmp.ge.s32.totalorder %v1313, 1
        %vm1346 = vcmp.ge.s32.totalorder %v1314, 1
        %vm1347 = vcmp.ge.s32.totalorder %v1315, 1
        %vm1348 = vcmp.ge.s32.totalorder %v1316, 1
        %vm1349 = vcmp.ge.s32.totalorder %v1317, 1
        %vm1350 = vcmp.ge.s32.totalorder %v1318, 1
        %vm1351 = vcmp.ge.s32.totalorder %v1319, 1
        %vm1352 = vcmp.ge.s32.totalorder %v1320, 1
        %vm1353 = vcmp.ge.s32.totalorder %v1321, 1
        %vm1354 = vcmp.ge.s32.totalorder %v1322, 1
        %vm1355 = vcmp.ge.s32.totalorder %v1323, 1
        %vm1356 = vcmp.ge.s32.totalorder %v1324, 1
        %vm1357 = vcmp.ge.s32.totalorder %v1325, 1
        %vm1358 = vcmp.ge.s32.totalorder %v1326, 1
        %vm1359 = vcmp.ge.s32.totalorder %v1327, 1
        %vm1360 = vcmp.ge.s32.totalorder %v1328, 1
        %vm1361 = vcmp.ge.s32.totalorder %v1329, 1
        %vm1362 = vcmp.ge.s32.totalorder %v1330, 1
        %vm1363 = vcmp.ge.s32.totalorder %v1331, 1
        %vm1364 = vcmp.ge.s32.totalorder %v1332, 1
        %vm1365 = vcmp.ge.s32.totalorder %v1333, 1
        %vm1366 = vcmp.ge.s32.totalorder %v1334, 1
        %vm1367 = vcmp.ge.s32.totalorder %v1335, 1
        %vm1368 = vcmp.ge.s32.totalorder %v1336, 1
        %vm1369 = vcmp.ge.s32.totalorder %v1337, 1
        %vm1370 = vcmp.ge.s32.totalorder %v1338, 1
        %vm1371 = vcmp.ge.s32.totalorder %v1339, 1
        %vm1372 = vcmp.ge.s32.totalorder %v1340, 1
        %vm1373 = vcmp.ge.s32.totalorder %v1341, 1
        %vm1374 = vcmp.ge.s32.totalorder %v1342, 1
        %vm1375 = vcmp.ge.s32.totalorder %v1343, 1
        %v1376 = vsel %vm1344, 1, 0
        %v1377 = vsel %vm1345, 1, 0
        %v1378 = vsel %vm1346, 1, 0
        %v1379 = vsel %vm1347, 1, 0
        %v1380 = vsel %vm1348, 1, 0
        %v1381 = vsel %vm1349, 1, 0
        %v1382 = vsel %vm1350, 1, 0
        %v1383 = vsel %vm1351, 1, 0
        %v1384 = vsel %vm1352, 1, 0
        %v1385 = vsel %vm1353, 1, 0
        %v1386 = vsel %vm1354, 1, 0
        %v1387 = vsel %vm1355, 1, 0
        %v1388 = vsel %vm1356, 1, 0
        %v1389 = vsel %vm1357, 1, 0
        %v1390 = vsel %vm1358, 1, 0
        %v1391 = vsel %vm1359, 1, 0
        %v1392 = vsel %vm1360, 1, 0
        %v1393 = vsel %vm1361, 1, 0
        %v1394 = vsel %vm1362, 1, 0
        %v1395 = vsel %vm1363, 1, 0
        %v1396 = vsel %vm1364, 1, 0
        %v1397 = vsel %vm1365, 1, 0
        %v1398 = vsel %vm1366, 1, 0
        %v1399 = vsel %vm1367, 1, 0
        %v1400 = vsel %vm1368, 1, 0
        %v1401 = vsel %vm1369, 1, 0
        %v1402 = vsel %vm1370, 1, 0
        %v1403 = vsel %vm1371, 1, 0
        %v1404 = vsel %vm1372, 1, 0
        %v1405 = vsel %vm1373, 1, 0
        %v1406 = vsel %vm1374, 1, 0
        %v1407 = vsel %vm1375, 1, 0
        %v1408 = vcvt.s32.f32 %v1376
        %v1409 = vcvt.s32.f32 %v1377
        %v1410 = vcvt.s32.f32 %v1378
        %v1411 = vcvt.s32.f32 %v1379
        %v1412 = vcvt.s32.f32 %v1380
        %v1413 = vcvt.s32.f32 %v1381
        %v1414 = vcvt.s32.f32 %v1382
        %v1415 = vcvt.s32.f32 %v1383
        %v1416 = vcvt.s32.f32 %v1384
        %v1417 = vcvt.s32.f32 %v1385
        %v1418 = vcvt.s32.f32 %v1386
        %v1419 = vcvt.s32.f32 %v1387
        %v1420 = vcvt.s32.f32 %v1388
        %v1421 = vcvt.s32.f32 %v1389
        %v1422 = vcvt.s32.f32 %v1390
        %v1423 = vcvt.s32.f32 %v1391
        %v1424 = vcvt.s32.f32 %v1392
        %v1425 = vcvt.s32.f32 %v1393
        %v1426 = vcvt.s32.f32 %v1394
        %v1427 = vcvt.s32.f32 %v1395
        %v1428 = vcvt.s32.f32 %v1396
        %v1429 = vcvt.s32.f32 %v1397
        %v1430 = vcvt.s32.f32 %v1398
        %v1431 = vcvt.s32.f32 %v1399
        %v1432 = vcvt.s32.f32 %v1400
        %v1433 = vcvt.s32.f32 %v1401
        %v1434 = vcvt.s32.f32 %v1402
        %v1435 = vcvt.s32.f32 %v1403
        %v1436 = vcvt.s32.f32 %v1404
        %v1437 = vcvt.s32.f32 %v1405
        %v1438 = vcvt.s32.f32 %v1406
        %v1439 = vcvt.s32.f32 %v1407
        %vm1440 = vcmp.le.s32.totalorder %v1312, 14
        %vm1441 = vcmp.le.s32.totalorder %v1313, 14
        %vm1442 = vcmp.le.s32.totalorder %v1314, 14
        %vm1443 = vcmp.le.s32.totalorder %v1315, 14
        %vm1444 = vcmp.le.s32.totalorder %v1316, 14
        %vm1445 = vcmp.le.s32.totalorder %v1317, 14
        %vm1446 = vcmp.le.s32.totalorder %v1318, 14
        %vm1447 = vcmp.le.s32.totalorder %v1319, 14
        %vm1448 = vcmp.le.s32.totalorder %v1320, 14
        %vm1449 = vcmp.le.s32.totalorder %v1321, 14
        %vm1450 = vcmp.le.s32.totalorder %v1322, 14
        %vm1451 = vcmp.le.s32.totalorder %v1323, 14
        %vm1452 = vcmp.le.s32.totalorder %v1324, 14
        %vm1453 = vcmp.le.s32.totalorder %v1325, 14
        %vm1454 = vcmp.le.s32.totalorder %v1326, 14
        %vm1455 = vcmp.le.s32.totalorder %v1327, 14
        %vm1456 = vcmp.le.s32.totalorder %v1328, 14
        %vm1457 = vcmp.le.s32.totalorder %v1329, 14
        %vm1458 = vcmp.le.s32.totalorder %v1330, 14
        %vm1459 = vcmp.le.s32.totalorder %v1331, 14
        %vm1460 = vcmp.le.s32.totalorder %v1332, 14
        %vm1461 = vcmp.le.s32.totalorder %v1333, 14
        %vm1462 = vcmp.le.s32.totalorder %v1334, 14
        %vm1463 = vcmp.le.s32.totalorder %v1335, 14
        %vm1464 = vcmp.le.s32.totalorder %v1336, 14
        %vm1465 = vcmp.le.s32.totalorder %v1337, 14
        %vm1466 = vcmp.le.s32.totalorder %v1338, 14
        %vm1467 = vcmp.le.s32.totalorder %v1339, 14
        %vm1468 = vcmp.le.s32.totalorder %v1340, 14
        %vm1469 = vcmp.le.s32.totalorder %v1341, 14
        %vm1470 = vcmp.le.s32.totalorder %v1342, 14
        %vm1471 = vcmp.le.s32.totalorder %v1343, 14
        %v1472 = vsel %vm1440, 1, 0
        %v1473 = vsel %vm1441, 1, 0
        %v1474 = vsel %vm1442, 1, 0
        %v1475 = vsel %vm1443, 1, 0
        %v1476 = vsel %vm1444, 1, 0
        %v1477 = vsel %vm1445, 1, 0
        %v1478 = vsel %vm1446, 1, 0
        %v1479 = vsel %vm1447, 1, 0
        %v1480 = vsel %vm1448, 1, 0
        %v1481 = vsel %vm1449, 1, 0
        %v1482 = vsel %vm1450, 1, 0
        %v1483 = vsel %vm1451, 1, 0
        %v1484 = vsel %vm1452, 1, 0
        %v1485 = vsel %vm1453, 1, 0
        %v1486 = vsel %vm1454, 1, 0
        %v1487 = vsel %vm1455, 1, 0
        %v1488 = vsel %vm1456, 1, 0
        %v1489 = vsel %vm1457, 1, 0
        %v1490 = vsel %vm1458, 1, 0
        %v1491 = vsel %vm1459, 1, 0
        %v1492 = vsel %vm1460, 1, 0
        %v1493 = vsel %vm1461, 1, 0
        %v1494 = vsel %vm1462, 1, 0
        %v1495 = vsel %vm1463, 1, 0
        %v1496 = vsel %vm1464, 1, 0
        %v1497 = vsel %vm1465, 1, 0
        %v1498 = vsel %vm1466, 1, 0
        %v1499 = vsel %vm1467, 1, 0
        %v1500 = vsel %vm1468, 1, 0
        %v1501 = vsel %vm1469, 1, 0
        %v1502 = vsel %vm1470, 1, 0
        %v1503 = vsel %vm1471, 1, 0
        %v1504 = vcvt.s32.f32 %v1472
        %v1505 = vcvt.s32.f32 %v1473
        %v1506 = vcvt.s32.f32 %v1474
        %v1507 = vcvt.s32.f32 %v1475
        %v1508 = vcvt.s32.f32 %v1476
        %v1509 = vcvt.s32.f32 %v1477
        %v1510 = vcvt.s32.f32 %v1478
        %v1511 = vcvt.s32.f32 %v1479
        %v1512 = vcvt.s32.f32 %v1480
        %v1513 = vcvt.s32.f32 %v1481
        %v1514 = vcvt.s32.f32 %v1482
        %v1515 = vcvt.s32.f32 %v1483
        %v1516 = vcvt.s32.f32 %v1484
        %v1517 = vcvt.s32.f32 %v1485
        %v1518 = vcvt.s32.f32 %v1486
        %v1519 = vcvt.s32.f32 %v1487
        %v1520 = vcvt.s32.f32 %v1488
        %v1521 = vcvt.s32.f32 %v1489
        %v1522 = vcvt.s32.f32 %v1490
        %v1523 = vcvt.s32.f32 %v1491
        %v1524 = vcvt.s32.f32 %v1492
        %v1525 = vcvt.s32.f32 %v1493
        %v1526 = vcvt.s32.f32 %v1494
        %v1527 = vcvt.s32.f32 %v1495
        %v1528 = vcvt.s32.f32 %v1496
        %v1529 = vcvt.s32.f32 %v1497
        %v1530 = vcvt.s32.f32 %v1498
        %v1531 = vcvt.s32.f32 %v1499
        %v1532 = vcvt.s32.f32 %v1500
        %v1533 = vcvt.s32.f32 %v1501
        %v1534 = vcvt.s32.f32 %v1502
        %v1535 = vcvt.s32.f32 %v1503
        %v1536 = vld [vmem:[%s926] sm:$0xff]
        %v1537 = vld [vmem:[%s926 + $0x8] sm:$0xff]
        %v1538 = vld [vmem:[%s926 + $0x10] sm:$0xff]
        %v1539 = vld [vmem:[%s926 + $0x18] sm:$0xff]
        %v1540 = vld [vmem:[%s926 + $0x20] sm:$0xff]
        %v1541 = vld [vmem:[%s926 + $0x28] sm:$0xff]
        %v1542 = vld [vmem:[%s926 + $0x30] sm:$0xff]
        %v1543 = vld [vmem:[%s926 + $0x38] sm:$0xff]
        %v1544 = vld [vmem:[%s926 + $0x40] sm:$0xff]
        %v1545 = vld [vmem:[%s926 + $0x48] sm:$0xff]
        %v1546 = vld [vmem:[%s926 + $0x50] sm:$0xff]
        %v1547 = vld [vmem:[%s926 + $0x58] sm:$0xff]
        %v1548 = vld [vmem:[%s926 + $0x60] sm:$0xff]
        %v1549 = vld [vmem:[%s926 + $0x68] sm:$0xff]
        %v1550 = vld [vmem:[%s926 + $0x70] sm:$0xff]
        %v1551 = vld [vmem:[%s926 + $0x78] sm:$0xff]
        %v1552 = vld [vmem:[%s926 + $0x80] sm:$0xff]
        %v1553 = vld [vmem:[%s926 + $0x88] sm:$0xff]
        %v1554 = vld [vmem:[%s926 + $0x90] sm:$0xff]
        %v1555 = vld [vmem:[%s926 + $0x98] sm:$0xff]
        %v1556 = vld [vmem:[%s926 + $0xa0] sm:$0xff]
        %v1557 = vld [vmem:[%s926 + $0xa8] sm:$0xff]
        %v1558 = vld [vmem:[%s926 + $0xb0] sm:$0xff]
        %v1559 = vld [vmem:[%s926 + $0xb8] sm:$0xff]
        %v1560 = vld [vmem:[%s926 + $0xc0] sm:$0xff]
        %v1561 = vld [vmem:[%s926 + $0xc8] sm:$0xff]
        %v1562 = vld [vmem:[%s926 + $0xd0] sm:$0xff]
        %v1563 = vld [vmem:[%s926 + $0xd8] sm:$0xff]
        %v1564 = vld [vmem:[%s926 + $0xe0] sm:$0xff]
        %v1565 = vld [vmem:[%s926 + $0xe8] sm:$0xff]
        %v1566 = vld [vmem:[%s926 + $0xf0] sm:$0xff]
        %v1567 = vld [vmem:[%s926 + $0xf8] sm:$0xff]
        %vm1600 = vcmask 1040384
        %v1601 = vrot.slane %v1536, 7
        %v1602 = vrot.slane %v1537, 7
        %v1603 = vsel %vm1600, %v1601, %v1602
        %v1604 = vrot.slane %v1538, 7
        %v1605 = vsel %vm1600, %v1602, %v1604
        %v1606 = vrot.slane %v1539, 7
        %v1607 = vsel %vm1600, %v1604, %v1606
        %v1608 = vrot.slane %v1540, 7
        %v1609 = vsel %vm1600, %v1606, %v1608
        %v1610 = vrot.slane %v1541, 7
        %v1611 = vsel %vm1600, %v1608, %v1610
        %v1612 = vrot.slane %v1542, 7
        %v1613 = vsel %vm1600, %v1610, %v1612
        %v1614 = vrot.slane %v1543, 7
        %v1615 = vsel %vm1600, %v1612, %v1614
        %v1616 = vrot.slane %v1544, 7
        %v1617 = vsel %vm1600, %v1614, %v1616
        %v1618 = vrot.slane %v1545, 7
        %v1619 = vsel %vm1600, %v1616, %v1618
        %v1620 = vrot.slane %v1546, 7
        %v1621 = vsel %vm1600, %v1618, %v1620
        %v1622 = vrot.slane %v1547, 7
        %v1623 = vsel %vm1600, %v1620, %v1622
        %v1624 = vrot.slane %v1548, 7
        %v1625 = vsel %vm1600, %v1622, %v1624
        %v1626 = vrot.slane %v1549, 7
        %v1627 = vsel %vm1600, %v1624, %v1626
        %v1628 = vrot.slane %v1550, 7
        %v1629 = vsel %vm1600, %v1626, %v1628
        %v1630 = vrot.slane %v1551, 7
        %v1631 = vsel %vm1600, %v1628, %v1630
        %v1632 = vrot.slane %v1552, 7
        %v1633 = vsel %vm1600, %v1630, %v1632
        %v1634 = vrot.slane %v1553, 7
        %v1635 = vsel %vm1600, %v1632, %v1634
        %v1636 = vrot.slane %v1554, 7
        %v1637 = vsel %vm1600, %v1634, %v1636
        %v1638 = vrot.slane %v1555, 7
        %v1639 = vsel %vm1600, %v1636, %v1638
        %v1640 = vrot.slane %v1556, 7
        %v1641 = vsel %vm1600, %v1638, %v1640
        %v1642 = vrot.slane %v1557, 7
        %v1643 = vsel %vm1600, %v1640, %v1642
        %v1644 = vrot.slane %v1558, 7
        %v1645 = vsel %vm1600, %v1642, %v1644
        %v1646 = vrot.slane %v1559, 7
        %v1647 = vsel %vm1600, %v1644, %v1646
        %v1648 = vrot.slane %v1560, 7
        %v1649 = vsel %vm1600, %v1646, %v1648
        %v1650 = vrot.slane %v1561, 7
        %v1651 = vsel %vm1600, %v1648, %v1650
        %v1652 = vrot.slane %v1562, 7
        %v1653 = vsel %vm1600, %v1650, %v1652
        %v1654 = vrot.slane %v1563, 7
        %v1655 = vsel %vm1600, %v1652, %v1654
        %v1656 = vrot.slane %v1564, 7
        %v1657 = vsel %vm1600, %v1654, %v1656
        %v1658 = vrot.slane %v1565, 7
        %v1659 = vsel %vm1600, %v1656, %v1658
        %v1660 = vrot.slane %v1566, 7
        %v1661 = vsel %vm1600, %v1658, %v1660
        %v1662 = vrot.slane %v1567, 7
        %v1663 = vsel %vm1600, %v1660, %v1662
        %v1697 = vsel %vm1600, 0.0, %v1601
        %v1698 = vsel %vm1600, %v1662, 0.0
        %v1699 = vmul.f32 %v1408, 0.0
        %v1700 = vmul.f32 %v1409, 0.0
        %v1701 = vmul.f32 %v1697, %v1410
        %v1702 = vmul.f32 %v1603, %v1411
        %v1703 = vmul.f32 %v1605, %v1412
        %v1704 = vmul.f32 %v1607, %v1413
        %v1705 = vmul.f32 %v1609, %v1414
        %v1706 = vmul.f32 %v1611, %v1415
        %v1707 = vmul.f32 %v1613, %v1416
        %v1708 = vmul.f32 %v1615, %v1417
        %v1709 = vmul.f32 %v1617, %v1418
        %v1710 = vmul.f32 %v1619, %v1419
        %v1711 = vmul.f32 %v1621, %v1420
        %v1712 = vmul.f32 %v1623, %v1421
        %v1713 = vmul.f32 %v1625, %v1422
        %v1714 = vmul.f32 %v1627, %v1423
        %v1715 = vmul.f32 %v1629, %v1424
        %v1716 = vmul.f32 %v1631, %v1425
        %v1717 = vmul.f32 %v1633, %v1426
        %v1718 = vmul.f32 %v1635, %v1427
        %v1719 = vmul.f32 %v1637, %v1428
        %v1720 = vmul.f32 %v1639, %v1429
        %v1721 = vmul.f32 %v1641, %v1430
        %v1722 = vmul.f32 %v1643, %v1431
        %v1723 = vmul.f32 %v1645, %v1432
        %v1724 = vmul.f32 %v1647, %v1433
        %v1725 = vmul.f32 %v1649, %v1434
        %v1726 = vmul.f32 %v1651, %v1435
        %v1727 = vmul.f32 %v1653, %v1436
        %v1728 = vmul.f32 %v1655, %v1437
        %v1729 = vmul.f32 %v1657, %v1438
        %v1730 = vmul.f32 %v1659, %v1439
        %vm1763 = vcmask 1041408
        %v1764 = vrot.slane %v1504, 6
        %v1765 = vrot.slane %v1505, 6
        %v1766 = vsel %vm1763, %v1764, %v1765
        %v1767 = vrot.slane %v1506, 6
        %v1768 = vsel %vm1763, %v1765, %v1767
        %v1769 = vrot.slane %v1507, 6
        %v1770 = vsel %vm1763, %v1767, %v1769
        %v1771 = vrot.slane %v1508, 6
        %v1772 = vsel %vm1763, %v1769, %v1771
        %v1773 = vrot.slane %v1509, 6
        %v1774 = vsel %vm1763, %v1771, %v1773
        %v1775 = vrot.slane %v1510, 6
        %v1776 = vsel %vm1763, %v1773, %v1775
        %v1777 = vrot.slane %v1511, 6
        %v1778 = vsel %vm1763, %v1775, %v1777
        %v1779 = vrot.slane %v1512, 6
        %v1780 = vsel %vm1763, %v1777, %v1779
        %v1781 = vrot.slane %v1513, 6
        %v1782 = vsel %vm1763, %v1779, %v1781
        %v1783 = vrot.slane %v1514, 6
        %v1784 = vsel %vm1763, %v1781, %v1783
        %v1785 = vrot.slane %v1515, 6
        %v1786 = vsel %vm1763, %v1783, %v1785
        %v1787 = vrot.slane %v1516, 6
        %v1788 = vsel %vm1763, %v1785, %v1787
        %v1789 = vrot.slane %v1517, 6
        %v1790 = vsel %vm1763, %v1787, %v1789
        %v1791 = vrot.slane %v1518, 6
        %v1792 = vsel %vm1763, %v1789, %v1791
        %v1793 = vrot.slane %v1519, 6
        %v1794 = vsel %vm1763, %v1791, %v1793
        %v1795 = vrot.slane %v1520, 6
        %v1796 = vsel %vm1763, %v1793, %v1795
        %v1797 = vrot.slane %v1521, 6
        %v1798 = vsel %vm1763, %v1795, %v1797
        %v1799 = vrot.slane %v1522, 6
        %v1800 = vsel %vm1763, %v1797, %v1799
        %v1801 = vrot.slane %v1523, 6
        %v1802 = vsel %vm1763, %v1799, %v1801
        %v1803 = vrot.slane %v1524, 6
        %v1804 = vsel %vm1763, %v1801, %v1803
        %v1805 = vrot.slane %v1525, 6
        %v1806 = vsel %vm1763, %v1803, %v1805
        %v1807 = vrot.slane %v1526, 6
        %v1808 = vsel %vm1763, %v1805, %v1807
        %v1809 = vrot.slane %v1527, 6
        %v1810 = vsel %vm1763, %v1807, %v1809
        %v1811 = vrot.slane %v1528, 6
        %v1812 = vsel %vm1763, %v1809, %v1811
        %v1813 = vrot.slane %v1529, 6
        %v1814 = vsel %vm1763, %v1811, %v1813
        %v1815 = vrot.slane %v1530, 6
        %v1816 = vsel %vm1763, %v1813, %v1815
        %v1817 = vrot.slane %v1531, 6
        %v1818 = vsel %vm1763, %v1815, %v1817
        %v1819 = vrot.slane %v1532, 6
        %v1820 = vsel %vm1763, %v1817, %v1819
        %v1821 = vrot.slane %v1533, 6
        %v1822 = vsel %vm1763, %v1819, %v1821
        %v1823 = vrot.slane %v1534, 6
        %v1824 = vsel %vm1763, %v1821, %v1823
        %v1825 = vrot.slane %v1535, 6
        %v1826 = vsel %vm1763, %v1823, %v1825
        %v1860 = vmul.f32 %v1764, 0.0
        %v1861 = vmul.f32 %v1766, 0.0
        %v1862 = vmul.f32 %v1697, %v1768
        %v1863 = vmul.f32 %v1603, %v1770
        %v1864 = vmul.f32 %v1605, %v1772
        %v1865 = vmul.f32 %v1607, %v1774
        %v1866 = vmul.f32 %v1609, %v1776
        %v1867 = vmul.f32 %v1611, %v1778
        %v1868 = vmul.f32 %v1613, %v1780
        %v1869 = vmul.f32 %v1615, %v1782
        %v1870 = vmul.f32 %v1617, %v1784
        %v1871 = vmul.f32 %v1619, %v1786
        %v1872 = vmul.f32 %v1621, %v1788
        %v1873 = vmul.f32 %v1623, %v1790
        %v1874 = vmul.f32 %v1625, %v1792
        %v1875 = vmul.f32 %v1627, %v1794
        %v1876 = vmul.f32 %v1629, %v1796
        %v1877 = vmul.f32 %v1631, %v1798
        %v1878 = vmul.f32 %v1633, %v1800
        %v1879 = vmul.f32 %v1635, %v1802
        %v1880 = vmul.f32 %v1637, %v1804
        %v1881 = vmul.f32 %v1639, %v1806
        %v1882 = vmul.f32 %v1641, %v1808
        %v1883 = vmul.f32 %v1643, %v1810
        %v1884 = vmul.f32 %v1645, %v1812
        %v1885 = vmul.f32 %v1647, %v1814
        %v1886 = vmul.f32 %v1649, %v1816
        %v1887 = vmul.f32 %v1651, %v1818
        %v1888 = vmul.f32 %v1653, %v1820
        %v1889 = vmul.f32 %v1655, %v1822
        %v1890 = vmul.f32 %v1657, %v1824
        %v1891 = vmul.f32 %v1659, %v1826
        %v1892 = vmul.f32 %v1661, %v1825
        %v1893 = vmul.f32 %v1697, %v1408
        %v1894 = vmul.f32 %v1603, %v1409
        %v1895 = vmul.f32 %v1605, %v1410
        %v1896 = vmul.f32 %v1607, %v1411
        %v1897 = vmul.f32 %v1609, %v1412
        %v1898 = vmul.f32 %v1611, %v1413
        %v1899 = vmul.f32 %v1613, %v1414
        %v1900 = vmul.f32 %v1615, %v1415
        %v1901 = vmul.f32 %v1617, %v1416
        %v1902 = vmul.f32 %v1619, %v1417
        %v1903 = vmul.f32 %v1621, %v1418
        %v1904 = vmul.f32 %v1623, %v1419
        %v1905 = vmul.f32 %v1625, %v1420
        %v1906 = vmul.f32 %v1627, %v1421
        %v1907 = vmul.f32 %v1629, %v1422
        %v1908 = vmul.f32 %v1631, %v1423
        %v1909 = vmul.f32 %v1633, %v1424
        %v1910 = vmul.f32 %v1635, %v1425
        %v1911 = vmul.f32 %v1637, %v1426
        %v1912 = vmul.f32 %v1639, %v1427
        %v1913 = vmul.f32 %v1641, %v1428
        %v1914 = vmul.f32 %v1643, %v1429
        %v1915 = vmul.f32 %v1645, %v1430
        %v1916 = vmul.f32 %v1647, %v1431
        %v1917 = vmul.f32 %v1649, %v1432
        %v1918 = vmul.f32 %v1651, %v1433
        %v1919 = vmul.f32 %v1653, %v1434
        %v1920 = vmul.f32 %v1655, %v1435
        %v1921 = vmul.f32 %v1657, %v1436
        %v1922 = vmul.f32 %v1659, %v1437
        %v1923 = vmul.f32 %v1661, %v1438
        %v1924 = vmul.f32 %v1663, %v1439
        %v1925 = vmul.f32 %v1697, %v1764
        %v1926 = vmul.f32 %v1603, %v1766
        %v1927 = vmul.f32 %v1605, %v1768
        %v1928 = vmul.f32 %v1607, %v1770
        %v1929 = vmul.f32 %v1609, %v1772
        %v1930 = vmul.f32 %v1611, %v1774
        %v1931 = vmul.f32 %v1613, %v1776
        %v1932 = vmul.f32 %v1615, %v1778
        %v1933 = vmul.f32 %v1617, %v1780
        %v1934 = vmul.f32 %v1619, %v1782
        %v1935 = vmul.f32 %v1621, %v1784
        %v1936 = vmul.f32 %v1623, %v1786
        %v1937 = vmul.f32 %v1625, %v1788
        %v1938 = vmul.f32 %v1627, %v1790
        %v1939 = vmul.f32 %v1629, %v1792
        %v1940 = vmul.f32 %v1631, %v1794
        %v1941 = vmul.f32 %v1633, %v1796
        %v1942 = vmul.f32 %v1635, %v1798
        %v1943 = vmul.f32 %v1637, %v1800
        %v1944 = vmul.f32 %v1639, %v1802
        %v1945 = vmul.f32 %v1641, %v1804
        %v1946 = vmul.f32 %v1643, %v1806
        %v1947 = vmul.f32 %v1645, %v1808
        %v1948 = vmul.f32 %v1647, %v1810
        %v1949 = vmul.f32 %v1649, %v1812
        %v1950 = vmul.f32 %v1651, %v1814
        %v1951 = vmul.f32 %v1653, %v1816
        %v1952 = vmul.f32 %v1655, %v1818
        %v1953 = vmul.f32 %v1657, %v1820
        %v1954 = vmul.f32 %v1659, %v1822
        %v1955 = vmul.f32 %v1661, %v1824
        %v1956 = vmul.f32 %v1663, %v1826
        %v1957 = vmul.f32 %v1698, %v1825
        %v1958 = vmul.f32 %v1605, %v1408
        %v1959 = vmul.f32 %v1607, %v1409
        %v1960 = vmul.f32 %v1609, %v1410
        %v1961 = vmul.f32 %v1611, %v1411
        %v1962 = vmul.f32 %v1613, %v1412
        %v1963 = vmul.f32 %v1615, %v1413
        %v1964 = vmul.f32 %v1617, %v1414
        %v1965 = vmul.f32 %v1619, %v1415
        %v1966 = vmul.f32 %v1621, %v1416
        %v1967 = vmul.f32 %v1623, %v1417
        %v1968 = vmul.f32 %v1625, %v1418
        %v1969 = vmul.f32 %v1627, %v1419
        %v1970 = vmul.f32 %v1629, %v1420
        %v1971 = vmul.f32 %v1631, %v1421
        %v1972 = vmul.f32 %v1633, %v1422
        %v1973 = vmul.f32 %v1635, %v1423
        %v1974 = vmul.f32 %v1637, %v1424
        %v1975 = vmul.f32 %v1639, %v1425
        %v1976 = vmul.f32 %v1641, %v1426
        %v1977 = vmul.f32 %v1643, %v1427
        %v1978 = vmul.f32 %v1645, %v1428
        %v1979 = vmul.f32 %v1647, %v1429
        %v1980 = vmul.f32 %v1649, %v1430
        %v1981 = vmul.f32 %v1651, %v1431
        %v1982 = vmul.f32 %v1653, %v1432
        %v1983 = vmul.f32 %v1655, %v1433
        %v1984 = vmul.f32 %v1657, %v1434
        %v1985 = vmul.f32 %v1659, %v1435
        %v1986 = vmul.f32 %v1661, %v1436
        %v1987 = vmul.f32 %v1663, %v1437
        %v1988 = vmul.f32 %v1698, %v1438
        %v1989 = vmul.f32 %v1439, 0.0
        %v1990 = vmul.f32 %v1605, %v1764
        %v1991 = vmul.f32 %v1607, %v1766
        %v1992 = vmul.f32 %v1609, %v1768
        %v1993 = vmul.f32 %v1611, %v1770
        %v1994 = vmul.f32 %v1613, %v1772
        %v1995 = vmul.f32 %v1615, %v1774
        %v1996 = vmul.f32 %v1617, %v1776
        %v1997 = vmul.f32 %v1619, %v1778
        %v1998 = vmul.f32 %v1621, %v1780
        %v1999 = vmul.f32 %v1623, %v1782
        %v2000 = vmul.f32 %v1625, %v1784
        %v2001 = vmul.f32 %v1627, %v1786
        %v2002 = vmul.f32 %v1629, %v1788
        %v2003 = vmul.f32 %v1631, %v1790
        %v2004 = vmul.f32 %v1633, %v1792
        %v2005 = vmul.f32 %v1635, %v1794
        %v2006 = vmul.f32 %v1637, %v1796
        %v2007 = vmul.f32 %v1639, %v1798
        %v2008 = vmul.f32 %v1641, %v1800
        %v2009 = vmul.f32 %v1643, %v1802
        %v2010 = vmul.f32 %v1645, %v1804
        %v2011 = vmul.f32 %v1647, %v1806
        %v2012 = vmul.f32 %v1649, %v1808
        %v2013 = vmul.f32 %v1651, %v1810
        %v2014 = vmul.f32 %v1653, %v1812
        %v2015 = vmul.f32 %v1655, %v1814
        %v2016 = vmul.f32 %v1657, %v1816
        %v2017 = vmul.f32 %v1659, %v1818
        %v2018 = vmul.f32 %v1661, %v1820
        %v2019 = vmul.f32 %v1663, %v1822
        %v2020 = vmul.f32 %v1698, %v1824
        %v2021 = vmul.f32 %v1826, 0.0
        %v2022 = vmul.f32 %v1825, 0.0
        %vm2025 = vcmask 1046528
        %v2026 = vrot.slane 0.0, 1
        %v2027 = vsel %vm2025, %v2026, %v2026
        %v2028 = vrot.slane %v1697, 1
        %v2029 = vsel %vm2025, %v2026, %v2028
        %v2030 = vrot.slane %v1603, 1
        %v2031 = vsel %vm2025, %v2028, %v2030
        %v2032 = vrot.slane %v1605, 1
        %v2033 = vsel %vm2025, %v2030, %v2032
        %v2034 = vrot.slane %v1607, 1
        %v2035 = vsel %vm2025, %v2032, %v2034
        %v2036 = vrot.slane %v1609, 1
        %v2037 = vsel %vm2025, %v2034, %v2036
        %v2038 = vrot.slane %v1611, 1
        %v2039 = vsel %vm2025, %v2036, %v2038
        %v2040 = vrot.slane %v1613, 1
        %v2041 = vsel %vm2025, %v2038, %v2040
        %v2042 = vrot.slane %v1615, 1
        %v2043 = vsel %vm2025, %v2040, %v2042
        %v2044 = vrot.slane %v1617, 1
        %v2045 = vsel %vm2025, %v2042, %v2044
        %v2046 = vrot.slane %v1619, 1
        %v2047 = vsel %vm2025, %v2044, %v2046
        %v2048 = vrot.slane %v1621, 1
        %v2049 = vsel %vm2025, %v2046, %v2048
        %v2050 = vrot.slane %v1623, 1
        %v2051 = vsel %vm2025, %v2048, %v2050
        %v2052 = vrot.slane %v1625, 1
        %v2053 = vsel %vm2025, %v2050, %v2052
        %v2054 = vrot.slane %v1627, 1
        %v2055 = vsel %vm2025, %v2052, %v2054
        %v2056 = vrot.slane %v1629, 1
        %v2057 = vsel %vm2025, %v2054, %v2056
        %v2058 = vrot.slane %v1631, 1
        %v2059 = vsel %vm2025, %v2056, %v2058
        %v2060 = vrot.slane %v1633, 1
        %v2061 = vsel %vm2025, %v2058, %v2060
        %v2062 = vrot.slane %v1635, 1
        %v2063 = vsel %vm2025, %v2060, %v2062
        %v2064 = vrot.slane %v1637, 1
        %v2065 = vsel %vm2025, %v2062, %v2064
        %v2066 = vrot.slane %v1639, 1
        %v2067 = vsel %vm2025, %v2064, %v2066
        %v2068 = vrot.slane %v1641, 1
        %v2069 = vsel %vm2025, %v2066, %v2068
        %v2070 = vrot.slane %v1643, 1
        %v2071 = vsel %vm2025, %v2068, %v2070
        %v2072 = vrot.slane %v1645, 1
        %v2073 = vsel %vm2025, %v2070, %v2072
        %v2074 = vrot.slane %v1647, 1
        %v2075 = vsel %vm2025, %v2072, %v2074
        %v2076 = vrot.slane %v1649, 1
        %v2077 = vsel %vm2025, %v2074, %v2076
        %v2078 = vrot.slane %v1651, 1
        %v2079 = vsel %vm2025, %v2076, %v2078
        %v2080 = vrot.slane %v1653, 1
        %v2081 = vsel %vm2025, %v2078, %v2080
        %v2082 = vrot.slane %v1655, 1
        %v2083 = vsel %vm2025, %v2080, %v2082
        %v2084 = vrot.slane %v1657, 1
        %v2085 = vsel %vm2025, %v2082, %v2084
        %v2086 = vrot.slane %v1659, 1
        %v2087 = vsel %vm2025, %v2084, %v2086
        %v2088 = vrot.slane %v1661, 1
        %v2089 = vsel %vm2025, %v2086, %v2088
        %2090 = vrot.lane.b32.xlu0 %v2027, 1
        %v2091 = vpop.permute.xlu0 %2090
        %2092 = vrot.lane.b32.xlu0 %v2029, 1
        %v2093 = vpop.permute.xlu0 %2092
        %2094 = vrot.lane.b32.xlu0 %v2031, 1
        %v2095 = vpop.permute.xlu0 %2094
        %2096 = vrot.lane.b32.xlu0 %v2033, 1
        %v2097 = vpop.permute.xlu0 %2096
        %2098 = vrot.lane.b32.xlu0 %v2035, 1
        %v2099 = vpop.permute.xlu0 %2098
        %2100 = vrot.lane.b32.xlu0 %v2037, 1
        %v2101 = vpop.permute.xlu0 %2100
        %2102 = vrot.lane.b32.xlu0 %v2039, 1
        %v2103 = vpop.permute.xlu0 %2102
        %2104 = vrot.lane.b32.xlu0 %v2041, 1
        %v2105 = vpop.permute.xlu0 %2104
        %2106 = vrot.lane.b32.xlu0 %v2043, 1
        %v2107 = vpop.permute.xlu0 %2106
        %2108 = vrot.lane.b32.xlu0 %v2045, 1
        %v2109 = vpop.permute.xlu0 %2108
        %2110 = vrot.lane.b32.xlu0 %v2047, 1
        %v2111 = vpop.permute.xlu0 %2110
        %2112 = vrot.lane.b32.xlu0 %v2049, 1
        %v2113 = vpop.permute.xlu0 %2112
        %2114 = vrot.lane.b32.xlu0 %v2051, 1
        %v2115 = vpop.permute.xlu0 %2114
        %2116 = vrot.lane.b32.xlu0 %v2053, 1
        %v2117 = vpop.permute.xlu0 %2116
        %2118 = vrot.lane.b32.xlu0 %v2055, 1
        %v2119 = vpop.permute.xlu0 %2118
        %2120 = vrot.lane.b32.xlu0 %v2057, 1
        %v2121 = vpop.permute.xlu0 %2120
        %2122 = vrot.lane.b32.xlu0 %v2059, 1
        %v2123 = vpop.permute.xlu0 %2122
        %2124 = vrot.lane.b32.xlu0 %v2061, 1
        %v2125 = vpop.permute.xlu0 %2124
        %2126 = vrot.lane.b32.xlu0 %v2063, 1
        %v2127 = vpop.permute.xlu0 %2126
        %2128 = vrot.lane.b32.xlu0 %v2065, 1
        %v2129 = vpop.permute.xlu0 %2128
        %2130 = vrot.lane.b32.xlu0 %v2067, 1
        %v2131 = vpop.permute.xlu0 %2130
        %2132 = vrot.lane.b32.xlu0 %v2069, 1
        %v2133 = vpop.permute.xlu0 %2132
        %2134 = vrot.lane.b32.xlu0 %v2071, 1
        %v2135 = vpop.permute.xlu0 %2134
        %2136 = vrot.lane.b32.xlu0 %v2073, 1
        %v2137 = vpop.permute.xlu0 %2136
        %2138 = vrot.lane.b32.xlu0 %v2075, 1
        %v2139 = vpop.permute.xlu0 %2138
        %2140 = vrot.lane.b32.xlu0 %v2077, 1
        %v2141 = vpop.permute.xlu0 %2140
        %2142 = vrot.lane.b32.xlu0 %v2079, 1
        %v2143 = vpop.permute.xlu0 %2142
        %2144 = vrot.lane.b32.xlu0 %v2081, 1
        %v2145 = vpop.permute.xlu0 %2144
        %2146 = vrot.lane.b32.xlu0 %v2083, 1
        %v2147 = vpop.permute.xlu0 %2146
        %2148 = vrot.lane.b32.xlu0 %v2085, 1
        %v2149 = vpop.permute.xlu0 %2148
        %2150 = vrot.lane.b32.xlu0 %v2087, 1
        %v2151 = vpop.permute.xlu0 %2150
        %2152 = vrot.lane.b32.xlu0 %v2089, 1
        %v2153 = vpop.permute.xlu0 %2152
        %vm2219 = vcmask 1045504
        %v2220 = vrot.slane %v1860, 2
        %v2221 = vrot.slane %v1861, 2
        %v2222 = vsel %vm2219, %v2220, %v2221
        %v2223 = vrot.slane %v1862, 2
        %v2224 = vsel %vm2219, %v2221, %v2223
        %v2225 = vrot.slane %v1863, 2
        %v2226 = vsel %vm2219, %v2223, %v2225
        %v2227 = vrot.slane %v1864, 2
        %v2228 = vsel %vm2219, %v2225, %v2227
        %v2229 = vrot.slane %v1865, 2
        %v2230 = vsel %vm2219, %v2227, %v2229
        %v2231 = vrot.slane %v1866, 2
        %v2232 = vsel %vm2219, %v2229, %v2231
        %v2233 = vrot.slane %v1867, 2
        %v2234 = vsel %vm2219, %v2231, %v2233
        %v2235 = vrot.slane %v1868, 2
        %v2236 = vsel %vm2219, %v2233, %v2235
        %v2237 = vrot.slane %v1869, 2
        %v2238 = vsel %vm2219, %v2235, %v2237
        %v2239 = vrot.slane %v1870, 2
        %v2240 = vsel %vm2219, %v2237, %v2239
        %v2241 = vrot.slane %v1871, 2
        %v2242 = vsel %vm2219, %v2239, %v2241
        %v2243 = vrot.slane %v1872, 2
        %v2244 = vsel %vm2219, %v2241, %v2243
        %v2245 = vrot.slane %v1873, 2
        %v2246 = vsel %vm2219, %v2243, %v2245
        %v2247 = vrot.slane %v1874, 2
        %v2248 = vsel %vm2219, %v2245, %v2247
        %v2249 = vrot.slane %v1875, 2
        %v2250 = vsel %vm2219, %v2247, %v2249
        %v2251 = vrot.slane %v1876, 2
        %v2252 = vsel %vm2219, %v2249, %v2251
        %v2253 = vrot.slane %v1877, 2
        %v2254 = vsel %vm2219, %v2251, %v2253
        %v2255 = vrot.slane %v1878, 2
        %v2256 = vsel %vm2219, %v2253, %v2255
        %v2257 = vrot.slane %v1879, 2
        %v2258 = vsel %vm2219, %v2255, %v2257
        %v2259 = vrot.slane %v1880, 2
        %v2260 = vsel %vm2219, %v2257, %v2259
        %v2261 = vrot.slane %v1881, 2
        %v2262 = vsel %vm2219, %v2259, %v2261
        %v2263 = vrot.slane %v1882, 2
        %v2264 = vsel %vm2219, %v2261, %v2263
        %v2265 = vrot.slane %v1883, 2
        %v2266 = vsel %vm2219, %v2263, %v2265
        %v2267 = vrot.slane %v1884, 2
        %v2268 = vsel %vm2219, %v2265, %v2267
        %v2269 = vrot.slane %v1885, 2
        %v2270 = vsel %vm2219, %v2267, %v2269
        %v2271 = vrot.slane %v1886, 2
        %v2272 = vsel %vm2219, %v2269, %v2271
        %v2273 = vrot.slane %v1887, 2
        %v2274 = vsel %vm2219, %v2271, %v2273
        %v2275 = vrot.slane %v1888, 2
        %v2276 = vsel %vm2219, %v2273, %v2275
        %v2277 = vrot.slane %v1889, 2
        %v2278 = vsel %vm2219, %v2275, %v2277
        %v2279 = vrot.slane %v1890, 2
        %v2280 = vsel %vm2219, %v2277, %v2279
        %v2281 = vrot.slane %v1891, 2
        %v2282 = vsel %vm2219, %v2279, %v2281
        %v2283 = vrot.slane %v1892, 2
        %v2284 = vsel %vm2219, %v2281, %v2283
        %2285 = vrot.lane.b32.xlu0 %v2222, 2
        %v2286 = vpop.permute.xlu0 %2285
        %2287 = vrot.lane.b32.xlu0 %v2224, 2
        %v2288 = vpop.permute.xlu0 %2287
        %2289 = vrot.lane.b32.xlu0 %v2226, 2
        %v2290 = vpop.permute.xlu0 %2289
        %2291 = vrot.lane.b32.xlu0 %v2228, 2
        %v2292 = vpop.permute.xlu0 %2291
        %2293 = vrot.lane.b32.xlu0 %v2230, 2
        %v2294 = vpop.permute.xlu0 %2293
        %2295 = vrot.lane.b32.xlu0 %v2232, 2
        %v2296 = vpop.permute.xlu0 %2295
        %2297 = vrot.lane.b32.xlu0 %v2234, 2
        %v2298 = vpop.permute.xlu0 %2297
        %2299 = vrot.lane.b32.xlu0 %v2236, 2
        %v2300 = vpop.permute.xlu0 %2299
        %2301 = vrot.lane.b32.xlu0 %v2238, 2
        %v2302 = vpop.permute.xlu0 %2301
        %2303 = vrot.lane.b32.xlu0 %v2240, 2
        %v2304 = vpop.permute.xlu0 %2303
        %2305 = vrot.lane.b32.xlu0 %v2242, 2
        %v2306 = vpop.permute.xlu0 %2305
        %2307 = vrot.lane.b32.xlu0 %v2244, 2
        %v2308 = vpop.permute.xlu0 %2307
        %2309 = vrot.lane.b32.xlu0 %v2246, 2
        %v2310 = vpop.permute.xlu0 %2309
        %2311 = vrot.lane.b32.xlu0 %v2248, 2
        %v2312 = vpop.permute.xlu0 %2311
        %2313 = vrot.lane.b32.xlu0 %v2250, 2
        %v2314 = vpop.permute.xlu0 %2313
        %2315 = vrot.lane.b32.xlu0 %v2252, 2
        %v2316 = vpop.permute.xlu0 %2315
        %2317 = vrot.lane.b32.xlu0 %v2254, 2
        %v2318 = vpop.permute.xlu0 %2317
        %2319 = vrot.lane.b32.xlu0 %v2256, 2
        %v2320 = vpop.permute.xlu0 %2319
        %2321 = vrot.lane.b32.xlu0 %v2258, 2
        %v2322 = vpop.permute.xlu0 %2321
        %2323 = vrot.lane.b32.xlu0 %v2260, 2
        %v2324 = vpop.permute.xlu0 %2323
        %2325 = vrot.lane.b32.xlu0 %v2262, 2
        %v2326 = vpop.permute.xlu0 %2325
        %2327 = vrot.lane.b32.xlu0 %v2264, 2
        %v2328 = vpop.permute.xlu0 %2327
        %2329 = vrot.lane.b32.xlu0 %v2266, 2
        %v2330 = vpop.permute.xlu0 %2329
        %2331 = vrot.lane.b32.xlu0 %v2268, 2
        %v2332 = vpop.permute.xlu0 %2331
        %2333 = vrot.lane.b32.xlu0 %v2270, 2
        %v2334 = vpop.permute.xlu0 %2333
        %2335 = vrot.lane.b32.xlu0 %v2272, 2
        %v2336 = vpop.permute.xlu0 %2335
        %2337 = vrot.lane.b32.xlu0 %v2274, 2
        %v2338 = vpop.permute.xlu0 %2337
        %2339 = vrot.lane.b32.xlu0 %v2276, 2
        %v2340 = vpop.permute.xlu0 %2339
        %2341 = vrot.lane.b32.xlu0 %v2278, 2
        %v2342 = vpop.permute.xlu0 %2341
        %2343 = vrot.lane.b32.xlu0 %v2280, 2
        %v2344 = vpop.permute.xlu0 %2343
        %2345 = vrot.lane.b32.xlu0 %v2282, 2
        %v2346 = vpop.permute.xlu0 %2345
        %2347 = vrot.lane.b32.xlu0 %v2284, 2
        %v2348 = vpop.permute.xlu0 %2347
        %2413 = vrot.lane.b32.xlu0 %v1893, 3
        %v2414 = vpop.permute.xlu0 %2413
        %2415 = vrot.lane.b32.xlu0 %v1894, 3
        %v2416 = vpop.permute.xlu0 %2415
        %2417 = vrot.lane.b32.xlu0 %v1895, 3
        %v2418 = vpop.permute.xlu0 %2417
        %2419 = vrot.lane.b32.xlu0 %v1896, 3
        %v2420 = vpop.permute.xlu0 %2419
        %2421 = vrot.lane.b32.xlu0 %v1897, 3
        %v2422 = vpop.permute.xlu0 %2421
        %2423 = vrot.lane.b32.xlu0 %v1898, 3
        %v2424 = vpop.permute.xlu0 %2423
        %2425 = vrot.lane.b32.xlu0 %v1899, 3
        %v2426 = vpop.permute.xlu0 %2425
        %2427 = vrot.lane.b32.xlu0 %v1900, 3
        %v2428 = vpop.permute.xlu0 %2427
        %2429 = vrot.lane.b32.xlu0 %v1901, 3
        %v2430 = vpop.permute.xlu0 %2429
        %2431 = vrot.lane.b32.xlu0 %v1902, 3
        %v2432 = vpop.permute.xlu0 %2431
        %2433 = vrot.lane.b32.xlu0 %v1903, 3
        %v2434 = vpop.permute.xlu0 %2433
        %2435 = vrot.lane.b32.xlu0 %v1904, 3
        %v2436 = vpop.permute.xlu0 %2435
        %2437 = vrot.lane.b32.xlu0 %v1905, 3
        %v2438 = vpop.permute.xlu0 %2437
        %2439 = vrot.lane.b32.xlu0 %v1906, 3
        %v2440 = vpop.permute.xlu0 %2439
        %2441 = vrot.lane.b32.xlu0 %v1907, 3
        %v2442 = vpop.permute.xlu0 %2441
        %2443 = vrot.lane.b32.xlu0 %v1908, 3
        %v2444 = vpop.permute.xlu0 %2443
        %2445 = vrot.lane.b32.xlu0 %v1909, 3
        %v2446 = vpop.permute.xlu0 %2445
        %2447 = vrot.lane.b32.xlu0 %v1910, 3
        %v2448 = vpop.permute.xlu0 %2447
        %2449 = vrot.lane.b32.xlu0 %v1911, 3
        %v2450 = vpop.permute.xlu0 %2449
        %2451 = vrot.lane.b32.xlu0 %v1912, 3
        %v2452 = vpop.permute.xlu0 %2451
        %2453 = vrot.lane.b32.xlu0 %v1913, 3
        %v2454 = vpop.permute.xlu0 %2453
        %2455 = vrot.lane.b32.xlu0 %v1914, 3
        %v2456 = vpop.permute.xlu0 %2455
        %2457 = vrot.lane.b32.xlu0 %v1915, 3
        %v2458 = vpop.permute.xlu0 %2457
        %2459 = vrot.lane.b32.xlu0 %v1916, 3
        %v2460 = vpop.permute.xlu0 %2459
        %2461 = vrot.lane.b32.xlu0 %v1917, 3
        %v2462 = vpop.permute.xlu0 %2461
        %2463 = vrot.lane.b32.xlu0 %v1918, 3
        %v2464 = vpop.permute.xlu0 %2463
        %2465 = vrot.lane.b32.xlu0 %v1919, 3
        %v2466 = vpop.permute.xlu0 %2465
        %2467 = vrot.lane.b32.xlu0 %v1920, 3
        %v2468 = vpop.permute.xlu0 %2467
        %2469 = vrot.lane.b32.xlu0 %v1921, 3
        %v2470 = vpop.permute.xlu0 %2469
        %2471 = vrot.lane.b32.xlu0 %v1922, 3
        %v2472 = vpop.permute.xlu0 %2471
        %2473 = vrot.lane.b32.xlu0 %v1923, 3
        %v2474 = vpop.permute.xlu0 %2473
        %2475 = vrot.lane.b32.xlu0 %v1924, 3
        %v2476 = vpop.permute.xlu0 %2475
        %v2510 = vrot.slane %v1663, 1
        %v2511 = vsel %vm2025, %v2088, %v2510
        %v2512 = vrot.slane %v1698, 1
        %v2513 = vsel %vm2025, %v2510, %v2512
        %2514 = vrot.lane.b32.xlu0 %v2031, 4
        %v2515 = vpop.permute.xlu0 %2514
        %2516 = vrot.lane.b32.xlu0 %v2033, 4
        %v2517 = vpop.permute.xlu0 %2516
        %2518 = vrot.lane.b32.xlu0 %v2035, 4
        %v2519 = vpop.permute.xlu0 %2518
        %2520 = vrot.lane.b32.xlu0 %v2037, 4
        %v2521 = vpop.permute.xlu0 %2520
        %2522 = vrot.lane.b32.xlu0 %v2039, 4
        %v2523 = vpop.permute.xlu0 %2522
        %2524 = vrot.lane.b32.xlu0 %v2041, 4
        %v2525 = vpop.permute.xlu0 %2524
        %2526 = vrot.lane.b32.xlu0 %v2043, 4
        %v2527 = vpop.permute.xlu0 %2526
        %2528 = vrot.lane.b32.xlu0 %v2045, 4
        %v2529 = vpop.permute.xlu0 %2528
        %2530 = vrot.lane.b32.xlu0 %v2047, 4
        %v2531 = vpop.permute.xlu0 %2530
        %2532 = vrot.lane.b32.xlu0 %v2049, 4
        %v2533 = vpop.permute.xlu0 %2532
        %2534 = vrot.lane.b32.xlu0 %v2051, 4
        %v2535 = vpop.permute.xlu0 %2534
        %2536 = vrot.lane.b32.xlu0 %v2053, 4
        %v2537 = vpop.permute.xlu0 %2536
        %2538 = vrot.lane.b32.xlu0 %v2055, 4
        %v2539 = vpop.permute.xlu0 %2538
        %2540 = vrot.lane.b32.xlu0 %v2057, 4
        %v2541 = vpop.permute.xlu0 %2540
        %2542 = vrot.lane.b32.xlu0 %v2059, 4
        %v2543 = vpop.permute.xlu0 %2542
        %2544 = vrot.lane.b32.xlu0 %v2061, 4
        %v2545 = vpop.permute.xlu0 %2544
        %2546 = vrot.lane.b32.xlu0 %v2063, 4
        %v2547 = vpop.permute.xlu0 %2546
        %2548 = vrot.lane.b32.xlu0 %v2065, 4
        %v2549 = vpop.permute.xlu0 %2548
        %2550 = vrot.lane.b32.xlu0 %v2067, 4
        %v2551 = vpop.permute.xlu0 %2550
        %2552 = vrot.lane.b32.xlu0 %v2069, 4
        %v2553 = vpop.permute.xlu0 %2552
        %2554 = vrot.lane.b32.xlu0 %v2071, 4
        %v2555 = vpop.permute.xlu0 %2554
        %2556 = vrot.lane.b32.xlu0 %v2073, 4
        %v2557 = vpop.permute.xlu0 %2556
        %2558 = vrot.lane.b32.xlu0 %v2075, 4
        %v2559 = vpop.permute.xlu0 %2558
        %2560 = vrot.lane.b32.xlu0 %v2077, 4
        %v2561 = vpop.permute.xlu0 %2560
        %2562 = vrot.lane.b32.xlu0 %v2079, 4
        %v2563 = vpop.permute.xlu0 %2562
        %2564 = vrot.lane.b32.xlu0 %v2081, 4
        %v2565 = vpop.permute.xlu0 %2564
        %2566 = vrot.lane.b32.xlu0 %v2083, 4
        %v2567 = vpop.permute.xlu0 %2566
        %2568 = vrot.lane.b32.xlu0 %v2085, 4
        %v2569 = vpop.permute.xlu0 %2568
        %2570 = vrot.lane.b32.xlu0 %v2087, 4
        %v2571 = vpop.permute.xlu0 %2570
        %2572 = vrot.lane.b32.xlu0 %v2089, 4
        %v2573 = vpop.permute.xlu0 %2572
        %2574 = vrot.lane.b32.xlu0 %v2511, 4
        %v2575 = vpop.permute.xlu0 %2574
        %2576 = vrot.lane.b32.xlu0 %v2513, 4
        %v2577 = vpop.permute.xlu0 %2576
        %v2643 = vrot.slane %v1925, 2
        %v2644 = vrot.slane %v1926, 2
        %v2645 = vsel %vm2219, %v2643, %v2644
        %v2646 = vrot.slane %v1927, 2
        %v2647 = vsel %vm2219, %v2644, %v2646
        %v2648 = vrot.slane %v1928, 2
        %v2649 = vsel %vm2219, %v2646, %v2648
        %v2650 = vrot.slane %v1929, 2
        %v2651 = vsel %vm2219, %v2648, %v2650
        %v2652 = vrot.slane %v1930, 2
        %v2653 = vsel %vm2219, %v2650, %v2652
        %v2654 = vrot.slane %v1931, 2
        %v2655 = vsel %vm2219, %v2652, %v2654
        %v2656 = vrot.slane %v1932, 2
        %v2657 = vsel %vm2219, %v2654, %v2656
        %v2658 = vrot.slane %v1933, 2
        %v2659 = vsel %vm2219, %v2656, %v2658
        %v2660 = vrot.slane %v1934, 2
        %v2661 = vsel %vm2219, %v2658, %v2660
        %v2662 = vrot.slane %v1935, 2
        %v2663 = vsel %vm2219, %v2660, %v2662
        %v2664 = vrot.slane %v1936, 2
        %v2665 = vsel %vm2219, %v2662, %v2664
        %v2666 = vrot.slane %v1937, 2
        %v2667 = vsel %vm2219, %v2664, %v2666
        %v2668 = vrot.slane %v1938, 2
        %v2669 = vsel %vm2219, %v2666, %v2668
        %v2670 = vrot.slane %v1939, 2
        %v2671 = vsel %vm2219, %v2668, %v2670
        %v2672 = vrot.slane %v1940, 2
        %v2673 = vsel %vm2219, %v2670, %v2672
        %v2674 = vrot.slane %v1941, 2
        %v2675 = vsel %vm2219, %v2672, %v2674
        %v2676 = vrot.slane %v1942, 2
        %v2677 = vsel %vm2219, %v2674, %v2676
        %v2678 = vrot.slane %v1943, 2
        %v2679 = vsel %vm2219, %v2676, %v2678
        %v2680 = vrot.slane %v1944, 2
        %v2681 = vsel %vm2219, %v2678, %v2680
        %v2682 = vrot.slane %v1945, 2
        %v2683 = vsel %vm2219, %v2680, %v2682
        %v2684 = vrot.slane %v1946, 2
        %v2685 = vsel %vm2219, %v2682, %v2684
        %v2686 = vrot.slane %v1947, 2
        %v2687 = vsel %vm2219, %v2684, %v2686
        %v2688 = vrot.slane %v1948, 2
        %v2689 = vsel %vm2219, %v2686, %v2688
        %v2690 = vrot.slane %v1949, 2
        %v2691 = vsel %vm2219, %v2688, %v2690
        %v2692 = vrot.slane %v1950, 2
        %v2693 = vsel %vm2219, %v2690, %v2692
        %v2694 = vrot.slane %v1951, 2
        %v2695 = vsel %vm2219, %v2692, %v2694
        %v2696 = vrot.slane %v1952, 2
        %v2697 = vsel %vm2219, %v2694, %v2696
        %v2698 = vrot.slane %v1953, 2
        %v2699 = vsel %vm2219, %v2696, %v2698
        %v2700 = vrot.slane %v1954, 2
        %v2701 = vsel %vm2219, %v2698, %v2700
        %v2702 = vrot.slane %v1955, 2
        %v2703 = vsel %vm2219, %v2700, %v2702
        %v2704 = vrot.slane %v1956, 2
        %v2705 = vsel %vm2219, %v2702, %v2704
        %v2706 = vrot.slane %v1957, 2
        %v2707 = vsel %vm2219, %v2704, %v2706
        %2708 = vrot.lane.b32.xlu0 %v2645, 5
        %v2709 = vpop.permute.xlu0 %2708
        %2710 = vrot.lane.b32.xlu0 %v2647, 5
        %v2711 = vpop.permute.xlu0 %2710
        %2712 = vrot.lane.b32.xlu0 %v2649, 5
        %v2713 = vpop.permute.xlu0 %2712
        %2714 = vrot.lane.b32.xlu0 %v2651, 5
        %v2715 = vpop.permute.xlu0 %2714
        %2716 = vrot.lane.b32.xlu0 %v2653, 5
        %v2717 = vpop.permute.xlu0 %2716
        %2718 = vrot.lane.b32.xlu0 %v2655, 5
        %v2719 = vpop.permute.xlu0 %2718
        %2720 = vrot.lane.b32.xlu0 %v2657, 5
        %v2721 = vpop.permute.xlu0 %2720
        %2722 = vrot.lane.b32.xlu0 %v2659, 5
        %v2723 = vpop.permute.xlu0 %2722
        %2724 = vrot.lane.b32.xlu0 %v2661, 5
        %v2725 = vpop.permute.xlu0 %2724
        %2726 = vrot.lane.b32.xlu0 %v2663, 5
        %v2727 = vpop.permute.xlu0 %2726
        %2728 = vrot.lane.b32.xlu0 %v2665, 5
        %v2729 = vpop.permute.xlu0 %2728
        %2730 = vrot.lane.b32.xlu0 %v2667, 5
        %v2731 = vpop.permute.xlu0 %2730
        %2732 = vrot.lane.b32.xlu0 %v2669, 5
        %v2733 = vpop.permute.xlu0 %2732
        %2734 = vrot.lane.b32.xlu0 %v2671, 5
        %v2735 = vpop.permute.xlu0 %2734
        %2736 = vrot.lane.b32.xlu0 %v2673, 5
        %v2737 = vpop.permute.xlu0 %2736
        %2738 = vrot.lane.b32.xlu0 %v2675, 5
        %v2739 = vpop.permute.xlu0 %2738
        %2740 = vrot.lane.b32.xlu0 %v2677, 5
        %v2741 = vpop.permute.xlu0 %2740
        %2742 = vrot.lane.b32.xlu0 %v2679, 5
        %v2743 = vpop.permute.xlu0 %2742
        %2744 = vrot.lane.b32.xlu0 %v2681, 5
        %v2745 = vpop.permute.xlu0 %2744
        %2746 = vrot.lane.b32.xlu0 %v2683, 5
        %v2747 = vpop.permute.xlu0 %2746
        %2748 = vrot.lane.b32.xlu0 %v2685, 5
        %v2749 = vpop.permute.xlu0 %2748
        %2750 = vrot.lane.b32.xlu0 %v2687, 5
        %v2751 = vpop.permute.xlu0 %2750
        %2752 = vrot.lane.b32.xlu0 %v2689, 5
        %v2753 = vpop.permute.xlu0 %2752
        %2754 = vrot.lane.b32.xlu0 %v2691, 5
        %v2755 = vpop.permute.xlu0 %2754
        %2756 = vrot.lane.b32.xlu0 %v2693, 5
        %v2757 = vpop.permute.xlu0 %2756
        %2758 = vrot.lane.b32.xlu0 %v2695, 5
        %v2759 = vpop.permute.xlu0 %2758
        %2760 = vrot.lane.b32.xlu0 %v2697, 5
        %v2761 = vpop.permute.xlu0 %2760
        %2762 = vrot.lane.b32.xlu0 %v2699, 5
        %v2763 = vpop.permute.xlu0 %2762
        %2764 = vrot.lane.b32.xlu0 %v2701, 5
        %v2765 = vpop.permute.xlu0 %2764
        %2766 = vrot.lane.b32.xlu0 %v2703, 5
        %v2767 = vpop.permute.xlu0 %2766
        %2768 = vrot.lane.b32.xlu0 %v2705, 5
        %v2769 = vpop.permute.xlu0 %2768
        %2770 = vrot.lane.b32.xlu0 %v2707, 5
        %v2771 = vpop.permute.xlu0 %2770
        %2836 = vrot.lane.b32.xlu0 %v1958, 6
        %v2837 = vpop.permute.xlu0 %2836
        %2838 = vrot.lane.b32.xlu0 %v1959, 6
        %v2839 = vpop.permute.xlu0 %2838
        %2840 = vrot.lane.b32.xlu0 %v1960, 6
        %v2841 = vpop.permute.xlu0 %2840
        %2842 = vrot.lane.b32.xlu0 %v1961, 6
        %v2843 = vpop.permute.xlu0 %2842
        %2844 = vrot.lane.b32.xlu0 %v1962, 6
        %v2845 = vpop.permute.xlu0 %2844
        %2846 = vrot.lane.b32.xlu0 %v1963, 6
        %v2847 = vpop.permute.xlu0 %2846
        %2848 = vrot.lane.b32.xlu0 %v1964, 6
        %v2849 = vpop.permute.xlu0 %2848
        %2850 = vrot.lane.b32.xlu0 %v1965, 6
        %v2851 = vpop.permute.xlu0 %2850
        %2852 = vrot.lane.b32.xlu0 %v1966, 6
        %v2853 = vpop.permute.xlu0 %2852
        %2854 = vrot.lane.b32.xlu0 %v1967, 6
        %v2855 = vpop.permute.xlu0 %2854
        %2856 = vrot.lane.b32.xlu0 %v1968, 6
        %v2857 = vpop.permute.xlu0 %2856
        %2858 = vrot.lane.b32.xlu0 %v1969, 6
        %v2859 = vpop.permute.xlu0 %2858
        %2860 = vrot.lane.b32.xlu0 %v1970, 6
        %v2861 = vpop.permute.xlu0 %2860
        %2862 = vrot.lane.b32.xlu0 %v1971, 6
        %v2863 = vpop.permute.xlu0 %2862
        %2864 = vrot.lane.b32.xlu0 %v1972, 6
        %v2865 = vpop.permute.xlu0 %2864
        %2866 = vrot.lane.b32.xlu0 %v1973, 6
        %v2867 = vpop.permute.xlu0 %2866
        %2868 = vrot.lane.b32.xlu0 %v1974, 6
        %v2869 = vpop.permute.xlu0 %2868
        %2870 = vrot.lane.b32.xlu0 %v1975, 6
        %v2871 = vpop.permute.xlu0 %2870
        %2872 = vrot.lane.b32.xlu0 %v1976, 6
        %v2873 = vpop.permute.xlu0 %2872
        %2874 = vrot.lane.b32.xlu0 %v1977, 6
        %v2875 = vpop.permute.xlu0 %2874
        %2876 = vrot.lane.b32.xlu0 %v1978, 6
        %v2877 = vpop.permute.xlu0 %2876
        %2878 = vrot.lane.b32.xlu0 %v1979, 6
        %v2879 = vpop.permute.xlu0 %2878
        %2880 = vrot.lane.b32.xlu0 %v1980, 6
        %v2881 = vpop.permute.xlu0 %2880
        %2882 = vrot.lane.b32.xlu0 %v1981, 6
        %v2883 = vpop.permute.xlu0 %2882
        %2884 = vrot.lane.b32.xlu0 %v1982, 6
        %v2885 = vpop.permute.xlu0 %2884
        %2886 = vrot.lane.b32.xlu0 %v1983, 6
        %v2887 = vpop.permute.xlu0 %2886
        %2888 = vrot.lane.b32.xlu0 %v1984, 6
        %v2889 = vpop.permute.xlu0 %2888
        %2890 = vrot.lane.b32.xlu0 %v1985, 6
        %v2891 = vpop.permute.xlu0 %2890
        %2892 = vrot.lane.b32.xlu0 %v1986, 6
        %v2893 = vpop.permute.xlu0 %2892
        %2894 = vrot.lane.b32.xlu0 %v1987, 6
        %v2895 = vpop.permute.xlu0 %2894
        %2896 = vrot.lane.b32.xlu0 %v1988, 6
        %v2897 = vpop.permute.xlu0 %2896
        %2898 = vrot.lane.b32.xlu0 %v1989, 6
        %v2899 = vpop.permute.xlu0 %2898
        %v2932 = vsel %vm2025, %v2512, %v2026
        %2933 = vrot.lane.b32.xlu0 %v2035, 7
        %v2934 = vpop.permute.xlu0 %2933
        %2935 = vrot.lane.b32.xlu0 %v2037, 7
        %v2936 = vpop.permute.xlu0 %2935
        %2937 = vrot.lane.b32.xlu0 %v2039, 7
        %v2938 = vpop.permute.xlu0 %2937
        %2939 = vrot.lane.b32.xlu0 %v2041, 7
        %v2940 = vpop.permute.xlu0 %2939
        %2941 = vrot.lane.b32.xlu0 %v2043, 7
        %v2942 = vpop.permute.xlu0 %2941
        %2943 = vrot.lane.b32.xlu0 %v2045, 7
        %v2944 = vpop.permute.xlu0 %2943
        %2945 = vrot.lane.b32.xlu0 %v2047, 7
        %v2946 = vpop.permute.xlu0 %2945
        %2947 = vrot.lane.b32.xlu0 %v2049, 7
        %v2948 = vpop.permute.xlu0 %2947
        %2949 = vrot.lane.b32.xlu0 %v2051, 7
        %v2950 = vpop.permute.xlu0 %2949
        %2951 = vrot.lane.b32.xlu0 %v2053, 7
        %v2952 = vpop.permute.xlu0 %2951
        %2953 = vrot.lane.b32.xlu0 %v2055, 7
        %v2954 = vpop.permute.xlu0 %2953
        %2955 = vrot.lane.b32.xlu0 %v2057, 7
        %v2956 = vpop.permute.xlu0 %2955
        %2957 = vrot.lane.b32.xlu0 %v2059, 7
        %v2958 = vpop.permute.xlu0 %2957
        %2959 = vrot.lane.b32.xlu0 %v2061, 7
        %v2960 = vpop.permute.xlu0 %2959
        %2961 = vrot.lane.b32.xlu0 %v2063, 7
        %v2962 = vpop.permute.xlu0 %2961
        %2963 = vrot.lane.b32.xlu0 %v2065, 7
        %v2964 = vpop.permute.xlu0 %2963
        %2965 = vrot.lane.b32.xlu0 %v2067, 7
        %v2966 = vpop.permute.xlu0 %2965
        %2967 = vrot.lane.b32.xlu0 %v2069, 7
        %v2968 = vpop.permute.xlu0 %2967
        %2969 = vrot.lane.b32.xlu0 %v2071, 7
        %v2970 = vpop.permute.xlu0 %2969
        %2971 = vrot.lane.b32.xlu0 %v2073, 7
        %v2972 = vpop.permute.xlu0 %2971
        %2973 = vrot.lane.b32.xlu0 %v2075, 7
        %v2974 = vpop.permute.xlu0 %2973
        %2975 = vrot.lane.b32.xlu0 %v2077, 7
        %v2976 = vpop.permute.xlu0 %2975
        %2977 = vrot.lane.b32.xlu0 %v2079, 7
        %v2978 = vpop.permute.xlu0 %2977
        %2979 = vrot.lane.b32.xlu0 %v2081, 7
        %v2980 = vpop.permute.xlu0 %2979
        %2981 = vrot.lane.b32.xlu0 %v2083, 7
        %v2982 = vpop.permute.xlu0 %2981
        %2983 = vrot.lane.b32.xlu0 %v2085, 7
        %v2984 = vpop.permute.xlu0 %2983
        %2985 = vrot.lane.b32.xlu0 %v2087, 7
        %v2986 = vpop.permute.xlu0 %2985
        %2987 = vrot.lane.b32.xlu0 %v2089, 7
        %v2988 = vpop.permute.xlu0 %2987
        %2989 = vrot.lane.b32.xlu0 %v2511, 7
        %v2990 = vpop.permute.xlu0 %2989
        %2991 = vrot.lane.b32.xlu0 %v2513, 7
        %v2992 = vpop.permute.xlu0 %2991
        %2993 = vrot.lane.b32.xlu0 %v2932, 7
        %v2994 = vpop.permute.xlu0 %2993
        %2995 = vrot.lane.b32.xlu0 %v2027, 7
        %v2996 = vpop.permute.xlu0 %2995
        %v3062 = vrot.slane %v1990, 2
        %v3063 = vrot.slane %v1991, 2
        %v3064 = vsel %vm2219, %v3062, %v3063
        %v3065 = vrot.slane %v1992, 2
        %v3066 = vsel %vm2219, %v3063, %v3065
        %v3067 = vrot.slane %v1993, 2
        %v3068 = vsel %vm2219, %v3065, %v3067
        %v3069 = vrot.slane %v1994, 2
        %v3070 = vsel %vm2219, %v3067, %v3069
        %v3071 = vrot.slane %v1995, 2
        %v3072 = vsel %vm2219, %v3069, %v3071
        %v3073 = vrot.slane %v1996, 2
        %v3074 = vsel %vm2219, %v3071, %v3073
        %v3075 = vrot.slane %v1997, 2
        %v3076 = vsel %vm2219, %v3073, %v3075
        %v3077 = vrot.slane %v1998, 2
        %v3078 = vsel %vm2219, %v3075, %v3077
        %v3079 = vrot.slane %v1999, 2
        %v3080 = vsel %vm2219, %v3077, %v3079
        %v3081 = vrot.slane %v2000, 2
        %v3082 = vsel %vm2219, %v3079, %v3081
        %v3083 = vrot.slane %v2001, 2
        %v3084 = vsel %vm2219, %v3081, %v3083
        %v3085 = vrot.slane %v2002, 2
        %v3086 = vsel %vm2219, %v3083, %v3085
        %v3087 = vrot.slane %v2003, 2
        %v3088 = vsel %vm2219, %v3085, %v3087
        %v3089 = vrot.slane %v2004, 2
        %v3090 = vsel %vm2219, %v3087, %v3089
        %v3091 = vrot.slane %v2005, 2
        %v3092 = vsel %vm2219, %v3089, %v3091
        %v3093 = vrot.slane %v2006, 2
        %v3094 = vsel %vm2219, %v3091, %v3093
        %v3095 = vrot.slane %v2007, 2
        %v3096 = vsel %vm2219, %v3093, %v3095
        %v3097 = vrot.slane %v2008, 2
        %v3098 = vsel %vm2219, %v3095, %v3097
        %v3099 = vrot.slane %v2009, 2
        %v3100 = vsel %vm2219, %v3097, %v3099
        %v3101 = vrot.slane %v2010, 2
        %v3102 = vsel %vm2219, %v3099, %v3101
        %v3103 = vrot.slane %v2011, 2
        %v3104 = vsel %vm2219, %v3101, %v3103
        %v3105 = vrot.slane %v2012, 2
        %v3106 = vsel %vm2219, %v3103, %v3105
        %v3107 = vrot.slane %v2013, 2
        %v3108 = vsel %vm2219, %v3105, %v3107
        %v3109 = vrot.slane %v2014, 2
        %v3110 = vsel %vm2219, %v3107, %v3109
        %v3111 = vrot.slane %v2015, 2
        %v3112 = vsel %vm2219, %v3109, %v3111
        %v3113 = vrot.slane %v2016, 2
        %v3114 = vsel %vm2219, %v3111, %v3113
        %v3115 = vrot.slane %v2017, 2
        %v3116 = vsel %vm2219, %v3113, %v3115
        %v3117 = vrot.slane %v2018, 2
        %v3118 = vsel %vm2219, %v3115, %v3117
        %v3119 = vrot.slane %v2019, 2
        %v3120 = vsel %vm2219, %v3117, %v3119
        %v3121 = vrot.slane %v2020, 2
        %v3122 = vsel %vm2219, %v3119, %v3121
        %v3123 = vrot.slane %v2021, 2
        %v3124 = vsel %vm2219, %v3121, %v3123
        %v3125 = vrot.slane %v2022, 2
        %v3126 = vsel %vm2219, %v3123, %v3125
        %3127 = vrot.lane.b32.xlu0 %v3064, 8
        %v3128 = vpop.permute.xlu0 %3127
        %3129 = vrot.lane.b32.xlu0 %v3066, 8
        %v3130 = vpop.permute.xlu0 %3129
        %3131 = vrot.lane.b32.xlu0 %v3068, 8
        %v3132 = vpop.permute.xlu0 %3131
        %3133 = vrot.lane.b32.xlu0 %v3070, 8
        %v3134 = vpop.permute.xlu0 %3133
        %3135 = vrot.lane.b32.xlu0 %v3072, 8
        %v3136 = vpop.permute.xlu0 %3135
        %3137 = vrot.lane.b32.xlu0 %v3074, 8
        %v3138 = vpop.permute.xlu0 %3137
        %3139 = vrot.lane.b32.xlu0 %v3076, 8
        %v3140 = vpop.permute.xlu0 %3139
        %3141 = vrot.lane.b32.xlu0 %v3078, 8
        %v3142 = vpop.permute.xlu0 %3141
        %3143 = vrot.lane.b32.xlu0 %v3080, 8
        %v3144 = vpop.permute.xlu0 %3143
        %3145 = vrot.lane.b32.xlu0 %v3082, 8
        %v3146 = vpop.permute.xlu0 %3145
        %3147 = vrot.lane.b32.xlu0 %v3084, 8
        %v3148 = vpop.permute.xlu0 %3147
        %3149 = vrot.lane.b32.xlu0 %v3086, 8
        %v3150 = vpop.permute.xlu0 %3149
        %3151 = vrot.lane.b32.xlu0 %v3088, 8
        %v3152 = vpop.permute.xlu0 %3151
        %3153 = vrot.lane.b32.xlu0 %v3090, 8
        %v3154 = vpop.permute.xlu0 %3153
        %3155 = vrot.lane.b32.xlu0 %v3092, 8
        %v3156 = vpop.permute.xlu0 %3155
        %3157 = vrot.lane.b32.xlu0 %v3094, 8
        %v3158 = vpop.permute.xlu0 %3157
        %3159 = vrot.lane.b32.xlu0 %v3096, 8
        %v3160 = vpop.permute.xlu0 %3159
        %3161 = vrot.lane.b32.xlu0 %v3098, 8
        %v3162 = vpop.permute.xlu0 %3161
        %3163 = vrot.lane.b32.xlu0 %v3100, 8
        %v3164 = vpop.permute.xlu0 %3163
        %3165 = vrot.lane.b32.xlu0 %v3102, 8
        %v3166 = vpop.permute.xlu0 %3165
        %3167 = vrot.lane.b32.xlu0 %v3104, 8
        %v3168 = vpop.permute.xlu0 %3167
        %3169 = vrot.lane.b32.xlu0 %v3106, 8
        %v3170 = vpop.permute.xlu0 %3169
        %3171 = vrot.lane.b32.xlu0 %v3108, 8
        %v3172 = vpop.permute.xlu0 %3171
        %3173 = vrot.lane.b32.xlu0 %v3110, 8
        %v3174 = vpop.permute.xlu0 %3173
        %3175 = vrot.lane.b32.xlu0 %v3112, 8
        %v3176 = vpop.permute.xlu0 %3175
        %3177 = vrot.lane.b32.xlu0 %v3114, 8
        %v3178 = vpop.permute.xlu0 %3177
        %3179 = vrot.lane.b32.xlu0 %v3116, 8
        %v3180 = vpop.permute.xlu0 %3179
        %3181 = vrot.lane.b32.xlu0 %v3118, 8
        %v3182 = vpop.permute.xlu0 %3181
        %3183 = vrot.lane.b32.xlu0 %v3120, 8
        %v3184 = vpop.permute.xlu0 %3183
        %3185 = vrot.lane.b32.xlu0 %v3122, 8
        %v3186 = vpop.permute.xlu0 %3185
        %3187 = vrot.lane.b32.xlu0 %v3124, 8
        %v3188 = vpop.permute.xlu0 %3187
        %3189 = vrot.lane.b32.xlu0 %v3126, 8
        %v3190 = vpop.permute.xlu0 %3189
        %vm3223 = vcmask 7168
        %v3224 = vsel %vm3223, %v1699, %v2091
        %v3225 = vsel %vm3223, %v1700, %v2093
        %v3226 = vsel %vm3223, %v1701, %v2095
        %v3227 = vsel %vm3223, %v1702, %v2097
        %v3228 = vsel %vm3223, %v1703, %v2099
        %v3229 = vsel %vm3223, %v1704, %v2101
        %v3230 = vsel %vm3223, %v1705, %v2103
        %v3231 = vsel %vm3223, %v1706, %v2105
        %v3232 = vsel %vm3223, %v1707, %v2107
        %v3233 = vsel %vm3223, %v1708, %v2109
        %v3234 = vsel %vm3223, %v1709, %v2111
        %v3235 = vsel %vm3223, %v1710, %v2113
        %v3236 = vsel %vm3223, %v1711, %v2115
        %v3237 = vsel %vm3223, %v1712, %v2117
        %v3238 = vsel %vm3223, %v1713, %v2119
        %v3239 = vsel %vm3223, %v1714, %v2121
        %v3240 = vsel %vm3223, %v1715, %v2123
        %v3241 = vsel %vm3223, %v1716, %v2125
        %v3242 = vsel %vm3223, %v1717, %v2127
        %v3243 = vsel %vm3223, %v1718, %v2129
        %v3244 = vsel %vm3223, %v1719, %v2131
        %v3245 = vsel %vm3223, %v1720, %v2133
        %v3246 = vsel %vm3223, %v1721, %v2135
        %v3247 = vsel %vm3223, %v1722, %v2137
        %v3248 = vsel %vm3223, %v1723, %v2139
        %v3249 = vsel %vm3223, %v1724, %v2141
        %v3250 = vsel %vm3223, %v1725, %v2143
        %v3251 = vsel %vm3223, %v1726, %v2145
        %v3252 = vsel %vm3223, %v1727, %v2147
        %v3253 = vsel %vm3223, %v1728, %v2149
        %v3254 = vsel %vm3223, %v1729, %v2151
        %v3255 = vsel %vm3223, %v1730, %v2153
        %vm3256 = vcmask 15360
        %v3257 = vsel %vm3256, %v3224, %v2286
        %v3258 = vsel %vm3256, %v3225, %v2288
        %v3259 = vsel %vm3256, %v3226, %v2290
        %v3260 = vsel %vm3256, %v3227, %v2292
        %v3261 = vsel %vm3256, %v3228, %v2294
        %v3262 = vsel %vm3256, %v3229, %v2296
        %v3263 = vsel %vm3256, %v3230, %v2298
        %v3264 = vsel %vm3256, %v3231, %v2300
        %v3265 = vsel %vm3256, %v3232, %v2302
        %v3266 = vsel %vm3256, %v3233, %v2304
        %v3267 = vsel %vm3256, %v3234, %v2306
        %v3268 = vsel %vm3256, %v3235, %v2308
        %v3269 = vsel %vm3256, %v3236, %v2310
        %v3270 = vsel %vm3256, %v3237, %v2312
        %v3271 = vsel %vm3256, %v3238, %v2314
        %v3272 = vsel %vm3256, %v3239, %v2316
        %v3273 = vsel %vm3256, %v3240, %v2318
        %v3274 = vsel %vm3256, %v3241, %v2320
        %v3275 = vsel %vm3256, %v3242, %v2322
        %v3276 = vsel %vm3256, %v3243, %v2324
        %v3277 = vsel %vm3256, %v3244, %v2326
        %v3278 = vsel %vm3256, %v3245, %v2328
        %v3279 = vsel %vm3256, %v3246, %v2330
        %v3280 = vsel %vm3256, %v3247, %v2332
        %v3281 = vsel %vm3256, %v3248, %v2334
        %v3282 = vsel %vm3256, %v3249, %v2336
        %v3283 = vsel %vm3256, %v3250, %v2338
        %v3284 = vsel %vm3256, %v3251, %v2340
        %v3285 = vsel %vm3256, %v3252, %v2342
        %v3286 = vsel %vm3256, %v3253, %v2344
        %v3287 = vsel %vm3256, %v3254, %v2346
        %v3288 = vsel %vm3256, %v3255, %v2348
        %vm3289 = vcmask 23552
        %v3290 = vsel %vm3289, %v3257, %v2414
        %v3291 = vsel %vm3289, %v3258, %v2416
        %v3292 = vsel %vm3289, %v3259, %v2418
        %v3293 = vsel %vm3289, %v3260, %v2420
        %v3294 = vsel %vm3289, %v3261, %v2422
        %v3295 = vsel %vm3289, %v3262, %v2424
        %v3296 = vsel %vm3289, %v3263, %v2426
        %v3297 = vsel %vm3289, %v3264, %v2428
        %v3298 = vsel %vm3289, %v3265, %v2430
        %v3299 = vsel %vm3289, %v3266, %v2432
        %v3300 = vsel %vm3289, %v3267, %v2434
        %v3301 = vsel %vm3289, %v3268, %v2436
        %v3302 = vsel %vm3289, %v3269, %v2438
        %v3303 = vsel %vm3289, %v3270, %v2440
        %v3304 = vsel %vm3289, %v3271, %v2442
        %v3305 = vsel %vm3289, %v3272, %v2444
        %v3306 = vsel %vm3289, %v3273, %v2446
        %v3307 = vsel %vm3289, %v3274, %v2448
        %v3308 = vsel %vm3289, %v3275, %v2450
        %v3309 = vsel %vm3289, %v3276, %v2452
        %v3310 = vsel %vm3289, %v3277, %v2454
        %v3311 = vsel %vm3289, %v3278, %v2456
        %v3312 = vsel %vm3289, %v3279, %v2458
        %v3313 = vsel %vm3289, %v3280, %v2460
        %v3314 = vsel %vm3289, %v3281, %v2462
        %v3315 = vsel %vm3289, %v3282, %v2464
        %v3316 = vsel %vm3289, %v3283, %v2466
        %v3317 = vsel %vm3289, %v3284, %v2468
        %v3318 = vsel %vm3289, %v3285, %v2470
        %v3319 = vsel %vm3289, %v3286, %v2472
        %v3320 = vsel %vm3289, %v3287, %v2474
        %v3321 = vsel %vm3289, %v3288, %v2476
        %vm3322 = vcmask 31744
        %v3323 = vsel %vm3322, %v3290, %v2515
        %v3324 = vsel %vm3322, %v3291, %v2517
        %v3325 = vsel %vm3322, %v3292, %v2519
        %v3326 = vsel %vm3322, %v3293, %v2521
        %v3327 = vsel %vm3322, %v3294, %v2523
        %v3328 = vsel %vm3322, %v3295, %v2525
        %v3329 = vsel %vm3322, %v3296, %v2527
        %v3330 = vsel %vm3322, %v3297, %v2529
        %v3331 = vsel %vm3322, %v3298, %v2531
        %v3332 = vsel %vm3322, %v3299, %v2533
        %v3333 = vsel %vm3322, %v3300, %v2535
        %v3334 = vsel %vm3322, %v3301, %v2537
        %v3335 = vsel %vm3322, %v3302, %v2539
        %v3336 = vsel %vm3322, %v3303, %v2541
        %v3337 = vsel %vm3322, %v3304, %v2543
        %v3338 = vsel %vm3322, %v3305, %v2545
        %v3339 = vsel %vm3322, %v3306, %v2547
        %v3340 = vsel %vm3322, %v3307, %v2549
        %v3341 = vsel %vm3322, %v3308, %v2551
        %v3342 = vsel %vm3322, %v3309, %v2553
        %v3343 = vsel %vm3322, %v3310, %v2555
        %v3344 = vsel %vm3322, %v3311, %v2557
        %v3345 = vsel %vm3322, %v3312, %v2559
        %v3346 = vsel %vm3322, %v3313, %v2561
        %v3347 = vsel %vm3322, %v3314, %v2563
        %v3348 = vsel %vm3322, %v3315, %v2565
        %v3349 = vsel %vm3322, %v3316, %v2567
        %v3350 = vsel %vm3322, %v3317, %v2569
        %v3351 = vsel %vm3322, %v3318, %v2571
        %v3352 = vsel %vm3322, %v3319, %v2573
        %v3353 = vsel %vm3322, %v3320, %v2575
        %v3354 = vsel %vm3322, %v3321, %v2577
        %vm3355 = vcmask 39936
        %v3356 = vsel %vm3355, %v3323, %v2709
        %v3357 = vsel %vm3355, %v3324, %v2711
        %v3358 = vsel %vm3355, %v3325, %v2713
        %v3359 = vsel %vm3355, %v3326, %v2715
        %v3360 = vsel %vm3355, %v3327, %v2717
        %v3361 = vsel %vm3355, %v3328, %v2719
        %v3362 = vsel %vm3355, %v3329, %v2721
        %v3363 = vsel %vm3355, %v3330, %v2723
        %v3364 = vsel %vm3355, %v3331, %v2725
        %v3365 = vsel %vm3355, %v3332, %v2727
        %v3366 = vsel %vm3355, %v3333, %v2729
        %v3367 = vsel %vm3355, %v3334, %v2731
        %v3368 = vsel %vm3355, %v3335, %v2733
        %v3369 = vsel %vm3355, %v3336, %v2735
        %v3370 = vsel %vm3355, %v3337, %v2737
        %v3371 = vsel %vm3355, %v3338, %v2739
        %v3372 = vsel %vm3355, %v3339, %v2741
        %v3373 = vsel %vm3355, %v3340, %v2743
        %v3374 = vsel %vm3355, %v3341, %v2745
        %v3375 = vsel %vm3355, %v3342, %v2747
        %v3376 = vsel %vm3355, %v3343, %v2749
        %v3377 = vsel %vm3355, %v3344, %v2751
        %v3378 = vsel %vm3355, %v3345, %v2753
        %v3379 = vsel %vm3355, %v3346, %v2755
        %v3380 = vsel %vm3355, %v3347, %v2757
        %v3381 = vsel %vm3355, %v3348, %v2759
        %v3382 = vsel %vm3355, %v3349, %v2761
        %v3383 = vsel %vm3355, %v3350, %v2763
        %v3384 = vsel %vm3355, %v3351, %v2765
        %v3385 = vsel %vm3355, %v3352, %v2767
        %v3386 = vsel %vm3355, %v3353, %v2769
        %v3387 = vsel %vm3355, %v3354, %v2771
        %vm3388 = vcmask 48128
        %v3389 = vsel %vm3388, %v3356, %v2837
        %v3390 = vsel %vm3388, %v3357, %v2839
        %v3391 = vsel %vm3388, %v3358, %v2841
        %v3392 = vsel %vm3388, %v3359, %v2843
        %v3393 = vsel %vm3388, %v3360, %v2845
        %v3394 = vsel %vm3388, %v3361, %v2847
        %v3395 = vsel %vm3388, %v3362, %v2849
        %v3396 = vsel %vm3388, %v3363, %v2851
        %v3397 = vsel %vm3388, %v3364, %v2853
        %v3398 = vsel %vm3388, %v3365, %v2855
        %v3399 = vsel %vm3388, %v3366, %v2857
        %v3400 = vsel %vm3388, %v3367, %v2859
        %v3401 = vsel %vm3388, %v3368, %v2861
        %v3402 = vsel %vm3388, %v3369, %v2863
        %v3403 = vsel %vm3388, %v3370, %v2865
        %v3404 = vsel %vm3388, %v3371, %v2867
        %v3405 = vsel %vm3388, %v3372, %v2869
        %v3406 = vsel %vm3388, %v3373, %v2871
        %v3407 = vsel %vm3388, %v3374, %v2873
        %v3408 = vsel %vm3388, %v3375, %v2875
        %v3409 = vsel %vm3388, %v3376, %v2877
        %v3410 = vsel %vm3388, %v3377, %v2879
        %v3411 = vsel %vm3388, %v3378, %v2881
        %v3412 = vsel %vm3388, %v3379, %v2883
        %v3413 = vsel %vm3388, %v3380, %v2885
        %v3414 = vsel %vm3388, %v3381, %v2887
        %v3415 = vsel %vm3388, %v3382, %v2889
        %v3416 = vsel %vm3388, %v3383, %v2891
        %v3417 = vsel %vm3388, %v3384, %v2893
        %v3418 = vsel %vm3388, %v3385, %v2895
        %v3419 = vsel %vm3388, %v3386, %v2897
        %v3420 = vsel %vm3388, %v3387, %v2899
        %vm3421 = vcmask 56320
        %v3422 = vsel %vm3421, %v3389, %v2934
        %v3423 = vsel %vm3421, %v3390, %v2936
        %v3424 = vsel %vm3421, %v3391, %v2938
        %v3425 = vsel %vm3421, %v3392, %v2940
        %v3426 = vsel %vm3421, %v3393, %v2942
        %v3427 = vsel %vm3421, %v3394, %v2944
        %v3428 = vsel %vm3421, %v3395, %v2946
        %v3429 = vsel %vm3421, %v3396, %v2948
        %v3430 = vsel %vm3421, %v3397, %v2950
        %v3431 = vsel %vm3421, %v3398, %v2952
        %v3432 = vsel %vm3421, %v3399, %v2954
        %v3433 = vsel %vm3421, %v3400, %v2956
        %v3434 = vsel %vm3421, %v3401, %v2958
        %v3435 = vsel %vm3421, %v3402, %v2960
        %v3436 = vsel %vm3421, %v3403, %v2962
        %v3437 = vsel %vm3421, %v3404, %v2964
        %v3438 = vsel %vm3421, %v3405, %v2966
        %v3439 = vsel %vm3421, %v3406, %v2968
        %v3440 = vsel %vm3421, %v3407, %v2970
        %v3441 = vsel %vm3421, %v3408, %v2972
        %v3442 = vsel %vm3421, %v3409, %v2974
        %v3443 = vsel %vm3421, %v3410, %v2976
        %v3444 = vsel %vm3421, %v3411, %v2978
        %v3445 = vsel %vm3421, %v3412, %v2980
        %v3446 = vsel %vm3421, %v3413, %v2982
        %v3447 = vsel %vm3421, %v3414, %v2984
        %v3448 = vsel %vm3421, %v3415, %v2986
        %v3449 = vsel %vm3421, %v3416, %v2988
        %v3450 = vsel %vm3421, %v3417, %v2990
        %v3451 = vsel %vm3421, %v3418, %v2992
        %v3452 = vsel %vm3421, %v3419, %v2994
        %v3453 = vsel %vm3421, %v3420, %v2996
        %vm3454 = vcmask 64512
        %v3455 = vsel %vm3454, %v3422, %v3128
        %v3456 = vsel %vm3454, %v3423, %v3130
        %v3457 = vsel %vm3454, %v3424, %v3132
        %v3458 = vsel %vm3454, %v3425, %v3134
        %v3459 = vsel %vm3454, %v3426, %v3136
        %v3460 = vsel %vm3454, %v3427, %v3138
        %v3461 = vsel %vm3454, %v3428, %v3140
        %v3462 = vsel %vm3454, %v3429, %v3142
        %v3463 = vsel %vm3454, %v3430, %v3144
        %v3464 = vsel %vm3454, %v3431, %v3146
        %v3465 = vsel %vm3454, %v3432, %v3148
        %v3466 = vsel %vm3454, %v3433, %v3150
        %v3467 = vsel %vm3454, %v3434, %v3152
        %v3468 = vsel %vm3454, %v3435, %v3154
        %v3469 = vsel %vm3454, %v3436, %v3156
        %v3470 = vsel %vm3454, %v3437, %v3158
        %v3471 = vsel %vm3454, %v3438, %v3160
        %v3472 = vsel %vm3454, %v3439, %v3162
        %v3473 = vsel %vm3454, %v3440, %v3164
        %v3474 = vsel %vm3454, %v3441, %v3166
        %v3475 = vsel %vm3454, %v3442, %v3168
        %v3476 = vsel %vm3454, %v3443, %v3170
        %v3477 = vsel %vm3454, %v3444, %v3172
        %v3478 = vsel %vm3454, %v3445, %v3174
        %v3479 = vsel %vm3454, %v3446, %v3176
        %v3480 = vsel %vm3454, %v3447, %v3178
        %v3481 = vsel %vm3454, %v3448, %v3180
        %v3482 = vsel %vm3454, %v3449, %v3182
        %v3483 = vsel %vm3454, %v3450, %v3184
        %v3484 = vsel %vm3454, %v3451, %v3186
        %v3485 = vsel %vm3454, %v3452, %v3188
        %v3486 = vsel %vm3454, %v3453, %v3190
        %v3487 = vld [vmem:[%s3] sm:$0xff]
        %v3488 = vld [vmem:[%s3 + $0x8] sm:$0x1]
        %v3489 = vld [vmem:[%s5] sm:$0x1]
        %v3491 = vperm.slane %v3489, 0
        %vm3493 = vcmask 72704
        %v3495 = vsel %vm3493, %v3455, 0
        %v3498 = vsel %vm3493, %v3456, 0
        %v3501 = vsel %vm3493, %v3457, 0
        %v3504 = vsel %vm3493, %v3458, 0
        %v3507 = vsel %vm3493, %v3459, 0
        %v3510 = vsel %vm3493, %v3460, 0
        %v3513 = vsel %vm3493, %v3461, 0
        %v3516 = vsel %vm3493, %v3462, 0
        %v3519 = vsel %vm3493, %v3463, 0
        %v3522 = vsel %vm3493, %v3464, 0
        %v3525 = vsel %vm3493, %v3465, 0
        %v3528 = vsel %vm3493, %v3466, 0
        %v3531 = vsel %vm3493, %v3467, 0
        %v3534 = vsel %vm3493, %v3468, 0
        %v3537 = vsel %vm3493, %v3469, 0
        %v3540 = vsel %vm3493, %v3470, 0
        %v3543 = vsel %vm3493, %v3471, 0
        %v3546 = vsel %vm3493, %v3472, 0
        %v3549 = vsel %vm3493, %v3473, 0
        %v3552 = vsel %vm3493, %v3474, 0
        %v3555 = vsel %vm3493, %v3475, 0
        %v3558 = vsel %vm3493, %v3476, 0
        %v3561 = vsel %vm3493, %v3477, 0
        %v3564 = vsel %vm3493, %v3478, 0
        %v3567 = vsel %vm3493, %v3479, 0
        %v3570 = vsel %vm3493, %v3480, 0
        %v3573 = vsel %vm3493, %v3481, 0
        %v3576 = vsel %vm3493, %v3482, 0
        %v3579 = vsel %vm3493, %v3483, 0
        %v3582 = vsel %vm3493, %v3484, 0
        %v3585 = vsel %vm3493, %v3485, 0
        %v3588 = vsel %vm3493, %v3486, 0
        %v3591 = vsel %vm1600, %v3488, 0
        %3593 = vmatpush.msra.mxu0 0.0
        %3594 = vmatpush.msra.mxu0 0.0
        %3595 = vmatpush.msra.mxu0 0.0
        %3596 = vmatpush.msra.mxu0 0.0
        %3597 = vmatpush.msra.mxu0 0.0
        %3598 = vmatpush.msra.mxu0 0.0
        %3599 = vmatpush.msra.mxu0 0.0
        %3600 = vmatpush.msra.mxu0 0.0
        %3601 = vmatpush.msra.mxu0 0.0
        %3602 = vmatpush.msra.mxu0 0.0
        %3603 = vmatpush.msra.mxu0 0.0
        %3604 = vmatpush.msra.mxu0 0.0
        %3605 = vmatpush.msra.mxu0 0.0
        %3606 = vmatpush.msra.mxu0 0.0
        %3607 = vmatpush.msra.mxu0 %v3591
        %3608 = vmatpush.msra.mxu0 %v3487
        %3609 = vmatmul.f32.gmra.mxu0 %v3495
        %v3610 = vpop.f32.mrf.mxu0
        %v3611 = vadd.f32 %v3491, %v3610
        %3612 = vmatmul.f32.gmra.mxu0 %v3498
        %v3613 = vpop.f32.mrf.mxu0
        %v3614 = vadd.f32 %v3491, %v3613
        %3615 = vmatmul.f32.gmra.mxu0 %v3501
        %v3616 = vpop.f32.mrf.mxu0
        %v3617 = vadd.f32 %v3491, %v3616
        %3618 = vmatmul.f32.gmra.mxu0 %v3504
        %v3619 = vpop.f32.mrf.mxu0
        %v3620 = vadd.f32 %v3491, %v3619
        %3621 = vmatmul.f32.gmra.mxu0 %v3507
        %v3622 = vpop.f32.mrf.mxu0
        %v3623 = vadd.f32 %v3491, %v3622
        %3624 = vmatmul.f32.gmra.mxu0 %v3510
        %v3625 = vpop.f32.mrf.mxu0
        %v3626 = vadd.f32 %v3491, %v3625
        %3627 = vmatmul.f32.gmra.mxu0 %v3513
        %v3628 = vpop.f32.mrf.mxu0
        %v3629 = vadd.f32 %v3491, %v3628
        %3630 = vmatmul.f32.gmra.mxu0 %v3516
        %v3631 = vpop.f32.mrf.mxu0
        %v3632 = vadd.f32 %v3491, %v3631
        %3633 = vmatmul.f32.gmra.mxu0 %v3519
        %v3634 = vpop.f32.mrf.mxu0
        %v3635 = vadd.f32 %v3491, %v3634
        %3636 = vmatmul.f32.gmra.mxu0 %v3522
        %v3637 = vpop.f32.mrf.mxu0
        %v3638 = vadd.f32 %v3491, %v3637
        %3639 = vmatmul.f32.gmra.mxu0 %v3525
        %v3640 = vpop.f32.mrf.mxu0
        %v3641 = vadd.f32 %v3491, %v3640
        %3642 = vmatmul.f32.gmra.mxu0 %v3528
        %v3643 = vpop.f32.mrf.mxu0
        %v3644 = vadd.f32 %v3491, %v3643
        %3645 = vmatmul.f32.gmra.mxu0 %v3531
        %v3646 = vpop.f32.mrf.mxu0
        %v3647 = vadd.f32 %v3491, %v3646
        %3648 = vmatmul.f32.gmra.mxu0 %v3534
        %v3649 = vpop.f32.mrf.mxu0
        %v3650 = vadd.f32 %v3491, %v3649
        %3651 = vmatmul.f32.gmra.mxu0 %v3537
        %v3652 = vpop.f32.mrf.mxu0
        %v3653 = vadd.f32 %v3491, %v3652
        %3654 = vmatmul.f32.gmra.mxu0 %v3540
        %v3655 = vpop.f32.mrf.mxu0
        %v3656 = vadd.f32 %v3491, %v3655
        %3657 = vmatmul.f32.gmra.mxu0 %v3543
        %v3658 = vpop.f32.mrf.mxu0
        %v3659 = vadd.f32 %v3491, %v3658
        %3660 = vmatmul.f32.gmra.mxu0 %v3546
        %v3661 = vpop.f32.mrf.mxu0
        %v3662 = vadd.f32 %v3491, %v3661
        %3663 = vmatmul.f32.gmra.mxu0 %v3549
        %v3664 = vpop.f32.mrf.mxu0
        %v3665 = vadd.f32 %v3491, %v3664
        %3666 = vmatmul.f32.gmra.mxu0 %v3552
        %v3667 = vpop.f32.mrf.mxu0
        %v3668 = vadd.f32 %v3491, %v3667
        %3669 = vmatmul.f32.gmra.mxu0 %v3555
        %v3670 = vpop.f32.mrf.mxu0
        %v3671 = vadd.f32 %v3491, %v3670
        %3672 = vmatmul.f32.gmra.mxu0 %v3558
        %v3673 = vpop.f32.mrf.mxu0
        %v3674 = vadd.f32 %v3491, %v3673
        %3675 = vmatmul.f32.gmra.mxu0 %v3561
        %v3676 = vpop.f32.mrf.mxu0
        %v3677 = vadd.f32 %v3491, %v3676
        %3678 = vmatmul.f32.gmra.mxu0 %v3564
        %v3679 = vpop.f32.mrf.mxu0
        %v3680 = vadd.f32 %v3491, %v3679
        %3681 = vmatmul.f32.gmra.mxu0 %v3567
        %v3682 = vpop.f32.mrf.mxu0
        %v3683 = vadd.f32 %v3491, %v3682
        %3684 = vmatmul.f32.gmra.mxu0 %v3570
        %v3685 = vpop.f32.mrf.mxu0
        %v3686 = vadd.f32 %v3491, %v3685
        %3687 = vmatmul.f32.gmra.mxu0 %v3573
        %v3688 = vpop.f32.mrf.mxu0
        %v3689 = vadd.f32 %v3491, %v3688
        %3690 = vmatmul.f32.gmra.mxu0 %v3576
        %v3691 = vpop.f32.mrf.mxu0
        %v3692 = vadd.f32 %v3491, %v3691
        %3693 = vmatmul.f32.gmra.mxu0 %v3579
        %v3694 = vpop.f32.mrf.mxu0
        %v3695 = vadd.f32 %v3491, %v3694
        %3696 = vmatmul.f32.gmra.mxu0 %v3582
        %v3697 = vpop.f32.mrf.mxu0
        %v3698 = vadd.f32 %v3491, %v3697
        %3699 = vmatmul.f32.gmra.mxu0 %v3585
        %v3700 = vpop.f32.mrf.mxu0
        %v3701 = vadd.f32 %v3491, %v3700
        %3702 = vmatmul.f32.gmra.mxu0 %v3588
        %v3703 = vpop.f32.mrf.mxu0
        %v3704 = vadd.f32 %v3491, %v3703
        %3705 = vdwg.mxu0
        %v3706 = vmax.f32 %v3611, 0.0
        %v3707 = vmax.f32 %v3614, 0.0
        %v3708 = vmax.f32 %v3617, 0.0
        %v3709 = vmax.f32 %v3620, 0.0
        %v3710 = vmax.f32 %v3623, 0.0
        %v3711 = vmax.f32 %v3626, 0.0
        %v3712 = vmax.f32 %v3629, 0.0
        %v3713 = vmax.f32 %v3632, 0.0
        %v3714 = vmax.f32 %v3635, 0.0
        %v3715 = vmax.f32 %v3638, 0.0
        %v3716 = vmax.f32 %v3641, 0.0
        %v3717 = vmax.f32 %v3644, 0.0
        %v3718 = vmax.f32 %v3647, 0.0
        %v3719 = vmax.f32 %v3650, 0.0
        %v3720 = vmax.f32 %v3653, 0.0
        %v3721 = vmax.f32 %v3656, 0.0
        %v3722 = vmax.f32 %v3659, 0.0
        %v3723 = vmax.f32 %v3662, 0.0
        %v3724 = vmax.f32 %v3665, 0.0
        %v3725 = vmax.f32 %v3668, 0.0
        %v3726 = vmax.f32 %v3671, 0.0
        %v3727 = vmax.f32 %v3674, 0.0
        %v3728 = vmax.f32 %v3677, 0.0
        %v3729 = vmax.f32 %v3680, 0.0
        %v3730 = vmax.f32 %v3683, 0.0
        %v3731 = vmax.f32 %v3686, 0.0
        %v3732 = vmax.f32 %v3689, 0.0
        %v3733 = vmax.f32 %v3692, 0.0
        %v3734 = vmax.f32 %v3695, 0.0
        %v3735 = vmax.f32 %v3698, 0.0
        %v3736 = vmax.f32 %v3701, 0.0
        %v3737 = vmax.f32 %v3704, 0.0
        %v3770 = vrot.slane %v3706, 7
        %v3771 = vrot.slane %v3707, 7
        %v3772 = vsel %vm1600, %v3770, %v3771
        %v3773 = vrot.slane %v3708, 7
        %v3774 = vsel %vm1600, %v3771, %v3773
        %v3775 = vrot.slane %v3709, 7
        %v3776 = vsel %vm1600, %v3773, %v3775
        %v3777 = vrot.slane %v3710, 7
        %v3778 = vsel %vm1600, %v3775, %v3777
        %v3779 = vrot.slane %v3711, 7
        %v3780 = vsel %vm1600, %v3777, %v3779
        %v3781 = vrot.slane %v3712, 7
        %v3782 = vsel %vm1600, %v3779, %v3781
        %v3783 = vrot.slane %v3713, 7
        %v3784 = vsel %vm1600, %v3781, %v3783
        %v3785 = vrot.slane %v3714, 7
        %v3786 = vsel %vm1600, %v3783, %v3785
        %v3787 = vrot.slane %v3715, 7
        %v3788 = vsel %vm1600, %v3785, %v3787
        %v3789 = vrot.slane %v3716, 7
        %v3790 = vsel %vm1600, %v3787, %v3789
        %v3791 = vrot.slane %v3717, 7
        %v3792 = vsel %vm1600, %v3789, %v3791
        %v3793 = vrot.slane %v3718, 7
        %v3794 = vsel %vm1600, %v3791, %v3793
        %v3795 = vrot.slane %v3719, 7
        %v3796 = vsel %vm1600, %v3793, %v3795
        %v3797 = vrot.slane %v3720, 7
        %v3798 = vsel %vm1600, %v3795, %v3797
        %v3799 = vrot.slane %v3721, 7
        %v3800 = vsel %vm1600, %v3797, %v3799
        %v3801 = vrot.slane %v3722, 7
        %v3802 = vsel %vm1600, %v3799, %v3801
        %v3803 = vrot.slane %v3723, 7
        %v3804 = vsel %vm1600, %v3801, %v3803
        %v3805 = vrot.slane %v3724, 7
        %v3806 = vsel %vm1600, %v3803, %v3805
        %v3807 = vrot.slane %v3725, 7
        %v3808 = vsel %vm1600, %v3805, %v3807
        %v3809 = vrot.slane %v3726, 7
        %v3810 = vsel %vm1600, %v3807, %v3809
        %v3811 = vrot.slane %v3727, 7
        %v3812 = vsel %vm1600, %v3809, %v3811
        %v3813 = vrot.slane %v3728, 7
        %v3814 = vsel %vm1600, %v3811, %v3813
        %v3815 = vrot.slane %v3729, 7
        %v3816 = vsel %vm1600, %v3813, %v3815
        %v3817 = vrot.slane %v3730, 7
        %v3818 = vsel %vm1600, %v3815, %v3817
        %v3819 = vrot.slane %v3731, 7
        %v3820 = vsel %vm1600, %v3817, %v3819
        %v3821 = vrot.slane %v3732, 7
        %v3822 = vsel %vm1600, %v3819, %v3821
        %v3823 = vrot.slane %v3733, 7
        %v3824 = vsel %vm1600, %v3821, %v3823
        %v3825 = vrot.slane %v3734, 7
        %v3826 = vsel %vm1600, %v3823, %v3825
        %v3827 = vrot.slane %v3735, 7
        %v3828 = vsel %vm1600, %v3825, %v3827
        %v3829 = vrot.slane %v3736, 7
        %v3830 = vsel %vm1600, %v3827, %v3829
        %v3831 = vrot.slane %v3737, 7
        %v3832 = vsel %vm1600, %v3829, %v3831
        %v3866 = vsel %vm1600, 0.0, %v3770
        %v3867 = vsel %vm1600, %v3831, 0.0
        %v3868 = vmul.f32 %v3866, %v1410
        %v3869 = vmul.f32 %v3772, %v1411
        %v3870 = vmul.f32 %v3774, %v1412
        %v3871 = vmul.f32 %v3776, %v1413
        %v3872 = vmul.f32 %v3778, %v1414
        %v3873 = vmul.f32 %v3780, %v1415
        %v3874 = vmul.f32 %v3782, %v1416
        %v3875 = vmul.f32 %v3784, %v1417
        %v3876 = vmul.f32 %v3786, %v1418
        %v3877 = vmul.f32 %v3788, %v1419
        %v3878 = vmul.f32 %v3790, %v1420
        %v3879 = vmul.f32 %v3792, %v1421
        %v3880 = vmul.f32 %v3794, %v1422
        %v3881 = vmul.f32 %v3796, %v1423
        %v3882 = vmul.f32 %v3798, %v1424
        %v3883 = vmul.f32 %v3800, %v1425
        %v3884 = vmul.f32 %v3802, %v1426
        %v3885 = vmul.f32 %v3804, %v1427
        %v3886 = vmul.f32 %v3806, %v1428
        %v3887 = vmul.f32 %v3808, %v1429
        %v3888 = vmul.f32 %v3810, %v1430
        %v3889 = vmul.f32 %v3812, %v1431
        %v3890 = vmul.f32 %v3814, %v1432
        %v3891 = vmul.f32 %v3816, %v1433
        %v3892 = vmul.f32 %v3818, %v1434
        %v3893 = vmul.f32 %v3820, %v1435
        %v3894 = vmul.f32 %v3822, %v1436
        %v3895 = vmul.f32 %v3824, %v1437
        %v3896 = vmul.f32 %v3826, %v1438
        %v3897 = vmul.f32 %v3828, %v1439
        %v3898 = vmul.f32 %v3866, %v1768
        %v3899 = vmul.f32 %v3772, %v1770
        %v3900 = vmul.f32 %v3774, %v1772
        %v3901 = vmul.f32 %v3776, %v1774
        %v3902 = vmul.f32 %v3778, %v1776
        %v3903 = vmul.f32 %v3780, %v1778
        %v3904 = vmul.f32 %v3782, %v1780
        %v3905 = vmul.f32 %v3784, %v1782
        %v3906 = vmul.f32 %v3786, %v1784
        %v3907 = vmul.f32 %v3788, %v1786
        %v3908 = vmul.f32 %v3790, %v1788
        %v3909 = vmul.f32 %v3792, %v1790
        %v3910 = vmul.f32 %v3794, %v1792
        %v3911 = vmul.f32 %v3796, %v1794
        %v3912 = vmul.f32 %v3798, %v1796
        %v3913 = vmul.f32 %v3800, %v1798
        %v3914 = vmul.f32 %v3802, %v1800
        %v3915 = vmul.f32 %v3804, %v1802
        %v3916 = vmul.f32 %v3806, %v1804
        %v3917 = vmul.f32 %v3808, %v1806
        %v3918 = vmul.f32 %v3810, %v1808
        %v3919 = vmul.f32 %v3812, %v1810
        %v3920 = vmul.f32 %v3814, %v1812
        %v3921 = vmul.f32 %v3816, %v1814
        %v3922 = vmul.f32 %v3818, %v1816
        %v3923 = vmul.f32 %v3820, %v1818
        %v3924 = vmul.f32 %v3822, %v1820
        %v3925 = vmul.f32 %v3824, %v1822
        %v3926 = vmul.f32 %v3826, %v1824
        %v3927 = vmul.f32 %v3828, %v1826
        %v3928 = vmul.f32 %v3830, %v1825
        %v3929 = vmul.f32 %v3866, %v1408
        %v3930 = vmul.f32 %v3772, %v1409
        %v3931 = vmul.f32 %v3774, %v1410
        %v3932 = vmul.f32 %v3776, %v1411
        %v3933 = vmul.f32 %v3778, %v1412
        %v3934 = vmul.f32 %v3780, %v1413
        %v3935 = vmul.f32 %v3782, %v1414
        %v3936 = vmul.f32 %v3784, %v1415
        %v3937 = vmul.f32 %v3786, %v1416
        %v3938 = vmul.f32 %v3788, %v1417
        %v3939 = vmul.f32 %v3790, %v1418
        %v3940 = vmul.f32 %v3792, %v1419
        %v3941 = vmul.f32 %v3794, %v1420
        %v3942 = vmul.f32 %v3796, %v1421
        %v3943 = vmul.f32 %v3798, %v1422
        %v3944 = vmul.f32 %v3800, %v1423
        %v3945 = vmul.f32 %v3802, %v1424
        %v3946 = vmul.f32 %v3804, %v1425
        %v3947 = vmul.f32 %v3806, %v1426
        %v3948 = vmul.f32 %v3808, %v1427
        %v3949 = vmul.f32 %v3810, %v1428
        %v3950 = vmul.f32 %v3812, %v1429
        %v3951 = vmul.f32 %v3814, %v1430
        %v3952 = vmul.f32 %v3816, %v1431
        %v3953 = vmul.f32 %v3818, %v1432
        %v3954 = vmul.f32 %v3820, %v1433
        %v3955 = vmul.f32 %v3822, %v1434
        %v3956 = vmul.f32 %v3824, %v1435
        %v3957 = vmul.f32 %v3826, %v1436
        %v3958 = vmul.f32 %v3828, %v1437
        %v3959 = vmul.f32 %v3830, %v1438
        %v3960 = vmul.f32 %v3832, %v1439
        %v3961 = vmul.f32 %v3866, %v1764
        %v3962 = vmul.f32 %v3772, %v1766
        %v3963 = vmul.f32 %v3774, %v1768
        %v3964 = vmul.f32 %v3776, %v1770
        %v3965 = vmul.f32 %v3778, %v1772
        %v3966 = vmul.f32 %v3780, %v1774
        %v3967 = vmul.f32 %v3782, %v1776
        %v3968 = vmul.f32 %v3784, %v1778
        %v3969 = vmul.f32 %v3786, %v1780
        %v3970 = vmul.f32 %v3788, %v1782
        %v3971 = vmul.f32 %v3790, %v1784
        %v3972 = vmul.f32 %v3792, %v1786
        %v3973 = vmul.f32 %v3794, %v1788
        %v3974 = vmul.f32 %v3796, %v1790
        %v3975 = vmul.f32 %v3798, %v1792
        %v3976 = vmul.f32 %v3800, %v1794
        %v3977 = vmul.f32 %v3802, %v1796
        %v3978 = vmul.f32 %v3804, %v1798
        %v3979 = vmul.f32 %v3806, %v1800
        %v3980 = vmul.f32 %v3808, %v1802
        %v3981 = vmul.f32 %v3810, %v1804
        %v3982 = vmul.f32 %v3812, %v1806
        %v3983 = vmul.f32 %v3814, %v1808
        %v3984 = vmul.f32 %v3816, %v1810
        %v3985 = vmul.f32 %v3818, %v1812
        %v3986 = vmul.f32 %v3820, %v1814
        %v3987 = vmul.f32 %v3822, %v1816
        %v3988 = vmul.f32 %v3824, %v1818
        %v3989 = vmul.f32 %v3826, %v1820
        %v3990 = vmul.f32 %v3828, %v1822
        %v3991 = vmul.f32 %v3830, %v1824
        %v3992 = vmul.f32 %v3832, %v1826
        %v3993 = vmul.f32 %v3867, %v1825
        %v3994 = vmul.f32 %v3774, %v1408
        %v3995 = vmul.f32 %v3776, %v1409
        %v3996 = vmul.f32 %v3778, %v1410
        %v3997 = vmul.f32 %v3780, %v1411
        %v3998 = vmul.f32 %v3782, %v1412
        %v3999 = vmul.f32 %v3784, %v1413
        %v4000 = vmul.f32 %v3786, %v1414
        %v4001 = vmul.f32 %v3788, %v1415
        %v4002 = vmul.f32 %v3790, %v1416
        %v4003 = vmul.f32 %v3792, %v1417
        %v4004 = vmul.f32 %v3794, %v1418
        %v4005 = vmul.f32 %v3796, %v1419
        %v4006 = vmul.f32 %v3798, %v1420
        %v4007 = vmul.f32 %v3800, %v1421
        %v4008 = vmul.f32 %v3802, %v1422
        %v4009 = vmul.f32 %v3804, %v1423
        %v4010 = vmul.f32 %v3806, %v1424
        %v4011 = vmul.f32 %v3808, %v1425
        %v4012 = vmul.f32 %v3810, %v1426
        %v4013 = vmul.f32 %v3812, %v1427
        %v4014 = vmul.f32 %v3814, %v1428
        %v4015 = vmul.f32 %v3816, %v1429
        %v4016 = vmul.f32 %v3818, %v1430
        %v4017 = vmul.f32 %v3820, %v1431
        %v4018 = vmul.f32 %v3822, %v1432
        %v4019 = vmul.f32 %v3824, %v1433
        %v4020 = vmul.f32 %v3826, %v1434
        %v4021 = vmul.f32 %v3828, %v1435
        %v4022 = vmul.f32 %v3830, %v1436
        %v4023 = vmul.f32 %v3832, %v1437
        %v4024 = vmul.f32 %v3867, %v1438
        %v4025 = vmul.f32 %v3774, %v1764
        %v4026 = vmul.f32 %v3776, %v1766
        %v4027 = vmul.f32 %v3778, %v1768
        %v4028 = vmul.f32 %v3780, %v1770
        %v4029 = vmul.f32 %v3782, %v1772
        %v4030 = vmul.f32 %v3784, %v1774
        %v4031 = vmul.f32 %v3786, %v1776
        %v4032 = vmul.f32 %v3788, %v1778
        %v4033 = vmul.f32 %v3790, %v1780
        %v4034 = vmul.f32 %v3792, %v1782
        %v4035 = vmul.f32 %v3794, %v1784
        %v4036 = vmul.f32 %v3796, %v1786
        %v4037 = vmul.f32 %v3798, %v1788
        %v4038 = vmul.f32 %v3800, %v1790
        %v4039 = vmul.f32 %v3802, %v1792
        %v4040 = vmul.f32 %v3804, %v1794
        %v4041 = vmul.f32 %v3806, %v1796
        %v4042 = vmul.f32 %v3808, %v1798
        %v4043 = vmul.f32 %v3810, %v1800
        %v4044 = vmul.f32 %v3812, %v1802
        %v4045 = vmul.f32 %v3814, %v1804
        %v4046 = vmul.f32 %v3816, %v1806
        %v4047 = vmul.f32 %v3818, %v1808
        %v4048 = vmul.f32 %v3820, %v1810
        %v4049 = vmul.f32 %v3822, %v1812
        %v4050 = vmul.f32 %v3824, %v1814
        %v4051 = vmul.f32 %v3826, %v1816
        %v4052 = vmul.f32 %v3828, %v1818
        %v4053 = vmul.f32 %v3830, %v1820
        %v4054 = vmul.f32 %v3832, %v1822
        %v4055 = vmul.f32 %v3867, %v1824
        %v4057 = vrot.slane %v3866, 1
        %v4058 = vsel %vm2025, %v2026, %v4057
        %v4059 = vrot.slane %v3772, 1
        %v4060 = vsel %vm2025, %v4057, %v4059
        %v4061 = vrot.slane %v3774, 1
        %v4062 = vsel %vm2025, %v4059, %v4061
        %v4063 = vrot.slane %v3776, 1
        %v4064 = vsel %vm2025, %v4061, %v4063
        %v4065 = vrot.slane %v3778, 1
        %v4066 = vsel %vm2025, %v4063, %v4065
        %v4067 = vrot.slane %v3780, 1
        %v4068 = vsel %vm2025, %v4065, %v4067
        %v4069 = vrot.slane %v3782, 1
        %v4070 = vsel %vm2025, %v4067, %v4069
        %v4071 = vrot.slane %v3784, 1
        %v4072 = vsel %vm2025, %v4069, %v4071
        %v4073 = vrot.slane %v3786, 1
        %v4074 = vsel %vm2025, %v4071, %v4073
        %v4075 = vrot.slane %v3788, 1
        %v4076 = vsel %vm2025, %v4073, %v4075
        %v4077 = vrot.slane %v3790, 1
        %v4078 = vsel %vm2025, %v4075, %v4077
        %v4079 = vrot.slane %v3792, 1
        %v4080 = vsel %vm2025, %v4077, %v4079
        %v4081 = vrot.slane %v3794, 1
        %v4082 = vsel %vm2025, %v4079, %v4081
        %v4083 = vrot.slane %v3796, 1
        %v4084 = vsel %vm2025, %v4081, %v4083
        %v4085 = vrot.slane %v3798, 1
        %v4086 = vsel %vm2025, %v4083, %v4085
        %v4087 = vrot.slane %v3800, 1
        %v4088 = vsel %vm2025, %v4085, %v4087
        %v4089 = vrot.slane %v3802, 1
        %v4090 = vsel %vm2025, %v4087, %v4089
        %v4091 = vrot.slane %v3804, 1
        %v4092 = vsel %vm2025, %v4089, %v4091
        %v4093 = vrot.slane %v3806, 1
        %v4094 = vsel %vm2025, %v4091, %v4093
        %v4095 = vrot.slane %v3808, 1
        %v4096 = vsel %vm2025, %v4093, %v4095
        %v4097 = vrot.slane %v3810, 1
        %v4098 = vsel %vm2025, %v4095, %v4097
        %v4099 = vrot.slane %v3812, 1
        %v4100 = vsel %vm2025, %v4097, %v4099
        %v4101 = vrot.slane %v3814, 1
        %v4102 = vsel %vm2025, %v4099, %v4101
        %v4103 = vrot.slane %v3816, 1
        %v4104 = vsel %vm2025, %v4101, %v4103
        %v4105 = vrot.slane %v3818, 1
        %v4106 = vsel %vm2025, %v4103, %v4105
        %v4107 = vrot.slane %v3820, 1
        %v4108 = vsel %vm2025, %v4105, %v4107
        %v4109 = vrot.slane %v3822, 1
        %v4110 = vsel %vm2025, %v4107, %v4109
        %v4111 = vrot.slane %v3824, 1
        %v4112 = vsel %vm2025, %v4109, %v4111
        %v4113 = vrot.slane %v3826, 1
        %v4114 = vsel %vm2025, %v4111, %v4113
        %v4115 = vrot.slane %v3828, 1
        %v4116 = vsel %vm2025, %v4113, %v4115
        %v4117 = vrot.slane %v3830, 1
        %v4118 = vsel %vm2025, %v4115, %v4117
        %4119 = vrot.lane.b32.xlu0 %v2027, 8
        %v4120 = vpop.permute.xlu0 %4119
        %4121 = vrot.lane.b32.xlu0 %v4058, 8
        %v4122 = vpop.permute.xlu0 %4121
        %4123 = vrot.lane.b32.xlu0 %v4060, 8
        %v4124 = vpop.permute.xlu0 %4123
        %4125 = vrot.lane.b32.xlu0 %v4062, 8
        %v4126 = vpop.permute.xlu0 %4125
        %4127 = vrot.lane.b32.xlu0 %v4064, 8
        %v4128 = vpop.permute.xlu0 %4127
        %4129 = vrot.lane.b32.xlu0 %v4066, 8
        %v4130 = vpop.permute.xlu0 %4129
        %4131 = vrot.lane.b32.xlu0 %v4068, 8
        %v4132 = vpop.permute.xlu0 %4131
        %4133 = vrot.lane.b32.xlu0 %v4070, 8
        %v4134 = vpop.permute.xlu0 %4133
        %4135 = vrot.lane.b32.xlu0 %v4072, 8
        %v4136 = vpop.permute.xlu0 %4135
        %4137 = vrot.lane.b32.xlu0 %v4074, 8
        %v4138 = vpop.permute.xlu0 %4137
        %4139 = vrot.lane.b32.xlu0 %v4076, 8
        %v4140 = vpop.permute.xlu0 %4139
        %4141 = vrot.lane.b32.xlu0 %v4078, 8
        %v4142 = vpop.permute.xlu0 %4141
        %4143 = vrot.lane.b32.xlu0 %v4080, 8
        %v4144 = vpop.permute.xlu0 %4143
        %4145 = vrot.lane.b32.xlu0 %v4082, 8
        %v4146 = vpop.permute.xlu0 %4145
        %4147 = vrot.lane.b32.xlu0 %v4084, 8
        %v4148 = vpop.permute.xlu0 %4147
        %4149 = vrot.lane.b32.xlu0 %v4086, 8
        %v4150 = vpop.permute.xlu0 %4149
        %4151 = vrot.lane.b32.xlu0 %v4088, 8
        %v4152 = vpop.permute.xlu0 %4151
        %4153 = vrot.lane.b32.xlu0 %v4090, 8
        %v4154 = vpop.permute.xlu0 %4153
        %4155 = vrot.lane.b32.xlu0 %v4092, 8
        %v4156 = vpop.permute.xlu0 %4155
        %4157 = vrot.lane.b32.xlu0 %v4094, 8
        %v4158 = vpop.permute.xlu0 %4157
        %4159 = vrot.lane.b32.xlu0 %v4096, 8
        %v4160 = vpop.permute.xlu0 %4159
        %4161 = vrot.lane.b32.xlu0 %v4098, 8
        %v4162 = vpop.permute.xlu0 %4161
        %4163 = vrot.lane.b32.xlu0 %v4100, 8
        %v4164 = vpop.permute.xlu0 %4163
        %4165 = vrot.lane.b32.xlu0 %v4102, 8
        %v4166 = vpop.permute.xlu0 %4165
        %4167 = vrot.lane.b32.xlu0 %v4104, 8
        %v4168 = vpop.permute.xlu0 %4167
        %4169 = vrot.lane.b32.xlu0 %v4106, 8
        %v4170 = vpop.permute.xlu0 %4169
        %4171 = vrot.lane.b32.xlu0 %v4108, 8
        %v4172 = vpop.permute.xlu0 %4171
        %4173 = vrot.lane.b32.xlu0 %v4110, 8
        %v4174 = vpop.permute.xlu0 %4173
        %4175 = vrot.lane.b32.xlu0 %v4112, 8
        %v4176 = vpop.permute.xlu0 %4175
        %4177 = vrot.lane.b32.xlu0 %v4114, 8
        %v4178 = vpop.permute.xlu0 %4177
        %4179 = vrot.lane.b32.xlu0 %v4116, 8
        %v4180 = vpop.permute.xlu0 %4179
        %4181 = vrot.lane.b32.xlu0 %v4118, 8
        %v4182 = vpop.permute.xlu0 %4181
        %v4246 = vrot.slane %v3898, 2
        %v4247 = vsel %vm2219, %v2221, %v4246
        %v4248 = vrot.slane %v3899, 2
        %v4249 = vsel %vm2219, %v4246, %v4248
        %v4250 = vrot.slane %v3900, 2
        %v4251 = vsel %vm2219, %v4248, %v4250
        %v4252 = vrot.slane %v3901, 2
        %v4253 = vsel %vm2219, %v4250, %v4252
        %v4254 = vrot.slane %v3902, 2
        %v4255 = vsel %vm2219, %v4252, %v4254
        %v4256 = vrot.slane %v3903, 2
        %v4257 = vsel %vm2219, %v4254, %v4256
        %v4258 = vrot.slane %v3904, 2
        %v4259 = vsel %vm2219, %v4256, %v4258
        %v4260 = vrot.slane %v3905, 2
        %v4261 = vsel %vm2219, %v4258, %v4260
        %v4262 = vrot.slane %v3906, 2
        %v4263 = vsel %vm2219, %v4260, %v4262
        %v4264 = vrot.slane %v3907, 2
        %v4265 = vsel %vm2219, %v4262, %v4264
        %v4266 = vrot.slane %v3908, 2
        %v4267 = vsel %vm2219, %v4264, %v4266
        %v4268 = vrot.slane %v3909, 2
        %v4269 = vsel %vm2219, %v4266, %v4268
        %v4270 = vrot.slane %v3910, 2
        %v4271 = vsel %vm2219, %v4268, %v4270
        %v4272 = vrot.slane %v3911, 2
        %v4273 = vsel %vm2219, %v4270, %v4272
        %v4274 = vrot.slane %v3912, 2
        %v4275 = vsel %vm2219, %v4272, %v4274
        %v4276 = vrot.slane %v3913, 2
        %v4277 = vsel %vm2219, %v4274, %v4276
        %v4278 = vrot.slane %v3914, 2
        %v4279 = vsel %vm2219, %v4276, %v4278
        %v4280 = vrot.slane %v3915, 2
        %v4281 = vsel %vm2219, %v4278, %v4280
        %v4282 = vrot.slane %v3916, 2
        %v4283 = vsel %vm2219, %v4280, %v4282
        %v4284 = vrot.slane %v3917, 2
        %v4285 = vsel %vm2219, %v4282, %v4284
        %v4286 = vrot.slane %v3918, 2
        %v4287 = vsel %vm2219, %v4284, %v4286
        %v4288 = vrot.slane %v3919, 2
        %v4289 = vsel %vm2219, %v4286, %v4288
        %v4290 = vrot.slane %v3920, 2
        %v4291 = vsel %vm2219, %v4288, %v4290
        %v4292 = vrot.slane %v3921, 2
        %v4293 = vsel %vm2219, %v4290, %v4292
        %v4294 = vrot.slane %v3922, 2
        %v4295 = vsel %vm2219, %v4292, %v4294
        %v4296 = vrot.slane %v3923, 2
        %v4297 = vsel %vm2219, %v4294, %v4296
        %v4298 = vrot.slane %v3924, 2
        %v4299 = vsel %vm2219, %v4296, %v4298
        %v4300 = vrot.slane %v3925, 2
        %v4301 = vsel %vm2219, %v4298, %v4300
        %v4302 = vrot.slane %v3926, 2
        %v4303 = vsel %vm2219, %v4300, %v4302
        %v4304 = vrot.slane %v3927, 2
        %v4305 = vsel %vm2219, %v4302, %v4304
        %v4306 = vrot.slane %v3928, 2
        %v4307 = vsel %vm2219, %v4304, %v4306
        %4308 = vrot.lane.b32.xlu0 %v2222, 16
        %v4309 = vpop.permute.xlu0 %4308
        %4310 = vrot.lane.b32.xlu0 %v4247, 16
        %v4311 = vpop.permute.xlu0 %4310
        %4312 = vrot.lane.b32.xlu0 %v4249, 16
        %v4313 = vpop.permute.xlu0 %4312
        %4314 = vrot.lane.b32.xlu0 %v4251, 16
        %v4315 = vpop.permute.xlu0 %4314
        %4316 = vrot.lane.b32.xlu0 %v4253, 16
        %v4317 = vpop.permute.xlu0 %4316
        %4318 = vrot.lane.b32.xlu0 %v4255, 16
        %v4319 = vpop.permute.xlu0 %4318
        %4320 = vrot.lane.b32.xlu0 %v4257, 16
        %v4321 = vpop.permute.xlu0 %4320
        %4322 = vrot.lane.b32.xlu0 %v4259, 16
        %v4323 = vpop.permute.xlu0 %4322
        %4324 = vrot.lane.b32.xlu0 %v4261, 16
        %v4325 = vpop.permute.xlu0 %4324
        %4326 = vrot.lane.b32.xlu0 %v4263, 16
        %v4327 = vpop.permute.xlu0 %4326
        %4328 = vrot.lane.b32.xlu0 %v4265, 16
        %v4329 = vpop.permute.xlu0 %4328
        %4330 = vrot.lane.b32.xlu0 %v4267, 16
        %v4331 = vpop.permute.xlu0 %4330
        %4332 = vrot.lane.b32.xlu0 %v4269, 16
        %v4333 = vpop.permute.xlu0 %4332
        %4334 = vrot.lane.b32.xlu0 %v4271, 16
        %v4335 = vpop.permute.xlu0 %4334
        %4336 = vrot.lane.b32.xlu0 %v4273, 16
        %v4337 = vpop.permute.xlu0 %4336
        %4338 = vrot.lane.b32.xlu0 %v4275, 16
        %v4339 = vpop.permute.xlu0 %4338
        %4340 = vrot.lane.b32.xlu0 %v4277, 16
        %v4341 = vpop.permute.xlu0 %4340
        %4342 = vrot.lane.b32.xlu0 %v4279, 16
        %v4343 = vpop.permute.xlu0 %4342
        %4344 = vrot.lane.b32.xlu0 %v4281, 16
        %v4345 = vpop.permute.xlu0 %4344
        %4346 = vrot.lane.b32.xlu0 %v4283, 16
        %v4347 = vpop.permute.xlu0 %4346
        %4348 = vrot.lane.b32.xlu0 %v4285, 16
        %v4349 = vpop.permute.xlu0 %4348
        %4350 = vrot.lane.b32.xlu0 %v4287, 16
        %v4351 = vpop.permute.xlu0 %4350
        %4352 = vrot.lane.b32.xlu0 %v4289, 16
        %v4353 = vpop.permute.xlu0 %4352
        %4354 = vrot.lane.b32.xlu0 %v4291, 16
        %v4355 = vpop.permute.xlu0 %4354
        %4356 = vrot.lane.b32.xlu0 %v4293, 16
        %v4357 = vpop.permute.xlu0 %4356
        %4358 = vrot.lane.b32.xlu0 %v4295, 16
        %v4359 = vpop.permute.xlu0 %4358
        %4360 = vrot.lane.b32.xlu0 %v4297, 16
        %v4361 = vpop.permute.xlu0 %4360
        %4362 = vrot.lane.b32.xlu0 %v4299, 16
        %v4363 = vpop.permute.xlu0 %4362
        %4364 = vrot.lane.b32.xlu0 %v4301, 16
        %v4365 = vpop.permute.xlu0 %4364
        %4366 = vrot.lane.b32.xlu0 %v4303, 16
        %v4367 = vpop.permute.xlu0 %4366
        %4368 = vrot.lane.b32.xlu0 %v4305, 16
        %v4369 = vpop.permute.xlu0 %4368
        %4370 = vrot.lane.b32.xlu0 %v4307, 16
        %v4371 = vpop.permute.xlu0 %4370
        %4436 = vrot.lane.b32.xlu0 %v3929, 24
        %v4437 = vpop.permute.xlu0 %4436
        %4438 = vrot.lane.b32.xlu0 %v3930, 24
        %v4439 = vpop.permute.xlu0 %4438
        %4440 = vrot.lane.b32.xlu0 %v3931, 24
        %v4441 = vpop.permute.xlu0 %4440
        %4442 = vrot.lane.b32.xlu0 %v3932, 24
        %v4443 = vpop.permute.xlu0 %4442
        %4444 = vrot.lane.b32.xlu0 %v3933, 24
        %v4445 = vpop.permute.xlu0 %4444
        %4446 = vrot.lane.b32.xlu0 %v3934, 24
        %v4447 = vpop.permute.xlu0 %4446
        %4448 = vrot.lane.b32.xlu0 %v3935, 24
        %v4449 = vpop.permute.xlu0 %4448
        %4450 = vrot.lane.b32.xlu0 %v3936, 24
        %v4451 = vpop.permute.xlu0 %4450
        %4452 = vrot.lane.b32.xlu0 %v3937, 24
        %v4453 = vpop.permute.xlu0 %4452
        %4454 = vrot.lane.b32.xlu0 %v3938, 24
        %v4455 = vpop.permute.xlu0 %4454
        %4456 = vrot.lane.b32.xlu0 %v3939, 24
        %v4457 = vpop.permute.xlu0 %4456
        %4458 = vrot.lane.b32.xlu0 %v3940, 24
        %v4459 = vpop.permute.xlu0 %4458
        %4460 = vrot.lane.b32.xlu0 %v3941, 24
        %v4461 = vpop.permute.xlu0 %4460
        %4462 = vrot.lane.b32.xlu0 %v3942, 24
        %v4463 = vpop.permute.xlu0 %4462
        %4464 = vrot.lane.b32.xlu0 %v3943, 24
        %v4465 = vpop.permute.xlu0 %4464
        %4466 = vrot.lane.b32.xlu0 %v3944, 24
        %v4467 = vpop.permute.xlu0 %4466
        %4468 = vrot.lane.b32.xlu0 %v3945, 24
        %v4469 = vpop.permute.xlu0 %4468
        %4470 = vrot.lane.b32.xlu0 %v3946, 24
        %v4471 = vpop.permute.xlu0 %4470
        %4472 = vrot.lane.b32.xlu0 %v3947, 24
        %v4473 = vpop.permute.xlu0 %4472
        %4474 = vrot.lane.b32.xlu0 %v3948, 24
        %v4475 = vpop.permute.xlu0 %4474
        %4476 = vrot.lane.b32.xlu0 %v3949, 24
        %v4477 = vpop.permute.xlu0 %4476
        %4478 = vrot.lane.b32.xlu0 %v3950, 24
        %v4479 = vpop.permute.xlu0 %4478
        %4480 = vrot.lane.b32.xlu0 %v3951, 24
        %v4481 = vpop.permute.xlu0 %4480
        %4482 = vrot.lane.b32.xlu0 %v3952, 24
        %v4483 = vpop.permute.xlu0 %4482
        %4484 = vrot.lane.b32.xlu0 %v3953, 24
        %v4485 = vpop.permute.xlu0 %4484
        %4486 = vrot.lane.b32.xlu0 %v3954, 24
        %v4487 = vpop.permute.xlu0 %4486
        %4488 = vrot.lane.b32.xlu0 %v3955, 24
        %v4489 = vpop.permute.xlu0 %4488
        %4490 = vrot.lane.b32.xlu0 %v3956, 24
        %v4491 = vpop.permute.xlu0 %4490
        %4492 = vrot.lane.b32.xlu0 %v3957, 24
        %v4493 = vpop.permute.xlu0 %4492
        %4494 = vrot.lane.b32.xlu0 %v3958, 24
        %v4495 = vpop.permute.xlu0 %4494
        %4496 = vrot.lane.b32.xlu0 %v3959, 24
        %v4497 = vpop.permute.xlu0 %4496
        %4498 = vrot.lane.b32.xlu0 %v3960, 24
        %v4499 = vpop.permute.xlu0 %4498
        %v4533 = vrot.slane %v3832, 1
        %v4534 = vsel %vm2025, %v4117, %v4533
        %v4535 = vrot.slane %v3867, 1
        %v4536 = vsel %vm2025, %v4533, %v4535
        %4537 = vrot.lane.b32.xlu0 %v4060, 32
        %v4538 = vpop.permute.xlu0 %4537
        %4539 = vrot.lane.b32.xlu0 %v4062, 32
        %v4540 = vpop.permute.xlu0 %4539
        %4541 = vrot.lane.b32.xlu0 %v4064, 32
        %v4542 = vpop.permute.xlu0 %4541
        %4543 = vrot.lane.b32.xlu0 %v4066, 32
        %v4544 = vpop.permute.xlu0 %4543
        %4545 = vrot.lane.b32.xlu0 %v4068, 32
        %v4546 = vpop.permute.xlu0 %4545
        %4547 = vrot.lane.b32.xlu0 %v4070, 32
        %v4548 = vpop.permute.xlu0 %4547
        %4549 = vrot.lane.b32.xlu0 %v4072, 32
        %v4550 = vpop.permute.xlu0 %4549
        %4551 = vrot.lane.b32.xlu0 %v4074, 32
        %v4552 = vpop.permute.xlu0 %4551
        %4553 = vrot.lane.b32.xlu0 %v4076, 32
        %v4554 = vpop.permute.xlu0 %4553
        %4555 = vrot.lane.b32.xlu0 %v4078, 32
        %v4556 = vpop.permute.xlu0 %4555
        %4557 = vrot.lane.b32.xlu0 %v4080, 32
        %v4558 = vpop.permute.xlu0 %4557
        %4559 = vrot.lane.b32.xlu0 %v4082, 32
        %v4560 = vpop.permute.xlu0 %4559
        %4561 = vrot.lane.b32.xlu0 %v4084, 32
        %v4562 = vpop.permute.xlu0 %4561
        %4563 = vrot.lane.b32.xlu0 %v4086, 32
        %v4564 = vpop.permute.xlu0 %4563
        %4565 = vrot.lane.b32.xlu0 %v4088, 32
        %v4566 = vpop.permute.xlu0 %4565
        %4567 = vrot.lane.b32.xlu0 %v4090, 32
        %v4568 = vpop.permute.xlu0 %4567
        %4569 = vrot.lane.b32.xlu0 %v4092, 32
        %v4570 = vpop.permute.xlu0 %4569
        %4571 = vrot.lane.b32.xlu0 %v4094, 32
        %v4572 = vpop.permute.xlu0 %4571
        %4573 = vrot.lane.b32.xlu0 %v4096, 32
        %v4574 = vpop.permute.xlu0 %4573
        %4575 = vrot.lane.b32.xlu0 %v4098, 32
        %v4576 = vpop.permute.xlu0 %4575
        %4577 = vrot.lane.b32.xlu0 %v4100, 32
        %v4578 = vpop.permute.xlu0 %4577
        %4579 = vrot.lane.b32.xlu0 %v4102, 32
        %v4580 = vpop.permute.xlu0 %4579
        %4581 = vrot.lane.b32.xlu0 %v4104, 32
        %v4582 = vpop.permute.xlu0 %4581
        %4583 = vrot.lane.b32.xlu0 %v4106, 32
        %v4584 = vpop.permute.xlu0 %4583
        %4585 = vrot.lane.b32.xlu0 %v4108, 32
        %v4586 = vpop.permute.xlu0 %4585
        %4587 = vrot.lane.b32.xlu0 %v4110, 32
        %v4588 = vpop.permute.xlu0 %4587
        %4589 = vrot.lane.b32.xlu0 %v4112, 32
        %v4590 = vpop.permute.xlu0 %4589
        %4591 = vrot.lane.b32.xlu0 %v4114, 32
        %v4592 = vpop.permute.xlu0 %4591
        %4593 = vrot.lane.b32.xlu0 %v4116, 32
        %v4594 = vpop.permute.xlu0 %4593
        %4595 = vrot.lane.b32.xlu0 %v4118, 32
        %v4596 = vpop.permute.xlu0 %4595
        %4597 = vrot.lane.b32.xlu0 %v4534, 32
        %v4598 = vpop.permute.xlu0 %4597
        %4599 = vrot.lane.b32.xlu0 %v4536, 32
        %v4600 = vpop.permute.xlu0 %4599
        %v4666 = vrot.slane %v3961, 2
        %v4667 = vrot.slane %v3962, 2
        %v4668 = vsel %vm2219, %v4666, %v4667
        %v4669 = vrot.slane %v3963, 2
        %v4670 = vsel %vm2219, %v4667, %v4669
        %v4671 = vrot.slane %v3964, 2
        %v4672 = vsel %vm2219, %v4669, %v4671
        %v4673 = vrot.slane %v3965, 2
        %v4674 = vsel %vm2219, %v4671, %v4673
        %v4675 = vrot.slane %v3966, 2
        %v4676 = vsel %vm2219, %v4673, %v4675
        %v4677 = vrot.slane %v3967, 2
        %v4678 = vsel %vm2219, %v4675, %v4677
        %v4679 = vrot.slane %v3968, 2
        %v4680 = vsel %vm2219, %v4677, %v4679
        %v4681 = vrot.slane %v3969, 2
        %v4682 = vsel %vm2219, %v4679, %v4681
        %v4683 = vrot.slane %v3970, 2
        %v4684 = vsel %vm2219, %v4681, %v4683
        %v4685 = vrot.slane %v3971, 2
        %v4686 = vsel %vm2219, %v4683, %v4685
        %v4687 = vrot.slane %v3972, 2
        %v4688 = vsel %vm2219, %v4685, %v4687
        %v4689 = vrot.slane %v3973, 2
        %v4690 = vsel %vm2219, %v4687, %v4689
        %v4691 = vrot.slane %v3974, 2
        %v4692 = vsel %vm2219, %v4689, %v4691
        %v4693 = vrot.slane %v3975, 2
        %v4694 = vsel %vm2219, %v4691, %v4693
        %v4695 = vrot.slane %v3976, 2
        %v4696 = vsel %vm2219, %v4693, %v4695
        %v4697 = vrot.slane %v3977, 2
        %v4698 = vsel %vm2219, %v4695, %v4697
        %v4699 = vrot.slane %v3978, 2
        %v4700 = vsel %vm2219, %v4697, %v4699
        %v4701 = vrot.slane %v3979, 2
        %v4702 = vsel %vm2219, %v4699, %v4701
        %v4703 = vrot.slane %v3980, 2
        %v4704 = vsel %vm2219, %v4701, %v4703
        %v4705 = vrot.slane %v3981, 2
        %v4706 = vsel %vm2219, %v4703, %v4705
        %v4707 = vrot.slane %v3982, 2
        %v4708 = vsel %vm2219, %v4705, %v4707
        %v4709 = vrot.slane %v3983, 2
        %v4710 = vsel %vm2219, %v4707, %v4709
        %v4711 = vrot.slane %v3984, 2
        %v4712 = vsel %vm2219, %v4709, %v4711
        %v4713 = vrot.slane %v3985, 2
        %v4714 = vsel %vm2219, %v4711, %v4713
        %v4715 = vrot.slane %v3986, 2
        %v4716 = vsel %vm2219, %v4713, %v4715
        %v4717 = vrot.slane %v3987, 2
        %v4718 = vsel %vm2219, %v4715, %v4717
        %v4719 = vrot.slane %v3988, 2
        %v4720 = vsel %vm2219, %v4717, %v4719
        %v4721 = vrot.slane %v3989, 2
        %v4722 = vsel %vm2219, %v4719, %v4721
        %v4723 = vrot.slane %v3990, 2
        %v4724 = vsel %vm2219, %v4721, %v4723
        %v4725 = vrot.slane %v3991, 2
        %v4726 = vsel %vm2219, %v4723, %v4725
        %v4727 = vrot.slane %v3992, 2
        %v4728 = vsel %vm2219, %v4725, %v4727
        %v4729 = vrot.slane %v3993, 2
        %v4730 = vsel %vm2219, %v4727, %v4729
        %4731 = vrot.lane.b32.xlu0 %v4668, 40
        %v4732 = vpop.permute.xlu0 %4731
        %4733 = vrot.lane.b32.xlu0 %v4670, 40
        %v4734 = vpop.permute.xlu0 %4733
        %4735 = vrot.lane.b32.xlu0 %v4672, 40
        %v4736 = vpop.permute.xlu0 %4735
        %4737 = vrot.lane.b32.xlu0 %v4674, 40
        %v4738 = vpop.permute.xlu0 %4737
        %4739 = vrot.lane.b32.xlu0 %v4676, 40
        %v4740 = vpop.permute.xlu0 %4739
        %4741 = vrot.lane.b32.xlu0 %v4678, 40
        %v4742 = vpop.permute.xlu0 %4741
        %4743 = vrot.lane.b32.xlu0 %v4680, 40
        %v4744 = vpop.permute.xlu0 %4743
        %4745 = vrot.lane.b32.xlu0 %v4682, 40
        %v4746 = vpop.permute.xlu0 %4745
        %4747 = vrot.lane.b32.xlu0 %v4684, 40
        %v4748 = vpop.permute.xlu0 %4747
        %4749 = vrot.lane.b32.xlu0 %v4686, 40
        %v4750 = vpop.permute.xlu0 %4749
        %4751 = vrot.lane.b32.xlu0 %v4688, 40
        %v4752 = vpop.permute.xlu0 %4751
        %4753 = vrot.lane.b32.xlu0 %v4690, 40
        %v4754 = vpop.permute.xlu0 %4753
        %4755 = vrot.lane.b32.xlu0 %v4692, 40
        %v4756 = vpop.permute.xlu0 %4755
        %4757 = vrot.lane.b32.xlu0 %v4694, 40
        %v4758 = vpop.permute.xlu0 %4757
        %4759 = vrot.lane.b32.xlu0 %v4696, 40
        %v4760 = vpop.permute.xlu0 %4759
        %4761 = vrot.lane.b32.xlu0 %v4698, 40
        %v4762 = vpop.permute.xlu0 %4761
        %4763 = vrot.lane.b32.xlu0 %v4700, 40
        %v4764 = vpop.permute.xlu0 %4763
        %4765 = vrot.lane.b32.xlu0 %v4702, 40
        %v4766 = vpop.permute.xlu0 %4765
        %4767 = vrot.lane.b32.xlu0 %v4704, 40
        %v4768 = vpop.permute.xlu0 %4767
        %4769 = vrot.lane.b32.xlu0 %v4706, 40
        %v4770 = vpop.permute.xlu0 %4769
        %4771 = vrot.lane.b32.xlu0 %v4708, 40
        %v4772 = vpop.permute.xlu0 %4771
        %4773 = vrot.lane.b32.xlu0 %v4710, 40
        %v4774 = vpop.permute.xlu0 %4773
        %4775 = vrot.lane.b32.xlu0 %v4712, 40
        %v4776 = vpop.permute.xlu0 %4775
        %4777 = vrot.lane.b32.xlu0 %v4714, 40
        %v4778 = vpop.permute.xlu0 %4777
        %4779 = vrot.lane.b32.xlu0 %v4716, 40
        %v4780 = vpop.permute.xlu0 %4779
        %4781 = vrot.lane.b32.xlu0 %v4718, 40
        %v4782 = vpop.permute.xlu0 %4781
        %4783 = vrot.lane.b32.xlu0 %v4720, 40
        %v4784 = vpop.permute.xlu0 %4783
        %4785 = vrot.lane.b32.xlu0 %v4722, 40
        %v4786 = vpop.permute.xlu0 %4785
        %4787 = vrot.lane.b32.xlu0 %v4724, 40
        %v4788 = vpop.permute.xlu0 %4787
        %4789 = vrot.lane.b32.xlu0 %v4726, 40
        %v4790 = vpop.permute.xlu0 %4789
        %4791 = vrot.lane.b32.xlu0 %v4728, 40
        %v4792 = vpop.permute.xlu0 %4791
        %4793 = vrot.lane.b32.xlu0 %v4730, 40
        %v4794 = vpop.permute.xlu0 %4793
        %4858 = vrot.lane.b32.xlu0 %v3994, 48
        %v4859 = vpop.permute.xlu0 %4858
        %4860 = vrot.lane.b32.xlu0 %v3995, 48
        %v4861 = vpop.permute.xlu0 %4860
        %4862 = vrot.lane.b32.xlu0 %v3996, 48
        %v4863 = vpop.permute.xlu0 %4862
        %4864 = vrot.lane.b32.xlu0 %v3997, 48
        %v4865 = vpop.permute.xlu0 %4864
        %4866 = vrot.lane.b32.xlu0 %v3998, 48
        %v4867 = vpop.permute.xlu0 %4866
        %4868 = vrot.lane.b32.xlu0 %v3999, 48
        %v4869 = vpop.permute.xlu0 %4868
        %4870 = vrot.lane.b32.xlu0 %v4000, 48
        %v4871 = vpop.permute.xlu0 %4870
        %4872 = vrot.lane.b32.xlu0 %v4001, 48
        %v4873 = vpop.permute.xlu0 %4872
        %4874 = vrot.lane.b32.xlu0 %v4002, 48
        %v4875 = vpop.permute.xlu0 %4874
        %4876 = vrot.lane.b32.xlu0 %v4003, 48
        %v4877 = vpop.permute.xlu0 %4876
        %4878 = vrot.lane.b32.xlu0 %v4004, 48
        %v4879 = vpop.permute.xlu0 %4878
        %4880 = vrot.lane.b32.xlu0 %v4005, 48
        %v4881 = vpop.permute.xlu0 %4880
        %4882 = vrot.lane.b32.xlu0 %v4006, 48
        %v4883 = vpop.permute.xlu0 %4882
        %4884 = vrot.lane.b32.xlu0 %v4007, 48
        %v4885 = vpop.permute.xlu0 %4884
        %4886 = vrot.lane.b32.xlu0 %v4008, 48
        %v4887 = vpop.permute.xlu0 %4886
        %4888 = vrot.lane.b32.xlu0 %v4009, 48
        %v4889 = vpop.permute.xlu0 %4888
        %4890 = vrot.lane.b32.xlu0 %v4010, 48
        %v4891 = vpop.permute.xlu0 %4890
        %4892 = vrot.lane.b32.xlu0 %v4011, 48
        %v4893 = vpop.permute.xlu0 %4892
        %4894 = vrot.lane.b32.xlu0 %v4012, 48
        %v4895 = vpop.permute.xlu0 %4894
        %4896 = vrot.lane.b32.xlu0 %v4013, 48
        %v4897 = vpop.permute.xlu0 %4896
        %4898 = vrot.lane.b32.xlu0 %v4014, 48
        %v4899 = vpop.permute.xlu0 %4898
        %4900 = vrot.lane.b32.xlu0 %v4015, 48
        %v4901 = vpop.permute.xlu0 %4900
        %4902 = vrot.lane.b32.xlu0 %v4016, 48
        %v4903 = vpop.permute.xlu0 %4902
        %4904 = vrot.lane.b32.xlu0 %v4017, 48
        %v4905 = vpop.permute.xlu0 %4904
        %4906 = vrot.lane.b32.xlu0 %v4018, 48
        %v4907 = vpop.permute.xlu0 %4906
        %4908 = vrot.lane.b32.xlu0 %v4019, 48
        %v4909 = vpop.permute.xlu0 %4908
        %4910 = vrot.lane.b32.xlu0 %v4020, 48
        %v4911 = vpop.permute.xlu0 %4910
        %4912 = vrot.lane.b32.xlu0 %v4021, 48
        %v4913 = vpop.permute.xlu0 %4912
        %4914 = vrot.lane.b32.xlu0 %v4022, 48
        %v4915 = vpop.permute.xlu0 %4914
        %4916 = vrot.lane.b32.xlu0 %v4023, 48
        %v4917 = vpop.permute.xlu0 %4916
        %4918 = vrot.lane.b32.xlu0 %v4024, 48
        %v4919 = vpop.permute.xlu0 %4918
        %4920 = vrot.lane.b32.xlu0 %v1989, 48
        %v4921 = vpop.permute.xlu0 %4920
        %v4954 = vsel %vm2025, %v4535, %v2026
        %4955 = vrot.lane.b32.xlu0 %v4064, 56
        %v4956 = vpop.permute.xlu0 %4955
        %4957 = vrot.lane.b32.xlu0 %v4066, 56
        %v4958 = vpop.permute.xlu0 %4957
        %4959 = vrot.lane.b32.xlu0 %v4068, 56
        %v4960 = vpop.permute.xlu0 %4959
        %4961 = vrot.lane.b32.xlu0 %v4070, 56
        %v4962 = vpop.permute.xlu0 %4961
        %4963 = vrot.lane.b32.xlu0 %v4072, 56
        %v4964 = vpop.permute.xlu0 %4963
        %4965 = vrot.lane.b32.xlu0 %v4074, 56
        %v4966 = vpop.permute.xlu0 %4965
        %4967 = vrot.lane.b32.xlu0 %v4076, 56
        %v4968 = vpop.permute.xlu0 %4967
        %4969 = vrot.lane.b32.xlu0 %v4078, 56
        %v4970 = vpop.permute.xlu0 %4969
        %4971 = vrot.lane.b32.xlu0 %v4080, 56
        %v4972 = vpop.permute.xlu0 %4971
        %4973 = vrot.lane.b32.xlu0 %v4082, 56
        %v4974 = vpop.permute.xlu0 %4973
        %4975 = vrot.lane.b32.xlu0 %v4084, 56
        %v4976 = vpop.permute.xlu0 %4975
        %4977 = vrot.lane.b32.xlu0 %v4086, 56
        %v4978 = vpop.permute.xlu0 %4977
        %4979 = vrot.lane.b32.xlu0 %v4088, 56
        %v4980 = vpop.permute.xlu0 %4979
        %4981 = vrot.lane.b32.xlu0 %v4090, 56
        %v4982 = vpop.permute.xlu0 %4981
        %4983 = vrot.lane.b32.xlu0 %v4092, 56
        %v4984 = vpop.permute.xlu0 %4983
        %4985 = vrot.lane.b32.xlu0 %v4094, 56
        %v4986 = vpop.permute.xlu0 %4985
        %4987 = vrot.lane.b32.xlu0 %v4096, 56
        %v4988 = vpop.permute.xlu0 %4987
        %4989 = vrot.lane.b32.xlu0 %v4098, 56
        %v4990 = vpop.permute.xlu0 %4989
        %4991 = vrot.lane.b32.xlu0 %v4100, 56
        %v4992 = vpop.permute.xlu0 %4991
        %4993 = vrot.lane.b32.xlu0 %v4102, 56
        %v4994 = vpop.permute.xlu0 %4993
        %4995 = vrot.lane.b32.xlu0 %v4104, 56
        %v4996 = vpop.permute.xlu0 %4995
        %4997 = vrot.lane.b32.xlu0 %v4106, 56
        %v4998 = vpop.permute.xlu0 %4997
        %4999 = vrot.lane.b32.xlu0 %v4108, 56
        %v5000 = vpop.permute.xlu0 %4999
        %5001 = vrot.lane.b32.xlu0 %v4110, 56
        %v5002 = vpop.permute.xlu0 %5001
        %5003 = vrot.lane.b32.xlu0 %v4112, 56
        %v5004 = vpop.permute.xlu0 %5003
        %5005 = vrot.lane.b32.xlu0 %v4114, 56
        %v5006 = vpop.permute.xlu0 %5005
        %5007 = vrot.lane.b32.xlu0 %v4116, 56
        %v5008 = vpop.permute.xlu0 %5007
        %5009 = vrot.lane.b32.xlu0 %v4118, 56
        %v5010 = vpop.permute.xlu0 %5009
        %5011 = vrot.lane.b32.xlu0 %v4534, 56
        %v5012 = vpop.permute.xlu0 %5011
        %5013 = vrot.lane.b32.xlu0 %v4536, 56
        %v5014 = vpop.permute.xlu0 %5013
        %5015 = vrot.lane.b32.xlu0 %v4954, 56
        %v5016 = vpop.permute.xlu0 %5015
        %5017 = vrot.lane.b32.xlu0 %v2027, 56
        %v5018 = vpop.permute.xlu0 %5017
        %v5082 = vrot.slane %v4025, 2
        %v5083 = vrot.slane %v4026, 2
        %v5084 = vsel %vm2219, %v5082, %v5083
        %v5085 = vrot.slane %v4027, 2
        %v5086 = vsel %vm2219, %v5083, %v5085
        %v5087 = vrot.slane %v4028, 2
        %v5088 = vsel %vm2219, %v5085, %v5087
        %v5089 = vrot.slane %v4029, 2
        %v5090 = vsel %vm2219, %v5087, %v5089
        %v5091 = vrot.slane %v4030, 2
        %v5092 = vsel %vm2219, %v5089, %v5091
        %v5093 = vrot.slane %v4031, 2
        %v5094 = vsel %vm2219, %v5091, %v5093
        %v5095 = vrot.slane %v4032, 2
        %v5096 = vsel %vm2219, %v5093, %v5095
        %v5097 = vrot.slane %v4033, 2
        %v5098 = vsel %vm2219, %v5095, %v5097
        %v5099 = vrot.slane %v4034, 2
        %v5100 = vsel %vm2219, %v5097, %v5099
        %v5101 = vrot.slane %v4035, 2
        %v5102 = vsel %vm2219, %v5099, %v5101
        %v5103 = vrot.slane %v4036, 2
        %v5104 = vsel %vm2219, %v5101, %v5103
        %v5105 = vrot.slane %v4037, 2
        %v5106 = vsel %vm2219, %v5103, %v5105
        %v5107 = vrot.slane %v4038, 2
        %v5108 = vsel %vm2219, %v5105, %v5107
        %v5109 = vrot.slane %v4039, 2
        %v5110 = vsel %vm2219, %v5107, %v5109
        %v5111 = vrot.slane %v4040, 2
        %v5112 = vsel %vm2219, %v5109, %v5111
        %v5113 = vrot.slane %v4041, 2
        %v5114 = vsel %vm2219, %v5111, %v5113
        %v5115 = vrot.slane %v4042, 2
        %v5116 = vsel %vm2219, %v5113, %v5115
        %v5117 = vrot.slane %v4043, 2
        %v5118 = vsel %vm2219, %v5115, %v5117
        %v5119 = vrot.slane %v4044, 2
        %v5120 = vsel %vm2219, %v5117, %v5119
        %v5121 = vrot.slane %v4045, 2
        %v5122 = vsel %vm2219, %v5119, %v5121
        %v5123 = vrot.slane %v4046, 2
        %v5124 = vsel %vm2219, %v5121, %v5123
        %v5125 = vrot.slane %v4047, 2
        %v5126 = vsel %vm2219, %v5123, %v5125
        %v5127 = vrot.slane %v4048, 2
        %v5128 = vsel %vm2219, %v5125, %v5127
        %v5129 = vrot.slane %v4049, 2
        %v5130 = vsel %vm2219, %v5127, %v5129
        %v5131 = vrot.slane %v4050, 2
        %v5132 = vsel %vm2219, %v5129, %v5131
        %v5133 = vrot.slane %v4051, 2
        %v5134 = vsel %vm2219, %v5131, %v5133
        %v5135 = vrot.slane %v4052, 2
        %v5136 = vsel %vm2219, %v5133, %v5135
        %v5137 = vrot.slane %v4053, 2
        %v5138 = vsel %vm2219, %v5135, %v5137
        %v5139 = vrot.slane %v4054, 2
        %v5140 = vsel %vm2219, %v5137, %v5139
        %v5141 = vrot.slane %v4055, 2
        %v5142 = vsel %vm2219, %v5139, %v5141
        %v5143 = vsel %vm2219, %v5141, %v3123
        %5144 = vrot.lane.b32.xlu0 %v5084, 64
        %v5145 = vpop.permute.xlu0 %5144
        %5146 = vrot.lane.b32.xlu0 %v5086, 64
        %v5147 = vpop.permute.xlu0 %5146
        %5148 = vrot.lane.b32.xlu0 %v5088, 64
        %v5149 = vpop.permute.xlu0 %5148
        %5150 = vrot.lane.b32.xlu0 %v5090, 64
        %v5151 = vpop.permute.xlu0 %5150
        %5152 = vrot.lane.b32.xlu0 %v5092, 64
        %v5153 = vpop.permute.xlu0 %5152
        %5154 = vrot.lane.b32.xlu0 %v5094, 64
        %v5155 = vpop.permute.xlu0 %5154
        %5156 = vrot.lane.b32.xlu0 %v5096, 64
        %v5157 = vpop.permute.xlu0 %5156
        %5158 = vrot.lane.b32.xlu0 %v5098, 64
        %v5159 = vpop.permute.xlu0 %5158
        %5160 = vrot.lane.b32.xlu0 %v5100, 64
        %v5161 = vpop.permute.xlu0 %5160
        %5162 = vrot.lane.b32.xlu0 %v5102, 64
        %v5163 = vpop.permute.xlu0 %5162
        %5164 = vrot.lane.b32.xlu0 %v5104, 64
        %v5165 = vpop.permute.xlu0 %5164
        %5166 = vrot.lane.b32.xlu0 %v5106, 64
        %v5167 = vpop.permute.xlu0 %5166
        %5168 = vrot.lane.b32.xlu0 %v5108, 64
        %v5169 = vpop.permute.xlu0 %5168
        %5170 = vrot.lane.b32.xlu0 %v5110, 64
        %v5171 = vpop.permute.xlu0 %5170
        %5172 = vrot.lane.b32.xlu0 %v5112, 64
        %v5173 = vpop.permute.xlu0 %5172
        %5174 = vrot.lane.b32.xlu0 %v5114, 64
        %v5175 = vpop.permute.xlu0 %5174
        %5176 = vrot.lane.b32.xlu0 %v5116, 64
        %v5177 = vpop.permute.xlu0 %5176
        %5178 = vrot.lane.b32.xlu0 %v5118, 64
        %v5179 = vpop.permute.xlu0 %5178
        %5180 = vrot.lane.b32.xlu0 %v5120, 64
        %v5181 = vpop.permute.xlu0 %5180
        %5182 = vrot.lane.b32.xlu0 %v5122, 64
        %v5183 = vpop.permute.xlu0 %5182
        %5184 = vrot.lane.b32.xlu0 %v5124, 64
        %v5185 = vpop.permute.xlu0 %5184
        %5186 = vrot.lane.b32.xlu0 %v5126, 64
        %v5187 = vpop.permute.xlu0 %5186
        %5188 = vrot.lane.b32.xlu0 %v5128, 64
        %v5189 = vpop.permute.xlu0 %5188
        %5190 = vrot.lane.b32.xlu0 %v5130, 64
        %v5191 = vpop.permute.xlu0 %5190
        %5192 = vrot.lane.b32.xlu0 %v5132, 64
        %v5193 = vpop.permute.xlu0 %5192
        %5194 = vrot.lane.b32.xlu0 %v5134, 64
        %v5195 = vpop.permute.xlu0 %5194
        %5196 = vrot.lane.b32.xlu0 %v5136, 64
        %v5197 = vpop.permute.xlu0 %5196
        %5198 = vrot.lane.b32.xlu0 %v5138, 64
        %v5199 = vpop.permute.xlu0 %5198
        %5200 = vrot.lane.b32.xlu0 %v5140, 64
        %v5201 = vpop.permute.xlu0 %5200
        %5202 = vrot.lane.b32.xlu0 %v5142, 64
        %v5203 = vpop.permute.xlu0 %5202
        %5204 = vrot.lane.b32.xlu0 %v5143, 64
        %v5205 = vpop.permute.xlu0 %5204
        %5206 = vrot.lane.b32.xlu0 %v3126, 64
        %v5207 = vpop.permute.xlu0 %5206
        %v5240 = vsel %vm3454, %v1699, %v4120
        %v5241 = vsel %vm3454, %v1700, %v4122
        %v5242 = vsel %vm3454, %v3868, %v4124
        %v5243 = vsel %vm3454, %v3869, %v4126
        %v5244 = vsel %vm3454, %v3870, %v4128
        %v5245 = vsel %vm3454, %v3871, %v4130
        %v5246 = vsel %vm3454, %v3872, %v4132
        %v5247 = vsel %vm3454, %v3873, %v4134
        %v5248 = vsel %vm3454, %v3874, %v4136
        %v5249 = vsel %vm3454, %v3875, %v4138
        %v5250 = vsel %vm3454, %v3876, %v4140
        %v5251 = vsel %vm3454, %v3877, %v4142
        %v5252 = vsel %vm3454, %v3878, %v4144
        %v5253 = vsel %vm3454, %v3879, %v4146
        %v5254 = vsel %vm3454, %v3880, %v4148
        %v5255 = vsel %vm3454, %v3881, %v4150
        %v5256 = vsel %vm3454, %v3882, %v4152
        %v5257 = vsel %vm3454, %v3883, %v4154
        %v5258 = vsel %vm3454, %v3884, %v4156
        %v5259 = vsel %vm3454, %v3885, %v4158
        %v5260 = vsel %vm3454, %v3886, %v4160
        %v5261 = vsel %vm3454, %v3887, %v4162
        %v5262 = vsel %vm3454, %v3888, %v4164
        %v5263 = vsel %vm3454, %v3889, %v4166
        %v5264 = vsel %vm3454, %v3890, %v4168
        %v5265 = vsel %vm3454, %v3891, %v4170
        %v5266 = vsel %vm3454, %v3892, %v4172
        %v5267 = vsel %vm3454, %v3893, %v4174
        %v5268 = vsel %vm3454, %v3894, %v4176
        %v5269 = vsel %vm3454, %v3895, %v4178
        %v5270 = vsel %vm3454, %v3896, %v4180
        %v5271 = vsel %vm3454, %v3897, %v4182
        %vm5272 = vcmask 130048
        %v5273 = vsel %vm5272, %v5240, %v4309
        %v5274 = vsel %vm5272, %v5241, %v4311
        %v5275 = vsel %vm5272, %v5242, %v4313
        %v5276 = vsel %vm5272, %v5243, %v4315
        %v5277 = vsel %vm5272, %v5244, %v4317
        %v5278 = vsel %vm5272, %v5245, %v4319
        %v5279 = vsel %vm5272, %v5246, %v4321
        %v5280 = vsel %vm5272, %v5247, %v4323
        %v5281 = vsel %vm5272, %v5248, %v4325
        %v5282 = vsel %vm5272, %v5249, %v4327
        %v5283 = vsel %vm5272, %v5250, %v4329
        %v5284 = vsel %vm5272, %v5251, %v4331
        %v5285 = vsel %vm5272, %v5252, %v4333
        %v5286 = vsel %vm5272, %v5253, %v4335
        %v5287 = vsel %vm5272, %v5254, %v4337
        %v5288 = vsel %vm5272, %v5255, %v4339
        %v5289 = vsel %vm5272, %v5256, %v4341
        %v5290 = vsel %vm5272, %v5257, %v4343
        %v5291 = vsel %vm5272, %v5258, %v4345
        %v5292 = vsel %vm5272, %v5259, %v4347
        %v5293 = vsel %vm5272, %v5260, %v4349
        %v5294 = vsel %vm5272, %v5261, %v4351
        %v5295 = vsel %vm5272, %v5262, %v4353
        %v5296 = vsel %vm5272, %v5263, %v4355
        %v5297 = vsel %vm5272, %v5264, %v4357
        %v5298 = vsel %vm5272, %v5265, %v4359
        %v5299 = vsel %vm5272, %v5266, %v4361
        %v5300 = vsel %vm5272, %v5267, %v4363
        %v5301 = vsel %vm5272, %v5268, %v4365
        %v5302 = vsel %vm5272, %v5269, %v4367
        %v5303 = vsel %vm5272, %v5270, %v4369
        %v5304 = vsel %vm5272, %v5271, %v4371
        %vm5305 = vcmask 195584
        %v5306 = vsel %vm5305, %v5273, %v4437
        %v5307 = vsel %vm5305, %v5274, %v4439
        %v5308 = vsel %vm5305, %v5275, %v4441
        %v5309 = vsel %vm5305, %v5276, %v4443
        %v5310 = vsel %vm5305, %v5277, %v4445
        %v5311 = vsel %vm5305, %v5278, %v4447
        %v5312 = vsel %vm5305, %v5279, %v4449
        %v5313 = vsel %vm5305, %v5280, %v4451
        %v5314 = vsel %vm5305, %v5281, %v4453
        %v5315 = vsel %vm5305, %v5282, %v4455
        %v5316 = vsel %vm5305, %v5283, %v4457
        %v5317 = vsel %vm5305, %v5284, %v4459
        %v5318 = vsel %vm5305, %v5285, %v4461
        %v5319 = vsel %vm5305, %v5286, %v4463
        %v5320 = vsel %vm5305, %v5287, %v4465
        %v5321 = vsel %vm5305, %v5288, %v4467
        %v5322 = vsel %vm5305, %v5289, %v4469
        %v5323 = vsel %vm5305, %v5290, %v4471
        %v5324 = vsel %vm5305, %v5291, %v4473
        %v5325 = vsel %vm5305, %v5292, %v4475
        %v5326 = vsel %vm5305, %v5293, %v4477
        %v5327 = vsel %vm5305, %v5294, %v4479
        %v5328 = vsel %vm5305, %v5295, %v4481
        %v5329 = vsel %vm5305, %v5296, %v4483
        %v5330 = vsel %vm5305, %v5297, %v4485
        %v5331 = vsel %vm5305, %v5298, %v4487
        %v5332 = vsel %vm5305, %v5299, %v4489
        %v5333 = vsel %vm5305, %v5300, %v4491
        %v5334 = vsel %vm5305, %v5301, %v4493
        %v5335 = vsel %vm5305, %v5302, %v4495
        %v5336 = vsel %vm5305, %v5303, %v4497
        %v5337 = vsel %vm5305, %v5304, %v4499
        %vm5338 = vcmask 261120
        %v5339 = vsel %vm5338, %v5306, %v4538
        %v5340 = vsel %vm5338, %v5307, %v4540
        %v5341 = vsel %vm5338, %v5308, %v4542
        %v5342 = vsel %vm5338, %v5309, %v4544
        %v5343 = vsel %vm5338, %v5310, %v4546
        %v5344 = vsel %vm5338, %v5311, %v4548
        %v5345 = vsel %vm5338, %v5312, %v4550
        %v5346 = vsel %vm5338, %v5313, %v4552
        %v5347 = vsel %vm5338, %v5314, %v4554
        %v5348 = vsel %vm5338, %v5315, %v4556
        %v5349 = vsel %vm5338, %v5316, %v4558
        %v5350 = vsel %vm5338, %v5317, %v4560
        %v5351 = vsel %vm5338, %v5318, %v4562
        %v5352 = vsel %vm5338, %v5319, %v4564
        %v5353 = vsel %vm5338, %v5320, %v4566
        %v5354 = vsel %vm5338, %v5321, %v4568
        %v5355 = vsel %vm5338, %v5322, %v4570
        %v5356 = vsel %vm5338, %v5323, %v4572
        %v5357 = vsel %vm5338, %v5324, %v4574
        %v5358 = vsel %vm5338, %v5325, %v4576
        %v5359 = vsel %vm5338, %v5326, %v4578
        %v5360 = vsel %vm5338, %v5327, %v4580
        %v5361 = vsel %vm5338, %v5328, %v4582
        %v5362 = vsel %vm5338, %v5329, %v4584
        %v5363 = vsel %vm5338, %v5330, %v4586
        %v5364 = vsel %vm5338, %v5331, %v4588
        %v5365 = vsel %vm5338, %v5332, %v4590
        %v5366 = vsel %vm5338, %v5333, %v4592
        %v5367 = vsel %vm5338, %v5334, %v4594
        %v5368 = vsel %vm5338, %v5335, %v4596
        %v5369 = vsel %vm5338, %v5336, %v4598
        %v5370 = vsel %vm5338, %v5337, %v4600
        %vm5371 = vcmask 326656
        %v5372 = vsel %vm5371, %v5339, %v4732
        %v5373 = vsel %vm5371, %v5340, %v4734
        %v5374 = vsel %vm5371, %v5341, %v4736
        %v5375 = vsel %vm5371, %v5342, %v4738
        %v5376 = vsel %vm5371, %v5343, %v4740
        %v5377 = vsel %vm5371, %v5344, %v4742
        %v5378 = vsel %vm5371, %v5345, %v4744
        %v5379 = vsel %vm5371, %v5346, %v4746
        %v5380 = vsel %vm5371, %v5347, %v4748
        %v5381 = vsel %vm5371, %v5348, %v4750
        %v5382 = vsel %vm5371, %v5349, %v4752
        %v5383 = vsel %vm5371, %v5350, %v4754
        %v5384 = vsel %vm5371, %v5351, %v4756
        %v5385 = vsel %vm5371, %v5352, %v4758
        %v5386 = vsel %vm5371, %v5353, %v4760
        %v5387 = vsel %vm5371, %v5354, %v4762
        %v5388 = vsel %vm5371, %v5355, %v4764
        %v5389 = vsel %vm5371, %v5356, %v4766
        %v5390 = vsel %vm5371, %v5357, %v4768
        %v5391 = vsel %vm5371, %v5358, %v4770
        %v5392 = vsel %vm5371, %v5359, %v4772
        %v5393 = vsel %vm5371, %v5360, %v4774
        %v5394 = vsel %vm5371, %v5361, %v4776
        %v5395 = vsel %vm5371, %v5362, %v4778
        %v5396 = vsel %vm5371, %v5363, %v4780
        %v5397 = vsel %vm5371, %v5364, %v4782
        %v5398 = vsel %vm5371, %v5365, %v4784
        %v5399 = vsel %vm5371, %v5366, %v4786
        %v5400 = vsel %vm5371, %v5367, %v4788
        %v5401 = vsel %vm5371, %v5368, %v4790
        %v5402 = vsel %vm5371, %v5369, %v4792
        %v5403 = vsel %vm5371, %v5370, %v4794
        %vm5404 = vcmask 392192
        %v5405 = vsel %vm5404, %v5372, %v4859
        %v5406 = vsel %vm5404, %v5373, %v4861
        %v5407 = vsel %vm5404, %v5374, %v4863
        %v5408 = vsel %vm5404, %v5375, %v4865
        %v5409 = vsel %vm5404, %v5376, %v4867
        %v5410 = vsel %vm5404, %v5377, %v4869
        %v5411 = vsel %vm5404, %v5378, %v4871
        %v5412 = vsel %vm5404, %v5379, %v4873
        %v5413 = vsel %vm5404, %v5380, %v4875
        %v5414 = vsel %vm5404, %v5381, %v4877
        %v5415 = vsel %vm5404, %v5382, %v4879
        %v5416 = vsel %vm5404, %v5383, %v4881
        %v5417 = vsel %vm5404, %v5384, %v4883
        %v5418 = vsel %vm5404, %v5385, %v4885
        %v5419 = vsel %vm5404, %v5386, %v4887
        %v5420 = vsel %vm5404, %v5387, %v4889
        %v5421 = vsel %vm5404, %v5388, %v4891
        %v5422 = vsel %vm5404, %v5389, %v4893
        %v5423 = vsel %vm5404, %v5390, %v4895
        %v5424 = vsel %vm5404, %v5391, %v4897
        %v5425 = vsel %vm5404, %v5392, %v4899
        %v5426 = vsel %vm5404, %v5393, %v4901
        %v5427 = vsel %vm5404, %v5394, %v4903
        %v5428 = vsel %vm5404, %v5395, %v4905
        %v5429 = vsel %vm5404, %v5396, %v4907
        %v5430 = vsel %vm5404, %v5397, %v4909
        %v5431 = vsel %vm5404, %v5398, %v4911
        %v5432 = vsel %vm5404, %v5399, %v4913
        %v5433 = vsel %vm5404, %v5400, %v4915
        %v5434 = vsel %vm5404, %v5401, %v4917
        %v5435 = vsel %vm5404, %v5402, %v4919
        %v5436 = vsel %vm5404, %v5403, %v4921
        %vm5437 = vcmask 457728
        %v5438 = vsel %vm5437, %v5405, %v4956
        %v5439 = vsel %vm5437, %v5406, %v4958
        %v5440 = vsel %vm5437, %v5407, %v4960
        %v5441 = vsel %vm5437, %v5408, %v4962
        %v5442 = vsel %vm5437, %v5409, %v4964
        %v5443 = vsel %vm5437, %v5410, %v4966
        %v5444 = vsel %vm5437, %v5411, %v4968
        %v5445 = vsel %vm5437, %v5412, %v4970
        %v5446 = vsel %vm5437, %v5413, %v4972
        %v5447 = vsel %vm5437, %v5414, %v4974
        %v5448 = vsel %vm5437, %v5415, %v4976
        %v5449 = vsel %vm5437, %v5416, %v4978
        %v5450 = vsel %vm5437, %v5417, %v4980
        %v5451 = vsel %vm5437, %v5418, %v4982
        %v5452 = vsel %vm5437, %v5419, %v4984
        %v5453 = vsel %vm5437, %v5420, %v4986
        %v5454 = vsel %vm5437, %v5421, %v4988
        %v5455 = vsel %vm5437, %v5422, %v4990
        %v5456 = vsel %vm5437, %v5423, %v4992
        %v5457 = vsel %vm5437, %v5424, %v4994
        %v5458 = vsel %vm5437, %v5425, %v4996
        %v5459 = vsel %vm5437, %v5426, %v4998
        %v5460 = vsel %vm5437, %v5427, %v5000
        %v5461 = vsel %vm5437, %v5428, %v5002
        %v5462 = vsel %vm5437, %v5429, %v5004
        %v5463 = vsel %vm5437, %v5430, %v5006
        %v5464 = vsel %vm5437, %v5431, %v5008
        %v5465 = vsel %vm5437, %v5432, %v5010
        %v5466 = vsel %vm5437, %v5433, %v5012
        %v5467 = vsel %vm5437, %v5434, %v5014
        %v5468 = vsel %vm5437, %v5435, %v5016
        %v5469 = vsel %vm5437, %v5436, %v5018
        %vm5470 = vcmask 523264
        %v5471 = vsel %vm5470, %v5438, %v5145
        %v5472 = vsel %vm5470, %v5439, %v5147
        %v5473 = vsel %vm5470, %v5440, %v5149
        %v5474 = vsel %vm5470, %v5441, %v5151
        %v5475 = vsel %vm5470, %v5442, %v5153
        %v5476 = vsel %vm5470, %v5443, %v5155
        %v5477 = vsel %vm5470, %v5444, %v5157
        %v5478 = vsel %vm5470, %v5445, %v5159
        %v5479 = vsel %vm5470, %v5446, %v5161
        %v5480 = vsel %vm5470, %v5447, %v5163
        %v5481 = vsel %vm5470, %v5448, %v5165
        %v5482 = vsel %vm5470, %v5449, %v5167
        %v5483 = vsel %vm5470, %v5450, %v5169
        %v5484 = vsel %vm5470, %v5451, %v5171
        %v5485 = vsel %vm5470, %v5452, %v5173
        %v5486 = vsel %vm5470, %v5453, %v5175
        %v5487 = vsel %vm5470, %v5454, %v5177
        %v5488 = vsel %vm5470, %v5455, %v5179
        %v5489 = vsel %vm5470, %v5456, %v5181
        %v5490 = vsel %vm5470, %v5457, %v5183
        %v5491 = vsel %vm5470, %v5458, %v5185
        %v5492 = vsel %vm5470, %v5459, %v5187
        %v5493 = vsel %vm5470, %v5460, %v5189
        %v5494 = vsel %vm5470, %v5461, %v5191
        %v5495 = vsel %vm5470, %v5462, %v5193
        %v5496 = vsel %vm5470, %v5463, %v5195
        %v5497 = vsel %vm5470, %v5464, %v5197
        %v5498 = vsel %vm5470, %v5465, %v5199
        %v5499 = vsel %vm5470, %v5466, %v5201
        %v5500 = vsel %vm5470, %v5467, %v5203
        %v5501 = vsel %vm5470, %v5468, %v5205
        %v5502 = vsel %vm5470, %v5469, %v5207
        %v5503 = vld [vmem:[%s7] sm:$0xff]
        %v5504 = vld [vmem:[%s7 + $0x8] sm:$0xff]
        %v5505 = vld [vmem:[%s7 + $0x10] sm:$0xff]
        %v5506 = vld [vmem:[%s7 + $0x18] sm:$0xff]
        %v5507 = vld [vmem:[%s7 + $0x20] sm:$0xff]
        %v5508 = vld [vmem:[%s7 + $0x28] sm:$0xff]
        %v5509 = vld [vmem:[%s7 + $0x30] sm:$0xff]
        %v5510 = vld [vmem:[%s7 + $0x38] sm:$0xff]
        %v5511 = vld [vmem:[%s7 + $0x40] sm:$0xff]
        %v5512 = vld [vmem:[%s9] sm:$0x1]
        %v5514 = vperm.slane %v5512, 0
        %vm5516 = vcmask 588800
        %v5518 = vsel %vm5516, %v5471, 0
        %v5521 = vsel %vm5516, %v5472, 0
        %v5524 = vsel %vm5516, %v5473, 0
        %v5527 = vsel %vm5516, %v5474, 0
        %v5530 = vsel %vm5516, %v5475, 0
        %v5533 = vsel %vm5516, %v5476, 0
        %v5536 = vsel %vm5516, %v5477, 0
        %v5539 = vsel %vm5516, %v5478, 0
        %v5542 = vsel %vm5516, %v5479, 0
        %v5545 = vsel %vm5516, %v5480, 0
        %v5548 = vsel %vm5516, %v5481, 0
        %v5551 = vsel %vm5516, %v5482, 0
        %v5554 = vsel %vm5516, %v5483, 0
        %v5557 = vsel %vm5516, %v5484, 0
        %v5560 = vsel %vm5516, %v5485, 0
        %v5563 = vsel %vm5516, %v5486, 0
        %v5566 = vsel %vm5516, %v5487, 0
        %v5569 = vsel %vm5516, %v5488, 0
        %v5572 = vsel %vm5516, %v5489, 0
        %v5575 = vsel %vm5516, %v5490, 0
        %v5578 = vsel %vm5516, %v5491, 0
        %v5581 = vsel %vm5516, %v5492, 0
        %v5584 = vsel %vm5516, %v5493, 0
        %v5587 = vsel %vm5516, %v5494, 0
        %v5590 = vsel %vm5516, %v5495, 0
        %v5593 = vsel %vm5516, %v5496, 0
        %v5596 = vsel %vm5516, %v5497, 0
        %v5599 = vsel %vm5516, %v5498, 0
        %v5602 = vsel %vm5516, %v5499, 0
        %v5605 = vsel %vm5516, %v5500, 0
        %v5608 = vsel %vm5516, %v5501, 0
        %v5611 = vsel %vm5516, %v5502, 0
        %5613 = vmatpush.msra.mxu0 0.0
        %5614 = vmatpush.msra.mxu0 0.0
        %5615 = vmatpush.msra.mxu0 0.0
        %5616 = vmatpush.msra.mxu0 0.0
        %5617 = vmatpush.msra.mxu0 0.0
        %5618 = vmatpush.msra.mxu0 0.0
        %5619 = vmatpush.msra.mxu0 0.0
        %5620 = vmatpush.msra.mxu0 %v5511
        %5621 = vmatpush.msra.mxu0 %v5510
        %5622 = vmatpush.msra.mxu0 %v5509
        %5623 = vmatpush.msra.mxu0 %v5508
        %5624 = vmatpush.msra.mxu0 %v5507
        %5625 = vmatpush.msra.mxu0 %v5506
        %5626 = vmatpush.msra.mxu0 %v5505
        %5627 = vmatpush.msra.mxu0 %v5504
        %5628 = vmatpush.msra.mxu0 %v5503
        %5629 = vmatmul.f32.gmra.mxu0 %v5518
        %v5630 = vpop.f32.mrf.mxu0
        %v5631 = vadd.f32 %v5514, %v5630
        %5632 = vmatmul.f32.gmra.mxu0 %v5521
        %v5633 = vpop.f32.mrf.mxu0
        %v5634 = vadd.f32 %v5514, %v5633
        %5635 = vmatmul.f32.gmra.mxu0 %v5524
        %v5636 = vpop.f32.mrf.mxu0
        %v5637 = vadd.f32 %v5514, %v5636
        %5638 = vmatmul.f32.gmra.mxu0 %v5527
        %v5639 = vpop.f32.mrf.mxu0
        %v5640 = vadd.f32 %v5514, %v5639
        %5641 = vmatmul.f32.gmra.mxu0 %v5530
        %v5642 = vpop.f32.mrf.mxu0
        %v5643 = vadd.f32 %v5514, %v5642
        %5644 = vmatmul.f32.gmra.mxu0 %v5533
        %v5645 = vpop.f32.mrf.mxu0
        %v5646 = vadd.f32 %v5514, %v5645
        %5647 = vmatmul.f32.gmra.mxu0 %v5536
        %v5648 = vpop.f32.mrf.mxu0
        %v5649 = vadd.f32 %v5514, %v5648
        %5650 = vmatmul.f32.gmra.mxu0 %v5539
        %v5651 = vpop.f32.mrf.mxu0
        %v5652 = vadd.f32 %v5514, %v5651
        %5653 = vmatmul.f32.gmra.mxu0 %v5542
        %v5654 = vpop.f32.mrf.mxu0
        %v5655 = vadd.f32 %v5514, %v5654
        %5656 = vmatmul.f32.gmra.mxu0 %v5545
        %v5657 = vpop.f32.mrf.mxu0
        %v5658 = vadd.f32 %v5514, %v5657
        %5659 = vmatmul.f32.gmra.mxu0 %v5548
        %v5660 = vpop.f32.mrf.mxu0
        %v5661 = vadd.f32 %v5514, %v5660
        %5662 = vmatmul.f32.gmra.mxu0 %v5551
        %v5663 = vpop.f32.mrf.mxu0
        %v5664 = vadd.f32 %v5514, %v5663
        %5665 = vmatmul.f32.gmra.mxu0 %v5554
        %v5666 = vpop.f32.mrf.mxu0
        %v5667 = vadd.f32 %v5514, %v5666
        %5668 = vmatmul.f32.gmra.mxu0 %v5557
        %v5669 = vpop.f32.mrf.mxu0
        %v5670 = vadd.f32 %v5514, %v5669
        %5671 = vmatmul.f32.gmra.mxu0 %v5560
        %v5672 = vpop.f32.mrf.mxu0
        %v5673 = vadd.f32 %v5514, %v5672
        %5674 = vmatmul.f32.gmra.mxu0 %v5563
        %v5675 = vpop.f32.mrf.mxu0
        %v5676 = vadd.f32 %v5514, %v5675
        %5677 = vmatmul.f32.gmra.mxu0 %v5566
        %v5678 = vpop.f32.mrf.mxu0
        %v5679 = vadd.f32 %v5514, %v5678
        %5680 = vmatmul.f32.gmra.mxu0 %v5569
        %v5681 = vpop.f32.mrf.mxu0
        %v5682 = vadd.f32 %v5514, %v5681
        %5683 = vmatmul.f32.gmra.mxu0 %v5572
        %v5684 = vpop.f32.mrf.mxu0
        %v5685 = vadd.f32 %v5514, %v5684
        %5686 = vmatmul.f32.gmra.mxu0 %v5575
        %v5687 = vpop.f32.mrf.mxu0
        %v5688 = vadd.f32 %v5514, %v5687
        %5689 = vmatmul.f32.gmra.mxu0 %v5578
        %v5690 = vpop.f32.mrf.mxu0
        %v5691 = vadd.f32 %v5514, %v5690
        %5692 = vmatmul.f32.gmra.mxu0 %v5581
        %v5693 = vpop.f32.mrf.mxu0
        %v5694 = vadd.f32 %v5514, %v5693
        %5695 = vmatmul.f32.gmra.mxu0 %v5584
        %v5696 = vpop.f32.mrf.mxu0
        %v5697 = vadd.f32 %v5514, %v5696
        %5698 = vmatmul.f32.gmra.mxu0 %v5587
        %v5699 = vpop.f32.mrf.mxu0
        %v5700 = vadd.f32 %v5514, %v5699
        %5701 = vmatmul.f32.gmra.mxu0 %v5590
        %v5702 = vpop.f32.mrf.mxu0
        %v5703 = vadd.f32 %v5514, %v5702
        %5704 = vmatmul.f32.gmra.mxu0 %v5593
        %v5705 = vpop.f32.mrf.mxu0
        %v5706 = vadd.f32 %v5514, %v5705
        %5707 = vmatmul.f32.gmra.mxu0 %v5596
        %v5708 = vpop.f32.mrf.mxu0
        %v5709 = vadd.f32 %v5514, %v5708
        %5710 = vmatmul.f32.gmra.mxu0 %v5599
        %v5711 = vpop.f32.mrf.mxu0
        %v5712 = vadd.f32 %v5514, %v5711
        %5713 = vmatmul.f32.gmra.mxu0 %v5602
        %v5714 = vpop.f32.mrf.mxu0
        %v5715 = vadd.f32 %v5514, %v5714
        %5716 = vmatmul.f32.gmra.mxu0 %v5605
        %v5717 = vpop.f32.mrf.mxu0
        %v5718 = vadd.f32 %v5514, %v5717
        %5719 = vmatmul.f32.gmra.mxu0 %v5608
        %v5720 = vpop.f32.mrf.mxu0
        %v5721 = vadd.f32 %v5514, %v5720
        %5722 = vmatmul.f32.gmra.mxu0 %v5611
        %v5723 = vpop.f32.mrf.mxu0
        %v5724 = vadd.f32 %v5514, %v5723
        %5725 = vdwg.mxu0
        %v5726 = vmax.f32 %v5631, 0.0
        %v5727 = vmax.f32 %v5634, 0.0
        %v5728 = vmax.f32 %v5637, 0.0
        %v5729 = vmax.f32 %v5640, 0.0
        %v5730 = vmax.f32 %v5643, 0.0
        %v5731 = vmax.f32 %v5646, 0.0
        %v5732 = vmax.f32 %v5649, 0.0
        %v5733 = vmax.f32 %v5652, 0.0
        %v5734 = vmax.f32 %v5655, 0.0
        %v5735 = vmax.f32 %v5658, 0.0
        %v5736 = vmax.f32 %v5661, 0.0
        %v5737 = vmax.f32 %v5664, 0.0
        %v5738 = vmax.f32 %v5667, 0.0
        %v5739 = vmax.f32 %v5670, 0.0
        %v5740 = vmax.f32 %v5673, 0.0
        %v5741 = vmax.f32 %v5676, 0.0
        %v5742 = vmax.f32 %v5679, 0.0
        %v5743 = vmax.f32 %v5682, 0.0
        %v5744 = vmax.f32 %v5685, 0.0
        %v5745 = vmax.f32 %v5688, 0.0
        %v5746 = vmax.f32 %v5691, 0.0
        %v5747 = vmax.f32 %v5694, 0.0
        %v5748 = vmax.f32 %v5697, 0.0
        %v5749 = vmax.f32 %v5700, 0.0
        %v5750 = vmax.f32 %v5703, 0.0
        %v5751 = vmax.f32 %v5706, 0.0
        %v5752 = vmax.f32 %v5709, 0.0
        %v5753 = vmax.f32 %v5712, 0.0
        %v5754 = vmax.f32 %v5715, 0.0
        %v5755 = vmax.f32 %v5718, 0.0
        %v5756 = vmax.f32 %v5721, 0.0
        %v5757 = vmax.f32 %v5724, 0.0
        %v5758 = vld [vmem:[%s11] sm:$0xff]
        %v5759 = vld [vmem:[%s11 + $0x8] sm:$0xff]
        %v5760 = vld [vmem:[%s11 + $0x10] sm:$0xff]
        %v5761 = vld [vmem:[%s11 + $0x18] sm:$0xff]
        %v5762 = vld [vmem:[%s11 + $0x20] sm:$0xff]
        %v5763 = vld [vmem:[%s11 + $0x28] sm:$0xff]
        %v5764 = vld [vmem:[%s11 + $0x30] sm:$0xff]
        %v5765 = vld [vmem:[%s11 + $0x38] sm:$0xff]
        %v5766 = vld [vmem:[%s11 + $0x40] sm:$0xff]
        %v5767 = vld [vmem:[%s11 + $0x48] sm:$0xff]
        %v5768 = vld [vmem:[%s11 + $0x50] sm:$0xff]
        %v5769 = vld [vmem:[%s11 + $0x58] sm:$0xff]
        %v5770 = vld [vmem:[%s11 + $0x60] sm:$0xff]
        %v5771 = vld [vmem:[%s11 + $0x68] sm:$0xff]
        %v5772 = vld [vmem:[%s11 + $0x70] sm:$0xff]
        %v5773 = vld [vmem:[%s11 + $0x78] sm:$0xff]
        %v5774 = vld [vmem:[%s11 + $0x80] sm:$0xff]
        %v5775 = vld [vmem:[%s11 + $0x88] sm:$0xff]
        %v5776 = vld [vmem:[%s11 + $0x90] sm:$0xff]
        %v5777 = vld [vmem:[%s11 + $0x98] sm:$0xff]
        %v5778 = vld [vmem:[%s11 + $0xa0] sm:$0xff]
        %v5779 = vld [vmem:[%s11 + $0xa8] sm:$0xff]
        %v5780 = vld [vmem:[%s11 + $0xb0] sm:$0xff]
        %v5781 = vld [vmem:[%s11 + $0xb8] sm:$0xff]
        %v5782 = vld [vmem:[%s11 + $0xc0] sm:$0xff]
        %v5783 = vld [vmem:[%s11 + $0xc8] sm:$0xff]
        %v5784 = vld [vmem:[%s11 + $0xd0] sm:$0xff]
        %v5785 = vld [vmem:[%s11 + $0xd8] sm:$0xff]
        %v5786 = vld [vmem:[%s11 + $0xe0] sm:$0xff]
        %v5787 = vld [vmem:[%s11 + $0xe8] sm:$0xff]
        %v5788 = vld [vmem:[%s11 + $0xf0] sm:$0xff]
        %v5789 = vld [vmem:[%s11 + $0xf8] sm:$0xff]
        %v5790 = vld [vmem:[%s11 + $0x100] sm:$0xff]
        %v5791 = vld [vmem:[%s11 + $0x108] sm:$0xff]
        %v5792 = vld [vmem:[%s11 + $0x110] sm:$0xff]
        %v5793 = vld [vmem:[%s11 + $0x118] sm:$0xff]
        %v5794 = vld [vmem:[%s11 + $0x120] sm:$0xff]
        %v5795 = vld [vmem:[%s11 + $0x128] sm:$0xff]
        %v5796 = vld [vmem:[%s11 + $0x130] sm:$0xff]
        %v5797 = vld [vmem:[%s11 + $0x138] sm:$0xff]
        %v5798 = vld [vmem:[%s11 + $0x140] sm:$0xff]
        %v5799 = vld [vmem:[%s11 + $0x148] sm:$0xff]
        %v5800 = vld [vmem:[%s11 + $0x150] sm:$0xff]
        %v5801 = vld [vmem:[%s11 + $0x158] sm:$0xff]
        %v5802 = vld [vmem:[%s11 + $0x160] sm:$0xff]
        %v5803 = vld [vmem:[%s11 + $0x168] sm:$0xff]
        %v5804 = vld [vmem:[%s11 + $0x170] sm:$0xff]
        %v5805 = vld [vmem:[%s11 + $0x178] sm:$0xff]
        %v5806 = vld [vmem:[%s11 + $0x180] sm:$0xff]
        %v5807 = vld [vmem:[%s11 + $0x188] sm:$0xff]
        %v5808 = vld [vmem:[%s11 + $0x190] sm:$0xff]
        %v5809 = vld [vmem:[%s11 + $0x198] sm:$0xff]
        %v5810 = vld [vmem:[%s11 + $0x1a0] sm:$0xff]
        %v5811 = vld [vmem:[%s11 + $0x1a8] sm:$0xff]
        %v5812 = vld [vmem:[%s11 + $0x1b0] sm:$0xff]
        %v5813 = vld [vmem:[%s11 + $0x1b8] sm:$0xff]
        %v5814 = vld [vmem:[%s11 + $0x1c0] sm:$0xff]
        %v5815 = vld [vmem:[%s11 + $0x1c8] sm:$0xff]
        %v5816 = vld [vmem:[%s11 + $0x1d0] sm:$0xff]
        %v5817 = vld [vmem:[%s11 + $0x1d8] sm:$0xff]
        %v5818 = vld [vmem:[%s11 + $0x1e0] sm:$0xff]
        %v5819 = vld [vmem:[%s11 + $0x1e8] sm:$0xff]
        %v5820 = vld [vmem:[%s11 + $0x1f0] sm:$0xff]
        %v5821 = vld [vmem:[%s11 + $0x1f8] sm:$0xff]
        %5822 = vmatpush.msra.mxu0 %v5741
        %5823 = vmatpush.msra.mxu0 %v5740
        %5824 = vmatpush.msra.mxu0 %v5739
        %5825 = vmatpush.msra.mxu0 %v5738
        %5826 = vmatpush.msra.mxu0 %v5737
        %5827 = vmatpush.msra.mxu0 %v5736
        %5828 = vmatpush.msra.mxu0 %v5735
        %5829 = vmatpush.msra.mxu0 %v5734
        %5830 = vmatpush.msra.mxu0 %v5733
        %5831 = vmatpush.msra.mxu0 %v5732
        %5832 = vmatpush.msra.mxu0 %v5731
        %5833 = vmatpush.msra.mxu0 %v5730
        %5834 = vmatpush.msra.mxu0 %v5729
        %5835 = vmatpush.msra.mxu0 %v5728
        %5836 = vmatpush.msra.mxu0 %v5727
        %5837 = vmatpush.msra.mxu0 %v5726
        %5838 = vmatmul.f32.gmra.mxu0 %v5758
        %v5839 = vpop.f32.mrf.mxu0
        %v5840 = vadd.f32 0.0, %v5839
        %5841 = vmatmul.f32.gmra.mxu0 %v5760
        %v5842 = vpop.f32.mrf.mxu0
        %v5843 = vadd.f32 0.0, %v5842
        %5844 = vmatmul.f32.gmra.mxu0 %v5762
        %v5845 = vpop.f32.mrf.mxu0
        %v5846 = vadd.f32 0.0, %v5845
        %5847 = vmatmul.f32.gmra.mxu0 %v5764
        %v5848 = vpop.f32.mrf.mxu0
        %v5849 = vadd.f32 0.0, %v5848
        %5850 = vmatmul.f32.gmra.mxu0 %v5766
        %v5851 = vpop.f32.mrf.mxu0
        %v5852 = vadd.f32 0.0, %v5851
        %5853 = vmatmul.f32.gmra.mxu0 %v5768
        %v5854 = vpop.f32.mrf.mxu0
        %v5855 = vadd.f32 0.0, %v5854
        %5856 = vmatmul.f32.gmra.mxu0 %v5770
        %v5857 = vpop.f32.mrf.mxu0
        %v5858 = vadd.f32 0.0, %v5857
        %5859 = vmatmul.f32.gmra.mxu0 %v5772
        %v5860 = vpop.f32.mrf.mxu0
        %v5861 = vadd.f32 0.0, %v5860
        %5862 = vmatmul.f32.gmra.mxu0 %v5774
        %v5863 = vpop.f32.mrf.mxu0
        %v5864 = vadd.f32 0.0, %v5863
        %5865 = vmatmul.f32.gmra.mxu0 %v5776
        %v5866 = vpop.f32.mrf.mxu0
        %v5867 = vadd.f32 0.0, %v5866
        %5868 = vmatmul.f32.gmra.mxu0 %v5778
        %v5869 = vpop.f32.mrf.mxu0
        %v5870 = vadd.f32 0.0, %v5869
        %5871 = vmatmul.f32.gmra.mxu0 %v5780
        %v5872 = vpop.f32.mrf.mxu0
        %v5873 = vadd.f32 0.0, %v5872
        %5874 = vmatmul.f32.gmra.mxu0 %v5782
        %v5875 = vpop.f32.mrf.mxu0
        %v5876 = vadd.f32 0.0, %v5875
        %5877 = vmatmul.f32.gmra.mxu0 %v5784
        %v5878 = vpop.f32.mrf.mxu0
        %v5879 = vadd.f32 0.0, %v5878
        %5880 = vmatmul.f32.gmra.mxu0 %v5786
        %v5881 = vpop.f32.mrf.mxu0
        %v5882 = vadd.f32 0.0, %v5881
        %5883 = vmatmul.f32.gmra.mxu0 %v5788
        %v5884 = vpop.f32.mrf.mxu0
        %v5885 = vadd.f32 0.0, %v5884
        %5886 = vmatmul.f32.gmra.mxu0 %v5790
        %v5887 = vpop.f32.mrf.mxu0
        %v5888 = vadd.f32 0.0, %v5887
        %5889 = vmatmul.f32.gmra.mxu0 %v5792
        %v5890 = vpop.f32.mrf.mxu0
        %v5891 = vadd.f32 0.0, %v5890
        %5892 = vmatmul.f32.gmra.mxu0 %v5794
        %v5893 = vpop.f32.mrf.mxu0
        %v5894 = vadd.f32 0.0, %v5893
        %5895 = vmatmul.f32.gmra.mxu0 %v5796
        %v5896 = vpop.f32.mrf.mxu0
        %v5897 = vadd.f32 0.0, %v5896
        %5898 = vmatmul.f32.gmra.mxu0 %v5798
        %v5899 = vpop.f32.mrf.mxu0
        %v5900 = vadd.f32 0.0, %v5899
        %5901 = vmatmul.f32.gmra.mxu0 %v5800
        %v5902 = vpop.f32.mrf.mxu0
        %v5903 = vadd.f32 0.0, %v5902
        %5904 = vmatmul.f32.gmra.mxu0 %v5802
        %v5905 = vpop.f32.mrf.mxu0
        %v5906 = vadd.f32 0.0, %v5905
        %5907 = vmatmul.f32.gmra.mxu0 %v5804
        %v5908 = vpop.f32.mrf.mxu0
        %v5909 = vadd.f32 0.0, %v5908
        %5910 = vmatmul.f32.gmra.mxu0 %v5806
        %v5911 = vpop.f32.mrf.mxu0
        %v5912 = vadd.f32 0.0, %v5911
        %5913 = vmatmul.f32.gmra.mxu0 %v5808
        %v5914 = vpop.f32.mrf.mxu0
        %v5915 = vadd.f32 0.0, %v5914
        %5916 = vmatmul.f32.gmra.mxu0 %v5810
        %v5917 = vpop.f32.mrf.mxu0
        %v5918 = vadd.f32 0.0, %v5917
        %5919 = vmatmul.f32.gmra.mxu0 %v5812
        %v5920 = vpop.f32.mrf.mxu0
        %v5921 = vadd.f32 0.0, %v5920
        %5922 = vmatmul.f32.gmra.mxu0 %v5814
        %v5923 = vpop.f32.mrf.mxu0
        %v5924 = vadd.f32 0.0, %v5923
        %5925 = vmatmul.f32.gmra.mxu0 %v5816
        %v5926 = vpop.f32.mrf.mxu0
        %v5927 = vadd.f32 0.0, %v5926
        %5928 = vmatmul.f32.gmra.mxu0 %v5818
        %v5929 = vpop.f32.mrf.mxu0
        %v5930 = vadd.f32 0.0, %v5929
        %5931 = vmatmul.f32.gmra.mxu0 %v5820
        %v5932 = vpop.f32.mrf.mxu0
        %v5933 = vadd.f32 0.0, %v5932
        %5934 = vdwg.mxu0
        %5935 = vmatpush.msra.mxu0 %v5757
        %5936 = vmatpush.msra.mxu0 %v5756
        %5937 = vmatpush.msra.mxu0 %v5755
        %5938 = vmatpush.msra.mxu0 %v5754
        %5939 = vmatpush.msra.mxu0 %v5753
        %5940 = vmatpush.msra.mxu0 %v5752
        %5941 = vmatpush.msra.mxu0 %v5751
        %5942 = vmatpush.msra.mxu0 %v5750
        %5943 = vmatpush.msra.mxu0 %v5749
        %5944 = vmatpush.msra.mxu0 %v5748
        %5945 = vmatpush.msra.mxu0 %v5747
        %5946 = vmatpush.msra.mxu0 %v5746
        %5947 = vmatpush.msra.mxu0 %v5745
        %5948 = vmatpush.msra.mxu0 %v5744
        %5949 = vmatpush.msra.mxu0 %v5743
        %5950 = vmatpush.msra.mxu0 %v5742
        %5951 = vmatmul.f32.gmra.mxu0 %v5759
        %v5952 = vpop.f32.mrf.mxu0
        %v5953 = vadd.f32 %v5840, %v5952
        %5954 = vmatmul.f32.gmra.mxu0 %v5761
        %v5955 = vpop.f32.mrf.mxu0
        %v5956 = vadd.f32 %v5843, %v5955
        %5957 = vmatmul.f32.gmra.mxu0 %v5763
        %v5958 = vpop.f32.mrf.mxu0
        %v5959 = vadd.f32 %v5846, %v5958
        %5960 = vmatmul.f32.gmra.mxu0 %v5765
        %v5961 = vpop.f32.mrf.mxu0
        %v5962 = vadd.f32 %v5849, %v5961
        %5963 = vmatmul.f32.gmra.mxu0 %v5767
        %v5964 = vpop.f32.mrf.mxu0
        %v5965 = vadd.f32 %v5852, %v5964
        %5966 = vmatmul.f32.gmra.mxu0 %v5769
        %v5967 = vpop.f32.mrf.mxu0
        %v5968 = vadd.f32 %v5855, %v5967
        %5969 = vmatmul.f32.gmra.mxu0 %v5771
        %v5970 = vpop.f32.mrf.mxu0
        %v5971 = vadd.f32 %v5858, %v5970
        %5972 = vmatmul.f32.gmra.mxu0 %v5773
        %v5973 = vpop.f32.mrf.mxu0
        %v5974 = vadd.f32 %v5861, %v5973
        %5975 = vmatmul.f32.gmra.mxu0 %v5775
        %v5976 = vpop.f32.mrf.mxu0
        %v5977 = vadd.f32 %v5864, %v5976
        %5978 = vmatmul.f32.gmra.mxu0 %v5777
        %v5979 = vpop.f32.mrf.mxu0
        %v5980 = vadd.f32 %v5867, %v5979
        %5981 = vmatmul.f32.gmra.mxu0 %v5779
        %v5982 = vpop.f32.mrf.mxu0
        %v5983 = vadd.f32 %v5870, %v5982
        %5984 = vmatmul.f32.gmra.mxu0 %v5781
        %v5985 = vpop.f32.mrf.mxu0
        %v5986 = vadd.f32 %v5873, %v5985
        %5987 = vmatmul.f32.gmra.mxu0 %v5783
        %v5988 = vpop.f32.mrf.mxu0
        %v5989 = vadd.f32 %v5876, %v5988
        %5990 = vmatmul.f32.gmra.mxu0 %v5785
        %v5991 = vpop.f32.mrf.mxu0
        %v5992 = vadd.f32 %v5879, %v5991
        %5993 = vmatmul.f32.gmra.mxu0 %v5787
        %v5994 = vpop.f32.mrf.mxu0
        %v5995 = vadd.f32 %v5882, %v5994
        %5996 = vmatmul.f32.gmra.mxu0 %v5789
        %v5997 = vpop.f32.mrf.mxu0
        %v5998 = vadd.f32 %v5885, %v5997
        %5999 = vmatmul.f32.gmra.mxu0 %v5791
        %v6000 = vpop.f32.mrf.mxu0
        %v6001 = vadd.f32 %v5888, %v6000
        %6002 = vmatmul.f32.gmra.mxu0 %v5793
        %v6003 = vpop.f32.mrf.mxu0
        %v6004 = vadd.f32 %v5891, %v6003
        %6005 = vmatmul.f32.gmra.mxu0 %v5795
        %v6006 = vpop.f32.mrf.mxu0
        %v6007 = vadd.f32 %v5894, %v6006
        %6008 = vmatmul.f32.gmra.mxu0 %v5797
        %v6009 = vpop.f32.mrf.mxu0
        %v6010 = vadd.f32 %v5897, %v6009
        %6011 = vmatmul.f32.gmra.mxu0 %v5799
        %v6012 = vpop.f32.mrf.mxu0
        %v6013 = vadd.f32 %v5900, %v6012
        %6014 = vmatmul.f32.gmra.mxu0 %v5801
        %v6015 = vpop.f32.mrf.mxu0
        %v6016 = vadd.f32 %v5903, %v6015
        %6017 = vmatmul.f32.gmra.mxu0 %v5803
        %v6018 = vpop.f32.mrf.mxu0
        %v6019 = vadd.f32 %v5906, %v6018
        %6020 = vmatmul.f32.gmra.mxu0 %v5805
        %v6021 = vpop.f32.mrf.mxu0
        %v6022 = vadd.f32 %v5909, %v6021
        %6023 = vmatmul.f32.gmra.mxu0 %v5807
        %v6024 = vpop.f32.mrf.mxu0
        %v6025 = vadd.f32 %v5912, %v6024
        %6026 = vmatmul.f32.gmra.mxu0 %v5809
        %v6027 = vpop.f32.mrf.mxu0
        %v6028 = vadd.f32 %v5915, %v6027
        %6029 = vmatmul.f32.gmra.mxu0 %v5811
        %v6030 = vpop.f32.mrf.mxu0
        %v6031 = vadd.f32 %v5918, %v6030
        %6032 = vmatmul.f32.gmra.mxu0 %v5813
        %v6033 = vpop.f32.mrf.mxu0
        %v6034 = vadd.f32 %v5921, %v6033
        %6035 = vmatmul.f32.gmra.mxu0 %v5815
        %v6036 = vpop.f32.mrf.mxu0
        %v6037 = vadd.f32 %v5924, %v6036
        %6038 = vmatmul.f32.gmra.mxu0 %v5817
        %v6039 = vpop.f32.mrf.mxu0
        %v6040 = vadd.f32 %v5927, %v6039
        %6041 = vmatmul.f32.gmra.mxu0 %v5819
        %v6042 = vpop.f32.mrf.mxu0
        %v6043 = vadd.f32 %v5930, %v6042
        %6044 = vmatmul.f32.gmra.mxu0 %v5821
        %v6045 = vpop.f32.mrf.mxu0
        %v6046 = vadd.f32 %v5933, %v6045
        %6047 = vdwg.mxu0
        %v6048 = vld [vmem:[%s13] sm:$0xff]
        %v6049 = vld [vmem:[%s13 + $0x8] sm:$0xff]
        %v6050 = vld [vmem:[%s13 + $0x10] sm:$0xff]
        %v6051 = vld [vmem:[%s13 + $0x18] sm:$0xff]
        %v6053 = vsel %vm5272, %v5959, 0
        %v6056 = vsel %vm5272, %v5962, 0
        %6058 = vmatpush.msra.mxu0 0.0
        %6059 = vmatpush.msra.mxu0 0.0
        %6060 = vmatpush.msra.mxu0 0.0
        %6061 = vmatpush.msra.mxu0 0.0
        %6062 = vmatpush.msra.mxu0 0.0
        %6063 = vmatpush.msra.mxu0 0.0
        %6064 = vmatpush.msra.mxu0 0.0
        %6065 = vmatpush.msra.mxu0 0.0
        %6066 = vmatpush.msra.mxu0 0.0
        %6067 = vmatpush.msra.mxu0 0.0
        %6068 = vmatpush.msra.mxu0 0.0
        %6069 = vmatpush.msra.mxu0 0.0
        %6070 = vmatpush.msra.mxu0 0.0
        %6071 = vmatpush.msra.mxu0 0.0
        %6072 = vmatpush.msra.mxu0 %v6051
        %6073 = vmatpush.msra.mxu0 %v6050
        %6074 = vmatmul.f32.gmra.mxu0 %v6053
        %v6075 = vpop.f32.mrf.mxu0
        %v6076 = vadd.f32 0.0, %v6075
        %6077 = vmatmul.f32.gmra.mxu0 %v6056
        %v6078 = vpop.f32.mrf.mxu0
        %v6079 = vadd.f32 0.0, %v6078
        %6080 = vdwg.mxu0
        %v6082 = vsel %vm5272, %v5953, 0
        %v6085 = vsel %vm5272, %v5956, 0
        %6087 = vmatpush.msra.mxu0 0.0
        %6088 = vmatpush.msra.mxu0 0.0
        %6089 = vmatpush.msra.mxu0 0.0
        %6090 = vmatpush.msra.mxu0 0.0
        %6091 = vmatpush.msra.mxu0 0.0
        %6092 = vmatpush.msra.mxu0 0.0
        %6093 = vmatpush.msra.mxu0 0.0
        %6094 = vmatpush.msra.mxu0 0.0
        %6095 = vmatpush.msra.mxu0 0.0
        %6096 = vmatpush.msra.mxu0 0.0
        %6097 = vmatpush.msra.mxu0 0.0
        %6098 = vmatpush.msra.mxu0 0.0
        %6099 = vmatpush.msra.mxu0 0.0
        %6100 = vmatpush.msra.mxu0 0.0
        %6101 = vmatpush.msra.mxu0 %v6049
        %6102 = vmatpush.msra.mxu0 %v6048
        %6103 = vmatmul.f32.gmra.mxu0 %v6082
        %v6104 = vpop.f32.mrf.mxu0
        %v6105 = vadd.f32 %v6076, %v6104
        %6106 = vmatmul.f32.gmra.mxu0 %v6085
        %v6107 = vpop.f32.mrf.mxu0
        %v6108 = vadd.f32 %v6079, %v6107
        %6109 = vdwg.mxu0
        %v6110 = vld [vmem:[%s13 + $0x20] sm:$0xff]
        %v6111 = vld [vmem:[%s13 + $0x28] sm:$0xff]
        %v6113 = vsel %vm5272, %v5965, 0
        %v6116 = vsel %vm5272, %v5968, 0
        %6118 = vmatpush.msra.mxu0 0.0
        %6119 = vmatpush.msra.mxu0 0.0
        %6120 = vmatpush.msra.mxu0 0.0
        %6121 = vmatpush.msra.mxu0 0.0
        %6122 = vmatpush.msra.mxu0 0.0
        %6123 = vmatpush.msra.mxu0 0.0
        %6124 = vmatpush.msra.mxu0 0.0
        %6125 = vmatpush.msra.mxu0 0.0
        %6126 = vmatpush.msra.mxu0 0.0
        %6127 = vmatpush.msra.mxu0 0.0
        %6128 = vmatpush.msra.mxu0 0.0
        %6129 = vmatpush.msra.mxu0 0.0
        %6130 = vmatpush.msra.mxu0 0.0
        %6131 = vmatpush.msra.mxu0 0.0
        %6132 = vmatpush.msra.mxu0 %v6111
        %6133 = vmatpush.msra.mxu0 %v6110
        %6134 = vmatmul.f32.gmra.mxu0 %v6113
        %v6135 = vpop.f32.mrf.mxu0
        %v6136 = vadd.f32 0.0, %v6135
        %6137 = vmatmul.f32.gmra.mxu0 %v6116
        %v6138 = vpop.f32.mrf.mxu0
        %v6139 = vadd.f32 0.0, %v6138
        %6140 = vdwg.mxu0
        %v6141 = vadd.f32 %v6105, %v6136
        %v6142 = vadd.f32 %v6108, %v6139
        %v6143 = vld [vmem:[%s13 + $0x30] sm:$0xff]
        %v6144 = vld [vmem:[%s13 + $0x38] sm:$0xff]
        %v6146 = vsel %vm5272, %v5971, 0
        %v6149 = vsel %vm5272, %v5974, 0
        %6151 = vmatpush.msra.mxu0 0.0
        %6152 = vmatpush.msra.mxu0 0.0
        %6153 = vmatpush.msra.mxu0 0.0
        %6154 = vmatpush.msra.mxu0 0.0
        %6155 = vmatpush.msra.mxu0 0.0
        %6156 = vmatpush.msra.mxu0 0.0
        %6157 = vmatpush.msra.mxu0 0.0
        %6158 = vmatpush.msra.mxu0 0.0
        %6159 = vmatpush.msra.mxu0 0.0
        %6160 = vmatpush.msra.mxu0 0.0
        %6161 = vmatpush.msra.mxu0 0.0
        %6162 = vmatpush.msra.mxu0 0.0
        %6163 = vmatpush.msra.mxu0 0.0
        %6164 = vmatpush.msra.mxu0 0.0
        %6165 = vmatpush.msra.mxu0 %v6144
        %6166 = vmatpush.msra.mxu0 %v6143
        %6167 = vmatmul.f32.gmra.mxu0 %v6146
        %v6168 = vpop.f32.mrf.mxu0
        %v6169 = vadd.f32 0.0, %v6168
        %6170 = vmatmul.f32.gmra.mxu0 %v6149
        %v6171 = vpop.f32.mrf.mxu0
        %v6172 = vadd.f32 0.0, %v6171
        %6173 = vdwg.mxu0
        %v6174 = vadd.f32 %v6141, %v6169
        %v6175 = vadd.f32 %v6142, %v6172
        %v6176 = vld [vmem:[%s13 + $0x40] sm:$0xff]
        %v6177 = vld [vmem:[%s13 + $0x48] sm:$0xff]
        %v6179 = vsel %vm5272, %v5977, 0
        %v6182 = vsel %vm5272, %v5980, 0
        %6184 = vmatpush.msra.mxu0 0.0
        %6185 = vmatpush.msra.mxu0 0.0
        %6186 = vmatpush.msra.mxu0 0.0
        %6187 = vmatpush.msra.mxu0 0.0
        %6188 = vmatpush.msra.mxu0 0.0
        %6189 = vmatpush.msra.mxu0 0.0
        %6190 = vmatpush.msra.mxu0 0.0
        %6191 = vmatpush.msra.mxu0 0.0
        %6192 = vmatpush.msra.mxu0 0.0
        %6193 = vmatpush.msra.mxu0 0.0
        %6194 = vmatpush.msra.mxu0 0.0
        %6195 = vmatpush.msra.mxu0 0.0
        %6196 = vmatpush.msra.mxu0 0.0
        %6197 = vmatpush.msra.mxu0 0.0
        %6198 = vmatpush.msra.mxu0 %v6177
        %6199 = vmatpush.msra.mxu0 %v6176
        %6200 = vmatmul.f32.gmra.mxu0 %v6179
        %v6201 = vpop.f32.mrf.mxu0
        %v6202 = vadd.f32 0.0, %v6201
        %6203 = vmatmul.f32.gmra.mxu0 %v6182
        %v6204 = vpop.f32.mrf.mxu0
        %v6205 = vadd.f32 0.0, %v6204
        %6206 = vdwg.mxu0
        %v6207 = vadd.f32 %v6174, %v6202
        %v6208 = vadd.f32 %v6175, %v6205
        %v6209 = vld [vmem:[%s13 + $0x50] sm:$0xff]
        %v6210 = vld [vmem:[%s13 + $0x58] sm:$0xff]
        %v6212 = vsel %vm5272, %v5983, 0
        %v6215 = vsel %vm5272, %v5986, 0
        %6217 = vmatpush.msra.mxu0 0.0
        %6218 = vmatpush.msra.mxu0 0.0
        %6219 = vmatpush.msra.mxu0 0.0
        %6220 = vmatpush.msra.mxu0 0.0
        %6221 = vmatpush.msra.mxu0 0.0
        %6222 = vmatpush.msra.mxu0 0.0
        %6223 = vmatpush.msra.mxu0 0.0
        %6224 = vmatpush.msra.mxu0 0.0
        %6225 = vmatpush.msra.mxu0 0.0
        %6226 = vmatpush.msra.mxu0 0.0
        %6227 = vmatpush.msra.mxu0 0.0
        %6228 = vmatpush.msra.mxu0 0.0
        %6229 = vmatpush.msra.mxu0 0.0
        %6230 = vmatpush.msra.mxu0 0.0
        %6231 = vmatpush.msra.mxu0 %v6210
        %6232 = vmatpush.msra.mxu0 %v6209
        %6233 = vmatmul.f32.gmra.mxu0 %v6212
        %v6234 = vpop.f32.mrf.mxu0
        %v6235 = vadd.f32 0.0, %v6234
        %6236 = vmatmul.f32.gmra.mxu0 %v6215
        %v6237 = vpop.f32.mrf.mxu0
        %v6238 = vadd.f32 0.0, %v6237
        %6239 = vdwg.mxu0
        %v6240 = vadd.f32 %v6207, %v6235
        %v6241 = vadd.f32 %v6208, %v6238
        %v6242 = vld [vmem:[%s13 + $0x60] sm:$0xff]
        %v6243 = vld [vmem:[%s13 + $0x68] sm:$0xff]
        %v6245 = vsel %vm5272, %v5989, 0
        %v6248 = vsel %vm5272, %v5992, 0
        %6250 = vmatpush.msra.mxu0 0.0
        %6251 = vmatpush.msra.mxu0 0.0
        %6252 = vmatpush.msra.mxu0 0.0
        %6253 = vmatpush.msra.mxu0 0.0
        %6254 = vmatpush.msra.mxu0 0.0
        %6255 = vmatpush.msra.mxu0 0.0
        %6256 = vmatpush.msra.mxu0 0.0
        %6257 = vmatpush.msra.mxu0 0.0
        %6258 = vmatpush.msra.mxu0 0.0
        %6259 = vmatpush.msra.mxu0 0.0
        %6260 = vmatpush.msra.mxu0 0.0
        %6261 = vmatpush.msra.mxu0 0.0
        %6262 = vmatpush.msra.mxu0 0.0
        %6263 = vmatpush.msra.mxu0 0.0
        %6264 = vmatpush.msra.mxu0 %v6243
        %6265 = vmatpush.msra.mxu0 %v6242
        %6266 = vmatmul.f32.gmra.mxu0 %v6245
        %v6267 = vpop.f32.mrf.mxu0
        %v6268 = vadd.f32 0.0, %v6267
        %6269 = vmatmul.f32.gmra.mxu0 %v6248
        %v6270 = vpop.f32.mrf.mxu0
        %v6271 = vadd.f32 0.0, %v6270
        %6272 = vdwg.mxu0
        %v6273 = vadd.f32 %v6240, %v6268
        %v6274 = vadd.f32 %v6241, %v6271
        %v6275 = vld [vmem:[%s13 + $0x70] sm:$0xff]
        %v6276 = vld [vmem:[%s13 + $0x78] sm:$0xff]
        %v6278 = vsel %vm5272, %v5995, 0
        %v6281 = vsel %vm5272, %v5998, 0
        %6283 = vmatpush.msra.mxu0 0.0
        %6284 = vmatpush.msra.mxu0 0.0
        %6285 = vmatpush.msra.mxu0 0.0
        %6286 = vmatpush.msra.mxu0 0.0
        %6287 = vmatpush.msra.mxu0 0.0
        %6288 = vmatpush.msra.mxu0 0.0
        %6289 = vmatpush.msra.mxu0 0.0
        %6290 = vmatpush.msra.mxu0 0.0
        %6291 = vmatpush.msra.mxu0 0.0
        %6292 = vmatpush.msra.mxu0 0.0
        %6293 = vmatpush.msra.mxu0 0.0
        %6294 = vmatpush.msra.mxu0 0.0
        %6295 = vmatpush.msra.mxu0 0.0
        %6296 = vmatpush.msra.mxu0 0.0
        %6297 = vmatpush.msra.mxu0 %v6276
        %6298 = vmatpush.msra.mxu0 %v6275
        %6299 = vmatmul.f32.gmra.mxu0 %v6278
        %v6300 = vpop.f32.mrf.mxu0
        %v6301 = vadd.f32 0.0, %v6300
        %6302 = vmatmul.f32.gmra.mxu0 %v6281
        %v6303 = vpop.f32.mrf.mxu0
        %v6304 = vadd.f32 0.0, %v6303
        %6305 = vdwg.mxu0
        %v6306 = vadd.f32 %v6273, %v6301
        %v6307 = vadd.f32 %v6274, %v6304
        %v6308 = vld [vmem:[%s13 + $0x80] sm:$0xff]
        %v6309 = vld [vmem:[%s13 + $0x88] sm:$0xff]
        %v6311 = vsel %vm5272, %v6001, 0
        %v6314 = vsel %vm5272, %v6004, 0
        %6316 = vmatpush.msra.mxu0 0.0
        %6317 = vmatpush.msra.mxu0 0.0
        %6318 = vmatpush.msra.mxu0 0.0
        %6319 = vmatpush.msra.mxu0 0.0
        %6320 = vmatpush.msra.mxu0 0.0
        %6321 = vmatpush.msra.mxu0 0.0
        %6322 = vmatpush.msra.mxu0 0.0
        %6323 = vmatpush.msra.mxu0 0.0
        %6324 = vmatpush.msra.mxu0 0.0
        %6325 = vmatpush.msra.mxu0 0.0
        %6326 = vmatpush.msra.mxu0 0.0
        %6327 = vmatpush.msra.mxu0 0.0
        %6328 = vmatpush.msra.mxu0 0.0
        %6329 = vmatpush.msra.mxu0 0.0
        %6330 = vmatpush.msra.mxu0 %v6309
        %6331 = vmatpush.msra.mxu0 %v6308
        %6332 = vmatmul.f32.gmra.mxu0 %v6311
        %v6333 = vpop.f32.mrf.mxu0
        %v6334 = vadd.f32 0.0, %v6333
        %6335 = vmatmul.f32.gmra.mxu0 %v6314
        %v6336 = vpop.f32.mrf.mxu0
        %v6337 = vadd.f32 0.0, %v6336
        %6338 = vdwg.mxu0
        %v6339 = vadd.f32 %v6306, %v6334
        %v6340 = vadd.f32 %v6307, %v6337
        %v6341 = vld [vmem:[%s13 + $0x90] sm:$0xff]
        %v6342 = vld [vmem:[%s13 + $0x98] sm:$0xff]
        %v6344 = vsel %vm5272, %v6007, 0
        %v6347 = vsel %vm5272, %v6010, 0
        %6349 = vmatpush.msra.mxu0 0.0
        %6350 = vmatpush.msra.mxu0 0.0
        %6351 = vmatpush.msra.mxu0 0.0
        %6352 = vmatpush.msra.mxu0 0.0
        %6353 = vmatpush.msra.mxu0 0.0
        %6354 = vmatpush.msra.mxu0 0.0
        %6355 = vmatpush.msra.mxu0 0.0
        %6356 = vmatpush.msra.mxu0 0.0
        %6357 = vmatpush.msra.mxu0 0.0
        %6358 = vmatpush.msra.mxu0 0.0
        %6359 = vmatpush.msra.mxu0 0.0
        %6360 = vmatpush.msra.mxu0 0.0
        %6361 = vmatpush.msra.mxu0 0.0
        %6362 = vmatpush.msra.mxu0 0.0
        %6363 = vmatpush.msra.mxu0 %v6342
        %6364 = vmatpush.msra.mxu0 %v6341
        %6365 = vmatmul.f32.gmra.mxu0 %v6344
        %v6366 = vpop.f32.mrf.mxu0
        %v6367 = vadd.f32 0.0, %v6366
        %6368 = vmatmul.f32.gmra.mxu0 %v6347
        %v6369 = vpop.f32.mrf.mxu0
        %v6370 = vadd.f32 0.0, %v6369
        %6371 = vdwg.mxu0
        %v6372 = vadd.f32 %v6339, %v6367
        %v6373 = vadd.f32 %v6340, %v6370
        %v6374 = vld [vmem:[%s13 + $0xa0] sm:$0xff]
        %v6375 = vld [vmem:[%s13 + $0xa8] sm:$0xff]
        %v6377 = vsel %vm5272, %v6013, 0
        %v6380 = vsel %vm5272, %v6016, 0
        %6382 = vmatpush.msra.mxu0 0.0
        %6383 = vmatpush.msra.mxu0 0.0
        %6384 = vmatpush.msra.mxu0 0.0
        %6385 = vmatpush.msra.mxu0 0.0
        %6386 = vmatpush.msra.mxu0 0.0
        %6387 = vmatpush.msra.mxu0 0.0
        %6388 = vmatpush.msra.mxu0 0.0
        %6389 = vmatpush.msra.mxu0 0.0
        %6390 = vmatpush.msra.mxu0 0.0
        %6391 = vmatpush.msra.mxu0 0.0
        %6392 = vmatpush.msra.mxu0 0.0
        %6393 = vmatpush.msra.mxu0 0.0
        %6394 = vmatpush.msra.mxu0 0.0
        %6395 = vmatpush.msra.mxu0 0.0
        %6396 = vmatpush.msra.mxu0 %v6375
        %6397 = vmatpush.msra.mxu0 %v6374
        %6398 = vmatmul.f32.gmra.mxu0 %v6377
        %v6399 = vpop.f32.mrf.mxu0
        %v6400 = vadd.f32 0.0, %v6399
        %6401 = vmatmul.f32.gmra.mxu0 %v6380
        %v6402 = vpop.f32.mrf.mxu0
        %v6403 = vadd.f32 0.0, %v6402
        %6404 = vdwg.mxu0
        %v6405 = vadd.f32 %v6372, %v6400
        %v6406 = vadd.f32 %v6373, %v6403
        %v6407 = vld [vmem:[%s13 + $0xb0] sm:$0xff]
        %v6408 = vld [vmem:[%s13 + $0xb8] sm:$0xff]
        %v6410 = vsel %vm5272, %v6019, 0
        %v6413 = vsel %vm5272, %v6022, 0
        %6415 = vmatpush.msra.mxu0 0.0
        %6416 = vmatpush.msra.mxu0 0.0
        %6417 = vmatpush.msra.mxu0 0.0
        %6418 = vmatpush.msra.mxu0 0.0
        %6419 = vmatpush.msra.mxu0 0.0
        %6420 = vmatpush.msra.mxu0 0.0
        %6421 = vmatpush.msra.mxu0 0.0
        %6422 = vmatpush.msra.mxu0 0.0
        %6423 = vmatpush.msra.mxu0 0.0
        %6424 = vmatpush.msra.mxu0 0.0
        %6425 = vmatpush.msra.mxu0 0.0
        %6426 = vmatpush.msra.mxu0 0.0
        %6427 = vmatpush.msra.mxu0 0.0
        %6428 = vmatpush.msra.mxu0 0.0
        %6429 = vmatpush.msra.mxu0 %v6408
        %6430 = vmatpush.msra.mxu0 %v6407
        %6431 = vmatmul.f32.gmra.mxu0 %v6410
        %v6432 = vpop.f32.mrf.mxu0
        %v6433 = vadd.f32 0.0, %v6432
        %6434 = vmatmul.f32.gmra.mxu0 %v6413
        %v6435 = vpop.f32.mrf.mxu0
        %v6436 = vadd.f32 0.0, %v6435
        %6437 = vdwg.mxu0
        %v6438 = vadd.f32 %v6405, %v6433
        %v6439 = vadd.f32 %v6406, %v6436
        %v6440 = vld [vmem:[%s13 + $0xc0] sm:$0xff]
        %v6441 = vld [vmem:[%s13 + $0xc8] sm:$0xff]
        %v6443 = vsel %vm5272, %v6025, 0
        %v6446 = vsel %vm5272, %v6028, 0
        %6448 = vmatpush.msra.mxu0 0.0
        %6449 = vmatpush.msra.mxu0 0.0
        %6450 = vmatpush.msra.mxu0 0.0
        %6451 = vmatpush.msra.mxu0 0.0
        %6452 = vmatpush.msra.mxu0 0.0
        %6453 = vmatpush.msra.mxu0 0.0
        %6454 = vmatpush.msra.mxu0 0.0
        %6455 = vmatpush.msra.mxu0 0.0
        %6456 = vmatpush.msra.mxu0 0.0
        %6457 = vmatpush.msra.mxu0 0.0
        %6458 = vmatpush.msra.mxu0 0.0
        %6459 = vmatpush.msra.mxu0 0.0
        %6460 = vmatpush.msra.mxu0 0.0
        %6461 = vmatpush.msra.mxu0 0.0
        %6462 = vmatpush.msra.mxu0 %v6441
        %6463 = vmatpush.msra.mxu0 %v6440
        %6464 = vmatmul.f32.gmra.mxu0 %v6443
        %v6465 = vpop.f32.mrf.mxu0
        %v6466 = vadd.f32 0.0, %v6465
        %6467 = vmatmul.f32.gmra.mxu0 %v6446
        %v6468 = vpop.f32.mrf.mxu0
        %v6469 = vadd.f32 0.0, %v6468
        %6470 = vdwg.mxu0
        %v6471 = vadd.f32 %v6438, %v6466
        %v6472 = vadd.f32 %v6439, %v6469
        %v6473 = vld [vmem:[%s13 + $0xd0] sm:$0xff]
        %v6474 = vld [vmem:[%s13 + $0xd8] sm:$0xff]
        %v6476 = vsel %vm5272, %v6031, 0
        %v6479 = vsel %vm5272, %v6034, 0
        %6481 = vmatpush.msra.mxu0 0.0
        %6482 = vmatpush.msra.mxu0 0.0
        %6483 = vmatpush.msra.mxu0 0.0
        %6484 = vmatpush.msra.mxu0 0.0
        %6485 = vmatpush.msra.mxu0 0.0
        %6486 = vmatpush.msra.mxu0 0.0
        %6487 = vmatpush.msra.mxu0 0.0
        %6488 = vmatpush.msra.mxu0 0.0
        %6489 = vmatpush.msra.mxu0 0.0
        %6490 = vmatpush.msra.mxu0 0.0
        %6491 = vmatpush.msra.mxu0 0.0
        %6492 = vmatpush.msra.mxu0 0.0
        %6493 = vmatpush.msra.mxu0 0.0
        %6494 = vmatpush.msra.mxu0 0.0
        %6495 = vmatpush.msra.mxu0 %v6474
        %6496 = vmatpush.msra.mxu0 %v6473
        %6497 = vmatmul.f32.gmra.mxu0 %v6476
        %v6498 = vpop.f32.mrf.mxu0
        %v6499 = vadd.f32 0.0, %v6498
        %6500 = vmatmul.f32.gmra.mxu0 %v6479
        %v6501 = vpop.f32.mrf.mxu0
        %v6502 = vadd.f32 0.0, %v6501
        %6503 = vdwg.mxu0
        %v6504 = vadd.f32 %v6471, %v6499
        %v6505 = vadd.f32 %v6472, %v6502
        %v6506 = vld [vmem:[%s13 + $0xe0] sm:$0xff]
        %v6507 = vld [vmem:[%s13 + $0xe8] sm:$0xff]
        %v6509 = vsel %vm5272, %v6037, 0
        %v6512 = vsel %vm5272, %v6040, 0
        %6514 = vmatpush.msra.mxu0 0.0
        %6515 = vmatpush.msra.mxu0 0.0
        %6516 = vmatpush.msra.mxu0 0.0
        %6517 = vmatpush.msra.mxu0 0.0
        %6518 = vmatpush.msra.mxu0 0.0
        %6519 = vmatpush.msra.mxu0 0.0
        %6520 = vmatpush.msra.mxu0 0.0
        %6521 = vmatpush.msra.mxu0 0.0
        %6522 = vmatpush.msra.mxu0 0.0
        %6523 = vmatpush.msra.mxu0 0.0
        %6524 = vmatpush.msra.mxu0 0.0
        %6525 = vmatpush.msra.mxu0 0.0
        %6526 = vmatpush.msra.mxu0 0.0
        %6527 = vmatpush.msra.mxu0 0.0
        %6528 = vmatpush.msra.mxu0 %v6507
        %6529 = vmatpush.msra.mxu0 %v6506
        %6530 = vmatmul.f32.gmra.mxu0 %v6509
        %v6531 = vpop.f32.mrf.mxu0
        %v6532 = vadd.f32 0.0, %v6531
        %6533 = vmatmul.f32.gmra.mxu0 %v6512
        %v6534 = vpop.f32.mrf.mxu0
        %v6535 = vadd.f32 0.0, %v6534
        %6536 = vdwg.mxu0
        %v6537 = vadd.f32 %v6504, %v6532
        %v6538 = vadd.f32 %v6505, %v6535
        %v6539 = vld [vmem:[%s13 + $0xf0] sm:$0xff]
        %v6540 = vld [vmem:[%s13 + $0xf8] sm:$0xff]
        %v6542 = vsel %vm5272, %v6043, 0
        %v6545 = vsel %vm5272, %v6046, 0
        %6547 = vmatpush.msra.mxu0 0.0
        %6548 = vmatpush.msra.mxu0 0.0
        %6549 = vmatpush.msra.mxu0 0.0
        %6550 = vmatpush.msra.mxu0 0.0
        %6551 = vmatpush.msra.mxu0 0.0
        %6552 = vmatpush.msra.mxu0 0.0
        %6553 = vmatpush.msra.mxu0 0.0
        %6554 = vmatpush.msra.mxu0 0.0
        %6555 = vmatpush.msra.mxu0 0.0
        %6556 = vmatpush.msra.mxu0 0.0
        %6557 = vmatpush.msra.mxu0 0.0
        %6558 = vmatpush.msra.mxu0 0.0
        %6559 = vmatpush.msra.mxu0 0.0
        %6560 = vmatpush.msra.mxu0 0.0
        %6561 = vmatpush.msra.mxu0 %v6540
        %6562 = vmatpush.msra.mxu0 %v6539
        %6563 = vmatmul.f32.gmra.mxu0 %v6542
        %v6564 = vpop.f32.mrf.mxu0
        %v6565 = vadd.f32 0.0, %v6564
        %6566 = vmatmul.f32.gmra.mxu0 %v6545
        %v6567 = vpop.f32.mrf.mxu0
        %v6568 = vadd.f32 0.0, %v6567
        %6569 = vdwg.mxu0
        %v6570 = vadd.f32 %v6537, %v6565
        %v6571 = vadd.f32 %v6538, %v6568
        %v6572 = vld [vmem:[%s15] sm:$0x1]
        %v6574 = vperm.slane %v6572, 0
        %v6576 = vadd.f32 %v6570, %v6574
        %v6577 = vadd.f32 %v6571, %v6574
        %v6578 = vld [vmem:[%s17] sm:$0xff]
        %v6579 = vld [vmem:[%s17 + $0x8] sm:$0xff]
        %v6580 = vld [vmem:[%s17 + $0x10] sm:$0xff]
        %v6581 = vld [vmem:[%s17 + $0x18] sm:$0xff]
        %v6582 = vld [vmem:[%s17 + $0x20] sm:$0xff]
        %v6583 = vld [vmem:[%s17 + $0x28] sm:$0xff]
        %v6584 = vld [vmem:[%s17 + $0x30] sm:$0xff]
        %v6585 = vld [vmem:[%s17 + $0x38] sm:$0xff]
        %v6586 = vld [vmem:[%s17 + $0x40] sm:$0xff]
        %v6587 = vld [vmem:[%s17 + $0x48] sm:$0xff]
        %v6588 = vld [vmem:[%s17 + $0x50] sm:$0xff]
        %v6589 = vld [vmem:[%s17 + $0x58] sm:$0xff]
        %v6590 = vld [vmem:[%s17 + $0x60] sm:$0xff]
        %v6591 = vld [vmem:[%s17 + $0x68] sm:$0xff]
        %v6592 = vld [vmem:[%s17 + $0x70] sm:$0xff]
        %v6593 = vld [vmem:[%s17 + $0x78] sm:$0xff]
        %v6594 = vld [vmem:[%s19] sm:$0x3]
        %v6596 = vperm.slane %v6594, 0
        %v6597 = vperm.slane %v6594, 1
        %v6601 = vsel %vm5470, %v6576, 0
        %v6604 = vsel %vm5470, %v6577, 0
        %6606 = vmatpush.msra.mxu0 0.0
        %6607 = vmatpush.msra.mxu0 0.0
        %6608 = vmatpush.msra.mxu0 0.0
        %6609 = vmatpush.msra.mxu0 0.0
        %6610 = vmatpush.msra.mxu0 0.0
        %6611 = vmatpush.msra.mxu0 0.0
        %6612 = vmatpush.msra.mxu0 0.0
        %6613 = vmatpush.msra.mxu0 0.0
        %6614 = vmatpush.msra.mxu0 %v6592
        %6615 = vmatpush.msra.mxu0 %v6590
        %6616 = vmatpush.msra.mxu0 %v6588
        %6617 = vmatpush.msra.mxu0 %v6586
        %6618 = vmatpush.msra.mxu0 %v6584
        %6619 = vmatpush.msra.mxu0 %v6582
        %6620 = vmatpush.msra.mxu0 %v6580
        %6621 = vmatpush.msra.mxu0 %v6578
        %6622 = vmatmul.f32.gmra.mxu0 %v6601
        %v6623 = vpop.f32.mrf.mxu0
        %v6624 = vadd.f32 %v6596, %v6623
        %6625 = vmatmul.f32.gmra.mxu0 %v6604
        %v6626 = vpop.f32.mrf.mxu0
        %v6627 = vadd.f32 %v6596, %v6626
        %6628 = vdwg.mxu0
        %6629 = vmatpush.msra.mxu0 0.0
        %6630 = vmatpush.msra.mxu0 0.0
        %6631 = vmatpush.msra.mxu0 0.0
        %6632 = vmatpush.msra.mxu0 0.0
        %6633 = vmatpush.msra.mxu0 0.0
        %6634 = vmatpush.msra.mxu0 0.0
        %6635 = vmatpush.msra.mxu0 0.0
        %6636 = vmatpush.msra.mxu0 0.0
        %6637 = vmatpush.msra.mxu0 %v6593
        %6638 = vmatpush.msra.mxu0 %v6591
        %6639 = vmatpush.msra.mxu0 %v6589
        %6640 = vmatpush.msra.mxu0 %v6587
        %6641 = vmatpush.msra.mxu0 %v6585
        %6642 = vmatpush.msra.mxu0 %v6583
        %6643 = vmatpush.msra.mxu0 %v6581
        %6644 = vmatpush.msra.mxu0 %v6579
        %6645 = vmatmul.f32.gmra.mxu0 %v6601
        %v6646 = vpop.f32.mrf.mxu0
        %v6647 = vadd.f32 %v6597, %v6646
        %6648 = vmatmul.f32.gmra.mxu0 %v6604
        %v6649 = vpop.f32.mrf.mxu0
        %v6650 = vadd.f32 %v6597, %v6649
        %6651 = vdwg.mxu0
        %6654 = vrot.lane.b32.xlu0 %v6624, 64
        %v6655 = vpop.permute.xlu0 %6654
        %6656 = vrot.lane.b32.xlu0 %v6627, 64
        %v6657 = vpop.permute.xlu0 %6656
        %v6658 = vsel %vm5272, %v6624, 0
        %v6660 = vsel %vm5272, %v6627, 0
        %v6662 = vsel %vm5272, %v6655, 0
        %v6664 = vsel %vm5272, %v6657, 0
        %6666 = vmatpush.xpose.msra.mxu0 0.0
        %6667 = vmatpush.xpose.msra.mxu0 0.0
        %6668 = vmatpush.xpose.msra.mxu0 0.0
        %6669 = vmatpush.xpose.msra.mxu0 0.0
        %6670 = vmatpush.xpose.msra.mxu0 0.0
        %6671 = vmatpush.xpose.msra.mxu0 0.0
        %6672 = vmatpush.xpose.msra.mxu0 0.0
        %6673 = vmatpush.xpose.msra.mxu0 0.0
        %6674 = vmatpush.xpose.msra.mxu0 0.0
        %6675 = vmatpush.xpose.msra.mxu0 0.0
        %6676 = vmatpush.xpose.msra.mxu0 0.0
        %6677 = vmatpush.xpose.msra.mxu0 0.0
        %6678 = vmatpush.xpose.msra.mxu0 0.0
        %6679 = vmatpush.xpose.msra.mxu0 0.0
        %6680 = vmatpush.xpose.msra.mxu0 %v6664
        %6681 = vmatpush.xpose.msra.mxu0 %v6662
        %6682 = vmatmul.f32.gmra.mxu0 %v6658
        %v6683 = vpop.f32.mrf.mxu0
        %v6684 = vadd.f32 0.0, %v6683
        %6685 = vmatmul.f32.gmra.mxu0 %v6660
        %v6686 = vpop.f32.mrf.mxu0
        %v6687 = vadd.f32 0.0, %v6686
        %6688 = vdwg.mxu0
        %v6689 = vsel %vm5272, %v6684, -inf
        %6690 = vmax.xlane.f32.xlu0 %v6689
        %v6691 = vpop.xlane.xlu0 %6690
        %v6692 = vsel %vm5272, %v6687, -inf
        %6693 = vmax.xlane.f32.xlu0 %v6692
        %v6694 = vpop.xlane.xlu0 %6693
        %v6695 = vsub.f32 %v6684, %v6691
        %v6696 = vsub.f32 %v6687, %v6694
        %v6697 = vmul.f32 %v6695, 1.442695
        %v6698 = vpow.pop %v6697
        %v6699 = vmul.f32 %v6696, 1.442695
        %v6700 = vpow.pop %v6699
        %v6701 = vsel %vm5272, %v6698, 0.0
        %6702 = vadd.xlane.f32.xlu0 %v6701
        %v6703 = vpop.xlane.xlu0 %6702
        %v6704 = vsel %vm5272, %v6700, 0.0
        %6705 = vadd.xlane.f32.xlu0 %v6704
        %v6706 = vpop.xlane.xlu0 %6705
        %v6707 = vrcp.pop %v6703
        %v6708 = vrcp.pop %v6706
        %v6709 = vmul.f32 %v6698, %v6707
        %v6710 = vmul.f32 %v6700, %v6708
        %v6712 = vsel %vm5272, %v6709, 0
        %v6715 = vsel %vm5272, %v6710, 0
        %6717 = vmatpush.msra.mxu0 0.0
        %6718 = vmatpush.msra.mxu0 0.0
        %6719 = vmatpush.msra.mxu0 0.0
        %6720 = vmatpush.msra.mxu0 0.0
        %6721 = vmatpush.msra.mxu0 0.0
        %6722 = vmatpush.msra.mxu0 0.0
        %6723 = vmatpush.msra.mxu0 0.0
        %6724 = vmatpush.msra.mxu0 0.0
        %6725 = vmatpush.msra.mxu0 0.0
        %6726 = vmatpush.msra.mxu0 0.0
        %6727 = vmatpush.msra.mxu0 0.0
        %6728 = vmatpush.msra.mxu0 0.0
        %6729 = vmatpush.msra.mxu0 0.0
        %6730 = vmatpush.msra.mxu0 0.0
        %6731 = vmatpush.msra.mxu0 %v6650
        %6732 = vmatpush.msra.mxu0 %v6647
        %6733 = vmatmul.f32.gmra.mxu0 %v6712
        %v6734 = vpop.f32.mrf.mxu0
        %v6735 = vadd.f32 0.0, %v6734
        %6736 = vmatmul.f32.gmra.mxu0 %v6715
        %v6737 = vpop.f32.mrf.mxu0
        %v6738 = vadd.f32 0.0, %v6737
        %6739 = vdwg.mxu0
        %6740 = vrot.lane.b32.xlu0 %v6624, 112
        %v6741 = vpop.permute.xlu0 %6740
        %6742 = vrot.lane.b32.xlu0 %v6627, 112
        %v6743 = vpop.permute.xlu0 %6742
        %6744 = vrot.lane.b32.xlu0 %v6624, 48
        %v6745 = vpop.permute.xlu0 %6744
        %6746 = vrot.lane.b32.xlu0 %v6627, 48
        %v6747 = vpop.permute.xlu0 %6746
        %v6748 = vsel %vm5272, %v6741, 0
        %v6750 = vsel %vm5272, %v6743, 0
        %v6752 = vsel %vm5272, %v6745, 0
        %v6754 = vsel %vm5272, %v6747, 0
        %6756 = vmatpush.xpose.msra.mxu0 0.0
        %6757 = vmatpush.xpose.msra.mxu0 0.0
        %6758 = vmatpush.xpose.msra.mxu0 0.0
        %6759 = vmatpush.xpose.msra.mxu0 0.0
        %6760 = vmatpush.xpose.msra.mxu0 0.0
        %6761 = vmatpush.xpose.msra.mxu0 0.0
        %6762 = vmatpush.xpose.msra.mxu0 0.0
        %6763 = vmatpush.xpose.msra.mxu0 0.0
        %6764 = vmatpush.xpose.msra.mxu0 0.0
        %6765 = vmatpush.xpose.msra.mxu0 0.0
        %6766 = vmatpush.xpose.msra.mxu0 0.0
        %6767 = vmatpush.xpose.msra.mxu0 0.0
        %6768 = vmatpush.xpose.msra.mxu0 0.0
        %6769 = vmatpush.xpose.msra.mxu0 0.0
        %6770 = vmatpush.xpose.msra.mxu0 %v6754
        %6771 = vmatpush.xpose.msra.mxu0 %v6752
        %6772 = vmatmul.f32.gmra.mxu0 %v6748
        %v6773 = vpop.f32.mrf.mxu0
        %v6774 = vadd.f32 0.0, %v6773
        %6775 = vmatmul.f32.gmra.mxu0 %v6750
        %v6776 = vpop.f32.mrf.mxu0
        %v6777 = vadd.f32 0.0, %v6776
        %6778 = vdwg.mxu0
        %v6779 = vsel %vm5272, %v6774, -inf
        %6780 = vmax.xlane.f32.xlu0 %v6779
        %v6781 = vpop.xlane.xlu0 %6780
        %v6782 = vsel %vm5272, %v6777, -inf
        %6783 = vmax.xlane.f32.xlu0 %v6782
        %v6784 = vpop.xlane.xlu0 %6783
        %v6785 = vsub.f32 %v6774, %v6781
        %v6786 = vsub.f32 %v6777, %v6784
        %v6787 = vmul.f32 %v6785, 1.442695
        %v6788 = vpow.pop %v6787
        %v6789 = vmul.f32 %v6786, 1.442695
        %v6790 = vpow.pop %v6789
        %v6791 = vsel %vm5272, %v6788, 0.0
        %6792 = vadd.xlane.f32.xlu0 %v6791
        %v6793 = vpop.xlane.xlu0 %6792
        %v6794 = vsel %vm5272, %v6790, 0.0
        %6795 = vadd.xlane.f32.xlu0 %v6794
        %v6796 = vpop.xlane.xlu0 %6795
        %v6797 = vrcp.pop %v6793
        %v6798 = vrcp.pop %v6796
        %v6799 = vmul.f32 %v6788, %v6797
        %v6800 = vmul.f32 %v6790, %v6798
        %6803 = vrot.lane.b32.xlu0 %v6647, 112
        %v6804 = vpop.permute.xlu0 %6803
        %6805 = vrot.lane.b32.xlu0 %v6650, 112
        %v6806 = vpop.permute.xlu0 %6805
        %v6810 = vsel %vm5272, %v6799, 0
        %v6813 = vsel %vm5272, %v6800, 0
        %6815 = vmatpush.msra.mxu0 0.0
        %6816 = vmatpush.msra.mxu0 0.0
        %6817 = vmatpush.msra.mxu0 0.0
        %6818 = vmatpush.msra.mxu0 0.0
        %6819 = vmatpush.msra.mxu0 0.0
        %6820 = vmatpush.msra.mxu0 0.0
        %6821 = vmatpush.msra.mxu0 0.0
        %6822 = vmatpush.msra.mxu0 0.0
        %6823 = vmatpush.msra.mxu0 0.0
        %6824 = vmatpush.msra.mxu0 0.0
        %6825 = vmatpush.msra.mxu0 0.0
        %6826 = vmatpush.msra.mxu0 0.0
        %6827 = vmatpush.msra.mxu0 0.0
        %6828 = vmatpush.msra.mxu0 0.0
        %6829 = vmatpush.msra.mxu0 %v6806
        %6830 = vmatpush.msra.mxu0 %v6804
        %6831 = vmatmul.f32.gmra.mxu0 %v6810
        %v6832 = vpop.f32.mrf.mxu0
        %v6833 = vadd.f32 0.0, %v6832
        %6834 = vmatmul.f32.gmra.mxu0 %v6813
        %v6835 = vpop.f32.mrf.mxu0
        %v6836 = vadd.f32 0.0, %v6835
        %6837 = vdwg.mxu0
        %6838 = vrot.lane.b32.xlu0 %v6624, 96
        %v6839 = vpop.permute.xlu0 %6838
        %6840 = vrot.lane.b32.xlu0 %v6627, 96
        %v6841 = vpop.permute.xlu0 %6840
        %6842 = vrot.lane.b32.xlu0 %v6624, 32
        %v6843 = vpop.permute.xlu0 %6842
        %6844 = vrot.lane.b32.xlu0 %v6627, 32
        %v6845 = vpop.permute.xlu0 %6844
        %v6846 = vsel %vm5272, %v6839, 0
        %v6848 = vsel %vm5272, %v6841, 0
        %v6850 = vsel %vm5272, %v6843, 0
        %v6852 = vsel %vm5272, %v6845, 0
        %6854 = vmatpush.xpose.msra.mxu0 0.0
        %6855 = vmatpush.xpose.msra.mxu0 0.0
        %6856 = vmatpush.xpose.msra.mxu0 0.0
        %6857 = vmatpush.xpose.msra.mxu0 0.0
        %6858 = vmatpush.xpose.msra.mxu0 0.0
        %6859 = vmatpush.xpose.msra.mxu0 0.0
        %6860 = vmatpush.xpose.msra.mxu0 0.0
        %6861 = vmatpush.xpose.msra.mxu0 0.0
        %6862 = vmatpush.xpose.msra.mxu0 0.0
        %6863 = vmatpush.xpose.msra.mxu0 0.0
        %6864 = vmatpush.xpose.msra.mxu0 0.0
        %6865 = vmatpush.xpose.msra.mxu0 0.0
        %6866 = vmatpush.xpose.msra.mxu0 0.0
        %6867 = vmatpush.xpose.msra.mxu0 0.0
        %6868 = vmatpush.xpose.msra.mxu0 %v6852
        %6869 = vmatpush.xpose.msra.mxu0 %v6850
        %6870 = vmatmul.f32.gmra.mxu0 %v6846
        %v6871 = vpop.f32.mrf.mxu0
        %v6872 = vadd.f32 0.0, %v6871
        %6873 = vmatmul.f32.gmra.mxu0 %v6848
        %v6874 = vpop.f32.mrf.mxu0
        %v6875 = vadd.f32 0.0, %v6874
        %6876 = vdwg.mxu0
        %v6877 = vsel %vm5272, %v6872, -inf
        %6878 = vmax.xlane.f32.xlu0 %v6877
        %v6879 = vpop.xlane.xlu0 %6878
        %v6880 = vsel %vm5272, %v6875, -inf
        %6881 = vmax.xlane.f32.xlu0 %v6880
        %v6882 = vpop.xlane.xlu0 %6881
        %v6883 = vsub.f32 %v6872, %v6879
        %v6884 = vsub.f32 %v6875, %v6882
        %v6885 = vmul.f32 %v6883, 1.442695
        %v6886 = vpow.pop %v6885
        %v6887 = vmul.f32 %v6884, 1.442695
        %v6888 = vpow.pop %v6887
        %v6889 = vsel %vm5272, %v6886, 0.0
        %6890 = vadd.xlane.f32.xlu0 %v6889
        %v6891 = vpop.xlane.xlu0 %6890
        %v6892 = vsel %vm5272, %v6888, 0.0
        %6893 = vadd.xlane.f32.xlu0 %v6892
        %v6894 = vpop.xlane.xlu0 %6893
        %v6895 = vrcp.pop %v6891
        %v6896 = vrcp.pop %v6894
        %v6897 = vmul.f32 %v6886, %v6895
        %v6898 = vmul.f32 %v6888, %v6896
        %6899 = vrot.lane.b32.xlu0 %v6647, 96
        %v6900 = vpop.permute.xlu0 %6899
        %6901 = vrot.lane.b32.xlu0 %v6650, 96
        %v6902 = vpop.permute.xlu0 %6901
        %v6906 = vsel %vm5272, %v6897, 0
        %v6909 = vsel %vm5272, %v6898, 0
        %6911 = vmatpush.msra.mxu0 0.0
        %6912 = vmatpush.msra.mxu0 0.0
        %6913 = vmatpush.msra.mxu0 0.0
        %6914 = vmatpush.msra.mxu0 0.0
        %6915 = vmatpush.msra.mxu0 0.0
        %6916 = vmatpush.msra.mxu0 0.0
        %6917 = vmatpush.msra.mxu0 0.0
        %6918 = vmatpush.msra.mxu0 0.0
        %6919 = vmatpush.msra.mxu0 0.0
        %6920 = vmatpush.msra.mxu0 0.0
        %6921 = vmatpush.msra.mxu0 0.0
        %6922 = vmatpush.msra.mxu0 0.0
        %6923 = vmatpush.msra.mxu0 0.0
        %6924 = vmatpush.msra.mxu0 0.0
        %6925 = vmatpush.msra.mxu0 %v6902
        %6926 = vmatpush.msra.mxu0 %v6900
        %6927 = vmatmul.f32.gmra.mxu0 %v6906
        %v6928 = vpop.f32.mrf.mxu0
        %v6929 = vadd.f32 0.0, %v6928
        %6930 = vmatmul.f32.gmra.mxu0 %v6909
        %v6931 = vpop.f32.mrf.mxu0
        %v6932 = vadd.f32 0.0, %v6931
        %6933 = vdwg.mxu0
        %6934 = vrot.lane.b32.xlu0 %v6624, 80
        %v6935 = vpop.permute.xlu0 %6934
        %6936 = vrot.lane.b32.xlu0 %v6627, 80
        %v6937 = vpop.permute.xlu0 %6936
        %6938 = vrot.lane.b32.xlu0 %v6624, 16
        %v6939 = vpop.permute.xlu0 %6938
        %6940 = vrot.lane.b32.xlu0 %v6627, 16
        %v6941 = vpop.permute.xlu0 %6940
        %v6942 = vsel %vm5272, %v6935, 0
        %v6944 = vsel %vm5272, %v6937, 0
        %v6946 = vsel %vm5272, %v6939, 0
        %v6948 = vsel %vm5272, %v6941, 0
        %6950 = vmatpush.xpose.msra.mxu0 0.0
        %6951 = vmatpush.xpose.msra.mxu0 0.0
        %6952 = vmatpush.xpose.msra.mxu0 0.0
        %6953 = vmatpush.xpose.msra.mxu0 0.0
        %6954 = vmatpush.xpose.msra.mxu0 0.0
        %6955 = vmatpush.xpose.msra.mxu0 0.0
        %6956 = vmatpush.xpose.msra.mxu0 0.0
        %6957 = vmatpush.xpose.msra.mxu0 0.0
        %6958 = vmatpush.xpose.msra.mxu0 0.0
        %6959 = vmatpush.xpose.msra.mxu0 0.0
        %6960 = vmatpush.xpose.msra.mxu0 0.0
        %6961 = vmatpush.xpose.msra.mxu0 0.0
        %6962 = vmatpush.xpose.msra.mxu0 0.0
        %6963 = vmatpush.xpose.msra.mxu0 0.0
        %6964 = vmatpush.xpose.msra.mxu0 %v6948
        %6965 = vmatpush.xpose.msra.mxu0 %v6946
        %6966 = vmatmul.f32.gmra.mxu0 %v6942
        %v6967 = vpop.f32.mrf.mxu0
        %v6968 = vadd.f32 0.0, %v6967
        %6969 = vmatmul.f32.gmra.mxu0 %v6944
        %v6970 = vpop.f32.mrf.mxu0
        %v6971 = vadd.f32 0.0, %v6970
        %6972 = vdwg.mxu0
        %v6973 = vsel %vm5272, %v6968, -inf
        %6974 = vmax.xlane.f32.xlu0 %v6973
        %v6975 = vpop.xlane.xlu0 %6974
        %v6976 = vsel %vm5272, %v6971, -inf
        %6977 = vmax.xlane.f32.xlu0 %v6976
        %v6978 = vpop.xlane.xlu0 %6977
        %v6979 = vsub.f32 %v6968, %v6975
        %v6980 = vsub.f32 %v6971, %v6978
        %v6981 = vmul.f32 %v6979, 1.442695
        %v6982 = vpow.pop %v6981
        %v6983 = vmul.f32 %v6980, 1.442695
        %v6984 = vpow.pop %v6983
        %v6985 = vsel %vm5272, %v6982, 0.0
        %6986 = vadd.xlane.f32.xlu0 %v6985
        %v6987 = vpop.xlane.xlu0 %6986
        %v6988 = vsel %vm5272, %v6984, 0.0
        %6989 = vadd.xlane.f32.xlu0 %v6988
        %v6990 = vpop.xlane.xlu0 %6989
        %v6991 = vrcp.pop %v6987
        %v6992 = vrcp.pop %v6990
        %v6993 = vmul.f32 %v6982, %v6991
        %v6994 = vmul.f32 %v6984, %v6992
        %6995 = vrot.lane.b32.xlu0 %v6647, 80
        %v6996 = vpop.permute.xlu0 %6995
        %6997 = vrot.lane.b32.xlu0 %v6650, 80
        %v6998 = vpop.permute.xlu0 %6997
        %v7002 = vsel %vm5272, %v6993, 0
        %v7005 = vsel %vm5272, %v6994, 0
        %7007 = vmatpush.msra.mxu0 0.0
        %7008 = vmatpush.msra.mxu0 0.0
        %7009 = vmatpush.msra.mxu0 0.0
        %7010 = vmatpush.msra.mxu0 0.0
        %7011 = vmatpush.msra.mxu0 0.0
        %7012 = vmatpush.msra.mxu0 0.0
        %7013 = vmatpush.msra.mxu0 0.0
        %7014 = vmatpush.msra.mxu0 0.0
        %7015 = vmatpush.msra.mxu0 0.0
        %7016 = vmatpush.msra.mxu0 0.0
        %7017 = vmatpush.msra.mxu0 0.0
        %7018 = vmatpush.msra.mxu0 0.0
        %7019 = vmatpush.msra.mxu0 0.0
        %7020 = vmatpush.msra.mxu0 0.0
        %7021 = vmatpush.msra.mxu0 %v6998
        %7022 = vmatpush.msra.mxu0 %v6996
        %7023 = vmatmul.f32.gmra.mxu0 %v7002
        %v7024 = vpop.f32.mrf.mxu0
        %v7025 = vadd.f32 0.0, %v7024
        %7026 = vmatmul.f32.gmra.mxu0 %v7005
        %v7027 = vpop.f32.mrf.mxu0
        %v7028 = vadd.f32 0.0, %v7027
        %7029 = vdwg.mxu0
        %7032 = vrot.lane.b32.xlu0 %v6833, 16
        %v7033 = vpop.permute.xlu0 %7032
        %7034 = vrot.lane.b32.xlu0 %v6836, 16
        %v7035 = vpop.permute.xlu0 %7034
        %7040 = vrot.lane.b32.xlu0 %v6929, 32
        %v7041 = vpop.permute.xlu0 %7040
        %7042 = vrot.lane.b32.xlu0 %v6932, 32
        %v7043 = vpop.permute.xlu0 %7042
        %7048 = vrot.lane.b32.xlu0 %v7025, 48
        %v7049 = vpop.permute.xlu0 %7048
        %7050 = vrot.lane.b32.xlu0 %v7028, 48
        %v7051 = vpop.permute.xlu0 %7050
        %v7054 = vsel %vm5272, %v6735, %v7033
        %v7055 = vsel %vm5272, %v6738, %v7035
        %v7056 = vsel %vm5338, %v7054, %v7041
        %v7057 = vsel %vm5338, %v7055, %v7043
        %v7058 = vsel %vm5404, %v7056, %v7049
        %v7059 = vsel %vm5404, %v7057, %v7051
        %v7060 = vld [vmem:[%s21] sm:$0xff]
        %v7061 = vld [vmem:[%s21 + $0x8] sm:$0xff]
        %v7062 = vld [vmem:[%s21 + $0x10] sm:$0xff]
        %v7063 = vld [vmem:[%s21 + $0x18] sm:$0xff]
        %v7064 = vld [vmem:[%s21 + $0x20] sm:$0xff]
        %v7065 = vld [vmem:[%s21 + $0x28] sm:$0xff]
        %v7066 = vld [vmem:[%s21 + $0x30] sm:$0xff]
        %v7067 = vld [vmem:[%s21 + $0x38] sm:$0xff]
        %v7068 = vld [vmem:[%s23] sm:$0x1]
        %v7070 = vperm.slane %v7068, 0
        %v7073 = vsel %vm5470, %v7058, 0
        %v7076 = vsel %vm5470, %v7059, 0
        %7078 = vmatpush.msra.mxu0 0.0
        %7079 = vmatpush.msra.mxu0 0.0
        %7080 = vmatpush.msra.mxu0 0.0
        %7081 = vmatpush.msra.mxu0 0.0
        %7082 = vmatpush.msra.mxu0 0.0
        %7083 = vmatpush.msra.mxu0 0.0
        %7084 = vmatpush.msra.mxu0 0.0
        %7085 = vmatpush.msra.mxu0 0.0
        %7086 = vmatpush.msra.mxu0 %v7067
        %7087 = vmatpush.msra.mxu0 %v7066
        %7088 = vmatpush.msra.mxu0 %v7065
        %7089 = vmatpush.msra.mxu0 %v7064
        %7090 = vmatpush.msra.mxu0 %v7063
        %7091 = vmatpush.msra.mxu0 %v7062
        %7092 = vmatpush.msra.mxu0 %v7061
        %7093 = vmatpush.msra.mxu0 %v7060
        %7094 = vmatmul.f32.gmra.mxu0 %v7073
        %v7095 = vpop.f32.mrf.mxu0
        %v7096 = vadd.f32 %v7070, %v7095
        %7097 = vmatmul.f32.gmra.mxu0 %v7076
        %v7098 = vpop.f32.mrf.mxu0
        %v7099 = vadd.f32 %v7070, %v7098
        %7100 = vdwg.mxu0
        %v7101 = vadd.f32 %v6576, %v7096
        %v7102 = vadd.f32 %v6577, %v7099
        %v7103 = vld [vmem:[%s25] sm:$0x1]
        %v7104 = vld [vmem:[%s27] sm:$0x1]
        %v7105 = vsel %vm5470, %v7101, 0.0
        %7106 = vadd.xlane.f32.xlu0 %v7105
        %v7107 = vpop.xlane.xlu0 %7106
        %v7108 = vsel %vm5470, %v7102, 0.0
        %7109 = vadd.xlane.f32.xlu0 %v7108
        %v7110 = vpop.xlane.xlu0 %7109
        %v7111 = vrcp.pop 64.0
        %v7112 = vmul.f32 64.0, %v7111
        %v7113 = vsub.f32 1.0, %v7112
        %v7114 = vmul.f32 %v7111, %v7113
        %v7115 = vadd.f32 %v7111, %v7114
        %vm7116 = vweird.f32 %v7111
        %v7117 = vsel %vm7116, %v7111, %v7115
        %v7118 = vmul.f32 %v7107, %v7117
        %v7119 = vmul.f32 %v7110, %v7117
        %v7120 = vsub.f32 %v7101, %v7118
        %v7121 = vsub.f32 %v7102, %v7119
        %v7122 = vmul.f32 %v7120, %v7120
        %v7123 = vmul.f32 %v7121, %v7121
        %v7124 = vsel %vm5470, %v7122, 0.0
        %7125 = vadd.xlane.f32.xlu0 %v7124
        %v7126 = vpop.xlane.xlu0 %7125
        %v7127 = vsel %vm5470, %v7123, 0.0
        %7128 = vadd.xlane.f32.xlu0 %v7127
        %v7129 = vpop.xlane.xlu0 %7128
        %v7130 = vmul.f32 %v7126, %v7117
        %v7131 = vmul.f32 %v7129, %v7117
        %v7132 = vadd.f32 %v7130, 1e-05
        %v7133 = vadd.f32 %v7131, 1e-05
        %v7134 = vrsqrt.pop %v7132
        %v7135 = vmul.f32 %v7134, %v7132
        %v7136 = vmul.f32 %v7135, %v7134
        %v7137 = vmul.f32 0.5, %v7136
        %v7138 = vsub.f32 1.5, %v7137
        %v7139 = vmul.f32 %v7134, %v7138
        %vm7140 = vweird.f32 %v7132
        %vm7141 = vweird.f32 %v7134
        %vm7142 = vmor %vm7140, %vm7141
        %v7143 = vsel %vm7142, %v7134, %v7139
        %v7144 = vrsqrt.pop %v7133
        %v7145 = vmul.f32 %v7144, %v7133
        %v7146 = vmul.f32 %v7145, %v7144
        %v7147 = vmul.f32 0.5, %v7146
        %v7148 = vsub.f32 1.5, %v7147
        %v7149 = vmul.f32 %v7144, %v7148
        %vm7150 = vweird.f32 %v7133
        %vm7151 = vweird.f32 %v7144
        %vm7152 = vmor %vm7150, %vm7151
        %v7153 = vsel %vm7152, %v7144, %v7149
        %v7154 = vmul.f32 %v7120, %v7143
        %v7155 = vmul.f32 %v7121, %v7153
        %v7157 = vperm.slane %v7103, 0
        %v7159 = vmul.f32 %v7154, %v7157
        %v7160 = vmul.f32 %v7155, %v7157
        %v7162 = vperm.slane %v7104, 0
        %v7164 = vadd.f32 %v7159, %v7162
        %v7165 = vadd.f32 %v7160, %v7162
        %v7166 = vld [vmem:[#allocation2] sm:$0xff]
        %v7167 = vld [vmem:[#allocation2 + $0x8] sm:$0xff]
        %v7168 = vld [vmem:[#allocation2 + $0x10] sm:$0xff]
        %v7169 = vld [vmem:[#allocation2 + $0x18] sm:$0xff]
        %v7170 = vld [vmem:[#allocation2 + $0x20] sm:$0xff]
        %v7171 = vld [vmem:[#allocation2 + $0x28] sm:$0xff]
        %v7172 = vld [vmem:[#allocation2 + $0x30] sm:$0xff]
        %v7173 = vld [vmem:[#allocation2 + $0x38] sm:$0xff]
        %v7174 = vld [vmem:[%s31] sm:$0x1]
        %v7176 = vperm.slane %v7174, 0
        %v7179 = vsel %vm5470, %v7164, 0
        %v7182 = vsel %vm5470, %v7165, 0
        %7184 = vmatpush.msra.mxu0 0.0
        %7185 = vmatpush.msra.mxu0 0.0
        %7186 = vmatpush.msra.mxu0 0.0
        %7187 = vmatpush.msra.mxu0 0.0
        %7188 = vmatpush.msra.mxu0 0.0
        %7189 = vmatpush.msra.mxu0 0.0
        %7190 = vmatpush.msra.mxu0 0.0
        %7191 = vmatpush.msra.mxu0 0.0
        %7192 = vmatpush.msra.mxu0 %v7173
        %7193 = vmatpush.msra.mxu0 %v7172
        %7194 = vmatpush.msra.mxu0 %v7171
        %7195 = vmatpush.msra.mxu0 %v7170
        %7196 = vmatpush.msra.mxu0 %v7169
        %7197 = vmatpush.msra.mxu0 %v7168
        %7198 = vmatpush.msra.mxu0 %v7167
        %7199 = vmatpush.msra.mxu0 %v7166
        %7200 = vmatmul.f32.gmra.mxu0 %v7179
        %v7201 = vpop.f32.mrf.mxu0
        %v7202 = vadd.f32 %v7176, %v7201
        %7203 = vmatmul.f32.gmra.mxu0 %v7182
        %v7204 = vpop.f32.mrf.mxu0
        %v7205 = vadd.f32 %v7176, %v7204
        %7206 = vdwg.mxu0
        %v7207 = vmul.f32 %v7202, 0.5
        %v7208 = vmul.f32 %v7205, 0.5
        %v7209 = vmul.f32 %v7202, 0.70710677
        %v7210 = vmul.f32 %v7205, 0.70710677
        %vm7211 = vcmp.ge.f32.partialorder %v7209, 0.0
        %vm7212 = vcmp.ge.f32.partialorder %v7210, 0.0
        %v7213 = vsel %vm7211, 1.0, -1.0
        %v7214 = vsel %vm7212, 1.0, -1.0
        %v7215 = vand.u32 2147483647, %v7209
        %v7216 = vand.u32 2147483647, %v7210
        %v7217 = vmul.f32 %v7215, 0.3275911
        %v7218 = vmul.f32 %v7216, 0.3275911
        %v7219 = vadd.f32 %v7217, 1.0
        %v7220 = vadd.f32 %v7218, 1.0
        %v7221 = vrcp.pop %v7219
        %v7222 = vmul.f32 %v7219, %v7221
        %v7223 = vsub.f32 1.0, %v7222
        %v7224 = vmul.f32 %v7221, %v7223
        %v7225 = vadd.f32 %v7221, %v7224
        %vm7226 = vweird.f32 %v7219
        %vm7227 = vweird.f32 %v7221
        %vm7228 = vmor %vm7226, %vm7227
        %v7229 = vsel %vm7228, %v7221, %v7225
        %v7230 = vand.u32 2147483647, %v7219
        %vm7231 = vcmp.eq.f32.partialorder %v7230, 8.507059e+37
        %v7232 = vand.u32 %v7219, 2147483648
        %v7233 = vor.u32 1.1754944e-38, %v7232
        %v7234 = vsel %vm7231, %v7233, %v7229
        %v7235 = vmul.f32 1.0, %v7234
        %v7236 = vrcp.pop %v7220
        %v7237 = vmul.f32 %v7220, %v7236
        %v7238 = vsub.f32 1.0, %v7237
        %v7239 = vmul.f32 %v7236, %v7238
        %v7240 = vadd.f32 %v7236, %v7239
        %vm7241 = vweird.f32 %v7220
        %vm7242 = vweird.f32 %v7236
        %vm7243 = vmor %vm7241, %vm7242
        %v7244 = vsel %vm7243, %v7236, %v7240
        %v7245 = vand.u32 2147483647, %v7220
        %vm7246 = vcmp.eq.f32.partialorder %v7245, 8.507059e+37
        %v7247 = vand.u32 %v7220, 2147483648
        %v7248 = vor.u32 1.1754944e-38, %v7247
        %v7249 = vsel %vm7246, %v7248, %v7244
        %v7250 = vmul.f32 1.0, %v7249
        %v7251 = vmul.f32 %v7235, 1.0614054
        %v7252 = vmul.f32 %v7250, 1.0614054
        %v7253 = vadd.f32 %v7251, -1.4531521
        %v7254 = vadd.f32 %v7252, -1.4531521
        %v7255 = vmul.f32 %v7253, %v7235
        %v7256 = vmul.f32 %v7254, %v7250
        %v7257 = vadd.f32 %v7255, 1.4214138
        %v7258 = vadd.f32 %v7256, 1.4214138
        %v7259 = vmul.f32 %v7257, %v7235
        %v7260 = vmul.f32 %v7258, %v7250
        %v7261 = vadd.f32 %v7259, -0.28449672
        %v7262 = vadd.f32 %v7260, -0.28449672
        %v7263 = vmul.f32 %v7261, %v7235
        %v7264 = vmul.f32 %v7262, %v7250
        %v7265 = vadd.f32 %v7263, 0.2548296
        %v7266 = vadd.f32 %v7264, 0.2548296
        %v7267 = vmul.f32 %v7265, %v7235
        %v7268 = vmul.f32 %v7266, %v7250
        %v7269 = vsub.f32 0.0, %v7215
        %v7270 = vsub.f32 0.0, %v7216
        %v7271 = vmul.f32 %v7269, %v7215
        %v7272 = vmul.f32 %v7270, %v7216
        %v7273 = vmul.f32 %v7271, 1.442695
        %v7274 = vpow.pop %v7273
        %v7275 = vmul.f32 %v7272, 1.442695
        %v7276 = vpow.pop %v7275
        %v7277 = vmul.f32 %v7267, %v7274
        %v7278 = vmul.f32 %v7268, %v7276
        %v7279 = vsub.f32 1.0, %v7277
        %v7280 = vsub.f32 1.0, %v7278
        %v7281 = vmul.f32 %v7213, %v7279
        %v7282 = vmul.f32 %v7214, %v7280
        %v7283 = vadd.f32 %v7281, 1.0
        %v7284 = vadd.f32 %v7282, 1.0
        %v7285 = vmul.f32 %v7207, %v7283
        %v7286 = vmul.f32 %v7208, %v7284
        %v7287 = vld [vmem:[%s33] sm:$0xff]
        %v7288 = vld [vmem:[%s33 + $0x8] sm:$0xff]
        %v7289 = vld [vmem:[%s33 + $0x10] sm:$0xff]
        %v7290 = vld [vmem:[%s33 + $0x18] sm:$0xff]
        %v7291 = vld [vmem:[%s33 + $0x20] sm:$0xff]
        %v7292 = vld [vmem:[%s33 + $0x28] sm:$0xff]
        %v7293 = vld [vmem:[%s33 + $0x30] sm:$0xff]
        %v7294 = vld [vmem:[%s33 + $0x38] sm:$0xff]
        %v7295 = vld [vmem:[%s33 + $0x40] sm:$0xff]
        %v7296 = vld [vmem:[%s33 + $0x48] sm:$0xff]
        %v7297 = vld [vmem:[%s33 + $0x50] sm:$0xff]
        %v7298 = vld [vmem:[%s33 + $0x58] sm:$0xff]
        %v7299 = vld [vmem:[%s33 + $0x60] sm:$0xff]
        %v7300 = vld [vmem:[%s33 + $0x68] sm:$0xff]
        %v7301 = vld [vmem:[%s33 + $0x70] sm:$0xff]
        %v7302 = vld [vmem:[%s33 + $0x78] sm:$0xff]
        %v7303 = vld [vmem:[%s35] sm:$0x1]
        %v7305 = vperm.slane %v7303, 0
        %7307 = vmatpush.msra.mxu0 %v7302
        %7308 = vmatpush.msra.mxu0 %v7301
        %7309 = vmatpush.msra.mxu0 %v7300
        %7310 = vmatpush.msra.mxu0 %v7299
        %7311 = vmatpush.msra.mxu0 %v7298
        %7312 = vmatpush.msra.mxu0 %v7297
        %7313 = vmatpush.msra.mxu0 %v7296
        %7314 = vmatpush.msra.mxu0 %v7295
        %7315 = vmatpush.msra.mxu0 %v7294
        %7316 = vmatpush.msra.mxu0 %v7293
        %7317 = vmatpush.msra.mxu0 %v7292
        %7318 = vmatpush.msra.mxu0 %v7291
        %7319 = vmatpush.msra.mxu0 %v7290
        %7320 = vmatpush.msra.mxu0 %v7289
        %7321 = vmatpush.msra.mxu0 %v7288
        %7322 = vmatpush.msra.mxu0 %v7287
        %7323 = vmatmul.f32.gmra.mxu0 %v7285
        %v7324 = vpop.f32.mrf.mxu0
        %v7325 = vadd.f32 %v7305, %v7324
        %7326 = vmatmul.f32.gmra.mxu0 %v7286
        %v7327 = vpop.f32.mrf.mxu0
        %v7328 = vadd.f32 %v7305, %v7327
        %7329 = vdwg.mxu0
        %v7330 = vadd.f32 %v7164, %v7325
        %v7331 = vadd.f32 %v7165, %v7328
        %v7332 = vld [vmem:[%s37] sm:$0x1]
        %v7333 = vld [vmem:[%s39] sm:$0x1]
        %v7334 = vsel %vm5470, %v7330, 0.0
        %7335 = vadd.xlane.f32.xlu0 %v7334
        %v7336 = vpop.xlane.xlu0 %7335
        %v7337 = vsel %vm5470, %v7331, 0.0
        %7338 = vadd.xlane.f32.xlu0 %v7337
        %v7339 = vpop.xlane.xlu0 %7338
        %v7340 = vmul.f32 %v7336, %v7117
        %v7341 = vmul.f32 %v7339, %v7117
        %v7342 = vsub.f32 %v7330, %v7340
        %v7343 = vsub.f32 %v7331, %v7341
        %v7344 = vmul.f32 %v7342, %v7342
        %v7345 = vmul.f32 %v7343, %v7343
        %v7346 = vsel %vm5470, %v7344, 0.0
        %7347 = vadd.xlane.f32.xlu0 %v7346
        %v7348 = vpop.xlane.xlu0 %7347
        %v7349 = vsel %vm5470, %v7345, 0.0
        %7350 = vadd.xlane.f32.xlu0 %v7349
        %v7351 = vpop.xlane.xlu0 %7350
        %v7352 = vmul.f32 %v7348, %v7117
        %v7353 = vmul.f32 %v7351, %v7117
        %v7354 = vadd.f32 %v7352, 1e-05
        %v7355 = vadd.f32 %v7353, 1e-05
        %v7356 = vrsqrt.pop %v7354
        %v7357 = vmul.f32 %v7356, %v7354
        %v7358 = vmul.f32 %v7357, %v7356
        %v7359 = vmul.f32 0.5, %v7358
        %v7360 = vsub.f32 1.5, %v7359
        %v7361 = vmul.f32 %v7356, %v7360
        %vm7362 = vweird.f32 %v7354
        %vm7363 = vweird.f32 %v7356
        %vm7364 = vmor %vm7362, %vm7363
        %v7365 = vsel %vm7364, %v7356, %v7361
        %v7366 = vrsqrt.pop %v7355
        %v7367 = vmul.f32 %v7366, %v7355
        %v7368 = vmul.f32 %v7367, %v7366
        %v7369 = vmul.f32 0.5, %v7368
        %v7370 = vsub.f32 1.5, %v7369
        %v7371 = vmul.f32 %v7366, %v7370
        %vm7372 = vweird.f32 %v7355
        %vm7373 = vweird.f32 %v7366
        %vm7374 = vmor %vm7372, %vm7373
        %v7375 = vsel %vm7374, %v7366, %v7371
        %v7376 = vmul.f32 %v7342, %v7365
        %v7377 = vmul.f32 %v7343, %v7375
        %v7379 = vperm.slane %v7332, 0
        %v7381 = vmul.f32 %v7376, %v7379
        %v7382 = vmul.f32 %v7377, %v7379
        %v7384 = vperm.slane %v7333, 0
        %v7386 = vadd.f32 %v7381, %v7384
        %v7387 = vadd.f32 %v7382, %v7384
        %v7388 = vadd.f32 %v7386, %v7386
        %v7389 = vadd.f32 %v7387, %v7387
        %s7390 = scalar_lea.vmem %s17, 128
        %v7391 = vld [vmem:[%s7390] sm:$0xff]
        %v7392 = vld [vmem:[%s7390 + $0x8] sm:$0xff]
        %v7393 = vld [vmem:[%s7390 + $0x10] sm:$0xff]
        %v7394 = vld [vmem:[%s7390 + $0x18] sm:$0xff]
        %v7395 = vld [vmem:[%s7390 + $0x20] sm:$0xff]
        %v7396 = vld [vmem:[%s7390 + $0x28] sm:$0xff]
        %v7397 = vld [vmem:[%s7390 + $0x30] sm:$0xff]
        %v7398 = vld [vmem:[%s7390 + $0x38] sm:$0xff]
        %v7399 = vld [vmem:[%s7390 + $0x40] sm:$0xff]
        %v7400 = vld [vmem:[%s7390 + $0x48] sm:$0xff]
        %v7401 = vld [vmem:[%s7390 + $0x50] sm:$0xff]
        %v7402 = vld [vmem:[%s7390 + $0x58] sm:$0xff]
        %v7403 = vld [vmem:[%s7390 + $0x60] sm:$0xff]
        %v7404 = vld [vmem:[%s7390 + $0x68] sm:$0xff]
        %v7405 = vld [vmem:[%s7390 + $0x70] sm:$0xff]
        %v7406 = vld [vmem:[%s7390 + $0x78] sm:$0xff]
        %s7407 = scalar_lea.vmem %s19, 2
        %v7408 = vld [vmem:[%s7407] sm:$0x3]
        %v7410 = vperm.slane %v7408, 0
        %v7411 = vperm.slane %v7408, 1
        %v7415 = vsel %vm5470, %v7388, 0
        %v7418 = vsel %vm5470, %v7389, 0
        %7420 = vmatpush.msra.mxu0 0.0
        %7421 = vmatpush.msra.mxu0 0.0
        %7422 = vmatpush.msra.mxu0 0.0
        %7423 = vmatpush.msra.mxu0 0.0
        %7424 = vmatpush.msra.mxu0 0.0
        %7425 = vmatpush.msra.mxu0 0.0
        %7426 = vmatpush.msra.mxu0 0.0
        %7427 = vmatpush.msra.mxu0 0.0
        %7428 = vmatpush.msra.mxu0 %v7405
        %7429 = vmatpush.msra.mxu0 %v7403
        %7430 = vmatpush.msra.mxu0 %v7401
        %7431 = vmatpush.msra.mxu0 %v7399
        %7432 = vmatpush.msra.mxu0 %v7397
        %7433 = vmatpush.msra.mxu0 %v7395
        %7434 = vmatpush.msra.mxu0 %v7393
        %7435 = vmatpush.msra.mxu0 %v7391
        %7436 = vmatmul.f32.gmra.mxu0 %v7415
        %v7437 = vpop.f32.mrf.mxu0
        %v7438 = vadd.f32 %v7410, %v7437
        %7439 = vmatmul.f32.gmra.mxu0 %v7418
        %v7440 = vpop.f32.mrf.mxu0
        %v7441 = vadd.f32 %v7410, %v7440
        %7442 = vdwg.mxu0
        %7443 = vmatpush.msra.mxu0 0.0
        %7444 = vmatpush.msra.mxu0 0.0
        %7445 = vmatpush.msra.mxu0 0.0
        %7446 = vmatpush.msra.mxu0 0.0
        %7447 = vmatpush.msra.mxu0 0.0
        %7448 = vmatpush.msra.mxu0 0.0
        %7449 = vmatpush.msra.mxu0 0.0
        %7450 = vmatpush.msra.mxu0 0.0
        %7451 = vmatpush.msra.mxu0 %v7406
        %7452 = vmatpush.msra.mxu0 %v7404
        %7453 = vmatpush.msra.mxu0 %v7402
        %7454 = vmatpush.msra.mxu0 %v7400
        %7455 = vmatpush.msra.mxu0 %v7398
        %7456 = vmatpush.msra.mxu0 %v7396
        %7457 = vmatpush.msra.mxu0 %v7394
        %7458 = vmatpush.msra.mxu0 %v7392
        %7459 = vmatmul.f32.gmra.mxu0 %v7415
        %v7460 = vpop.f32.mrf.mxu0
        %v7461 = vadd.f32 %v7411, %v7460
        %7462 = vmatmul.f32.gmra.mxu0 %v7418
        %v7463 = vpop.f32.mrf.mxu0
        %v7464 = vadd.f32 %v7411, %v7463
        %7465 = vdwg.mxu0
        %7468 = vrot.lane.b32.xlu0 %v7438, 64
        %v7469 = vpop.permute.xlu0 %7468
        %7470 = vrot.lane.b32.xlu0 %v7441, 64
        %v7471 = vpop.permute.xlu0 %7470
        %v7472 = vsel %vm5272, %v7438, 0
        %v7474 = vsel %vm5272, %v7441, 0
        %v7476 = vsel %vm5272, %v7469, 0
        %v7478 = vsel %vm5272, %v7471, 0
        %7480 = vmatpush.xpose.msra.mxu0 0.0
        %7481 = vmatpush.xpose.msra.mxu0 0.0
        %7482 = vmatpush.xpose.msra.mxu0 0.0
        %7483 = vmatpush.xpose.msra.mxu0 0.0
        %7484 = vmatpush.xpose.msra.mxu0 0.0
        %7485 = vmatpush.xpose.msra.mxu0 0.0
        %7486 = vmatpush.xpose.msra.mxu0 0.0
        %7487 = vmatpush.xpose.msra.mxu0 0.0
        %7488 = vmatpush.xpose.msra.mxu0 0.0
        %7489 = vmatpush.xpose.msra.mxu0 0.0
        %7490 = vmatpush.xpose.msra.mxu0 0.0
        %7491 = vmatpush.xpose.msra.mxu0 0.0
        %7492 = vmatpush.xpose.msra.mxu0 0.0
        %7493 = vmatpush.xpose.msra.mxu0 0.0
        %7494 = vmatpush.xpose.msra.mxu0 %v7478
        %7495 = vmatpush.xpose.msra.mxu0 %v7476
        %7496 = vmatmul.f32.gmra.mxu0 %v7472
        %v7497 = vpop.f32.mrf.mxu0
        %v7498 = vadd.f32 0.0, %v7497
        %7499 = vmatmul.f32.gmra.mxu0 %v7474
        %v7500 = vpop.f32.mrf.mxu0
        %v7501 = vadd.f32 0.0, %v7500
        %7502 = vdwg.mxu0
        %v7503 = vsel %vm5272, %v7498, -inf
        %7504 = vmax.xlane.f32.xlu0 %v7503
        %v7505 = vpop.xlane.xlu0 %7504
        %v7506 = vsel %vm5272, %v7501, -inf
        %7507 = vmax.xlane.f32.xlu0 %v7506
        %v7508 = vpop.xlane.xlu0 %7507
        %v7509 = vsub.f32 %v7498, %v7505
        %v7510 = vsub.f32 %v7501, %v7508
        %v7511 = vmul.f32 %v7509, 1.442695
        %v7512 = vpow.pop %v7511
        %v7513 = vmul.f32 %v7510, 1.442695
        %v7514 = vpow.pop %v7513
        %v7515 = vsel %vm5272, %v7512, 0.0
        %7516 = vadd.xlane.f32.xlu0 %v7515
        %v7517 = vpop.xlane.xlu0 %7516
        %v7518 = vsel %vm5272, %v7514, 0.0
        %7519 = vadd.xlane.f32.xlu0 %v7518
        %v7520 = vpop.xlane.xlu0 %7519
        %v7521 = vrcp.pop %v7517
        %v7522 = vrcp.pop %v7520
        %v7523 = vmul.f32 %v7512, %v7521
        %v7524 = vmul.f32 %v7514, %v7522
        %v7526 = vsel %vm5272, %v7523, 0
        %v7529 = vsel %vm5272, %v7524, 0
        %7531 = vmatpush.msra.mxu0 0.0
        %7532 = vmatpush.msra.mxu0 0.0
        %7533 = vmatpush.msra.mxu0 0.0
        %7534 = vmatpush.msra.mxu0 0.0
        %7535 = vmatpush.msra.mxu0 0.0
        %7536 = vmatpush.msra.mxu0 0.0
        %7537 = vmatpush.msra.mxu0 0.0
        %7538 = vmatpush.msra.mxu0 0.0
        %7539 = vmatpush.msra.mxu0 0.0
        %7540 = vmatpush.msra.mxu0 0.0
        %7541 = vmatpush.msra.mxu0 0.0
        %7542 = vmatpush.msra.mxu0 0.0
        %7543 = vmatpush.msra.mxu0 0.0
        %7544 = vmatpush.msra.mxu0 0.0
        %7545 = vmatpush.msra.mxu0 %v7464
        %7546 = vmatpush.msra.mxu0 %v7461
        %7547 = vmatmul.f32.gmra.mxu0 %v7526
        %v7548 = vpop.f32.mrf.mxu0
        %v7549 = vadd.f32 0.0, %v7548
        %7550 = vmatmul.f32.gmra.mxu0 %v7529
        %v7551 = vpop.f32.mrf.mxu0
        %v7552 = vadd.f32 0.0, %v7551
        %7553 = vdwg.mxu0
        %7554 = vrot.lane.b32.xlu0 %v7438, 112
        %v7555 = vpop.permute.xlu0 %7554
        %7556 = vrot.lane.b32.xlu0 %v7441, 112
        %v7557 = vpop.permute.xlu0 %7556
        %7558 = vrot.lane.b32.xlu0 %v7438, 48
        %v7559 = vpop.permute.xlu0 %7558
        %7560 = vrot.lane.b32.xlu0 %v7441, 48
        %v7561 = vpop.permute.xlu0 %7560
        %v7562 = vsel %vm5272, %v7555, 0
        %v7564 = vsel %vm5272, %v7557, 0
        %v7566 = vsel %vm5272, %v7559, 0
        %v7568 = vsel %vm5272, %v7561, 0
        %7570 = vmatpush.xpose.msra.mxu0 0.0
        %7571 = vmatpush.xpose.msra.mxu0 0.0
        %7572 = vmatpush.xpose.msra.mxu0 0.0
        %7573 = vmatpush.xpose.msra.mxu0 0.0
        %7574 = vmatpush.xpose.msra.mxu0 0.0
        %7575 = vmatpush.xpose.msra.mxu0 0.0
        %7576 = vmatpush.xpose.msra.mxu0 0.0
        %7577 = vmatpush.xpose.msra.mxu0 0.0
        %7578 = vmatpush.xpose.msra.mxu0 0.0
        %7579 = vmatpush.xpose.msra.mxu0 0.0
        %7580 = vmatpush.xpose.msra.mxu0 0.0
        %7581 = vmatpush.xpose.msra.mxu0 0.0
        %7582 = vmatpush.xpose.msra.mxu0 0.0
        %7583 = vmatpush.xpose.msra.mxu0 0.0
        %7584 = vmatpush.xpose.msra.mxu0 %v7568
        %7585 = vmatpush.xpose.msra.mxu0 %v7566
        %7586 = vmatmul.f32.gmra.mxu0 %v7562
        %v7587 = vpop.f32.mrf.mxu0
        %v7588 = vadd.f32 0.0, %v7587
        %7589 = vmatmul.f32.gmra.mxu0 %v7564
        %v7590 = vpop.f32.mrf.mxu0
        %v7591 = vadd.f32 0.0, %v7590
        %7592 = vdwg.mxu0
        %v7593 = vsel %vm5272, %v7588, -inf
        %7594 = vmax.xlane.f32.xlu0 %v7593
        %v7595 = vpop.xlane.xlu0 %7594
        %v7596 = vsel %vm5272, %v7591, -inf
        %7597 = vmax.xlane.f32.xlu0 %v7596
        %v7598 = vpop.xlane.xlu0 %7597
        %v7599 = vsub.f32 %v7588, %v7595
        %v7600 = vsub.f32 %v7591, %v7598
        %v7601 = vmul.f32 %v7599, 1.442695
        %v7602 = vpow.pop %v7601
        %v7603 = vmul.f32 %v7600, 1.442695
        %v7604 = vpow.pop %v7603
        %v7605 = vsel %vm5272, %v7602, 0.0
        %7606 = vadd.xlane.f32.xlu0 %v7605
        %v7607 = vpop.xlane.xlu0 %7606
        %v7608 = vsel %vm5272, %v7604, 0.0
        %7609 = vadd.xlane.f32.xlu0 %v7608
        %v7610 = vpop.xlane.xlu0 %7609
        %v7611 = vrcp.pop %v7607
        %v7612 = vrcp.pop %v7610
        %v7613 = vmul.f32 %v7602, %v7611
        %v7614 = vmul.f32 %v7604, %v7612
        %7617 = vrot.lane.b32.xlu0 %v7461, 112
        %v7618 = vpop.permute.xlu0 %7617
        %7619 = vrot.lane.b32.xlu0 %v7464, 112
        %v7620 = vpop.permute.xlu0 %7619
        %v7624 = vsel %vm5272, %v7613, 0
        %v7627 = vsel %vm5272, %v7614, 0
        %7629 = vmatpush.msra.mxu0 0.0
        %7630 = vmatpush.msra.mxu0 0.0
        %7631 = vmatpush.msra.mxu0 0.0
        %7632 = vmatpush.msra.mxu0 0.0
        %7633 = vmatpush.msra.mxu0 0.0
        %7634 = vmatpush.msra.mxu0 0.0
        %7635 = vmatpush.msra.mxu0 0.0
        %7636 = vmatpush.msra.mxu0 0.0
        %7637 = vmatpush.msra.mxu0 0.0
        %7638 = vmatpush.msra.mxu0 0.0
        %7639 = vmatpush.msra.mxu0 0.0
        %7640 = vmatpush.msra.mxu0 0.0
        %7641 = vmatpush.msra.mxu0 0.0
        %7642 = vmatpush.msra.mxu0 0.0
        %7643 = vmatpush.msra.mxu0 %v7620
        %7644 = vmatpush.msra.mxu0 %v7618
        %7645 = vmatmul.f32.gmra.mxu0 %v7624
        %v7646 = vpop.f32.mrf.mxu0
        %v7647 = vadd.f32 0.0, %v7646
        %7648 = vmatmul.f32.gmra.mxu0 %v7627
        %v7649 = vpop.f32.mrf.mxu0
        %v7650 = vadd.f32 0.0, %v7649
        %7651 = vdwg.mxu0
        %7652 = vrot.lane.b32.xlu0 %v7438, 96
        %v7653 = vpop.permute.xlu0 %7652
        %7654 = vrot.lane.b32.xlu0 %v7441, 96
        %v7655 = vpop.permute.xlu0 %7654
        %7656 = vrot.lane.b32.xlu0 %v7438, 32
        %v7657 = vpop.permute.xlu0 %7656
        %7658 = vrot.lane.b32.xlu0 %v7441, 32
        %v7659 = vpop.permute.xlu0 %7658
        %v7660 = vsel %vm5272, %v7653, 0
        %v7662 = vsel %vm5272, %v7655, 0
        %v7664 = vsel %vm5272, %v7657, 0
        %v7666 = vsel %vm5272, %v7659, 0
        %7668 = vmatpush.xpose.msra.mxu0 0.0
        %7669 = vmatpush.xpose.msra.mxu0 0.0
        %7670 = vmatpush.xpose.msra.mxu0 0.0
        %7671 = vmatpush.xpose.msra.mxu0 0.0
        %7672 = vmatpush.xpose.msra.mxu0 0.0
        %7673 = vmatpush.xpose.msra.mxu0 0.0
        %7674 = vmatpush.xpose.msra.mxu0 0.0
        %7675 = vmatpush.xpose.msra.mxu0 0.0
        %7676 = vmatpush.xpose.msra.mxu0 0.0
        %7677 = vmatpush.xpose.msra.mxu0 0.0
        %7678 = vmatpush.xpose.msra.mxu0 0.0
        %7679 = vmatpush.xpose.msra.mxu0 0.0
        %7680 = vmatpush.xpose.msra.mxu0 0.0
        %7681 = vmatpush.xpose.msra.mxu0 0.0
        %7682 = vmatpush.xpose.msra.mxu0 %v7666
        %7683 = vmatpush.xpose.msra.mxu0 %v7664
        %7684 = vmatmul.f32.gmra.mxu0 %v7660
        %v7685 = vpop.f32.mrf.mxu0
        %v7686 = vadd.f32 0.0, %v7685
        %7687 = vmatmul.f32.gmra.mxu0 %v7662
        %v7688 = vpop.f32.mrf.mxu0
        %v7689 = vadd.f32 0.0, %v7688
        %7690 = vdwg.mxu0
        %v7691 = vsel %vm5272, %v7686, -inf
        %7692 = vmax.xlane.f32.xlu0 %v7691
        %v7693 = vpop.xlane.xlu0 %7692
        %v7694 = vsel %vm5272, %v7689, -inf
        %7695 = vmax.xlane.f32.xlu0 %v7694
        %v7696 = vpop.xlane.xlu0 %7695
        %v7697 = vsub.f32 %v7686, %v7693
        %v7698 = vsub.f32 %v7689, %v7696
        %v7699 = vmul.f32 %v7697, 1.442695
        %v7700 = vpow.pop %v7699
        %v7701 = vmul.f32 %v7698, 1.442695
        %v7702 = vpow.pop %v7701
        %v7703 = vsel %vm5272, %v7700, 0.0
        %7704 = vadd.xlane.f32.xlu0 %v7703
        %v7705 = vpop.xlane.xlu0 %7704
        %v7706 = vsel %vm5272, %v7702, 0.0
        %7707 = vadd.xlane.f32.xlu0 %v7706
        %v7708 = vpop.xlane.xlu0 %7707
        %v7709 = vrcp.pop %v7705
        %v7710 = vrcp.pop %v7708
        %v7711 = vmul.f32 %v7700, %v7709
        %v7712 = vmul.f32 %v7702, %v7710
        %7713 = vrot.lane.b32.xlu0 %v7461, 96
        %v7714 = vpop.permute.xlu0 %7713
        %7715 = vrot.lane.b32.xlu0 %v7464, 96
        %v7716 = vpop.permute.xlu0 %7715
        %v7720 = vsel %vm5272, %v7711, 0
        %v7723 = vsel %vm5272, %v7712, 0
        %7725 = vmatpush.msra.mxu0 0.0
        %7726 = vmatpush.msra.mxu0 0.0
        %7727 = vmatpush.msra.mxu0 0.0
        %7728 = vmatpush.msra.mxu0 0.0
        %7729 = vmatpush.msra.mxu0 0.0
        %7730 = vmatpush.msra.mxu0 0.0
        %7731 = vmatpush.msra.mxu0 0.0
        %7732 = vmatpush.msra.mxu0 0.0
        %7733 = vmatpush.msra.mxu0 0.0
        %7734 = vmatpush.msra.mxu0 0.0
        %7735 = vmatpush.msra.mxu0 0.0
        %7736 = vmatpush.msra.mxu0 0.0
        %7737 = vmatpush.msra.mxu0 0.0
        %7738 = vmatpush.msra.mxu0 0.0
        %7739 = vmatpush.msra.mxu0 %v7716
        %7740 = vmatpush.msra.mxu0 %v7714
        %7741 = vmatmul.f32.gmra.mxu0 %v7720
        %v7742 = vpop.f32.mrf.mxu0
        %v7743 = vadd.f32 0.0, %v7742
        %7744 = vmatmul.f32.gmra.mxu0 %v7723
        %v7745 = vpop.f32.mrf.mxu0
        %v7746 = vadd.f32 0.0, %v7745
        %7747 = vdwg.mxu0
        %7748 = vrot.lane.b32.xlu0 %v7438, 80
        %v7749 = vpop.permute.xlu0 %7748
        %7750 = vrot.lane.b32.xlu0 %v7441, 80
        %v7751 = vpop.permute.xlu0 %7750
        %7752 = vrot.lane.b32.xlu0 %v7438, 16
        %v7753 = vpop.permute.xlu0 %7752
        %7754 = vrot.lane.b32.xlu0 %v7441, 16
        %v7755 = vpop.permute.xlu0 %7754
        %v7756 = vsel %vm5272, %v7749, 0
        %v7758 = vsel %vm5272, %v7751, 0
        %v7760 = vsel %vm5272, %v7753, 0
        %v7762 = vsel %vm5272, %v7755, 0
        %7764 = vmatpush.xpose.msra.mxu0 0.0
        %7765 = vmatpush.xpose.msra.mxu0 0.0
        %7766 = vmatpush.xpose.msra.mxu0 0.0
        %7767 = vmatpush.xpose.msra.mxu0 0.0
        %7768 = vmatpush.xpose.msra.mxu0 0.0
        %7769 = vmatpush.xpose.msra.mxu0 0.0
        %7770 = vmatpush.xpose.msra.mxu0 0.0
        %7771 = vmatpush.xpose.msra.mxu0 0.0
        %7772 = vmatpush.xpose.msra.mxu0 0.0
        %7773 = vmatpush.xpose.msra.mxu0 0.0
        %7774 = vmatpush.xpose.msra.mxu0 0.0
        %7775 = vmatpush.xpose.msra.mxu0 0.0
        %7776 = vmatpush.xpose.msra.mxu0 0.0
        %7777 = vmatpush.xpose.msra.mxu0 0.0
        %7778 = vmatpush.xpose.msra.mxu0 %v7762
        %7779 = vmatpush.xpose.msra.mxu0 %v7760
        %7780 = vmatmul.f32.gmra.mxu0 %v7756
        %v7781 = vpop.f32.mrf.mxu0
        %v7782 = vadd.f32 0.0, %v7781
        %7783 = vmatmul.f32.gmra.mxu0 %v7758
        %v7784 = vpop.f32.mrf.mxu0
        %v7785 = vadd.f32 0.0, %v7784
        %7786 = vdwg.mxu0
        %v7787 = vsel %vm5272, %v7782, -inf
        %7788 = vmax.xlane.f32.xlu0 %v7787
        %v7789 = vpop.xlane.xlu0 %7788
        %v7790 = vsel %vm5272, %v7785, -inf
        %7791 = vmax.xlane.f32.xlu0 %v7790
        %v7792 = vpop.xlane.xlu0 %7791
        %v7793 = vsub.f32 %v7782, %v7789
        %v7794 = vsub.f32 %v7785, %v7792
        %v7795 = vmul.f32 %v7793, 1.442695
        %v7796 = vpow.pop %v7795
        %v7797 = vmul.f32 %v7794, 1.442695
        %v7798 = vpow.pop %v7797
        %v7799 = vsel %vm5272, %v7796, 0.0
        %7800 = vadd.xlane.f32.xlu0 %v7799
        %v7801 = vpop.xlane.xlu0 %7800
        %v7802 = vsel %vm5272, %v7798, 0.0
        %7803 = vadd.xlane.f32.xlu0 %v7802
        %v7804 = vpop.xlane.xlu0 %7803
        %v7805 = vrcp.pop %v7801
        %v7806 = vrcp.pop %v7804
        %v7807 = vmul.f32 %v7796, %v7805
        %v7808 = vmul.f32 %v7798, %v7806
        %7809 = vrot.lane.b32.xlu0 %v7461, 80
        %v7810 = vpop.permute.xlu0 %7809
        %7811 = vrot.lane.b32.xlu0 %v7464, 80
        %v7812 = vpop.permute.xlu0 %7811
        %v7816 = vsel %vm5272, %v7807, 0
        %v7819 = vsel %vm5272, %v7808, 0
        %7821 = vmatpush.msra.mxu0 0.0
        %7822 = vmatpush.msra.mxu0 0.0
        %7823 = vmatpush.msra.mxu0 0.0
        %7824 = vmatpush.msra.mxu0 0.0
        %7825 = vmatpush.msra.mxu0 0.0
        %7826 = vmatpush.msra.mxu0 0.0
        %7827 = vmatpush.msra.mxu0 0.0
        %7828 = vmatpush.msra.mxu0 0.0
        %7829 = vmatpush.msra.mxu0 0.0
        %7830 = vmatpush.msra.mxu0 0.0
        %7831 = vmatpush.msra.mxu0 0.0
        %7832 = vmatpush.msra.mxu0 0.0
        %7833 = vmatpush.msra.mxu0 0.0
        %7834 = vmatpush.msra.mxu0 0.0
        %7835 = vmatpush.msra.mxu0 %v7812
        %7836 = vmatpush.msra.mxu0 %v7810
        %7837 = vmatmul.f32.gmra.mxu0 %v7816
        %v7838 = vpop.f32.mrf.mxu0
        %v7839 = vadd.f32 0.0, %v7838
        %7840 = vmatmul.f32.gmra.mxu0 %v7819
        %v7841 = vpop.f32.mrf.mxu0
        %v7842 = vadd.f32 0.0, %v7841
        %7843 = vdwg.mxu0
        %7846 = vrot.lane.b32.xlu0 %v7647, 16
        %v7847 = vpop.permute.xlu0 %7846
        %7848 = vrot.lane.b32.xlu0 %v7650, 16
        %v7849 = vpop.permute.xlu0 %7848
        %7854 = vrot.lane.b32.xlu0 %v7743, 32
        %v7855 = vpop.permute.xlu0 %7854
        %7856 = vrot.lane.b32.xlu0 %v7746, 32
        %v7857 = vpop.permute.xlu0 %7856
        %7862 = vrot.lane.b32.xlu0 %v7839, 48
        %v7863 = vpop.permute.xlu0 %7862
        %7864 = vrot.lane.b32.xlu0 %v7842, 48
        %v7865 = vpop.permute.xlu0 %7864
        %v7868 = vsel %vm5272, %v7549, %v7847
        %v7869 = vsel %vm5272, %v7552, %v7849
        %v7870 = vsel %vm5338, %v7868, %v7855
        %v7871 = vsel %vm5338, %v7869, %v7857
        %v7872 = vsel %vm5404, %v7870, %v7863
        %v7873 = vsel %vm5404, %v7871, %v7865
        %s7874 = scalar_lea.vmem %s21, 64
        %v7875 = vld [vmem:[%s7874] sm:$0xff]
        %v7876 = vld [vmem:[%s7874 + $0x8] sm:$0xff]
        %v7877 = vld [vmem:[%s7874 + $0x10] sm:$0xff]
        %v7878 = vld [vmem:[%s7874 + $0x18] sm:$0xff]
        %v7879 = vld [vmem:[%s7874 + $0x20] sm:$0xff]
        %v7880 = vld [vmem:[%s7874 + $0x28] sm:$0xff]
        %v7881 = vld [vmem:[%s7874 + $0x30] sm:$0xff]
        %v7882 = vld [vmem:[%s7874 + $0x38] sm:$0xff]
        %s7883 = scalar_lea.vmem %s23, 1
        %v7884 = vld [vmem:[%s7883] sm:$0x1]
        %v7886 = vperm.slane %v7884, 0
        %v7889 = vsel %vm5470, %v7872, 0
        %v7892 = vsel %vm5470, %v7873, 0
        %7894 = vmatpush.msra.mxu0 0.0
        %7895 = vmatpush.msra.mxu0 0.0
        %7896 = vmatpush.msra.mxu0 0.0
        %7897 = vmatpush.msra.mxu0 0.0
        %7898 = vmatpush.msra.mxu0 0.0
        %7899 = vmatpush.msra.mxu0 0.0
        %7900 = vmatpush.msra.mxu0 0.0
        %7901 = vmatpush.msra.mxu0 0.0
        %7902 = vmatpush.msra.mxu0 %v7882
        %7903 = vmatpush.msra.mxu0 %v7881
        %7904 = vmatpush.msra.mxu0 %v7880
        %7905 = vmatpush.msra.mxu0 %v7879
        %7906 = vmatpush.msra.mxu0 %v7878
        %7907 = vmatpush.msra.mxu0 %v7877
        %7908 = vmatpush.msra.mxu0 %v7876
        %7909 = vmatpush.msra.mxu0 %v7875
        %7910 = vmatmul.f32.gmra.mxu0 %v7889
        %v7911 = vpop.f32.mrf.mxu0
        %v7912 = vadd.f32 %v7886, %v7911
        %7913 = vmatmul.f32.gmra.mxu0 %v7892
        %v7914 = vpop.f32.mrf.mxu0
        %v7915 = vadd.f32 %v7886, %v7914
        %7916 = vdwg.mxu0
        %v7917 = vadd.f32 %v7388, %v7912
        %v7918 = vadd.f32 %v7389, %v7915
        %s7919 = scalar_lea.vmem %s25, 1
        %v7920 = vld [vmem:[%s7919] sm:$0x1]
        %s7921 = scalar_lea.vmem %s27, 1
        %v7922 = vld [vmem:[%s7921] sm:$0x1]
        %v7923 = vsel %vm5470, %v7917, 0.0
        %7924 = vadd.xlane.f32.xlu0 %v7923
        %v7925 = vpop.xlane.xlu0 %7924
        %v7926 = vsel %vm5470, %v7918, 0.0
        %7927 = vadd.xlane.f32.xlu0 %v7926
        %v7928 = vpop.xlane.xlu0 %7927
        %v7929 = vmul.f32 %v7925, %v7117
        %v7930 = vmul.f32 %v7928, %v7117
        %v7931 = vsub.f32 %v7917, %v7929
        %v7932 = vsub.f32 %v7918, %v7930
        %v7933 = vmul.f32 %v7931, %v7931
        %v7934 = vmul.f32 %v7932, %v7932
        %v7935 = vsel %vm5470, %v7933, 0.0
        %7936 = vadd.xlane.f32.xlu0 %v7935
        %v7937 = vpop.xlane.xlu0 %7936
        %v7938 = vsel %vm5470, %v7934, 0.0
        %7939 = vadd.xlane.f32.xlu0 %v7938
        %v7940 = vpop.xlane.xlu0 %7939
        %v7941 = vmul.f32 %v7937, %v7117
        %v7942 = vmul.f32 %v7940, %v7117
        %v7943 = vadd.f32 %v7941, 1e-05
        %v7944 = vadd.f32 %v7942, 1e-05
        %v7945 = vrsqrt.pop %v7943
        %v7946 = vmul.f32 %v7945, %v7943
        %v7947 = vmul.f32 %v7946, %v7945
        %v7948 = vmul.f32 0.5, %v7947
        %v7949 = vsub.f32 1.5, %v7948
        %v7950 = vmul.f32 %v7945, %v7949
        %vm7951 = vweird.f32 %v7943
        %vm7952 = vweird.f32 %v7945
        %vm7953 = vmor %vm7951, %vm7952
        %v7954 = vsel %vm7953, %v7945, %v7950
        %v7955 = vrsqrt.pop %v7944
        %v7956 = vmul.f32 %v7955, %v7944
        %v7957 = vmul.f32 %v7956, %v7955
        %v7958 = vmul.f32 0.5, %v7957
        %v7959 = vsub.f32 1.5, %v7958
        %v7960 = vmul.f32 %v7955, %v7959
        %vm7961 = vweird.f32 %v7944
        %vm7962 = vweird.f32 %v7955
        %vm7963 = vmor %vm7961, %vm7962
        %v7964 = vsel %vm7963, %v7955, %v7960
        %v7965 = vmul.f32 %v7931, %v7954
        %v7966 = vmul.f32 %v7932, %v7964
        %v7968 = vperm.slane %v7920, 0
        %v7970 = vmul.f32 %v7965, %v7968
        %v7971 = vmul.f32 %v7966, %v7968
        %v7973 = vperm.slane %v7922, 0
        %v7975 = vadd.f32 %v7970, %v7973
        %v7976 = vadd.f32 %v7971, %v7973
        %s7977 = scalar_lea.vmem [#allocation2], 64
        %v7978 = vld [vmem:[%s7977] sm:$0xff]
        %v7979 = vld [vmem:[%s7977 + $0x8] sm:$0xff]
        %v7980 = vld [vmem:[%s7977 + $0x10] sm:$0xff]
        %v7981 = vld [vmem:[%s7977 + $0x18] sm:$0xff]
        %v7982 = vld [vmem:[%s7977 + $0x20] sm:$0xff]
        %v7983 = vld [vmem:[%s7977 + $0x28] sm:$0xff]
        %v7984 = vld [vmem:[%s7977 + $0x30] sm:$0xff]
        %v7985 = vld [vmem:[%s7977 + $0x38] sm:$0xff]
        %s7986 = scalar_lea.vmem %s31, 1
        %v7987 = vld [vmem:[%s7986] sm:$0x1]
        %v7989 = vperm.slane %v7987, 0
        %v7992 = vsel %vm5470, %v7975, 0
        %v7995 = vsel %vm5470, %v7976, 0
        %7997 = vmatpush.msra.mxu0 0.0
        %7998 = vmatpush.msra.mxu0 0.0
        %7999 = vmatpush.msra.mxu0 0.0
        %8000 = vmatpush.msra.mxu0 0.0
        %8001 = vmatpush.msra.mxu0 0.0
        %8002 = vmatpush.msra.mxu0 0.0
        %8003 = vmatpush.msra.mxu0 0.0
        %8004 = vmatpush.msra.mxu0 0.0
        %8005 = vmatpush.msra.mxu0 %v7985
        %8006 = vmatpush.msra.mxu0 %v7984
        %8007 = vmatpush.msra.mxu0 %v7983
        %8008 = vmatpush.msra.mxu0 %v7982
        %8009 = vmatpush.msra.mxu0 %v7981
        %8010 = vmatpush.msra.mxu0 %v7980
        %8011 = vmatpush.msra.mxu0 %v7979
        %8012 = vmatpush.msra.mxu0 %v7978
        %8013 = vmatmul.f32.gmra.mxu0 %v7992
        %v8014 = vpop.f32.mrf.mxu0
        %v8015 = vadd.f32 %v7989, %v8014
        %8016 = vmatmul.f32.gmra.mxu0 %v7995
        %v8017 = vpop.f32.mrf.mxu0
        %v8018 = vadd.f32 %v7989, %v8017
        %8019 = vdwg.mxu0
        %v8020 = vmul.f32 %v8015, 0.5
        %v8021 = vmul.f32 %v8018, 0.5
        %v8022 = vmul.f32 %v8015, 0.70710677
        %v8023 = vmul.f32 %v8018, 0.70710677
        %vm8024 = vcmp.ge.f32.partialorder %v8022, 0.0
        %vm8025 = vcmp.ge.f32.partialorder %v8023, 0.0
        %v8026 = vsel %vm8024, 1.0, -1.0
        %v8027 = vsel %vm8025, 1.0, -1.0
        %v8028 = vand.u32 2147483647, %v8022
        %v8029 = vand.u32 2147483647, %v8023
        %v8030 = vmul.f32 %v8028, 0.3275911
        %v8031 = vmul.f32 %v8029, 0.3275911
        %v8032 = vadd.f32 %v8030, 1.0
        %v8033 = vadd.f32 %v8031, 1.0
        %v8034 = vrcp.pop %v8032
        %v8035 = vmul.f32 %v8032, %v8034
        %v8036 = vsub.f32 1.0, %v8035
        %v8037 = vmul.f32 %v8034, %v8036
        %v8038 = vadd.f32 %v8034, %v8037
        %vm8039 = vweird.f32 %v8032
        %vm8040 = vweird.f32 %v8034
        %vm8041 = vmor %vm8039, %vm8040
        %v8042 = vsel %vm8041, %v8034, %v8038
        %v8043 = vand.u32 2147483647, %v8032
        %vm8044 = vcmp.eq.f32.partialorder %v8043, 8.507059e+37
        %v8045 = vand.u32 %v8032, 2147483648
        %v8046 = vor.u32 1.1754944e-38, %v8045
        %v8047 = vsel %vm8044, %v8046, %v8042
        %v8048 = vmul.f32 1.0, %v8047
        %v8049 = vrcp.pop %v8033
        %v8050 = vmul.f32 %v8033, %v8049
        %v8051 = vsub.f32 1.0, %v8050
        %v8052 = vmul.f32 %v8049, %v8051
        %v8053 = vadd.f32 %v8049, %v8052
        %vm8054 = vweird.f32 %v8033
        %vm8055 = vweird.f32 %v8049
        %vm8056 = vmor %vm8054, %vm8055
        %v8057 = vsel %vm8056, %v8049, %v8053
        %v8058 = vand.u32 2147483647, %v8033
        %vm8059 = vcmp.eq.f32.partialorder %v8058, 8.507059e+37
        %v8060 = vand.u32 %v8033, 2147483648
        %v8061 = vor.u32 1.1754944e-38, %v8060
        %v8062 = vsel %vm8059, %v8061, %v8057
        %v8063 = vmul.f32 1.0, %v8062
        %v8064 = vmul.f32 %v8048, 1.0614054
        %v8065 = vmul.f32 %v8063, 1.0614054
        %v8066 = vadd.f32 %v8064, -1.4531521
        %v8067 = vadd.f32 %v8065, -1.4531521
        %v8068 = vmul.f32 %v8066, %v8048
        %v8069 = vmul.f32 %v8067, %v8063
        %v8070 = vadd.f32 %v8068, 1.4214138
        %v8071 = vadd.f32 %v8069, 1.4214138
        %v8072 = vmul.f32 %v8070, %v8048
        %v8073 = vmul.f32 %v8071, %v8063
        %v8074 = vadd.f32 %v8072, -0.28449672
        %v8075 = vadd.f32 %v8073, -0.28449672
        %v8076 = vmul.f32 %v8074, %v8048
        %v8077 = vmul.f32 %v8075, %v8063
        %v8078 = vadd.f32 %v8076, 0.2548296
        %v8079 = vadd.f32 %v8077, 0.2548296
        %v8080 = vmul.f32 %v8078, %v8048
        %v8081 = vmul.f32 %v8079, %v8063
        %v8082 = vsub.f32 0.0, %v8028
        %v8083 = vsub.f32 0.0, %v8029
        %v8084 = vmul.f32 %v8082, %v8028
        %v8085 = vmul.f32 %v8083, %v8029
        %v8086 = vmul.f32 %v8084, 1.442695
        %v8087 = vpow.pop %v8086
        %v8088 = vmul.f32 %v8085, 1.442695
        %v8089 = vpow.pop %v8088
        %v8090 = vmul.f32 %v8080, %v8087
        %v8091 = vmul.f32 %v8081, %v8089
        %v8092 = vsub.f32 1.0, %v8090
        %v8093 = vsub.f32 1.0, %v8091
        %v8094 = vmul.f32 %v8026, %v8092
        %v8095 = vmul.f32 %v8027, %v8093
        %v8096 = vadd.f32 %v8094, 1.0
        %v8097 = vadd.f32 %v8095, 1.0
        %v8098 = vmul.f32 %v8020, %v8096
        %v8099 = vmul.f32 %v8021, %v8097
        %s8100 = scalar_lea.vmem %s33, 128
        %v8101 = vld [vmem:[%s8100] sm:$0xff]
        %v8102 = vld [vmem:[%s8100 + $0x8] sm:$0xff]
        %v8103 = vld [vmem:[%s8100 + $0x10] sm:$0xff]
        %v8104 = vld [vmem:[%s8100 + $0x18] sm:$0xff]
        %v8105 = vld [vmem:[%s8100 + $0x20] sm:$0xff]
        %v8106 = vld [vmem:[%s8100 + $0x28] sm:$0xff]
        %v8107 = vld [vmem:[%s8100 + $0x30] sm:$0xff]
        %v8108 = vld [vmem:[%s8100 + $0x38] sm:$0xff]
        %v8109 = vld [vmem:[%s8100 + $0x40] sm:$0xff]
        %v8110 = vld [vmem:[%s8100 + $0x48] sm:$0xff]
        %v8111 = vld [vmem:[%s8100 + $0x50] sm:$0xff]
        %v8112 = vld [vmem:[%s8100 + $0x58] sm:$0xff]
        %v8113 = vld [vmem:[%s8100 + $0x60] sm:$0xff]
        %v8114 = vld [vmem:[%s8100 + $0x68] sm:$0xff]
        %v8115 = vld [vmem:[%s8100 + $0x70] sm:$0xff]
        %v8116 = vld [vmem:[%s8100 + $0x78] sm:$0xff]
        %s8117 = scalar_lea.vmem %s35, 1
        %v8118 = vld [vmem:[%s8117] sm:$0x1]
        %v8120 = vperm.slane %v8118, 0
        %8122 = vmatpush.msra.mxu0 %v8116
        %8123 = vmatpush.msra.mxu0 %v8115
        %8124 = vmatpush.msra.mxu0 %v8114
        %8125 = vmatpush.msra.mxu0 %v8113
        %8126 = vmatpush.msra.mxu0 %v8112
        %8127 = vmatpush.msra.mxu0 %v8111
        %8128 = vmatpush.msra.mxu0 %v8110
        %8129 = vmatpush.msra.mxu0 %v8109
        %8130 = vmatpush.msra.mxu0 %v8108
        %8131 = vmatpush.msra.mxu0 %v8107
        %8132 = vmatpush.msra.mxu0 %v8106
        %8133 = vmatpush.msra.mxu0 %v8105
        %8134 = vmatpush.msra.mxu0 %v8104
        %8135 = vmatpush.msra.mxu0 %v8103
        %8136 = vmatpush.msra.mxu0 %v8102
        %8137 = vmatpush.msra.mxu0 %v8101
        %8138 = vmatmul.f32.gmra.mxu0 %v8098
        %v8139 = vpop.f32.mrf.mxu0
        %v8140 = vadd.f32 %v8120, %v8139
        %8141 = vmatmul.f32.gmra.mxu0 %v8099
        %v8142 = vpop.f32.mrf.mxu0
        %v8143 = vadd.f32 %v8120, %v8142
        %8144 = vdwg.mxu0
        %v8145 = vadd.f32 %v7975, %v8140
        %v8146 = vadd.f32 %v7976, %v8143
        %s8147 = scalar_lea.vmem %s37, 1
        %v8148 = vld [vmem:[%s8147] sm:$0x1]
        %s8149 = scalar_lea.vmem %s39, 1
        %v8150 = vld [vmem:[%s8149] sm:$0x1]
        %v8151 = vsel %vm5470, %v8145, 0.0
        %8152 = vadd.xlane.f32.xlu0 %v8151
        %v8153 = vpop.xlane.xlu0 %8152
        %v8154 = vsel %vm5470, %v8146, 0.0
        %8155 = vadd.xlane.f32.xlu0 %v8154
        %v8156 = vpop.xlane.xlu0 %8155
        %v8157 = vmul.f32 %v8153, %v7117
        %v8158 = vmul.f32 %v8156, %v7117
        %v8159 = vsub.f32 %v8145, %v8157
        %v8160 = vsub.f32 %v8146, %v8158
        %v8161 = vmul.f32 %v8159, %v8159
        %v8162 = vmul.f32 %v8160, %v8160
        %v8163 = vsel %vm5470, %v8161, 0.0
        %8164 = vadd.xlane.f32.xlu0 %v8163
        %v8165 = vpop.xlane.xlu0 %8164
        %v8166 = vsel %vm5470, %v8162, 0.0
        %8167 = vadd.xlane.f32.xlu0 %v8166
        %v8168 = vpop.xlane.xlu0 %8167
        %v8169 = vmul.f32 %v8165, %v7117
        %v8170 = vmul.f32 %v8168, %v7117
        %v8171 = vadd.f32 %v8169, 1e-05
        %v8172 = vadd.f32 %v8170, 1e-05
        %v8173 = vrsqrt.pop %v8171
        %v8174 = vmul.f32 %v8173, %v8171
        %v8175 = vmul.f32 %v8174, %v8173
        %v8176 = vmul.f32 0.5, %v8175
        %v8177 = vsub.f32 1.5, %v8176
        %v8178 = vmul.f32 %v8173, %v8177
        %vm8179 = vweird.f32 %v8171
        %vm8180 = vweird.f32 %v8173
        %vm8181 = vmor %vm8179, %vm8180
        %v8182 = vsel %vm8181, %v8173, %v8178
        %v8183 = vrsqrt.pop %v8172
        %v8184 = vmul.f32 %v8183, %v8172
        %v8185 = vmul.f32 %v8184, %v8183
        %v8186 = vmul.f32 0.5, %v8185
        %v8187 = vsub.f32 1.5, %v8186
        %v8188 = vmul.f32 %v8183, %v8187
        %vm8189 = vweird.f32 %v8172
        %vm8190 = vweird.f32 %v8183
        %vm8191 = vmor %vm8189, %vm8190
        %v8192 = vsel %vm8191, %v8183, %v8188
        %v8193 = vmul.f32 %v8159, %v8182
        %v8194 = vmul.f32 %v8160, %v8192
        %v8196 = vperm.slane %v8148, 0
        %v8198 = vmul.f32 %v8193, %v8196
        %v8199 = vmul.f32 %v8194, %v8196
        %v8201 = vperm.slane %v8150, 0
        %v8203 = vadd.f32 %v8198, %v8201
        %v8204 = vadd.f32 %v8199, %v8201
        %v8205 = vadd.f32 %v8203, %v7386
        %v8206 = vadd.f32 %v8204, %v7387
        %v8207 = vadd.f32 %v8205, %v8203
        %v8208 = vadd.f32 %v8206, %v8204
        %s8209 = scalar_lea.vmem %s17, 256
        %v8210 = vld [vmem:[%s8209] sm:$0xff]
        %v8211 = vld [vmem:[%s8209 + $0x8] sm:$0xff]
        %v8212 = vld [vmem:[%s8209 + $0x10] sm:$0xff]
        %v8213 = vld [vmem:[%s8209 + $0x18] sm:$0xff]
        %v8214 = vld [vmem:[%s8209 + $0x20] sm:$0xff]
        %v8215 = vld [vmem:[%s8209 + $0x28] sm:$0xff]
        %v8216 = vld [vmem:[%s8209 + $0x30] sm:$0xff]
        %v8217 = vld [vmem:[%s8209 + $0x38] sm:$0xff]
        %v8218 = vld [vmem:[%s8209 + $0x40] sm:$0xff]
        %v8219 = vld [vmem:[%s8209 + $0x48] sm:$0xff]
        %v8220 = vld [vmem:[%s8209 + $0x50] sm:$0xff]
        %v8221 = vld [vmem:[%s8209 + $0x58] sm:$0xff]
        %v8222 = vld [vmem:[%s8209 + $0x60] sm:$0xff]
        %v8223 = vld [vmem:[%s8209 + $0x68] sm:$0xff]
        %v8224 = vld [vmem:[%s8209 + $0x70] sm:$0xff]
        %v8225 = vld [vmem:[%s8209 + $0x78] sm:$0xff]
        %s8226 = scalar_lea.vmem %s19, 4
        %v8227 = vld [vmem:[%s8226] sm:$0x3]
        %v8229 = vperm.slane %v8227, 0
        %v8230 = vperm.slane %v8227, 1
        %v8234 = vsel %vm5470, %v8207, 0
        %v8237 = vsel %vm5470, %v8208, 0
        %8239 = vmatpush.msra.mxu0 0.0
        %8240 = vmatpush.msra.mxu0 0.0
        %8241 = vmatpush.msra.mxu0 0.0
        %8242 = vmatpush.msra.mxu0 0.0
        %8243 = vmatpush.msra.mxu0 0.0
        %8244 = vmatpush.msra.mxu0 0.0
        %8245 = vmatpush.msra.mxu0 0.0
        %8246 = vmatpush.msra.mxu0 0.0
        %8247 = vmatpush.msra.mxu0 %v8224
        %8248 = vmatpush.msra.mxu0 %v8222
        %8249 = vmatpush.msra.mxu0 %v8220
        %8250 = vmatpush.msra.mxu0 %v8218
        %8251 = vmatpush.msra.mxu0 %v8216
        %8252 = vmatpush.msra.mxu0 %v8214
        %8253 = vmatpush.msra.mxu0 %v8212
        %8254 = vmatpush.msra.mxu0 %v8210
        %8255 = vmatmul.f32.gmra.mxu0 %v8234
        %v8256 = vpop.f32.mrf.mxu0
        %v8257 = vadd.f32 %v8229, %v8256
        %8258 = vmatmul.f32.gmra.mxu0 %v8237
        %v8259 = vpop.f32.mrf.mxu0
        %v8260 = vadd.f32 %v8229, %v8259
        %8261 = vdwg.mxu0
        %8262 = vmatpush.msra.mxu0 0.0
        %8263 = vmatpush.msra.mxu0 0.0
        %8264 = vmatpush.msra.mxu0 0.0
        %8265 = vmatpush.msra.mxu0 0.0
        %8266 = vmatpush.msra.mxu0 0.0
        %8267 = vmatpush.msra.mxu0 0.0
        %8268 = vmatpush.msra.mxu0 0.0
        %8269 = vmatpush.msra.mxu0 0.0
        %8270 = vmatpush.msra.mxu0 %v8225
        %8271 = vmatpush.msra.mxu0 %v8223
        %8272 = vmatpush.msra.mxu0 %v8221
        %8273 = vmatpush.msra.mxu0 %v8219
        %8274 = vmatpush.msra.mxu0 %v8217
        %8275 = vmatpush.msra.mxu0 %v8215
        %8276 = vmatpush.msra.mxu0 %v8213
        %8277 = vmatpush.msra.mxu0 %v8211
        %8278 = vmatmul.f32.gmra.mxu0 %v8234
        %v8279 = vpop.f32.mrf.mxu0
        %v8280 = vadd.f32 %v8230, %v8279
        %8281 = vmatmul.f32.gmra.mxu0 %v8237
        %v8282 = vpop.f32.mrf.mxu0
        %v8283 = vadd.f32 %v8230, %v8282
        %8284 = vdwg.mxu0
        %8287 = vrot.lane.b32.xlu0 %v8257, 64
        %v8288 = vpop.permute.xlu0 %8287
        %8289 = vrot.lane.b32.xlu0 %v8260, 64
        %v8290 = vpop.permute.xlu0 %8289
        %v8291 = vsel %vm5272, %v8257, 0
        %v8293 = vsel %vm5272, %v8260, 0
        %v8295 = vsel %vm5272, %v8288, 0
        %v8297 = vsel %vm5272, %v8290, 0
        %8299 = vmatpush.xpose.msra.mxu0 0.0
        %8300 = vmatpush.xpose.msra.mxu0 0.0
        %8301 = vmatpush.xpose.msra.mxu0 0.0
        %8302 = vmatpush.xpose.msra.mxu0 0.0
        %8303 = vmatpush.xpose.msra.mxu0 0.0
        %8304 = vmatpush.xpose.msra.mxu0 0.0
        %8305 = vmatpush.xpose.msra.mxu0 0.0
        %8306 = vmatpush.xpose.msra.mxu0 0.0
        %8307 = vmatpush.xpose.msra.mxu0 0.0
        %8308 = vmatpush.xpose.msra.mxu0 0.0
        %8309 = vmatpush.xpose.msra.mxu0 0.0
        %8310 = vmatpush.xpose.msra.mxu0 0.0
        %8311 = vmatpush.xpose.msra.mxu0 0.0
        %8312 = vmatpush.xpose.msra.mxu0 0.0
        %8313 = vmatpush.xpose.msra.mxu0 %v8297
        %8314 = vmatpush.xpose.msra.mxu0 %v8295
        %8315 = vmatmul.f32.gmra.mxu0 %v8291
        %v8316 = vpop.f32.mrf.mxu0
        %v8317 = vadd.f32 0.0, %v8316
        %8318 = vmatmul.f32.gmra.mxu0 %v8293
        %v8319 = vpop.f32.mrf.mxu0
        %v8320 = vadd.f32 0.0, %v8319
        %8321 = vdwg.mxu0
        %v8322 = vsel %vm5272, %v8317, -inf
        %8323 = vmax.xlane.f32.xlu0 %v8322
        %v8324 = vpop.xlane.xlu0 %8323
        %v8325 = vsel %vm5272, %v8320, -inf
        %8326 = vmax.xlane.f32.xlu0 %v8325
        %v8327 = vpop.xlane.xlu0 %8326
        %v8328 = vsub.f32 %v8317, %v8324
        %v8329 = vsub.f32 %v8320, %v8327
        %v8330 = vmul.f32 %v8328, 1.442695
        %v8331 = vpow.pop %v8330
        %v8332 = vmul.f32 %v8329, 1.442695
        %v8333 = vpow.pop %v8332
        %v8334 = vsel %vm5272, %v8331, 0.0
        %8335 = vadd.xlane.f32.xlu0 %v8334
        %v8336 = vpop.xlane.xlu0 %8335
        %v8337 = vsel %vm5272, %v8333, 0.0
        %8338 = vadd.xlane.f32.xlu0 %v8337
        %v8339 = vpop.xlane.xlu0 %8338
        %v8340 = vrcp.pop %v8336
        %v8341 = vrcp.pop %v8339
        %v8342 = vmul.f32 %v8331, %v8340
        %v8343 = vmul.f32 %v8333, %v8341
        %v8345 = vsel %vm5272, %v8342, 0
        %v8348 = vsel %vm5272, %v8343, 0
        %8350 = vmatpush.msra.mxu0 0.0
        %8351 = vmatpush.msra.mxu0 0.0
        %8352 = vmatpush.msra.mxu0 0.0
        %8353 = vmatpush.msra.mxu0 0.0
        %8354 = vmatpush.msra.mxu0 0.0
        %8355 = vmatpush.msra.mxu0 0.0
        %8356 = vmatpush.msra.mxu0 0.0
        %8357 = vmatpush.msra.mxu0 0.0
        %8358 = vmatpush.msra.mxu0 0.0
        %8359 = vmatpush.msra.mxu0 0.0
        %8360 = vmatpush.msra.mxu0 0.0
        %8361 = vmatpush.msra.mxu0 0.0
        %8362 = vmatpush.msra.mxu0 0.0
        %8363 = vmatpush.msra.mxu0 0.0
        %8364 = vmatpush.msra.mxu0 %v8283
        %8365 = vmatpush.msra.mxu0 %v8280
        %8366 = vmatmul.f32.gmra.mxu0 %v8345
        %v8367 = vpop.f32.mrf.mxu0
        %v8368 = vadd.f32 0.0, %v8367
        %8369 = vmatmul.f32.gmra.mxu0 %v8348
        %v8370 = vpop.f32.mrf.mxu0
        %v8371 = vadd.f32 0.0, %v8370
        %8372 = vdwg.mxu0
        %8373 = vrot.lane.b32.xlu0 %v8257, 112
        %v8374 = vpop.permute.xlu0 %8373
        %8375 = vrot.lane.b32.xlu0 %v8260, 112
        %v8376 = vpop.permute.xlu0 %8375
        %8377 = vrot.lane.b32.xlu0 %v8257, 48
        %v8378 = vpop.permute.xlu0 %8377
        %8379 = vrot.lane.b32.xlu0 %v8260, 48
        %v8380 = vpop.permute.xlu0 %8379
        %v8381 = vsel %vm5272, %v8374, 0
        %v8383 = vsel %vm5272, %v8376, 0
        %v8385 = vsel %vm5272, %v8378, 0
        %v8387 = vsel %vm5272, %v8380, 0
        %8389 = vmatpush.xpose.msra.mxu0 0.0
        %8390 = vmatpush.xpose.msra.mxu0 0.0
        %8391 = vmatpush.xpose.msra.mxu0 0.0
        %8392 = vmatpush.xpose.msra.mxu0 0.0
        %8393 = vmatpush.xpose.msra.mxu0 0.0
        %8394 = vmatpush.xpose.msra.mxu0 0.0
        %8395 = vmatpush.xpose.msra.mxu0 0.0
        %8396 = vmatpush.xpose.msra.mxu0 0.0
        %8397 = vmatpush.xpose.msra.mxu0 0.0
        %8398 = vmatpush.xpose.msra.mxu0 0.0
        %8399 = vmatpush.xpose.msra.mxu0 0.0
        %8400 = vmatpush.xpose.msra.mxu0 0.0
        %8401 = vmatpush.xpose.msra.mxu0 0.0
        %8402 = vmatpush.xpose.msra.mxu0 0.0
        %8403 = vmatpush.xpose.msra.mxu0 %v8387
        %8404 = vmatpush.xpose.msra.mxu0 %v8385
        %8405 = vmatmul.f32.gmra.mxu0 %v8381
        %v8406 = vpop.f32.mrf.mxu0
        %v8407 = vadd.f32 0.0, %v8406
        %8408 = vmatmul.f32.gmra.mxu0 %v8383
        %v8409 = vpop.f32.mrf.mxu0
        %v8410 = vadd.f32 0.0, %v8409
        %8411 = vdwg.mxu0
        %v8412 = vsel %vm5272, %v8407, -inf
        %8413 = vmax.xlane.f32.xlu0 %v8412
        %v8414 = vpop.xlane.xlu0 %8413
        %v8415 = vsel %vm5272, %v8410, -inf
        %8416 = vmax.xlane.f32.xlu0 %v8415
        %v8417 = vpop.xlane.xlu0 %8416
        %v8418 = vsub.f32 %v8407, %v8414
        %v8419 = vsub.f32 %v8410, %v8417
        %v8420 = vmul.f32 %v8418, 1.442695
        %v8421 = vpow.pop %v8420
        %v8422 = vmul.f32 %v8419, 1.442695
        %v8423 = vpow.pop %v8422
        %v8424 = vsel %vm5272, %v8421, 0.0
        %8425 = vadd.xlane.f32.xlu0 %v8424
        %v8426 = vpop.xlane.xlu0 %8425
        %v8427 = vsel %vm5272, %v8423, 0.0
        %8428 = vadd.xlane.f32.xlu0 %v8427
        %v8429 = vpop.xlane.xlu0 %8428
        %v8430 = vrcp.pop %v8426
        %v8431 = vrcp.pop %v8429
        %v8432 = vmul.f32 %v8421, %v8430
        %v8433 = vmul.f32 %v8423, %v8431
        %8436 = vrot.lane.b32.xlu0 %v8280, 112
        %v8437 = vpop.permute.xlu0 %8436
        %8438 = vrot.lane.b32.xlu0 %v8283, 112
        %v8439 = vpop.permute.xlu0 %8438
        %v8443 = vsel %vm5272, %v8432, 0
        %v8446 = vsel %vm5272, %v8433, 0
        %8448 = vmatpush.msra.mxu0 0.0
        %8449 = vmatpush.msra.mxu0 0.0
        %8450 = vmatpush.msra.mxu0 0.0
        %8451 = vmatpush.msra.mxu0 0.0
        %8452 = vmatpush.msra.mxu0 0.0
        %8453 = vmatpush.msra.mxu0 0.0
        %8454 = vmatpush.msra.mxu0 0.0
        %8455 = vmatpush.msra.mxu0 0.0
        %8456 = vmatpush.msra.mxu0 0.0
        %8457 = vmatpush.msra.mxu0 0.0
        %8458 = vmatpush.msra.mxu0 0.0
        %8459 = vmatpush.msra.mxu0 0.0
        %8460 = vmatpush.msra.mxu0 0.0
        %8461 = vmatpush.msra.mxu0 0.0
        %8462 = vmatpush.msra.mxu0 %v8439
        %8463 = vmatpush.msra.mxu0 %v8437
        %8464 = vmatmul.f32.gmra.mxu0 %v8443
        %v8465 = vpop.f32.mrf.mxu0
        %v8466 = vadd.f32 0.0, %v8465
        %8467 = vmatmul.f32.gmra.mxu0 %v8446
        %v8468 = vpop.f32.mrf.mxu0
        %v8469 = vadd.f32 0.0, %v8468
        %8470 = vdwg.mxu0
        %8471 = vrot.lane.b32.xlu0 %v8257, 96
        %v8472 = vpop.permute.xlu0 %8471
        %8473 = vrot.lane.b32.xlu0 %v8260, 96
        %v8474 = vpop.permute.xlu0 %8473
        %8475 = vrot.lane.b32.xlu0 %v8257, 32
        %v8476 = vpop.permute.xlu0 %8475
        %8477 = vrot.lane.b32.xlu0 %v8260, 32
        %v8478 = vpop.permute.xlu0 %8477
        %v8479 = vsel %vm5272, %v8472, 0
        %v8481 = vsel %vm5272, %v8474, 0
        %v8483 = vsel %vm5272, %v8476, 0
        %v8485 = vsel %vm5272, %v8478, 0
        %8487 = vmatpush.xpose.msra.mxu0 0.0
        %8488 = vmatpush.xpose.msra.mxu0 0.0
        %8489 = vmatpush.xpose.msra.mxu0 0.0
        %8490 = vmatpush.xpose.msra.mxu0 0.0
        %8491 = vmatpush.xpose.msra.mxu0 0.0
        %8492 = vmatpush.xpose.msra.mxu0 0.0
        %8493 = vmatpush.xpose.msra.mxu0 0.0
        %8494 = vmatpush.xpose.msra.mxu0 0.0
        %8495 = vmatpush.xpose.msra.mxu0 0.0
        %8496 = vmatpush.xpose.msra.mxu0 0.0
        %8497 = vmatpush.xpose.msra.mxu0 0.0
        %8498 = vmatpush.xpose.msra.mxu0 0.0
        %8499 = vmatpush.xpose.msra.mxu0 0.0
        %8500 = vmatpush.xpose.msra.mxu0 0.0
        %8501 = vmatpush.xpose.msra.mxu0 %v8485
        %8502 = vmatpush.xpose.msra.mxu0 %v8483
        %8503 = vmatmul.f32.gmra.mxu0 %v8479
        %v8504 = vpop.f32.mrf.mxu0
        %v8505 = vadd.f32 0.0, %v8504
        %8506 = vmatmul.f32.gmra.mxu0 %v8481
        %v8507 = vpop.f32.mrf.mxu0
        %v8508 = vadd.f32 0.0, %v8507
        %8509 = vdwg.mxu0
        %v8510 = vsel %vm5272, %v8505, -inf
        %8511 = vmax.xlane.f32.xlu0 %v8510
        %v8512 = vpop.xlane.xlu0 %8511
        %v8513 = vsel %vm5272, %v8508, -inf
        %8514 = vmax.xlane.f32.xlu0 %v8513
        %v8515 = vpop.xlane.xlu0 %8514
        %v8516 = vsub.f32 %v8505, %v8512
        %v8517 = vsub.f32 %v8508, %v8515
        %v8518 = vmul.f32 %v8516, 1.442695
        %v8519 = vpow.pop %v8518
        %v8520 = vmul.f32 %v8517, 1.442695
        %v8521 = vpow.pop %v8520
        %v8522 = vsel %vm5272, %v8519, 0.0
        %8523 = vadd.xlane.f32.xlu0 %v8522
        %v8524 = vpop.xlane.xlu0 %8523
        %v8525 = vsel %vm5272, %v8521, 0.0
        %8526 = vadd.xlane.f32.xlu0 %v8525
        %v8527 = vpop.xlane.xlu0 %8526
        %v8528 = vrcp.pop %v8524
        %v8529 = vrcp.pop %v8527
        %v8530 = vmul.f32 %v8519, %v8528
        %v8531 = vmul.f32 %v8521, %v8529
        %8532 = vrot.lane.b32.xlu0 %v8280, 96
        %v8533 = vpop.permute.xlu0 %8532
        %8534 = vrot.lane.b32.xlu0 %v8283, 96
        %v8535 = vpop.permute.xlu0 %8534
        %v8539 = vsel %vm5272, %v8530, 0
        %v8542 = vsel %vm5272, %v8531, 0
        %8544 = vmatpush.msra.mxu0 0.0
        %8545 = vmatpush.msra.mxu0 0.0
        %8546 = vmatpush.msra.mxu0 0.0
        %8547 = vmatpush.msra.mxu0 0.0
        %8548 = vmatpush.msra.mxu0 0.0
        %8549 = vmatpush.msra.mxu0 0.0
        %8550 = vmatpush.msra.mxu0 0.0
        %8551 = vmatpush.msra.mxu0 0.0
        %8552 = vmatpush.msra.mxu0 0.0
        %8553 = vmatpush.msra.mxu0 0.0
        %8554 = vmatpush.msra.mxu0 0.0
        %8555 = vmatpush.msra.mxu0 0.0
        %8556 = vmatpush.msra.mxu0 0.0
        %8557 = vmatpush.msra.mxu0 0.0
        %8558 = vmatpush.msra.mxu0 %v8535
        %8559 = vmatpush.msra.mxu0 %v8533
        %8560 = vmatmul.f32.gmra.mxu0 %v8539
        %v8561 = vpop.f32.mrf.mxu0
        %v8562 = vadd.f32 0.0, %v8561
        %8563 = vmatmul.f32.gmra.mxu0 %v8542
        %v8564 = vpop.f32.mrf.mxu0
        %v8565 = vadd.f32 0.0, %v8564
        %8566 = vdwg.mxu0
        %8567 = vrot.lane.b32.xlu0 %v8257, 80
        %v8568 = vpop.permute.xlu0 %8567
        %8569 = vrot.lane.b32.xlu0 %v8260, 80
        %v8570 = vpop.permute.xlu0 %8569
        %8571 = vrot.lane.b32.xlu0 %v8257, 16
        %v8572 = vpop.permute.xlu0 %8571
        %8573 = vrot.lane.b32.xlu0 %v8260, 16
        %v8574 = vpop.permute.xlu0 %8573
        %v8575 = vsel %vm5272, %v8568, 0
        %v8577 = vsel %vm5272, %v8570, 0
        %v8579 = vsel %vm5272, %v8572, 0
        %v8581 = vsel %vm5272, %v8574, 0
        %8583 = vmatpush.xpose.msra.mxu0 0.0
        %8584 = vmatpush.xpose.msra.mxu0 0.0
        %8585 = vmatpush.xpose.msra.mxu0 0.0
        %8586 = vmatpush.xpose.msra.mxu0 0.0
        %8587 = vmatpush.xpose.msra.mxu0 0.0
        %8588 = vmatpush.xpose.msra.mxu0 0.0
        %8589 = vmatpush.xpose.msra.mxu0 0.0
        %8590 = vmatpush.xpose.msra.mxu0 0.0
        %8591 = vmatpush.xpose.msra.mxu0 0.0
        %8592 = vmatpush.xpose.msra.mxu0 0.0
        %8593 = vmatpush.xpose.msra.mxu0 0.0
        %8594 = vmatpush.xpose.msra.mxu0 0.0
        %8595 = vmatpush.xpose.msra.mxu0 0.0
        %8596 = vmatpush.xpose.msra.mxu0 0.0
        %8597 = vmatpush.xpose.msra.mxu0 %v8581
        %8598 = vmatpush.xpose.msra.mxu0 %v8579
        %8599 = vmatmul.f32.gmra.mxu0 %v8575
        %v8600 = vpop.f32.mrf.mxu0
        %v8601 = vadd.f32 0.0, %v8600
        %8602 = vmatmul.f32.gmra.mxu0 %v8577
        %v8603 = vpop.f32.mrf.mxu0
        %v8604 = vadd.f32 0.0, %v8603
        %8605 = vdwg.mxu0
        %v8606 = vsel %vm5272, %v8601, -inf
        %8607 = vmax.xlane.f32.xlu0 %v8606
        %v8608 = vpop.xlane.xlu0 %8607
        %v8609 = vsel %vm5272, %v8604, -inf
        %8610 = vmax.xlane.f32.xlu0 %v8609
        %v8611 = vpop.xlane.xlu0 %8610
        %v8612 = vsub.f32 %v8601, %v8608
        %v8613 = vsub.f32 %v8604, %v8611
        %v8614 = vmul.f32 %v8612, 1.442695
        %v8615 = vpow.pop %v8614
        %v8616 = vmul.f32 %v8613, 1.442695
        %v8617 = vpow.pop %v8616
        %v8618 = vsel %vm5272, %v8615, 0.0
        %8619 = vadd.xlane.f32.xlu0 %v8618
        %v8620 = vpop.xlane.xlu0 %8619
        %v8621 = vsel %vm5272, %v8617, 0.0
        %8622 = vadd.xlane.f32.xlu0 %v8621
        %v8623 = vpop.xlane.xlu0 %8622
        %v8624 = vrcp.pop %v8620
        %v8625 = vrcp.pop %v8623
        %v8626 = vmul.f32 %v8615, %v8624
        %v8627 = vmul.f32 %v8617, %v8625
        %8628 = vrot.lane.b32.xlu0 %v8280, 80
        %v8629 = vpop.permute.xlu0 %8628
        %8630 = vrot.lane.b32.xlu0 %v8283, 80
        %v8631 = vpop.permute.xlu0 %8630
        %v8635 = vsel %vm5272, %v8626, 0
        %v8638 = vsel %vm5272, %v8627, 0
        %8640 = vmatpush.msra.mxu0 0.0
        %8641 = vmatpush.msra.mxu0 0.0
        %8642 = vmatpush.msra.mxu0 0.0
        %8643 = vmatpush.msra.mxu0 0.0
        %8644 = vmatpush.msra.mxu0 0.0
        %8645 = vmatpush.msra.mxu0 0.0
        %8646 = vmatpush.msra.mxu0 0.0
        %8647 = vmatpush.msra.mxu0 0.0
        %8648 = vmatpush.msra.mxu0 0.0
        %8649 = vmatpush.msra.mxu0 0.0
        %8650 = vmatpush.msra.mxu0 0.0
        %8651 = vmatpush.msra.mxu0 0.0
        %8652 = vmatpush.msra.mxu0 0.0
        %8653 = vmatpush.msra.mxu0 0.0
        %8654 = vmatpush.msra.mxu0 %v8631
        %8655 = vmatpush.msra.mxu0 %v8629
        %8656 = vmatmul.f32.gmra.mxu0 %v8635
        %v8657 = vpop.f32.mrf.mxu0
        %v8658 = vadd.f32 0.0, %v8657
        %8659 = vmatmul.f32.gmra.mxu0 %v8638
        %v8660 = vpop.f32.mrf.mxu0
        %v8661 = vadd.f32 0.0, %v8660
        %8662 = vdwg.mxu0
        %8665 = vrot.lane.b32.xlu0 %v8466, 16
        %v8666 = vpop.permute.xlu0 %8665
        %8667 = vrot.lane.b32.xlu0 %v8469, 16
        %v8668 = vpop.permute.xlu0 %8667
        %8673 = vrot.lane.b32.xlu0 %v8562, 32
        %v8674 = vpop.permute.xlu0 %8673
        %8675 = vrot.lane.b32.xlu0 %v8565, 32
        %v8676 = vpop.permute.xlu0 %8675
        %8681 = vrot.lane.b32.xlu0 %v8658, 48
        %v8682 = vpop.permute.xlu0 %8681
        %8683 = vrot.lane.b32.xlu0 %v8661, 48
        %v8684 = vpop.permute.xlu0 %8683
        %v8687 = vsel %vm5272, %v8368, %v8666
        %v8688 = vsel %vm5272, %v8371, %v8668
        %v8689 = vsel %vm5338, %v8687, %v8674
        %v8690 = vsel %vm5338, %v8688, %v8676
        %v8691 = vsel %vm5404, %v8689, %v8682
        %v8692 = vsel %vm5404, %v8690, %v8684
        %s8693 = scalar_lea.vmem %s21, 128
        %v8694 = vld [vmem:[%s8693] sm:$0xff]
        %v8695 = vld [vmem:[%s8693 + $0x8] sm:$0xff]
        %v8696 = vld [vmem:[%s8693 + $0x10] sm:$0xff]
        %v8697 = vld [vmem:[%s8693 + $0x18] sm:$0xff]
        %v8698 = vld [vmem:[%s8693 + $0x20] sm:$0xff]
        %v8699 = vld [vmem:[%s8693 + $0x28] sm:$0xff]
        %v8700 = vld [vmem:[%s8693 + $0x30] sm:$0xff]
        %v8701 = vld [vmem:[%s8693 + $0x38] sm:$0xff]
        %s8702 = scalar_lea.vmem %s23, 2
        %v8703 = vld [vmem:[%s8702] sm:$0x1]
        %v8705 = vperm.slane %v8703, 0
        %v8708 = vsel %vm5470, %v8691, 0
        %v8711 = vsel %vm5470, %v8692, 0
        %8713 = vmatpush.msra.mxu0 0.0
        %8714 = vmatpush.msra.mxu0 0.0
        %8715 = vmatpush.msra.mxu0 0.0
        %8716 = vmatpush.msra.mxu0 0.0
        %8717 = vmatpush.msra.mxu0 0.0
        %8718 = vmatpush.msra.mxu0 0.0
        %8719 = vmatpush.msra.mxu0 0.0
        %8720 = vmatpush.msra.mxu0 0.0
        %8721 = vmatpush.msra.mxu0 %v8701
        %8722 = vmatpush.msra.mxu0 %v8700
        %8723 = vmatpush.msra.mxu0 %v8699
        %8724 = vmatpush.msra.mxu0 %v8698
        %8725 = vmatpush.msra.mxu0 %v8697
        %8726 = vmatpush.msra.mxu0 %v8696
        %8727 = vmatpush.msra.mxu0 %v8695
        %8728 = vmatpush.msra.mxu0 %v8694
        %8729 = vmatmul.f32.gmra.mxu0 %v8708
        %v8730 = vpop.f32.mrf.mxu0
        %v8731 = vadd.f32 %v8705, %v8730
        %8732 = vmatmul.f32.gmra.mxu0 %v8711
        %v8733 = vpop.f32.mrf.mxu0
        %v8734 = vadd.f32 %v8705, %v8733
        %8735 = vdwg.mxu0
        %v8736 = vadd.f32 %v8207, %v8731
        %v8737 = vadd.f32 %v8208, %v8734
        %s8738 = scalar_lea.vmem %s25, 2
        %v8739 = vld [vmem:[%s8738] sm:$0x1]
        %s8740 = scalar_lea.vmem %s27, 2
        %v8741 = vld [vmem:[%s8740] sm:$0x1]
        %v8742 = vsel %vm5470, %v8736, 0.0
        %8743 = vadd.xlane.f32.xlu0 %v8742
        %v8744 = vpop.xlane.xlu0 %8743
        %v8745 = vsel %vm5470, %v8737, 0.0
        %8746 = vadd.xlane.f32.xlu0 %v8745
        %v8747 = vpop.xlane.xlu0 %8746
        %v8748 = vmul.f32 %v8744, %v7117
        %v8749 = vmul.f32 %v8747, %v7117
        %v8750 = vsub.f32 %v8736, %v8748
        %v8751 = vsub.f32 %v8737, %v8749
        %v8752 = vmul.f32 %v8750, %v8750
        %v8753 = vmul.f32 %v8751, %v8751
        %v8754 = vsel %vm5470, %v8752, 0.0
        %8755 = vadd.xlane.f32.xlu0 %v8754
        %v8756 = vpop.xlane.xlu0 %8755
        %v8757 = vsel %vm5470, %v8753, 0.0
        %8758 = vadd.xlane.f32.xlu0 %v8757
        %v8759 = vpop.xlane.xlu0 %8758
        %v8760 = vmul.f32 %v8756, %v7117
        %v8761 = vmul.f32 %v8759, %v7117
        %v8762 = vadd.f32 %v8760, 1e-05
        %v8763 = vadd.f32 %v8761, 1e-05
        %v8764 = vrsqrt.pop %v8762
        %v8765 = vmul.f32 %v8764, %v8762
        %v8766 = vmul.f32 %v8765, %v8764
        %v8767 = vmul.f32 0.5, %v8766
        %v8768 = vsub.f32 1.5, %v8767
        %v8769 = vmul.f32 %v8764, %v8768
        %vm8770 = vweird.f32 %v8762
        %vm8771 = vweird.f32 %v8764
        %vm8772 = vmor %vm8770, %vm8771
        %v8773 = vsel %vm8772, %v8764, %v8769
        %v8774 = vrsqrt.pop %v8763
        %v8775 = vmul.f32 %v8774, %v8763
        %v8776 = vmul.f32 %v8775, %v8774
        %v8777 = vmul.f32 0.5, %v8776
        %v8778 = vsub.f32 1.5, %v8777
        %v8779 = vmul.f32 %v8774, %v8778
        %vm8780 = vweird.f32 %v8763
        %vm8781 = vweird.f32 %v8774
        %vm8782 = vmor %vm8780, %vm8781
        %v8783 = vsel %vm8782, %v8774, %v8779
        %v8784 = vmul.f32 %v8750, %v8773
        %v8785 = vmul.f32 %v8751, %v8783
        %v8787 = vperm.slane %v8739, 0
        %v8789 = vmul.f32 %v8784, %v8787
        %v8790 = vmul.f32 %v8785, %v8787
        %v8792 = vperm.slane %v8741, 0
        %v8794 = vadd.f32 %v8789, %v8792
        %v8795 = vadd.f32 %v8790, %v8792
        %s8796 = scalar_lea.vmem [#allocation2], 128
        %v8797 = vld [vmem:[%s8796] sm:$0xff]
        %v8798 = vld [vmem:[%s8796 + $0x8] sm:$0xff]
        %v8799 = vld [vmem:[%s8796 + $0x10] sm:$0xff]
        %v8800 = vld [vmem:[%s8796 + $0x18] sm:$0xff]
        %v8801 = vld [vmem:[%s8796 + $0x20] sm:$0xff]
        %v8802 = vld [vmem:[%s8796 + $0x28] sm:$0xff]
        %v8803 = vld [vmem:[%s8796 + $0x30] sm:$0xff]
        %v8804 = vld [vmem:[%s8796 + $0x38] sm:$0xff]
        %s8805 = scalar_lea.vmem %s31, 2
        %v8806 = vld [vmem:[%s8805] sm:$0x1]
        %v8808 = vperm.slane %v8806, 0
        %v8811 = vsel %vm5470, %v8794, 0
        %v8814 = vsel %vm5470, %v8795, 0
        %8816 = vmatpush.msra.mxu0 0.0
        %8817 = vmatpush.msra.mxu0 0.0
        %8818 = vmatpush.msra.mxu0 0.0
        %8819 = vmatpush.msra.mxu0 0.0
        %8820 = vmatpush.msra.mxu0 0.0
        %8821 = vmatpush.msra.mxu0 0.0
        %8822 = vmatpush.msra.mxu0 0.0
        %8823 = vmatpush.msra.mxu0 0.0
        %8824 = vmatpush.msra.mxu0 %v8804
        %8825 = vmatpush.msra.mxu0 %v8803
        %8826 = vmatpush.msra.mxu0 %v8802
        %8827 = vmatpush.msra.mxu0 %v8801
        %8828 = vmatpush.msra.mxu0 %v8800
        %8829 = vmatpush.msra.mxu0 %v8799
        %8830 = vmatpush.msra.mxu0 %v8798
        %8831 = vmatpush.msra.mxu0 %v8797
        %8832 = vmatmul.f32.gmra.mxu0 %v8811
        %v8833 = vpop.f32.mrf.mxu0
        %v8834 = vadd.f32 %v8808, %v8833
        %8835 = vmatmul.f32.gmra.mxu0 %v8814
        %v8836 = vpop.f32.mrf.mxu0
        %v8837 = vadd.f32 %v8808, %v8836
        %8838 = vdwg.mxu0
        %v8839 = vmul.f32 %v8834, 0.5
        %v8840 = vmul.f32 %v8837, 0.5
        %v8841 = vmul.f32 %v8834, 0.70710677
        %v8842 = vmul.f32 %v8837, 0.70710677
        %vm8843 = vcmp.ge.f32.partialorder %v8841, 0.0
        %vm8844 = vcmp.ge.f32.partialorder %v8842, 0.0
        %v8845 = vsel %vm8843, 1.0, -1.0
        %v8846 = vsel %vm8844, 1.0, -1.0
        %v8847 = vand.u32 2147483647, %v8841
        %v8848 = vand.u32 2147483647, %v8842
        %v8849 = vmul.f32 %v8847, 0.3275911
        %v8850 = vmul.f32 %v8848, 0.3275911
        %v8851 = vadd.f32 %v8849, 1.0
        %v8852 = vadd.f32 %v8850, 1.0
        %v8853 = vrcp.pop %v8851
        %v8854 = vmul.f32 %v8851, %v8853
        %v8855 = vsub.f32 1.0, %v8854
        %v8856 = vmul.f32 %v8853, %v8855
        %v8857 = vadd.f32 %v8853, %v8856
        %vm8858 = vweird.f32 %v8851
        %vm8859 = vweird.f32 %v8853
        %vm8860 = vmor %vm8858, %vm8859
        %v8861 = vsel %vm8860, %v8853, %v8857
        %v8862 = vand.u32 2147483647, %v8851
        %vm8863 = vcmp.eq.f32.partialorder %v8862, 8.507059e+37
        %v8864 = vand.u32 %v8851, 2147483648
        %v8865 = vor.u32 1.1754944e-38, %v8864
        %v8866 = vsel %vm8863, %v8865, %v8861
        %v8867 = vmul.f32 1.0, %v8866
        %v8868 = vrcp.pop %v8852
        %v8869 = vmul.f32 %v8852, %v8868
        %v8870 = vsub.f32 1.0, %v8869
        %v8871 = vmul.f32 %v8868, %v8870
        %v8872 = vadd.f32 %v8868, %v8871
        %vm8873 = vweird.f32 %v8852
        %vm8874 = vweird.f32 %v8868
        %vm8875 = vmor %vm8873, %vm8874
        %v8876 = vsel %vm8875, %v8868, %v8872
        %v8877 = vand.u32 2147483647, %v8852
        %vm8878 = vcmp.eq.f32.partialorder %v8877, 8.507059e+37
        %v8879 = vand.u32 %v8852, 2147483648
        %v8880 = vor.u32 1.1754944e-38, %v8879
        %v8881 = vsel %vm8878, %v8880, %v8876
        %v8882 = vmul.f32 1.0, %v8881
        %v8883 = vmul.f32 %v8867, 1.0614054
        %v8884 = vmul.f32 %v8882, 1.0614054
        %v8885 = vadd.f32 %v8883, -1.4531521
        %v8886 = vadd.f32 %v8884, -1.4531521
        %v8887 = vmul.f32 %v8885, %v8867
        %v8888 = vmul.f32 %v8886, %v8882
        %v8889 = vadd.f32 %v8887, 1.4214138
        %v8890 = vadd.f32 %v8888, 1.4214138
        %v8891 = vmul.f32 %v8889, %v8867
        %v8892 = vmul.f32 %v8890, %v8882
        %v8893 = vadd.f32 %v8891, -0.28449672
        %v8894 = vadd.f32 %v8892, -0.28449672
        %v8895 = vmul.f32 %v8893, %v8867
        %v8896 = vmul.f32 %v8894, %v8882
        %v8897 = vadd.f32 %v8895, 0.2548296
        %v8898 = vadd.f32 %v8896, 0.2548296
        %v8899 = vmul.f32 %v8897, %v8867
        %v8900 = vmul.f32 %v8898, %v8882
        %v8901 = vsub.f32 0.0, %v8847
        %v8902 = vsub.f32 0.0, %v8848
        %v8903 = vmul.f32 %v8901, %v8847
        %v8904 = vmul.f32 %v8902, %v8848
        %v8905 = vmul.f32 %v8903, 1.442695
        %v8906 = vpow.pop %v8905
        %v8907 = vmul.f32 %v8904, 1.442695
        %v8908 = vpow.pop %v8907
        %v8909 = vmul.f32 %v8899, %v8906
        %v8910 = vmul.f32 %v8900, %v8908
        %v8911 = vsub.f32 1.0, %v8909
        %v8912 = vsub.f32 1.0, %v8910
        %v8913 = vmul.f32 %v8845, %v8911
        %v8914 = vmul.f32 %v8846, %v8912
        %v8915 = vadd.f32 %v8913, 1.0
        %v8916 = vadd.f32 %v8914, 1.0
        %v8917 = vmul.f32 %v8839, %v8915
        %v8918 = vmul.f32 %v8840, %v8916
        %s8919 = scalar_lea.vmem %s33, 256
        %v8920 = vld [vmem:[%s8919] sm:$0xff]
        %v8921 = vld [vmem:[%s8919 + $0x8] sm:$0xff]
        %v8922 = vld [vmem:[%s8919 + $0x10] sm:$0xff]
        %v8923 = vld [vmem:[%s8919 + $0x18] sm:$0xff]
        %v8924 = vld [vmem:[%s8919 + $0x20] sm:$0xff]
        %v8925 = vld [vmem:[%s8919 + $0x28] sm:$0xff]
        %v8926 = vld [vmem:[%s8919 + $0x30] sm:$0xff]
        %v8927 = vld [vmem:[%s8919 + $0x38] sm:$0xff]
        %v8928 = vld [vmem:[%s8919 + $0x40] sm:$0xff]
        %v8929 = vld [vmem:[%s8919 + $0x48] sm:$0xff]
        %v8930 = vld [vmem:[%s8919 + $0x50] sm:$0xff]
        %v8931 = vld [vmem:[%s8919 + $0x58] sm:$0xff]
        %v8932 = vld [vmem:[%s8919 + $0x60] sm:$0xff]
        %v8933 = vld [vmem:[%s8919 + $0x68] sm:$0xff]
        %v8934 = vld [vmem:[%s8919 + $0x70] sm:$0xff]
        %v8935 = vld [vmem:[%s8919 + $0x78] sm:$0xff]
        %s8936 = scalar_lea.vmem %s35, 2
        %v8937 = vld [vmem:[%s8936] sm:$0x1]
        %v8939 = vperm.slane %v8937, 0
        %8941 = vmatpush.msra.mxu0 %v8935
        %8942 = vmatpush.msra.mxu0 %v8934
        %8943 = vmatpush.msra.mxu0 %v8933
        %8944 = vmatpush.msra.mxu0 %v8932
        %8945 = vmatpush.msra.mxu0 %v8931
        %8946 = vmatpush.msra.mxu0 %v8930
        %8947 = vmatpush.msra.mxu0 %v8929
        %8948 = vmatpush.msra.mxu0 %v8928
        %8949 = vmatpush.msra.mxu0 %v8927
        %8950 = vmatpush.msra.mxu0 %v8926
        %8951 = vmatpush.msra.mxu0 %v8925
        %8952 = vmatpush.msra.mxu0 %v8924
        %8953 = vmatpush.msra.mxu0 %v8923
        %8954 = vmatpush.msra.mxu0 %v8922
        %8955 = vmatpush.msra.mxu0 %v8921
        %8956 = vmatpush.msra.mxu0 %v8920
        %8957 = vmatmul.f32.gmra.mxu0 %v8917
        %v8958 = vpop.f32.mrf.mxu0
        %v8959 = vadd.f32 %v8939, %v8958
        %8960 = vmatmul.f32.gmra.mxu0 %v8918
        %v8961 = vpop.f32.mrf.mxu0
        %v8962 = vadd.f32 %v8939, %v8961
        %8963 = vdwg.mxu0
        %v8964 = vadd.f32 %v8794, %v8959
        %v8965 = vadd.f32 %v8795, %v8962
        %s8966 = scalar_lea.vmem %s37, 2
        %v8967 = vld [vmem:[%s8966] sm:$0x1]
        %s8968 = scalar_lea.vmem %s39, 2
        %v8969 = vld [vmem:[%s8968] sm:$0x1]
        %v8970 = vsel %vm5470, %v8964, 0.0
        %8971 = vadd.xlane.f32.xlu0 %v8970
        %v8972 = vpop.xlane.xlu0 %8971
        %v8973 = vsel %vm5470, %v8965, 0.0
        %8974 = vadd.xlane.f32.xlu0 %v8973
        %v8975 = vpop.xlane.xlu0 %8974
        %v8976 = vmul.f32 %v8972, %v7117
        %v8977 = vmul.f32 %v8975, %v7117
        %v8978 = vsub.f32 %v8964, %v8976
        %v8979 = vsub.f32 %v8965, %v8977
        %v8980 = vmul.f32 %v8978, %v8978
        %v8981 = vmul.f32 %v8979, %v8979
        %v8982 = vsel %vm5470, %v8980, 0.0
        %8983 = vadd.xlane.f32.xlu0 %v8982
        %v8984 = vpop.xlane.xlu0 %8983
        %v8985 = vsel %vm5470, %v8981, 0.0
        %8986 = vadd.xlane.f32.xlu0 %v8985
        %v8987 = vpop.xlane.xlu0 %8986
        %v8988 = vmul.f32 %v8984, %v7117
        %v8989 = vmul.f32 %v8987, %v7117
        %v8990 = vadd.f32 %v8988, 1e-05
        %v8991 = vadd.f32 %v8989, 1e-05
        %v8992 = vrsqrt.pop %v8990
        %v8993 = vmul.f32 %v8992, %v8990
        %v8994 = vmul.f32 %v8993, %v8992
        %v8995 = vmul.f32 0.5, %v8994
        %v8996 = vsub.f32 1.5, %v8995
        %v8997 = vmul.f32 %v8992, %v8996
        %vm8998 = vweird.f32 %v8990
        %vm8999 = vweird.f32 %v8992
        %vm9000 = vmor %vm8998, %vm8999
        %v9001 = vsel %vm9000, %v8992, %v8997
        %v9002 = vrsqrt.pop %v8991
        %v9003 = vmul.f32 %v9002, %v8991
        %v9004 = vmul.f32 %v9003, %v9002
        %v9005 = vmul.f32 0.5, %v9004
        %v9006 = vsub.f32 1.5, %v9005
        %v9007 = vmul.f32 %v9002, %v9006
        %vm9008 = vweird.f32 %v8991
        %vm9009 = vweird.f32 %v9002
        %vm9010 = vmor %vm9008, %vm9009
        %v9011 = vsel %vm9010, %v9002, %v9007
        %v9012 = vmul.f32 %v8978, %v9001
        %v9013 = vmul.f32 %v8979, %v9011
        %v9015 = vperm.slane %v8967, 0
        %v9017 = vmul.f32 %v9012, %v9015
        %v9018 = vmul.f32 %v9013, %v9015
        %v9020 = vperm.slane %v8969, 0
        %v9022 = vadd.f32 %v9017, %v9020
        %v9023 = vadd.f32 %v9018, %v9020
        %v9024 = vadd.f32 %v9022, %v7386
        %v9025 = vadd.f32 %v9023, %v7387
        %v9026 = vadd.f32 %v9024, %v8203
        %v9027 = vadd.f32 %v9025, %v8204
        %v9028 = vadd.f32 %v9026, %v9022
        %v9029 = vadd.f32 %v9027, %v9023
        %s9030 = scalar_lea.vmem %s17, 384
        %v9031 = vld [vmem:[%s9030] sm:$0xff]
        %v9032 = vld [vmem:[%s9030 + $0x8] sm:$0xff]
        %v9033 = vld [vmem:[%s9030 + $0x10] sm:$0xff]
        %v9034 = vld [vmem:[%s9030 + $0x18] sm:$0xff]
        %v9035 = vld [vmem:[%s9030 + $0x20] sm:$0xff]
        %v9036 = vld [vmem:[%s9030 + $0x28] sm:$0xff]
        %v9037 = vld [vmem:[%s9030 + $0x30] sm:$0xff]
        %v9038 = vld [vmem:[%s9030 + $0x38] sm:$0xff]
        %v9039 = vld [vmem:[%s9030 + $0x40] sm:$0xff]
        %v9040 = vld [vmem:[%s9030 + $0x48] sm:$0xff]
        %v9041 = vld [vmem:[%s9030 + $0x50] sm:$0xff]
        %v9042 = vld [vmem:[%s9030 + $0x58] sm:$0xff]
        %v9043 = vld [vmem:[%s9030 + $0x60] sm:$0xff]
        %v9044 = vld [vmem:[%s9030 + $0x68] sm:$0xff]
        %v9045 = vld [vmem:[%s9030 + $0x70] sm:$0xff]
        %v9046 = vld [vmem:[%s9030 + $0x78] sm:$0xff]
        %s9047 = scalar_lea.vmem %s19, 6
        %v9048 = vld [vmem:[%s9047] sm:$0x3]
        %v9050 = vperm.slane %v9048, 0
        %v9051 = vperm.slane %v9048, 1
        %v9055 = vsel %vm5470, %v9028, 0
        %v9058 = vsel %vm5470, %v9029, 0
        %9060 = vmatpush.msra.mxu0 0.0
        %9061 = vmatpush.msra.mxu0 0.0
        %9062 = vmatpush.msra.mxu0 0.0
        %9063 = vmatpush.msra.mxu0 0.0
        %9064 = vmatpush.msra.mxu0 0.0
        %9065 = vmatpush.msra.mxu0 0.0
        %9066 = vmatpush.msra.mxu0 0.0
        %9067 = vmatpush.msra.mxu0 0.0
        %9068 = vmatpush.msra.mxu0 %v9045
        %9069 = vmatpush.msra.mxu0 %v9043
        %9070 = vmatpush.msra.mxu0 %v9041
        %9071 = vmatpush.msra.mxu0 %v9039
        %9072 = vmatpush.msra.mxu0 %v9037
        %9073 = vmatpush.msra.mxu0 %v9035
        %9074 = vmatpush.msra.mxu0 %v9033
        %9075 = vmatpush.msra.mxu0 %v9031
        %9076 = vmatmul.f32.gmra.mxu0 %v9055
        %v9077 = vpop.f32.mrf.mxu0
        %v9078 = vadd.f32 %v9050, %v9077
        %9079 = vmatmul.f32.gmra.mxu0 %v9058
        %v9080 = vpop.f32.mrf.mxu0
        %v9081 = vadd.f32 %v9050, %v9080
        %9082 = vdwg.mxu0
        %9083 = vmatpush.msra.mxu0 0.0
        %9084 = vmatpush.msra.mxu0 0.0
        %9085 = vmatpush.msra.mxu0 0.0
        %9086 = vmatpush.msra.mxu0 0.0
        %9087 = vmatpush.msra.mxu0 0.0
        %9088 = vmatpush.msra.mxu0 0.0
        %9089 = vmatpush.msra.mxu0 0.0
        %9090 = vmatpush.msra.mxu0 0.0
        %9091 = vmatpush.msra.mxu0 %v9046
        %9092 = vmatpush.msra.mxu0 %v9044
        %9093 = vmatpush.msra.mxu0 %v9042
        %9094 = vmatpush.msra.mxu0 %v9040
        %9095 = vmatpush.msra.mxu0 %v9038
        %9096 = vmatpush.msra.mxu0 %v9036
        %9097 = vmatpush.msra.mxu0 %v9034
        %9098 = vmatpush.msra.mxu0 %v9032
        %9099 = vmatmul.f32.gmra.mxu0 %v9055
        %v9100 = vpop.f32.mrf.mxu0
        %v9101 = vadd.f32 %v9051, %v9100
        %9102 = vmatmul.f32.gmra.mxu0 %v9058
        %v9103 = vpop.f32.mrf.mxu0
        %v9104 = vadd.f32 %v9051, %v9103
        %9105 = vdwg.mxu0
        %9108 = vrot.lane.b32.xlu0 %v9078, 64
        %v9109 = vpop.permute.xlu0 %9108
        %9110 = vrot.lane.b32.xlu0 %v9081, 64
        %v9111 = vpop.permute.xlu0 %9110
        %v9112 = vsel %vm5272, %v9078, 0
        %v9114 = vsel %vm5272, %v9081, 0
        %v9116 = vsel %vm5272, %v9109, 0
        %v9118 = vsel %vm5272, %v9111, 0
        %9120 = vmatpush.xpose.msra.mxu0 0.0
        %9121 = vmatpush.xpose.msra.mxu0 0.0
        %9122 = vmatpush.xpose.msra.mxu0 0.0
        %9123 = vmatpush.xpose.msra.mxu0 0.0
        %9124 = vmatpush.xpose.msra.mxu0 0.0
        %9125 = vmatpush.xpose.msra.mxu0 0.0
        %9126 = vmatpush.xpose.msra.mxu0 0.0
        %9127 = vmatpush.xpose.msra.mxu0 0.0
        %9128 = vmatpush.xpose.msra.mxu0 0.0
        %9129 = vmatpush.xpose.msra.mxu0 0.0
        %9130 = vmatpush.xpose.msra.mxu0 0.0
        %9131 = vmatpush.xpose.msra.mxu0 0.0
        %9132 = vmatpush.xpose.msra.mxu0 0.0
        %9133 = vmatpush.xpose.msra.mxu0 0.0
        %9134 = vmatpush.xpose.msra.mxu0 %v9118
        %9135 = vmatpush.xpose.msra.mxu0 %v9116
        %9136 = vmatmul.f32.gmra.mxu0 %v9112
        %v9137 = vpop.f32.mrf.mxu0
        %v9138 = vadd.f32 0.0, %v9137
        %9139 = vmatmul.f32.gmra.mxu0 %v9114
        %v9140 = vpop.f32.mrf.mxu0
        %v9141 = vadd.f32 0.0, %v9140
        %9142 = vdwg.mxu0
        %v9143 = vsel %vm5272, %v9138, -inf
        %9144 = vmax.xlane.f32.xlu0 %v9143
        %v9145 = vpop.xlane.xlu0 %9144
        %v9146 = vsel %vm5272, %v9141, -inf
        %9147 = vmax.xlane.f32.xlu0 %v9146
        %v9148 = vpop.xlane.xlu0 %9147
        %v9149 = vsub.f32 %v9138, %v9145
        %v9150 = vsub.f32 %v9141, %v9148
        %v9151 = vmul.f32 %v9149, 1.442695
        %v9152 = vpow.pop %v9151
        %v9153 = vmul.f32 %v9150, 1.442695
        %v9154 = vpow.pop %v9153
        %v9155 = vsel %vm5272, %v9152, 0.0
        %9156 = vadd.xlane.f32.xlu0 %v9155
        %v9157 = vpop.xlane.xlu0 %9156
        %v9158 = vsel %vm5272, %v9154, 0.0
        %9159 = vadd.xlane.f32.xlu0 %v9158
        %v9160 = vpop.xlane.xlu0 %9159
        %v9161 = vrcp.pop %v9157
        %v9162 = vrcp.pop %v9160
        %v9163 = vmul.f32 %v9152, %v9161
        %v9164 = vmul.f32 %v9154, %v9162
        %v9166 = vsel %vm5272, %v9163, 0
        %v9169 = vsel %vm5272, %v9164, 0
        %9171 = vmatpush.msra.mxu0 0.0
        %9172 = vmatpush.msra.mxu0 0.0
        %9173 = vmatpush.msra.mxu0 0.0
        %9174 = vmatpush.msra.mxu0 0.0
        %9175 = vmatpush.msra.mxu0 0.0
        %9176 = vmatpush.msra.mxu0 0.0
        %9177 = vmatpush.msra.mxu0 0.0
        %9178 = vmatpush.msra.mxu0 0.0
        %9179 = vmatpush.msra.mxu0 0.0
        %9180 = vmatpush.msra.mxu0 0.0
        %9181 = vmatpush.msra.mxu0 0.0
        %9182 = vmatpush.msra.mxu0 0.0
        %9183 = vmatpush.msra.mxu0 0.0
        %9184 = vmatpush.msra.mxu0 0.0
        %9185 = vmatpush.msra.mxu0 %v9104
        %9186 = vmatpush.msra.mxu0 %v9101
        %9187 = vmatmul.f32.gmra.mxu0 %v9166
        %v9188 = vpop.f32.mrf.mxu0
        %v9189 = vadd.f32 0.0, %v9188
        %9190 = vmatmul.f32.gmra.mxu0 %v9169
        %v9191 = vpop.f32.mrf.mxu0
        %v9192 = vadd.f32 0.0, %v9191
        %9193 = vdwg.mxu0
        %9194 = vrot.lane.b32.xlu0 %v9078, 112
        %v9195 = vpop.permute.xlu0 %9194
        %9196 = vrot.lane.b32.xlu0 %v9081, 112
        %v9197 = vpop.permute.xlu0 %9196
        %9198 = vrot.lane.b32.xlu0 %v9078, 48
        %v9199 = vpop.permute.xlu0 %9198
        %9200 = vrot.lane.b32.xlu0 %v9081, 48
        %v9201 = vpop.permute.xlu0 %9200
        %v9202 = vsel %vm5272, %v9195, 0
        %v9204 = vsel %vm5272, %v9197, 0
        %v9206 = vsel %vm5272, %v9199, 0
        %v9208 = vsel %vm5272, %v9201, 0
        %9210 = vmatpush.xpose.msra.mxu0 0.0
        %9211 = vmatpush.xpose.msra.mxu0 0.0
        %9212 = vmatpush.xpose.msra.mxu0 0.0
        %9213 = vmatpush.xpose.msra.mxu0 0.0
        %9214 = vmatpush.xpose.msra.mxu0 0.0
        %9215 = vmatpush.xpose.msra.mxu0 0.0
        %9216 = vmatpush.xpose.msra.mxu0 0.0
        %9217 = vmatpush.xpose.msra.mxu0 0.0
        %9218 = vmatpush.xpose.msra.mxu0 0.0
        %9219 = vmatpush.xpose.msra.mxu0 0.0
        %9220 = vmatpush.xpose.msra.mxu0 0.0
        %9221 = vmatpush.xpose.msra.mxu0 0.0
        %9222 = vmatpush.xpose.msra.mxu0 0.0
        %9223 = vmatpush.xpose.msra.mxu0 0.0
        %9224 = vmatpush.xpose.msra.mxu0 %v9208
        %9225 = vmatpush.xpose.msra.mxu0 %v9206
        %9226 = vmatmul.f32.gmra.mxu0 %v9202
        %v9227 = vpop.f32.mrf.mxu0
        %v9228 = vadd.f32 0.0, %v9227
        %9229 = vmatmul.f32.gmra.mxu0 %v9204
        %v9230 = vpop.f32.mrf.mxu0
        %v9231 = vadd.f32 0.0, %v9230
        %9232 = vdwg.mxu0
        %v9233 = vsel %vm5272, %v9228, -inf
        %9234 = vmax.xlane.f32.xlu0 %v9233
        %v9235 = vpop.xlane.xlu0 %9234
        %v9236 = vsel %vm5272, %v9231, -inf
        %9237 = vmax.xlane.f32.xlu0 %v9236
        %v9238 = vpop.xlane.xlu0 %9237
        %v9239 = vsub.f32 %v9228, %v9235
        %v9240 = vsub.f32 %v9231, %v9238
        %v9241 = vmul.f32 %v9239, 1.442695
        %v9242 = vpow.pop %v9241
        %v9243 = vmul.f32 %v9240, 1.442695
        %v9244 = vpow.pop %v9243
        %v9245 = vsel %vm5272, %v9242, 0.0
        %9246 = vadd.xlane.f32.xlu0 %v9245
        %v9247 = vpop.xlane.xlu0 %9246
        %v9248 = vsel %vm5272, %v9244, 0.0
        %9249 = vadd.xlane.f32.xlu0 %v9248
        %v9250 = vpop.xlane.xlu0 %9249
        %v9251 = vrcp.pop %v9247
        %v9252 = vrcp.pop %v9250
        %v9253 = vmul.f32 %v9242, %v9251
        %v9254 = vmul.f32 %v9244, %v9252
        %9257 = vrot.lane.b32.xlu0 %v9101, 112
        %v9258 = vpop.permute.xlu0 %9257
        %9259 = vrot.lane.b32.xlu0 %v9104, 112
        %v9260 = vpop.permute.xlu0 %9259
        %v9264 = vsel %vm5272, %v9253, 0
        %v9267 = vsel %vm5272, %v9254, 0
        %9269 = vmatpush.msra.mxu0 0.0
        %9270 = vmatpush.msra.mxu0 0.0
        %9271 = vmatpush.msra.mxu0 0.0
        %9272 = vmatpush.msra.mxu0 0.0
        %9273 = vmatpush.msra.mxu0 0.0
        %9274 = vmatpush.msra.mxu0 0.0
        %9275 = vmatpush.msra.mxu0 0.0
        %9276 = vmatpush.msra.mxu0 0.0
        %9277 = vmatpush.msra.mxu0 0.0
        %9278 = vmatpush.msra.mxu0 0.0
        %9279 = vmatpush.msra.mxu0 0.0
        %9280 = vmatpush.msra.mxu0 0.0
        %9281 = vmatpush.msra.mxu0 0.0
        %9282 = vmatpush.msra.mxu0 0.0
        %9283 = vmatpush.msra.mxu0 %v9260
        %9284 = vmatpush.msra.mxu0 %v9258
        %9285 = vmatmul.f32.gmra.mxu0 %v9264
        %v9286 = vpop.f32.mrf.mxu0
        %v9287 = vadd.f32 0.0, %v9286
        %9288 = vmatmul.f32.gmra.mxu0 %v9267
        %v9289 = vpop.f32.mrf.mxu0
        %v9290 = vadd.f32 0.0, %v9289
        %9291 = vdwg.mxu0
        %9292 = vrot.lane.b32.xlu0 %v9078, 96
        %v9293 = vpop.permute.xlu0 %9292
        %9294 = vrot.lane.b32.xlu0 %v9081, 96
        %v9295 = vpop.permute.xlu0 %9294
        %9296 = vrot.lane.b32.xlu0 %v9078, 32
        %v9297 = vpop.permute.xlu0 %9296
        %9298 = vrot.lane.b32.xlu0 %v9081, 32
        %v9299 = vpop.permute.xlu0 %9298
        %v9300 = vsel %vm5272, %v9293, 0
        %v9302 = vsel %vm5272, %v9295, 0
        %v9304 = vsel %vm5272, %v9297, 0
        %v9306 = vsel %vm5272, %v9299, 0
        %9308 = vmatpush.xpose.msra.mxu0 0.0
        %9309 = vmatpush.xpose.msra.mxu0 0.0
        %9310 = vmatpush.xpose.msra.mxu0 0.0
        %9311 = vmatpush.xpose.msra.mxu0 0.0
        %9312 = vmatpush.xpose.msra.mxu0 0.0
        %9313 = vmatpush.xpose.msra.mxu0 0.0
        %9314 = vmatpush.xpose.msra.mxu0 0.0
        %9315 = vmatpush.xpose.msra.mxu0 0.0
        %9316 = vmatpush.xpose.msra.mxu0 0.0
        %9317 = vmatpush.xpose.msra.mxu0 0.0
        %9318 = vmatpush.xpose.msra.mxu0 0.0
        %9319 = vmatpush.xpose.msra.mxu0 0.0
        %9320 = vmatpush.xpose.msra.mxu0 0.0
        %9321 = vmatpush.xpose.msra.mxu0 0.0
        %9322 = vmatpush.xpose.msra.mxu0 %v9306
        %9323 = vmatpush.xpose.msra.mxu0 %v9304
        %9324 = vmatmul.f32.gmra.mxu0 %v9300
        %v9325 = vpop.f32.mrf.mxu0
        %v9326 = vadd.f32 0.0, %v9325
        %9327 = vmatmul.f32.gmra.mxu0 %v9302
        %v9328 = vpop.f32.mrf.mxu0
        %v9329 = vadd.f32 0.0, %v9328
        %9330 = vdwg.mxu0
        %v9331 = vsel %vm5272, %v9326, -inf
        %9332 = vmax.xlane.f32.xlu0 %v9331
        %v9333 = vpop.xlane.xlu0 %9332
        %v9334 = vsel %vm5272, %v9329, -inf
        %9335 = vmax.xlane.f32.xlu0 %v9334
        %v9336 = vpop.xlane.xlu0 %9335
        %v9337 = vsub.f32 %v9326, %v9333
        %v9338 = vsub.f32 %v9329, %v9336
        %v9339 = vmul.f32 %v9337, 1.442695
        %v9340 = vpow.pop %v9339
        %v9341 = vmul.f32 %v9338, 1.442695
        %v9342 = vpow.pop %v9341
        %v9343 = vsel %vm5272, %v9340, 0.0
        %9344 = vadd.xlane.f32.xlu0 %v9343
        %v9345 = vpop.xlane.xlu0 %9344
        %v9346 = vsel %vm5272, %v9342, 0.0
        %9347 = vadd.xlane.f32.xlu0 %v9346
        %v9348 = vpop.xlane.xlu0 %9347
        %v9349 = vrcp.pop %v9345
        %v9350 = vrcp.pop %v9348
        %v9351 = vmul.f32 %v9340, %v9349
        %v9352 = vmul.f32 %v9342, %v9350
        %9353 = vrot.lane.b32.xlu0 %v9101, 96
        %v9354 = vpop.permute.xlu0 %9353
        %9355 = vrot.lane.b32.xlu0 %v9104, 96
        %v9356 = vpop.permute.xlu0 %9355
        %v9360 = vsel %vm5272, %v9351, 0
        %v9363 = vsel %vm5272, %v9352, 0
        %9365 = vmatpush.msra.mxu0 0.0
        %9366 = vmatpush.msra.mxu0 0.0
        %9367 = vmatpush.msra.mxu0 0.0
        %9368 = vmatpush.msra.mxu0 0.0
        %9369 = vmatpush.msra.mxu0 0.0
        %9370 = vmatpush.msra.mxu0 0.0
        %9371 = vmatpush.msra.mxu0 0.0
        %9372 = vmatpush.msra.mxu0 0.0
        %9373 = vmatpush.msra.mxu0 0.0
        %9374 = vmatpush.msra.mxu0 0.0
        %9375 = vmatpush.msra.mxu0 0.0
        %9376 = vmatpush.msra.mxu0 0.0
        %9377 = vmatpush.msra.mxu0 0.0
        %9378 = vmatpush.msra.mxu0 0.0
        %9379 = vmatpush.msra.mxu0 %v9356
        %9380 = vmatpush.msra.mxu0 %v9354
        %9381 = vmatmul.f32.gmra.mxu0 %v9360
        %v9382 = vpop.f32.mrf.mxu0
        %v9383 = vadd.f32 0.0, %v9382
        %9384 = vmatmul.f32.gmra.mxu0 %v9363
        %v9385 = vpop.f32.mrf.mxu0
        %v9386 = vadd.f32 0.0, %v9385
        %9387 = vdwg.mxu0
        %9388 = vrot.lane.b32.xlu0 %v9078, 80
        %v9389 = vpop.permute.xlu0 %9388
        %9390 = vrot.lane.b32.xlu0 %v9081, 80
        %v9391 = vpop.permute.xlu0 %9390
        %9392 = vrot.lane.b32.xlu0 %v9078, 16
        %v9393 = vpop.permute.xlu0 %9392
        %9394 = vrot.lane.b32.xlu0 %v9081, 16
        %v9395 = vpop.permute.xlu0 %9394
        %v9396 = vsel %vm5272, %v9389, 0
        %v9398 = vsel %vm5272, %v9391, 0
        %v9400 = vsel %vm5272, %v9393, 0
        %v9402 = vsel %vm5272, %v9395, 0
        %9404 = vmatpush.xpose.msra.mxu0 0.0
        %9405 = vmatpush.xpose.msra.mxu0 0.0
        %9406 = vmatpush.xpose.msra.mxu0 0.0
        %9407 = vmatpush.xpose.msra.mxu0 0.0
        %9408 = vmatpush.xpose.msra.mxu0 0.0
        %9409 = vmatpush.xpose.msra.mxu0 0.0
        %9410 = vmatpush.xpose.msra.mxu0 0.0
        %9411 = vmatpush.xpose.msra.mxu0 0.0
        %9412 = vmatpush.xpose.msra.mxu0 0.0
        %9413 = vmatpush.xpose.msra.mxu0 0.0
        %9414 = vmatpush.xpose.msra.mxu0 0.0
        %9415 = vmatpush.xpose.msra.mxu0 0.0
        %9416 = vmatpush.xpose.msra.mxu0 0.0
        %9417 = vmatpush.xpose.msra.mxu0 0.0
        %9418 = vmatpush.xpose.msra.mxu0 %v9402
        %9419 = vmatpush.xpose.msra.mxu0 %v9400
        %9420 = vmatmul.f32.gmra.mxu0 %v9396
        %v9421 = vpop.f32.mrf.mxu0
        %v9422 = vadd.f32 0.0, %v9421
        %9423 = vmatmul.f32.gmra.mxu0 %v9398
        %v9424 = vpop.f32.mrf.mxu0
        %v9425 = vadd.f32 0.0, %v9424
        %9426 = vdwg.mxu0
        %v9427 = vsel %vm5272, %v9422, -inf
        %9428 = vmax.xlane.f32.xlu0 %v9427
        %v9429 = vpop.xlane.xlu0 %9428
        %v9430 = vsel %vm5272, %v9425, -inf
        %9431 = vmax.xlane.f32.xlu0 %v9430
        %v9432 = vpop.xlane.xlu0 %9431
        %v9433 = vsub.f32 %v9422, %v9429
        %v9434 = vsub.f32 %v9425, %v9432
        %v9435 = vmul.f32 %v9433, 1.442695
        %v9436 = vpow.pop %v9435
        %v9437 = vmul.f32 %v9434, 1.442695
        %v9438 = vpow.pop %v9437
        %v9439 = vsel %vm5272, %v9436, 0.0
        %9440 = vadd.xlane.f32.xlu0 %v9439
        %v9441 = vpop.xlane.xlu0 %9440
        %v9442 = vsel %vm5272, %v9438, 0.0
        %9443 = vadd.xlane.f32.xlu0 %v9442
        %v9444 = vpop.xlane.xlu0 %9443
        %v9445 = vrcp.pop %v9441
        %v9446 = vrcp.pop %v9444
        %v9447 = vmul.f32 %v9436, %v9445
        %v9448 = vmul.f32 %v9438, %v9446
        %9449 = vrot.lane.b32.xlu0 %v9101, 80
        %v9450 = vpop.permute.xlu0 %9449
        %9451 = vrot.lane.b32.xlu0 %v9104, 80
        %v9452 = vpop.permute.xlu0 %9451
        %v9456 = vsel %vm5272, %v9447, 0
        %v9459 = vsel %vm5272, %v9448, 0
        %9461 = vmatpush.msra.mxu0 0.0
        %9462 = vmatpush.msra.mxu0 0.0
        %9463 = vmatpush.msra.mxu0 0.0
        %9464 = vmatpush.msra.mxu0 0.0
        %9465 = vmatpush.msra.mxu0 0.0
        %9466 = vmatpush.msra.mxu0 0.0
        %9467 = vmatpush.msra.mxu0 0.0
        %9468 = vmatpush.msra.mxu0 0.0
        %9469 = vmatpush.msra.mxu0 0.0
        %9470 = vmatpush.msra.mxu0 0.0
        %9471 = vmatpush.msra.mxu0 0.0
        %9472 = vmatpush.msra.mxu0 0.0
        %9473 = vmatpush.msra.mxu0 0.0
        %9474 = vmatpush.msra.mxu0 0.0
        %9475 = vmatpush.msra.mxu0 %v9452
        %9476 = vmatpush.msra.mxu0 %v9450
        %9477 = vmatmul.f32.gmra.mxu0 %v9456
        %v9478 = vpop.f32.mrf.mxu0
        %v9479 = vadd.f32 0.0, %v9478
        %9480 = vmatmul.f32.gmra.mxu0 %v9459
        %v9481 = vpop.f32.mrf.mxu0
        %v9482 = vadd.f32 0.0, %v9481
        %9483 = vdwg.mxu0
        %9486 = vrot.lane.b32.xlu0 %v9287, 16
        %v9487 = vpop.permute.xlu0 %9486
        %9488 = vrot.lane.b32.xlu0 %v9290, 16
        %v9489 = vpop.permute.xlu0 %9488
        %9494 = vrot.lane.b32.xlu0 %v9383, 32
        %v9495 = vpop.permute.xlu0 %9494
        %9496 = vrot.lane.b32.xlu0 %v9386, 32
        %v9497 = vpop.permute.xlu0 %9496
        %9502 = vrot.lane.b32.xlu0 %v9479, 48
        %v9503 = vpop.permute.xlu0 %9502
        %9504 = vrot.lane.b32.xlu0 %v9482, 48
        %v9505 = vpop.permute.xlu0 %9504
        %v9508 = vsel %vm5272, %v9189, %v9487
        %v9509 = vsel %vm5272, %v9192, %v9489
        %v9510 = vsel %vm5338, %v9508, %v9495
        %v9511 = vsel %vm5338, %v9509, %v9497
        %v9512 = vsel %vm5404, %v9510, %v9503
        %v9513 = vsel %vm5404, %v9511, %v9505
        %s9514 = scalar_lea.vmem %s21, 192
        %v9515 = vld [vmem:[%s9514] sm:$0xff]
        %v9516 = vld [vmem:[%s9514 + $0x8] sm:$0xff]
        %v9517 = vld [vmem:[%s9514 + $0x10] sm:$0xff]
        %v9518 = vld [vmem:[%s9514 + $0x18] sm:$0xff]
        %v9519 = vld [vmem:[%s9514 + $0x20] sm:$0xff]
        %v9520 = vld [vmem:[%s9514 + $0x28] sm:$0xff]
        %v9521 = vld [vmem:[%s9514 + $0x30] sm:$0xff]
        %v9522 = vld [vmem:[%s9514 + $0x38] sm:$0xff]
        %s9523 = scalar_lea.vmem %s23, 3
        %v9524 = vld [vmem:[%s9523] sm:$0x1]
        %v9526 = vperm.slane %v9524, 0
        %v9529 = vsel %vm5470, %v9512, 0
        %v9532 = vsel %vm5470, %v9513, 0
        %9534 = vmatpush.msra.mxu0 0.0
        %9535 = vmatpush.msra.mxu0 0.0
        %9536 = vmatpush.msra.mxu0 0.0
        %9537 = vmatpush.msra.mxu0 0.0
        %9538 = vmatpush.msra.mxu0 0.0
        %9539 = vmatpush.msra.mxu0 0.0
        %9540 = vmatpush.msra.mxu0 0.0
        %9541 = vmatpush.msra.mxu0 0.0
        %9542 = vmatpush.msra.mxu0 %v9522
        %9543 = vmatpush.msra.mxu0 %v9521
        %9544 = vmatpush.msra.mxu0 %v9520
        %9545 = vmatpush.msra.mxu0 %v9519
        %9546 = vmatpush.msra.mxu0 %v9518
        %9547 = vmatpush.msra.mxu0 %v9517
        %9548 = vmatpush.msra.mxu0 %v9516
        %9549 = vmatpush.msra.mxu0 %v9515
        %9550 = vmatmul.f32.gmra.mxu0 %v9529
        %v9551 = vpop.f32.mrf.mxu0
        %v9552 = vadd.f32 %v9526, %v9551
        %9553 = vmatmul.f32.gmra.mxu0 %v9532
        %v9554 = vpop.f32.mrf.mxu0
        %v9555 = vadd.f32 %v9526, %v9554
        %9556 = vdwg.mxu0
        %v9557 = vadd.f32 %v9028, %v9552
        %v9558 = vadd.f32 %v9029, %v9555
        %s9559 = scalar_lea.vmem %s25, 3
        %v9560 = vld [vmem:[%s9559] sm:$0x1]
        %s9561 = scalar_lea.vmem %s27, 3
        %v9562 = vld [vmem:[%s9561] sm:$0x1]
        %v9563 = vsel %vm5470, %v9557, 0.0
        %9564 = vadd.xlane.f32.xlu0 %v9563
        %v9565 = vpop.xlane.xlu0 %9564
        %v9566 = vsel %vm5470, %v9558, 0.0
        %9567 = vadd.xlane.f32.xlu0 %v9566
        %v9568 = vpop.xlane.xlu0 %9567
        %v9569 = vmul.f32 %v9565, %v7117
        %v9570 = vmul.f32 %v9568, %v7117
        %v9571 = vsub.f32 %v9557, %v9569
        %v9572 = vsub.f32 %v9558, %v9570
        %v9573 = vmul.f32 %v9571, %v9571
        %v9574 = vmul.f32 %v9572, %v9572
        %v9575 = vsel %vm5470, %v9573, 0.0
        %9576 = vadd.xlane.f32.xlu0 %v9575
        %v9577 = vpop.xlane.xlu0 %9576
        %v9578 = vsel %vm5470, %v9574, 0.0
        %9579 = vadd.xlane.f32.xlu0 %v9578
        %v9580 = vpop.xlane.xlu0 %9579
        %v9581 = vmul.f32 %v9577, %v7117
        %v9582 = vmul.f32 %v9580, %v7117
        %v9583 = vadd.f32 %v9581, 1e-05
        %v9584 = vadd.f32 %v9582, 1e-05
        %v9585 = vrsqrt.pop %v9583
        %v9586 = vmul.f32 %v9585, %v9583
        %v9587 = vmul.f32 %v9586, %v9585
        %v9588 = vmul.f32 0.5, %v9587
        %v9589 = vsub.f32 1.5, %v9588
        %v9590 = vmul.f32 %v9585, %v9589
        %vm9591 = vweird.f32 %v9583
        %vm9592 = vweird.f32 %v9585
        %vm9593 = vmor %vm9591, %vm9592
        %v9594 = vsel %vm9593, %v9585, %v9590
        %v9595 = vrsqrt.pop %v9584
        %v9596 = vmul.f32 %v9595, %v9584
        %v9597 = vmul.f32 %v9596, %v9595
        %v9598 = vmul.f32 0.5, %v9597
        %v9599 = vsub.f32 1.5, %v9598
        %v9600 = vmul.f32 %v9595, %v9599
        %vm9601 = vweird.f32 %v9584
        %vm9602 = vweird.f32 %v9595
        %vm9603 = vmor %vm9601, %vm9602
        %v9604 = vsel %vm9603, %v9595, %v9600
        %v9605 = vmul.f32 %v9571, %v9594
        %v9606 = vmul.f32 %v9572, %v9604
        %v9608 = vperm.slane %v9560, 0
        %v9610 = vmul.f32 %v9605, %v9608
        %v9611 = vmul.f32 %v9606, %v9608
        %v9613 = vperm.slane %v9562, 0
        %v9615 = vadd.f32 %v9610, %v9613
        %v9616 = vadd.f32 %v9611, %v9613
        %s9617 = scalar_lea.vmem [#allocation2], 192
        %v9618 = vld [vmem:[%s9617] sm:$0xff]
        %v9619 = vld [vmem:[%s9617 + $0x8] sm:$0xff]
        %v9620 = vld [vmem:[%s9617 + $0x10] sm:$0xff]
        %v9621 = vld [vmem:[%s9617 + $0x18] sm:$0xff]
        %v9622 = vld [vmem:[%s9617 + $0x20] sm:$0xff]
        %v9623 = vld [vmem:[%s9617 + $0x28] sm:$0xff]
        %v9624 = vld [vmem:[%s9617 + $0x30] sm:$0xff]
        %v9625 = vld [vmem:[%s9617 + $0x38] sm:$0xff]
        %s9626 = scalar_lea.vmem %s31, 3
        %v9627 = vld [vmem:[%s9626] sm:$0x1]
        %v9629 = vperm.slane %v9627, 0
        %v9632 = vsel %vm5470, %v9615, 0
        %v9635 = vsel %vm5470, %v9616, 0
        %9637 = vmatpush.msra.mxu0 0.0
        %9638 = vmatpush.msra.mxu0 0.0
        %9639 = vmatpush.msra.mxu0 0.0
        %9640 = vmatpush.msra.mxu0 0.0
        %9641 = vmatpush.msra.mxu0 0.0
        %9642 = vmatpush.msra.mxu0 0.0
        %9643 = vmatpush.msra.mxu0 0.0
        %9644 = vmatpush.msra.mxu0 0.0
        %9645 = vmatpush.msra.mxu0 %v9625
        %9646 = vmatpush.msra.mxu0 %v9624
        %9647 = vmatpush.msra.mxu0 %v9623
        %9648 = vmatpush.msra.mxu0 %v9622
        %9649 = vmatpush.msra.mxu0 %v9621
        %9650 = vmatpush.msra.mxu0 %v9620
        %9651 = vmatpush.msra.mxu0 %v9619
        %9652 = vmatpush.msra.mxu0 %v9618
        %9653 = vmatmul.f32.gmra.mxu0 %v9632
        %v9654 = vpop.f32.mrf.mxu0
        %v9655 = vadd.f32 %v9629, %v9654
        %9656 = vmatmul.f32.gmra.mxu0 %v9635
        %v9657 = vpop.f32.mrf.mxu0
        %v9658 = vadd.f32 %v9629, %v9657
        %9659 = vdwg.mxu0
        %v9660 = vmul.f32 %v9655, 0.5
        %v9661 = vmul.f32 %v9658, 0.5
        %v9662 = vmul.f32 %v9655, 0.70710677
        %v9663 = vmul.f32 %v9658, 0.70710677
        %vm9664 = vcmp.ge.f32.partialorder %v9662, 0.0
        %vm9665 = vcmp.ge.f32.partialorder %v9663, 0.0
        %v9666 = vsel %vm9664, 1.0, -1.0
        %v9667 = vsel %vm9665, 1.0, -1.0
        %v9668 = vand.u32 2147483647, %v9662
        %v9669 = vand.u32 2147483647, %v9663
        %v9670 = vmul.f32 %v9668, 0.3275911
        %v9671 = vmul.f32 %v9669, 0.3275911
        %v9672 = vadd.f32 %v9670, 1.0
        %v9673 = vadd.f32 %v9671, 1.0
        %v9674 = vrcp.pop %v9672
        %v9675 = vmul.f32 %v9672, %v9674
        %v9676 = vsub.f32 1.0, %v9675
        %v9677 = vmul.f32 %v9674, %v9676
        %v9678 = vadd.f32 %v9674, %v9677
        %vm9679 = vweird.f32 %v9672
        %vm9680 = vweird.f32 %v9674
        %vm9681 = vmor %vm9679, %vm9680
        %v9682 = vsel %vm9681, %v9674, %v9678
        %v9683 = vand.u32 2147483647, %v9672
        %vm9684 = vcmp.eq.f32.partialorder %v9683, 8.507059e+37
        %v9685 = vand.u32 %v9672, 2147483648
        %v9686 = vor.u32 1.1754944e-38, %v9685
        %v9687 = vsel %vm9684, %v9686, %v9682
        %v9688 = vmul.f32 1.0, %v9687
        %v9689 = vrcp.pop %v9673
        %v9690 = vmul.f32 %v9673, %v9689
        %v9691 = vsub.f32 1.0, %v9690
        %v9692 = vmul.f32 %v9689, %v9691
        %v9693 = vadd.f32 %v9689, %v9692
        %vm9694 = vweird.f32 %v9673
        %vm9695 = vweird.f32 %v9689
        %vm9696 = vmor %vm9694, %vm9695
        %v9697 = vsel %vm9696, %v9689, %v9693
        %v9698 = vand.u32 2147483647, %v9673
        %vm9699 = vcmp.eq.f32.partialorder %v9698, 8.507059e+37
        %v9700 = vand.u32 %v9673, 2147483648
        %v9701 = vor.u32 1.1754944e-38, %v9700
        %v9702 = vsel %vm9699, %v9701, %v9697
        %v9703 = vmul.f32 1.0, %v9702
        %v9704 = vmul.f32 %v9688, 1.0614054
        %v9705 = vmul.f32 %v9703, 1.0614054
        %v9706 = vadd.f32 %v9704, -1.4531521
        %v9707 = vadd.f32 %v9705, -1.4531521
        %v9708 = vmul.f32 %v9706, %v9688
        %v9709 = vmul.f32 %v9707, %v9703
        %v9710 = vadd.f32 %v9708, 1.4214138
        %v9711 = vadd.f32 %v9709, 1.4214138
        %v9712 = vmul.f32 %v9710, %v9688
        %v9713 = vmul.f32 %v9711, %v9703
        %v9714 = vadd.f32 %v9712, -0.28449672
        %v9715 = vadd.f32 %v9713, -0.28449672
        %v9716 = vmul.f32 %v9714, %v9688
        %v9717 = vmul.f32 %v9715, %v9703
        %v9718 = vadd.f32 %v9716, 0.2548296
        %v9719 = vadd.f32 %v9717, 0.2548296
        %v9720 = vmul.f32 %v9718, %v9688
        %v9721 = vmul.f32 %v9719, %v9703
        %v9722 = vsub.f32 0.0, %v9668
        %v9723 = vsub.f32 0.0, %v9669
        %v9724 = vmul.f32 %v9722, %v9668
        %v9725 = vmul.f32 %v9723, %v9669
        %v9726 = vmul.f32 %v9724, 1.442695
        %v9727 = vpow.pop %v9726
        %v9728 = vmul.f32 %v9725, 1.442695
        %v9729 = vpow.pop %v9728
        %v9730 = vmul.f32 %v9720, %v9727
        %v9731 = vmul.f32 %v9721, %v9729
        %v9732 = vsub.f32 1.0, %v9730
        %v9733 = vsub.f32 1.0, %v9731
        %v9734 = vmul.f32 %v9666, %v9732
        %v9735 = vmul.f32 %v9667, %v9733
        %v9736 = vadd.f32 %v9734, 1.0
        %v9737 = vadd.f32 %v9735, 1.0
        %v9738 = vmul.f32 %v9660, %v9736
        %v9739 = vmul.f32 %v9661, %v9737
        %s9740 = scalar_lea.vmem %s33, 384
        %v9741 = vld [vmem:[%s9740] sm:$0xff]
        %v9742 = vld [vmem:[%s9740 + $0x8] sm:$0xff]
        %v9743 = vld [vmem:[%s9740 + $0x10] sm:$0xff]
        %v9744 = vld [vmem:[%s9740 + $0x18] sm:$0xff]
        %v9745 = vld [vmem:[%s9740 + $0x20] sm:$0xff]
        %v9746 = vld [vmem:[%s9740 + $0x28] sm:$0xff]
        %v9747 = vld [vmem:[%s9740 + $0x30] sm:$0xff]
        %v9748 = vld [vmem:[%s9740 + $0x38] sm:$0xff]
        %v9749 = vld [vmem:[%s9740 + $0x40] sm:$0xff]
        %v9750 = vld [vmem:[%s9740 + $0x48] sm:$0xff]
        %v9751 = vld [vmem:[%s9740 + $0x50] sm:$0xff]
        %v9752 = vld [vmem:[%s9740 + $0x58] sm:$0xff]
        %v9753 = vld [vmem:[%s9740 + $0x60] sm:$0xff]
        %v9754 = vld [vmem:[%s9740 + $0x68] sm:$0xff]
        %v9755 = vld [vmem:[%s9740 + $0x70] sm:$0xff]
        %v9756 = vld [vmem:[%s9740 + $0x78] sm:$0xff]
        %s9757 = scalar_lea.vmem %s35, 3
        %v9758 = vld [vmem:[%s9757] sm:$0x1]
        %v9760 = vperm.slane %v9758, 0
        %9762 = vmatpush.msra.mxu0 %v9756
        %9763 = vmatpush.msra.mxu0 %v9755
        %9764 = vmatpush.msra.mxu0 %v9754
        %9765 = vmatpush.msra.mxu0 %v9753
        %9766 = vmatpush.msra.mxu0 %v9752
        %9767 = vmatpush.msra.mxu0 %v9751
        %9768 = vmatpush.msra.mxu0 %v9750
        %9769 = vmatpush.msra.mxu0 %v9749
        %9770 = vmatpush.msra.mxu0 %v9748
        %9771 = vmatpush.msra.mxu0 %v9747
        %9772 = vmatpush.msra.mxu0 %v9746
        %9773 = vmatpush.msra.mxu0 %v9745
        %9774 = vmatpush.msra.mxu0 %v9744
        %9775 = vmatpush.msra.mxu0 %v9743
        %9776 = vmatpush.msra.mxu0 %v9742
        %9777 = vmatpush.msra.mxu0 %v9741
        %9778 = vmatmul.f32.gmra.mxu0 %v9738
        %v9779 = vpop.f32.mrf.mxu0
        %v9780 = vadd.f32 %v9760, %v9779
        %9781 = vmatmul.f32.gmra.mxu0 %v9739
        %v9782 = vpop.f32.mrf.mxu0
        %v9783 = vadd.f32 %v9760, %v9782
        %9784 = vdwg.mxu0
        %v9785 = vadd.f32 %v9615, %v9780
        %v9786 = vadd.f32 %v9616, %v9783
        %s9787 = scalar_lea.vmem %s37, 3
        %v9788 = vld [vmem:[%s9787] sm:$0x1]
        %s9789 = scalar_lea.vmem %s39, 3
        %v9790 = vld [vmem:[%s9789] sm:$0x1]
        %v9791 = vsel %vm5470, %v9785, 0.0
        %9792 = vadd.xlane.f32.xlu0 %v9791
        %v9793 = vpop.xlane.xlu0 %9792
        %v9794 = vsel %vm5470, %v9786, 0.0
        %9795 = vadd.xlane.f32.xlu0 %v9794
        %v9796 = vpop.xlane.xlu0 %9795
        %v9797 = vmul.f32 %v9793, %v7117
        %v9798 = vmul.f32 %v9796, %v7117
        %v9799 = vsub.f32 %v9785, %v9797
        %v9800 = vsub.f32 %v9786, %v9798
        %v9801 = vmul.f32 %v9799, %v9799
        %v9802 = vmul.f32 %v9800, %v9800
        %v9803 = vsel %vm5470, %v9801, 0.0
        %9804 = vadd.xlane.f32.xlu0 %v9803
        %v9805 = vpop.xlane.xlu0 %9804
        %v9806 = vsel %vm5470, %v9802, 0.0
        %9807 = vadd.xlane.f32.xlu0 %v9806
        %v9808 = vpop.xlane.xlu0 %9807
        %v9809 = vmul.f32 %v9805, %v7117
        %v9810 = vmul.f32 %v9808, %v7117
        %v9811 = vadd.f32 %v9809, 1e-05
        %v9812 = vadd.f32 %v9810, 1e-05
        %v9813 = vrsqrt.pop %v9811
        %v9814 = vmul.f32 %v9813, %v9811
        %v9815 = vmul.f32 %v9814, %v9813
        %v9816 = vmul.f32 0.5, %v9815
        %v9817 = vsub.f32 1.5, %v9816
        %v9818 = vmul.f32 %v9813, %v9817
        %vm9819 = vweird.f32 %v9811
        %vm9820 = vweird.f32 %v9813
        %vm9821 = vmor %vm9819, %vm9820
        %v9822 = vsel %vm9821, %v9813, %v9818
        %v9823 = vrsqrt.pop %v9812
        %v9824 = vmul.f32 %v9823, %v9812
        %v9825 = vmul.f32 %v9824, %v9823
        %v9826 = vmul.f32 0.5, %v9825
        %v9827 = vsub.f32 1.5, %v9826
        %v9828 = vmul.f32 %v9823, %v9827
        %vm9829 = vweird.f32 %v9812
        %vm9830 = vweird.f32 %v9823
        %vm9831 = vmor %vm9829, %vm9830
        %v9832 = vsel %vm9831, %v9823, %v9828
        %v9833 = vmul.f32 %v9799, %v9822
        %v9834 = vmul.f32 %v9800, %v9832
        %v9836 = vperm.slane %v9788, 0
        %v9838 = vmul.f32 %v9833, %v9836
        %v9839 = vmul.f32 %v9834, %v9836
        %v9841 = vperm.slane %v9790, 0
        %v9843 = vadd.f32 %v9838, %v9841
        %v9844 = vadd.f32 %v9839, %v9841
        %v9845 = vsel %vm5470, %v9843, 0.0
        %v9846 = vsel %vm5470, %v9844, 0.0
        %v9847 = vadd.f32 %v9845, %v9846
        %v9848 = vrot.slane %v9847, 4
        %v9849 = vadd.f32 %v9847, %v9848
        %v9850 = vrot.slane %v9849, 2
        %v9851 = vadd.f32 %v9849, %v9850
        %v9852 = vrot.slane %v9851, 1
        %v9853 = vadd.f32 %v9851, %v9852
        %v9854 = vmul.f32 %v9853, 0.0625
        %v9855 = vld [vmem:[%s41] sm:$0x1]
        %v9856 = vld [vmem:[%s43] sm:$0x1]
        %v9857 = vsel %vm5470, %v9854, 0.0
        %9858 = vadd.xlane.f32.xlu0 %v9857
        %v9859 = vpop.xlane.xlu0 %9858
        %v9860 = vmul.f32 %v9859, %v7117
        %v9861 = vsub.f32 %v9854, %v9860
        %v9862 = vmul.f32 %v9861, %v9861
        %v9863 = vsel %vm5470, %v9862, 0.0
        %9864 = vadd.xlane.f32.xlu0 %v9863
        %v9865 = vpop.xlane.xlu0 %9864
        %v9866 = vmul.f32 %v9865, %v7117
        %v9867 = vadd.f32 %v9866, 1e-05
        %v9868 = vrsqrt.pop %v9867
        %v9869 = vmul.f32 %v9868, %v9867
        %v9870 = vmul.f32 %v9869, %v9868
        %v9871 = vmul.f32 0.5, %v9870
        %v9872 = vsub.f32 1.5, %v9871
        %v9873 = vmul.f32 %v9868, %v9872
        %vm9874 = vweird.f32 %v9867
        %vm9875 = vweird.f32 %v9868
        %vm9876 = vmor %vm9874, %vm9875
        %v9877 = vsel %vm9876, %v9868, %v9873
        %v9878 = vmul.f32 %v9861, %v9877
        %v9879 = vmul.f32 %v9878, %v9855
        %v9880 = vadd.f32 %v9879, %v9856
        %v9881 = vld [vmem:[%s45] sm:$0xff]
        %v9882 = vld [vmem:[%s45 + $0x8] sm:$0xff]
        %v9883 = vld [vmem:[%s45 + $0x10] sm:$0xff]
        %v9884 = vld [vmem:[%s45 + $0x18] sm:$0xff]
        %v9885 = vld [vmem:[%s45 + $0x20] sm:$0xff]
        %v9886 = vld [vmem:[%s45 + $0x28] sm:$0xff]
        %v9887 = vld [vmem:[%s45 + $0x30] sm:$0xff]
        %v9888 = vld [vmem:[%s45 + $0x38] sm:$0xff]
        %v9889 = vld [vmem:[%s47] sm:$0x1]
        %v9891 = vsel %vm5470, %v9880, 0
        %9893 = vmatpush.msra.mxu0 0.0
        %9894 = vmatpush.msra.mxu0 0.0
        %9895 = vmatpush.msra.mxu0 0.0
        %9896 = vmatpush.msra.mxu0 0.0
        %9897 = vmatpush.msra.mxu0 0.0
        %9898 = vmatpush.msra.mxu0 0.0
        %9899 = vmatpush.msra.mxu0 0.0
        %9900 = vmatpush.msra.mxu0 0.0
        %9901 = vmatpush.msra.mxu0 %v9888
        %9902 = vmatpush.msra.mxu0 %v9887
        %9903 = vmatpush.msra.mxu0 %v9886
        %9904 = vmatpush.msra.mxu0 %v9885
        %9905 = vmatpush.msra.mxu0 %v9884
        %9906 = vmatpush.msra.mxu0 %v9883
        %9907 = vmatpush.msra.mxu0 %v9882
        %9908 = vmatpush.msra.mxu0 %v9881
        %9909 = vmatmul.f32.gmra.mxu0 %v9891
        %v9910 = vpop.f32.mrf.mxu0
        %v9911 = vadd.f32 %v9889, %v9910
        %9912 = vdwg.mxu0
        %vm9913 = vcmask 24576
        %9914 = vst.msk [vmem:[%s915] sm:$0x1] %vm9913, %v9911
        %v9915 = vld [vmem:[%s49] sm:$0x1]
        %v9916 = vld [vmem:[%s51] sm:$0x1]
        %v9917 = vmul.f32 %v9878, %v9915
        %v9918 = vadd.f32 %v9917, %v9916
        %v9919 = vld [vmem:[%s53] sm:$0xff]
        %v9920 = vld [vmem:[%s53 + $0x8] sm:$0xff]
        %v9921 = vld [vmem:[%s53 + $0x10] sm:$0xff]
        %v9922 = vld [vmem:[%s53 + $0x18] sm:$0xff]
        %v9923 = vld [vmem:[%s53 + $0x20] sm:$0xff]
        %v9924 = vld [vmem:[%s53 + $0x28] sm:$0xff]
        %v9925 = vld [vmem:[%s53 + $0x30] sm:$0xff]
        %v9926 = vld [vmem:[%s53 + $0x38] sm:$0xff]
        %v9927 = vld [vmem:[%s55] sm:$0x1]
        %v9929 = vsel %vm5470, %v9918, 0
        %9931 = vmatpush.msra.mxu0 0.0
        %9932 = vmatpush.msra.mxu0 0.0
        %9933 = vmatpush.msra.mxu0 0.0
        %9934 = vmatpush.msra.mxu0 0.0
        %9935 = vmatpush.msra.mxu0 0.0
        %9936 = vmatpush.msra.mxu0 0.0
        %9937 = vmatpush.msra.mxu0 0.0
        %9938 = vmatpush.msra.mxu0 0.0
        %9939 = vmatpush.msra.mxu0 %v9926
        %9940 = vmatpush.msra.mxu0 %v9925
        %9941 = vmatpush.msra.mxu0 %v9924
        %9942 = vmatpush.msra.mxu0 %v9923
        %9943 = vmatpush.msra.mxu0 %v9922
        %9944 = vmatpush.msra.mxu0 %v9921
        %9945 = vmatpush.msra.mxu0 %v9920
        %9946 = vmatpush.msra.mxu0 %v9919
        %9947 = vmatmul.f32.gmra.mxu0 %v9929
        %v9948 = vpop.f32.mrf.mxu0
        %v9949 = vadd.f32 %v9927, %v9948
        %9950 = vdwg.mxu0
        %vm9951 = vcmask 16384
        %9952 = vst.msk [vmem:[%s921] sm:$0x1] %vm9951, %v9949
        %s9953 = sand.u32 %s679, 1
        %s9954 = scalar_lea.sflag [#allocation4], %s9953
        %s9955 = sand.u32 %s679, 1
        %s9956 = scalar_lea.vmem [#allocation5], %s9955
        %s9957 = sand.u32 %s705, 1
        %s9958 = scalar_lea.sflag [#allocation7], %s9957
        %s9959 = sand.u32 %s705, 1
        %s9960 = scalar_lea.vmem [#allocation6], %s9959
        // Predicated region
        $region137: #{dsvit_forward.1} parent=131 // pred_check
          %p9961 = pneg %p689
        $region138: #{dsvit_forward.1} parent=131 // pred_check_branch
          %9963 = sbr.rel (%p9961) target = $region140
        $region139: #{dsvit_forward.1} parent=131 // pred_region
          %9965 = vsyncadd %s9954, 0
          %s9966 = scalar_lea.hbm %s57, %s78
          %s9968 = sshll.u32 %s9956, 4
          %s9969 = int_to_ptr.vmem [resolvable:$true] %s9968
          %s9970 = sshll.u32 %s9966, 4
          %s9971 = int_to_ptr.hbm [resolvable:$true] %s9970
          %9973 = dma.vmem_to_hbm [thread:$0]  %s9969, 16, %s9971, %s9954
        $region140: #{dsvit_forward.1} parent=131 // pred_fallthru
          _
        // Predicated region
        $region141: #{dsvit_forward.1} parent=131 // pred_check
          %p9974 = pneg %p715
        $region142: #{dsvit_forward.1} parent=131 // pred_check_branch
          %9976 = sbr.rel (%p9974) target = $region144
        $region143: #{dsvit_forward.1} parent=131 // pred_region
          %9978 = vsyncadd %s9958, 0
          %s9979 = scalar_lea.hbm %s59, %s78
          %s9981 = sshll.u32 %s9960, 4
          %s9982 = int_to_ptr.vmem [resolvable:$true] %s9981
          %s9983 = sshll.u32 %s9979, 4
          %s9984 = int_to_ptr.hbm [resolvable:$true] %s9983
          %9986 = dma.vmem_to_hbm [thread:$0]  %s9982, 16, %s9984, %s9958
        $region144: #{dsvit_forward.1} parent=131 // pred_fallthru
          _
      $region132: #{dsvit_forward.1} parent=5 // pred_fallthru
        _
      %p9987 = scmp.le.s32.totalorder 2, %s73
      // Predicated region
      $region145: #{dsvit_forward.1} parent=5 // pred_check
        %p9988 = pneg %p9987
      $region146: #{dsvit_forward.1} parent=5 // pred_check_branch
        %9990 = sbr.rel (%p9988) target = $region148
      $region147: #{dsvit_forward.1} parent=5 // pred_region
        %s9991 = ssub.s32 %s73, 2
        // Predicated region
        $region149: #{dsvit_forward.1} parent=147 // pred_check
          %p9992 = pneg %p695
        $region150: #{dsvit_forward.1} parent=147 // pred_check_branch
          %9994 = sbr.rel (%p9992) target = $region152
        $region151: #{dsvit_forward.1} parent=147 // pred_region
          %s9995 = sand.u32 %s680, 1
          %s9996 = scalar_lea.sflag [#allocation4], %s9995
          %s9997 = sand.u32 %s680, 1
          %s9998 = scalar_lea.vmem [#allocation5], %s9997
          %10000 = dma.done %s9996, 16
        $region152: #{dsvit_forward.1} parent=147 // pred_fallthru
          _
        // Predicated region
        $region153: #{dsvit_forward.1} parent=147 // pred_check
          %p10001 = pneg %p721
        $region154: #{dsvit_forward.1} parent=147 // pred_check_branch
          %10003 = sbr.rel (%p10001) target = $region156
        $region155: #{dsvit_forward.1} parent=147 // pred_region
          %s10004 = sand.u32 %s706, 1
          %s10005 = scalar_lea.sflag [#allocation7], %s10004
          %s10006 = sand.u32 %s706, 1
          %s10007 = scalar_lea.vmem [#allocation6], %s10006
          %10009 = dma.done %s10005, 16
        $region156: #{dsvit_forward.1} parent=147 // pred_fallthru
          _
      $region148: #{dsvit_forward.1} parent=5 // pred_fallthru
        _
    $region6: #{dsvit_forward.1} parent=1 // loop_footer
      %s77 = sadd.s32 1, %s73
    $region7: #{dsvit_forward.1} parent=1 // loop_footer_branch
      %72 = sbr.rel target = $region3
    $region8: #{dsvit_forward.1} parent=1 // loop_exit
      _
    %10010 = vsyncpa [#allocation3], 1
    %s10011 = scalar_lea.sflag [#allocation3], 1
    %10012 = vsyncpa %s10011, 1
    %10013 = vsyncpa [#allocation4], 1
    %s10014 = scalar_lea.sflag [#allocation4], 1
    %10015 = vsyncpa %s10014, 1
    %10016 = vsyncpa [#allocation7], 1
    %s10017 = scalar_lea.sflag [#allocation7], 1
    %10018 = vsyncpa %s10017, 1

</llo_original>
